<compile_context>
chip_gen: v7x
topology: tpu7x:2x2x1
jax: 0.10.0
libtpu: 0.0.40
codegen_flags: <defaults>
</compile_context>

<pallas_src>
import functools

import jax
import jax.numpy as jnp
from jax.experimental import pallas as pl
from jax.experimental.pallas import tpu as pltpu
from jax.scipy.linalg import block_diag


# ---------------------------------------------------------------------------
# in-kernel helpers
# ---------------------------------------------------------------------------

def _silu(v):
    return v * jax.nn.sigmoid(v)


# ---------------------------------------------------------------------------
# the kernel
# ---------------------------------------------------------------------------

def _refiner_kernel(
        # batch-blocked inputs
        x_sum_ref, text_ref,
        # resident weights
        wt_ref, bt_ref,
        ssm_G_ref,
        wconv_ref, bconv_ref, ln_g_ref, ln_b_ref,
        wf1f_ref, wf1b_ref, bf1_ref, wf2_ref, bf2_ref,
        wh1_ref, bh1_ref, wh2_ref, bh2_ref,
        wc1_ref, bc1_ref, wc2_ref, bc2_ref,
        # outputs
        logits_ref, conf_ref, ff_ref, bf_ref, loss_ref,
        # scratch
        acc_ref,
        *, T, Bb, H, K, C, conv_offsets, n_ssm):
    f32 = jnp.float32
    rows = T * Bb

    # conditioning:  x = (token-mean + pos + conf) + text_proj(text)      -> (T, Bb, H)
    text_cond = jnp.dot(text_ref[...], wt_ref[...], preferred_element_type=f32) + bt_ref[...]
    x = jnp.transpose(x_sum_ref[...], (1, 0, 2)) + text_cond[None, :, :]   # time-major
    x2 = x.reshape(rows, H)

    # ---------------- forward branch: 3 linear SSM blocks ----------------
    # Each layer is exactly y = G_l @ u (G_l precomputed causal Toeplitz, D folded on the
    # diagonal).  Because y_t is constant over H, u_{l+1} = u_l + y_l, so intermediate
    # (T,Bb,H) feature maps never need materializing.
    u = jnp.mean(x, axis=-1)                     # (T, Bb)
    ysum = jnp.zeros_like(u)
    for l in range(n_ssm):
        y = jnp.dot(ssm_G_ref[l], u, preferred_element_type=f32)   # (T, Bb)
        ysum = ysum + y
        u = u + y
    ff = x + ysum[:, :, None]                    # (T, Bb, H)
    ff_ref[...] = jnp.transpose(ff, (1, 0, 2))   # batch-major (Bb, T, H) store

    # ---- backward branch: dilated grouped conv pyramid (+ folded 1x1 pointwise) ----
    # Per-tap: matmul only the valid time window and accumulate in place into the matching
    # row range of the VMEM scratch (no zero-padded shifted copies, no wasted matmul rows).
    acc_ref[...] = x2 + bconv_ref[...]           # residual + folded bias
    for k, off in enumerate(conv_offsets):       # offsets are static; |off| < T guaranteed
        L = (T - abs(off)) * Bb
        src = max(off, 0) * Bb
        dst = max(-off, 0) * Bb
        acc_ref[dst:dst + L, :] += jnp.dot(x2[src:src + L, :], wconv_ref[k],
                                           preferred_element_type=f32)
    bwd = acc_ref[...]
    mu = jnp.mean(bwd, axis=-1, keepdims=True)   # LayerNorm over H
    dvn = bwd - mu
    var = jnp.mean(dvn * dvn, axis=-1, keepdims=True)
    bwd = dvn * jax.lax.rsqrt(var + 1e-5) * ln_g_ref[...] + ln_b_ref[...]
    bwd3 = bwd.reshape(T, Bb, H)
    bf_ref[...] = jnp.transpose(bwd3, (1, 0, 2))

    # --------- fusion MLP (concat avoided: first linear split per branch) ---------
    ff2 = ff.reshape(rows, H)
    fuse = (jnp.dot(ff2, wf1f_ref[...], preferred_element_type=f32)
            + jnp.dot(bwd, wf1b_ref[...], preferred_element_type=f32)
            + bf1_ref[...])
    final = jnp.dot(_silu(fuse), wf2_ref[...], preferred_element_type=f32) + bf2_ref[...]

    # --------- output heads: first linear batched over codebooks, second per codebook
    #           (no dense block-diagonal weight, no zero FLOPs / zero VMEM) ---------
    h1 = _silu(jnp.dot(final, wh1_ref[...], preferred_element_type=f32) + bh1_ref[...])
    per_cb = []
    for cb in range(C):
        lcb = (jnp.dot(h1[:, cb * H:(cb + 1) * H], wh2_ref[cb],
                       preferred_element_type=f32) + bh2_ref[cb])          # (rows, K)
        per_cb.append(jnp.transpose(lcb.reshape(T, Bb, K), (1, 0, 2)))      # (Bb, T, K)
    logits_ref[...] = jnp.stack(per_cb, axis=1)                             # (Bb, C, T, K)
    # TODO(synk): at production T (logits block ~T*Bb*C*K f32) the head stage should be
    # row-chunked / emitted as bf16 to stay inside v7x's 64 MiB VMEM.

    # --------- confidence head (lane-dense (Bb, T) output, no size-1 last dim) ---------
    c1 = _silu(jnp.dot(final, wc1_ref[...], preferred_element_type=f32) + bc1_ref[...])
    conf = jax.nn.sigmoid(jnp.dot(c1, wc2_ref[...], preferred_element_type=f32) + bc2_ref[...])
    conf_ref[...] = conf.reshape(T, Bb).T

    # --------- branch-loss partial sums (finalized in the wrapper) ---------
    td = ff[1:] - ff[:-1]
    fwd_sq = jnp.sum(td * td)
    bwd_sq = jnp.sum(bwd * bwd)
    mt = jnp.mean(bwd3, axis=0, keepdims=True)
    dv = bwd3 - mt
    var_sum = jnp.sum(dv * dv) / (T - 1)          # sum over (Bb,H) of unbiased var over T
    lane = jax.lax.broadcasted_iota(jnp.int32, (8, 128), 1)
    sub = jax.lax.broadcasted_iota(jnp.int32, (8, 128), 0)
    first = sub == 0
    blk = jnp.where(first & (lane == 0), fwd_sq,
          jnp.where(first & (lane == 1), bwd_sq,
          jnp.where(first & (lane == 2), var_sum, 0.0)))
    loss_ref[0] = blk


# ---------------------------------------------------------------------------
# wrapper-side weight preprocessing (one-time, plain JAX)
# ---------------------------------------------------------------------------

def _grouped_tap_dense(w, groups, tap):
    """Dense (C_in, C_out) matrix for one tap of a grouped Conv1d weight (C_out, C_in//g, K)."""
    out_ch = w.shape[0]
    out_pg = out_ch // groups
    blocks = [w[g * out_pg:(g + 1) * out_pg, :, tap].T for g in range(groups)]
    return block_diag(*blocks)


def _ssm_toeplitz(A, Bvec, Cvec, Dscal, T):
    """Exact collapse of the linear SSM (rank-1 B, rank-1 C) to a causal (T,T) operator.

    g[k] = C A^k B  (scalar impulse response);  G[t, s] = g[t-s] for t >= s, plus D on the
    diagonal, so that  y = G @ u  reproduces the step-by-step recurrence.
    """
    def body(v, _):
        g = (Cvec @ v)[0, 0]
        return A @ v, g

    _, g = jax.lax.scan(body, Bvec, xs=None, length=T)         # (T,)
    t_idx = jnp.arange(T)
    lag = t_idx[:, None] - t_idx[None, :]
    G = jnp.where(lag >= 0, g[jnp.clip(lag, 0, T - 1)], 0.0)
    return G + Dscal * jnp.eye(T, dtype=jnp.float32)


def pack_kernel_params(p, T, num_codebooks):
    H = p["pw_w"].shape[0]
    Hq = H // 4
    C = num_codebooks
    K = p["head2_w"][0].shape[0]

    wt = p["text_w"].T
    bt = p["text_b"].reshape(1, H)

    # SSM layers -> causal Toeplitz operators (exact because B and C are rank-1).
    ssm_G = jnp.stack([_ssm_toeplitz(A, Bp, Cp, Dp[0], T)
                       for (A, Bp, Cp, Dp) in p["ssm"]], axis=0)            # (3, T, T)

    # fold the 1x1 pointwise conv into every dilated-conv tap; drop taps whose offset
    # can never overlap a length-T sequence.
    M = p["pw_w"][:, :, 0]                                                  # (H_out, H_in)
    b_conv = p["pw_b"]
    offsets, wfold = [], []
    for pidx, dil in enumerate((1, 3, 9, 27)):
        Mp = M[:, pidx * Hq:(pidx + 1) * Hq]                                # (H, Hq)
        b_conv = b_conv + Mp @ p["pyr_b"][pidx]
        for j in range(3):
            off = (j - 1) * dil
            if abs(off) >= T:
                continue
            offsets.append(off)
            wfold.append(_grouped_tap_dense(p["pyr_w"][pidx], 4, j) @ Mp.T)  # (H, H)
    wconv = jnp.stack(wfold, 0)
    bconv = b_conv.reshape(1, H)

    wf1f = p["f1_w"][:, :H].T
    wf1b = p["f1_w"][:, H:].T
    bf1 = p["f1_b"].reshape(1, H)
    wf2 = p["f2_w"].T
    bf2 = p["f2_b"].reshape(1, H)

    wh1 = jnp.concatenate([p["head1_w"][cb].T for cb in range(C)], axis=1)   # (H, C*H)
    bh1 = jnp.concatenate([p["head1_b"][cb] for cb in range(C)], 0).reshape(1, -1)
    # second head kept per-codebook: (C, H, K) / (C, 1, K) — no block-diagonal zeros.
    wh2 = jnp.stack([p["head2_w"][cb].T for cb in range(C)], axis=0)
    bh2 = jnp.stack([p["head2_b"][cb].reshape(1, K) for cb in range(C)], axis=0)

    wc1 = p["c1_w"].T
    bc1 = p["c1_b"].reshape(1, -1)
    wc2 = p["c2_w"].T
    bc2 = p["c2_b"].reshape(1, 1)

    weights = (wt, bt, ssm_G, wconv, bconv,
               p["ln_g"].reshape(1, H), p["ln_b"].reshape(1, H),
               wf1f, wf1b, bf1, wf2, bf2, wh1, bh1, wh2, bh2, wc1, bc1, wc2, bc2)
    return weights, tuple(offsets)


# ---------------------------------------------------------------------------
# forward pass (glue + pallas_call)
# ---------------------------------------------------------------------------

def _pick_b_blk(B, cap=64, min_split=16):
    """Largest divisor of B that fits the cap; prefer >=2 grid blocks (both v7x
    TensorCores busy) whenever blocks can stay >= min_split rows and sublane-aligned."""
    divisors = [d for d in range(1, B + 1) if B % d == 0]
    fitting = [d for d in divisors if d <= cap]
    best = max(fitting)
    split = [d for d in fitting if d >= min_split and d % 8 == 0 and B // d >= 2]
    if split:
        best = max(split)
    return best


def hybrid_refiner_forward(text_emb, current_tokens, params, confidence_level=5):
    B, C, T = current_tokens.shape
    H = params["pos_emb"].shape[1]
    K = params["head2_w"][0].shape[0]
    Dt = text_emb.shape[1]

    # glue: data-dependent embedding gathers (batch-major; no wrapper transposes anywhere)
    tok = jnp.mean(jnp.stack([params["tok_emb"][cb][current_tokens[:, cb, :]]
                              for cb in range(C)], axis=0), axis=0)            # (B, T, H)
    pos = params["pos_emb"][:T]                                                # (T, H)
    conf_vec = params["conf_emb"][min(confidence_level, 19)]                   # (H,)
    x_sum = (tok + pos[None, :, :] + conf_vec[None, None, :]).astype(jnp.float32)

    weights, conv_offsets = pack_kernel_params(params, T, C)

    B_BLK = _pick_b_blk(B)
    n_blk = B // B_BLK

    kernel = functools.partial(_refiner_kernel, T=T, Bb=B_BLK, H=H, K=K, C=C,
                               conv_offsets=conv_offsets, n_ssm=3)

    def full_spec(a):
        return pl.BlockSpec(a.shape, lambda i, _nd=a.ndim: (0,) * _nd)

    in_specs = ([pl.BlockSpec((B_BLK, T, H), lambda i: (i, 0, 0)),
                 pl.BlockSpec((B_BLK, Dt), lambda i: (i, 0))]
                + [full_spec(w) for w in weights])
    # NOTE(synk): grid-invariant weight specs could additionally be single-buffered
    # (pipeline_mode=pl.Buffered(1)) on VMEM-tight configs (v7x, large B_BLK).

    out_shape = (
        jax.ShapeDtypeStruct((B, C, T, K), jnp.float32),      # logits, final layout
        jax.ShapeDtypeStruct((B, T), jnp.float32),            # confidence (lane-dense)
        jax.ShapeDtypeStruct((B, T, H), jnp.float32),         # forward features
        jax.ShapeDtypeStruct((B, T, H), jnp.float32),         # backward features
        jax.ShapeDtypeStruct((n_blk, 8, 128), jnp.float32),   # per-block loss partial sums
    )
    out_specs = (
        pl.BlockSpec((B_BLK, C, T, K), lambda i: (i, 0, 0, 0)),
        pl.BlockSpec((B_BLK, T), lambda i: (i, 0)),
        pl.BlockSpec((B_BLK, T, H), lambda i: (i, 0, 0)),
        pl.BlockSpec((B_BLK, T, H), lambda i: (i, 0, 0)),
        pl.BlockSpec((1, 8, 128), lambda i: (i, 0, 0)),
    )

    # raise the scoped-VMEM budget only when the estimated resident footprint needs it
    weight_bytes = sum(int(w.size) * w.dtype.itemsize for w in weights)
    io_block_bytes = 4 * (B_BLK * T * H + B_BLK * Dt
                          + B_BLK * C * T * K + B_BLK * T + 2 * B_BLK * T * H + 8 * 128)
    scratch_bytes = 4 * T * B_BLK * H
    est = 2 * (weight_bytes + io_block_bytes) + scratch_bytes
    vmem_limit = None
    if est > 12 * 1024 * 1024:
        # TODO(synk): on v7x cap this nearer 56 MiB and shrink B_BLK instead.
        vmem_limit = min(int(est * 1.25), 96 * 1024 * 1024)

    logits, confidence, forward_features, backward_features, loss_part = pl.pallas_call(
        kernel,
        grid=(n_blk,),
        in_specs=in_specs,
        out_specs=out_specs,
        out_shape=out_shape,
        scratch_shapes=[pltpu.VMEM((T * B_BLK, H), jnp.float32)],
        compiler_params=pltpu.CompilerParams(
            dimension_semantics=("parallel",),
            vmem_limit_bytes=vmem_limit),
    )(x_sum, text_emb.astype(jnp.float32), *weights)

    fwd_sq = jnp.sum(loss_part[:, 0, 0])
    bwd_sq = jnp.sum(loss_part[:, 0, 1])
    var_sum = jnp.sum(loss_part[:, 0, 2])
    forward_loss = fwd_sq / (B * (T - 1) * H) * 0.001
    backward_loss = bwd_sq / (B * T * H) * 1e-4 - var_sum / (B * H) * 1e-4

    return {"logits": logits, "confidence": confidence,
            "forward_loss": forward_loss, "backward_loss": backward_loss,
            "forward_features": forward_features, "backward_features": backward_features}


# ---------------------------------------------------------------------------
# parameters (PyTorch-layout, PyTorch-style init)
# ---------------------------------------------------------------------------

def init_params(key, text_dim, num_codebooks, codebook_size, hidden_dim):
    H = hidden_dim
    Hq = H // 4
    Hc = H // 2
    ks = iter(jax.random.split(key, 64))

    def nrm(shape, scale=1.0):
        return jax.random.normal(next(ks), shape, jnp.float32) * scale

    def uni(shape, k):
        return jax.random.uniform(next(ks), shape, jnp.float32, -k, k)

    p = {}
    p["tok_emb"] = [nrm((codebook_size, H)) for _ in range(num_codebooks)]
    p["pos_emb"] = nrm((1000, H))
    p["conf_emb"] = nrm((20, H))
    kt = 1.0 / text_dim ** 0.5
    p["text_w"] = uni((H, text_dim), kt)
    p["text_b"] = uni((H,), kt)
    p["ssm"] = [(nrm((H, H), H ** -0.5), nrm((H, 1), H ** -0.5),
                 nrm((1, H), H ** -0.5), jnp.zeros((1,), jnp.float32))
                for _ in range(3)]
    kc = 1.0 / ((H // 4) * 3) ** 0.5
    p["pyr_w"] = [uni((Hq, H // 4, 3), kc) for _ in range(4)]     # (out, in/groups, k)
    p["pyr_b"] = [uni((Hq,), kc) for _ in range(4)]
    kpw = 1.0 / H ** 0.5
    p["pw_w"] = uni((H, H, 1), kpw)
    p["pw_b"] = uni((H,), kpw)
    p["ln_g"] = jnp.ones((H,), jnp.float32)
    p["ln_b"] = jnp.zeros((H,), jnp.float32)
    kf1 = 1.0 / (2 * H) ** 0.5
    p["f1_w"] = uni((H, 2 * H), kf1)
    p["f1_b"] = uni((H,), kf1)
    kh = 1.0 / H ** 0.5
    p["f2_w"] = uni((H, H), kh)
    p["f2_b"] = uni((H,), kh)
    p["head1_w"] = [uni((H, H), kh) for _ in range(num_codebooks)]
    p["head1_b"] = [uni((H,), kh) for _ in range(num_codebooks)]
    p["head2_w"] = [uni((codebook_size, H), kh) for _ in range(num_codebooks)]
    p["head2_b"] = [uni((codebook_size,), kh) for _ in range(num_codebooks)]
    p["c1_w"] = uni((Hc, H), kh)
    p["c1_b"] = uni((Hc,), kh)
    kc2 = 1.0 / Hc ** 0.5
    p["c2_w"] = uni((1, Hc), kc2)
    p["c2_b"] = uni((1,), kc2)
    return p


# ---------------------------------------------------------------------------
# pure-JAX reference (mirrors the torch forward, eval mode)
# ---------------------------------------------------------------------------

def _conv1d_ref(x, w, b, dilation, padding, groups):
    out = jax.lax.conv_general_dilated(
        x, w, window_strides=(1,), padding=[(padding, padding)],
        rhs_dilation=(dilation,), dimension_numbers=("NCH", "OIH", "NCH"),
        feature_group_count=groups)
    return out + b[None, :, None]


def reference_forward(text_emb, current_tokens, p, confidence_level=5):
    B, C, T = current_tokens.shape
    H = p["pos_emb"].shape[1]
    tok = jnp.mean(jnp.stack([p["tok_emb"][cb][current_tokens[:, cb, :]]
                              for cb in range(C)], axis=0), axis=0)
    pos = p["pos_emb"][:T]
    conf_vec = p["conf_emb"][min(confidence_level, 19)]
    text_cond = text_emb @ p["text_w"].T + p["text_b"]
    x = tok + pos[None] + conf_vec[None, None, :] + text_cond[:, None, :]

    ff = x
    for (A, Bp, Cp, Dp) in p["ssm"]:
        u = ff.mean(-1)                                  # (B, T)
        h = jnp.zeros((B, H), jnp.float32)
        hs = []
        for t in range(T):
            h = h @ A.T + u[:, t:t + 1] @ Bp.T
            hs.append(h)
        hst = jnp.stack(hs, axis=1)                      # (B, T, H)
        y = jnp.einsum("bth,h->bt", hst, Cp[0]) + u * Dp[0]
        ff = ff + y[..., None]

    xc = jnp.transpose(x, (0, 2, 1))                     # (B, H, T)
    feats = [_conv1d_ref(xc, p["pyr_w"][i], p["pyr_b"][i], d, d, 4)
             for i, d in enumerate((1, 3, 9, 27))]
    ms = jnp.concatenate(feats, axis=1)
    bw = jnp.einsum("oi,bit->bot", p["pw_w"][:, :, 0], ms) + p["pw_b"][None, :, None]
    bw = bw + xc
    bwt = jnp.transpose(bw, (0, 2, 1))
    mu = bwt.mean(-1, keepdims=True)
    var = ((bwt - mu) ** 2).mean(-1, keepdims=True)
    bwt = (bwt - mu) / jnp.sqrt(var + 1e-5) * p["ln_g"] + p["ln_b"]

    fused = jnp.concatenate([ff, bwt], axis=-1)
    h1 = fused @ p["f1_w"].T + p["f1_b"]
    h1 = h1 * jax.nn.sigmoid(h1)
    final = h1 @ p["f2_w"].T + p["f2_b"]

    logits = []
    for cb in range(C):
        a = final @ p["head1_w"][cb].T + p["head1_b"][cb]
        a = a * jax.nn.sigmoid(a)
        logits.append(a @ p["head2_w"][cb].T + p["head2_b"][cb])
    logits = jnp.stack(logits, axis=1)                   # (B, C, T, K)

    c1 = final @ p["c1_w"].T + p["c1_b"]
    c1 = c1 * jax.nn.sigmoid(c1)
    conf = jax.nn.sigmoid(c1 @ p["c2_w"].T + p["c2_b"])[..., 0]

    td = ff[:, 1:] - ff[:, :-1]
    fwd_loss = jnp.mean(td ** 2) * 0.001
    bwd_loss = jnp.mean(bwt ** 2) * 1e-4 - jnp.var(bwt, axis=1, ddof=1).mean() * 1e-4

    return {"logits": logits, "confidence": conf, "forward_loss": fwd_loss,
            "backward_loss": bwd_loss, "forward_features": ff, "backward_features": bwt}


# ---------------------------------------------------------------------------

if __name__ == "__main__":
    B, NUM_CODEBOOKS, T = 2, 4, 16
    HIDDEN, CODEBOOK_SIZE, TEXT_DIM = 32, 64, 48

    key = jax.random.PRNGKey(0)
    kp, ktok, ktxt = jax.random.split(key, 3)
    params = init_params(kp, TEXT_DIM, NUM_CODEBOOKS, CODEBOOK_SIZE, HIDDEN)
    tokens = jax.random.randint(ktok, (B, NUM_CODEBOOKS, T), 0, CODEBOOK_SIZE, dtype=jnp.int32)
    text_emb = jax.random.normal(ktxt, (B, TEXT_DIM), jnp.float32)

    out = hybrid_refiner_forward(text_emb, tokens, params, confidence_level=5)
    out = jax.block_until_ready(out)

    ref = reference_forward(text_emb, tokens, params, confidence_level=5)

    def check(name, a, b, atol=1e-3, rtol=1e-3):
        a = jnp.asarray(a)
        b = jnp.asarray(b)
        assert a.shape == b.shape, (name, a.shape, b.shape)
        assert bool(jnp.allclose(a, b, atol=atol, rtol=rtol)), (
            name, float(jnp.max(jnp.abs(a - b))))

    check("logits", out["logits"], ref["logits"])
    check("confidence", out["confidence"], ref["confidence"])
    check("forward_features", out["forward_features"], ref["forward_features"])
    check("backward_features", out["backward_features"], ref["backward_features"])
    check("forward_loss", out["forward_loss"], ref["forward_loss"], atol=1e-5)
    check("backward_loss", out["backward_loss"], ref["backward_loss"], atol=1e-5)

    assert out["logits"].shape == (B, NUM_CODEBOOKS, T, CODEBOOK_SIZE)
    assert out["confidence"].shape == (B, T)
    print("KERNEL_OK")
</pallas_src>

<mosaic_0001>
module attributes {stable_mosaic.version = 11 : i64} {
  func.func @_refiner_kernel(%arg0: i32, %arg1: memref<2x16x32xf32, #tpu.memory_space<vmem>>, %arg2: memref<2x48xf32, #tpu.memory_space<vmem>>, %arg3: memref<48x32xf32, #tpu.memory_space<vmem>>, %arg4: memref<1x32xf32, #tpu.memory_space<vmem>>, %arg5: memref<3x16x16xf32, #tpu.memory_space<vmem>>, %arg6: memref<10x32x32xf32, #tpu.memory_space<vmem>>, %arg7: memref<1x32xf32, #tpu.memory_space<vmem>>, %arg8: memref<1x32xf32, #tpu.memory_space<vmem>>, %arg9: memref<1x32xf32, #tpu.memory_space<vmem>>, %arg10: memref<32x32xf32, #tpu.memory_space<vmem>>, %arg11: memref<32x32xf32, #tpu.memory_space<vmem>>, %arg12: memref<1x32xf32, #tpu.memory_space<vmem>>, %arg13: memref<32x32xf32, #tpu.memory_space<vmem>>, %arg14: memref<1x32xf32, #tpu.memory_space<vmem>>, %arg15: memref<32x128xf32, #tpu.memory_space<vmem>>, %arg16: memref<1x128xf32, #tpu.memory_space<vmem>>, %arg17: memref<4x32x64xf32, #tpu.memory_space<vmem>>, %arg18: memref<4x1x64xf32, #tpu.memory_space<vmem>>, %arg19: memref<32x16xf32, #tpu.memory_space<vmem>>, %arg20: memref<1x16xf32, #tpu.memory_space<vmem>>, %arg21: memref<16x1xf32, #tpu.memory_space<vmem>>, %arg22: memref<1x1xf32, #tpu.memory_space<vmem>>, %arg23: memref<2x4x16x64xf32, #tpu.memory_space<vmem>>, %arg24: memref<2x16xf32, #tpu.memory_space<vmem>>, %arg25: memref<2x16x32xf32, #tpu.memory_space<vmem>>, %arg26: memref<2x16x32xf32, #tpu.memory_space<vmem>>, %arg27: memref<1x8x128xf32, #tpu.memory_space<vmem>>, %arg28: memref<32x32xf32, #tpu.memory_space<vmem>>) attributes {dimension_semantics = [#tpu.dimension_semantics<parallel>], iteration_bounds = array<i64: 1>, scalar_prefetch = 0 : i64, scratch_operands = 1 : i64, tpu.core_type = #tpu.core_type<tc>, window_params = [{transform_indices = @transform_0, window_bounds = array<i64: 2, 16, 32>}, {transform_indices = @transform_1, window_bounds = array<i64: 2, 48>}, {pipeline_mode = #tpu.pipeline_mode<synchronous>, transform_indices = @transform_2, window_bounds = array<i64: 48, 32>}, {pipeline_mode = #tpu.pipeline_mode<synchronous>, transform_indices = @transform_3, window_bounds = array<i64: 1, 32>}, {pipeline_mode = #tpu.pipeline_mode<synchronous>, transform_indices = @transform_4, window_bounds = array<i64: 3, 16, 16>}, {pipeline_mode = #tpu.pipeline_mode<synchronous>, transform_indices = @transform_5, window_bounds = array<i64: 10, 32, 32>}, {pipeline_mode = #tpu.pipeline_mode<synchronous>, transform_indices = @transform_6, window_bounds = array<i64: 1, 32>}, {pipeline_mode = #tpu.pipeline_mode<synchronous>, transform_indices = @transform_7, window_bounds = array<i64: 1, 32>}, {pipeline_mode = #tpu.pipeline_mode<synchronous>, transform_indices = @transform_8, window_bounds = array<i64: 1, 32>}, {pipeline_mode = #tpu.pipeline_mode<synchronous>, transform_indices = @transform_9, window_bounds = array<i64: 32, 32>}, {pipeline_mode = #tpu.pipeline_mode<synchronous>, transform_indices = @transform_10, window_bounds = array<i64: 32, 32>}, {pipeline_mode = #tpu.pipeline_mode<synchronous>, transform_indices = @transform_11, window_bounds = array<i64: 1, 32>}, {pipeline_mode = #tpu.pipeline_mode<synchronous>, transform_indices = @transform_12, window_bounds = array<i64: 32, 32>}, {pipeline_mode = #tpu.pipeline_mode<synchronous>, transform_indices = @transform_13, window_bounds = array<i64: 1, 32>}, {pipeline_mode = #tpu.pipeline_mode<synchronous>, transform_indices = @transform_14, window_bounds = array<i64: 32, 128>}, {pipeline_mode = #tpu.pipeline_mode<synchronous>, transform_indices = @transform_15, window_bounds = array<i64: 1, 128>}, {pipeline_mode = #tpu.pipeline_mode<synchronous>, transform_indices = @transform_16, window_bounds = array<i64: 4, 32, 64>}, {pipeline_mode = #tpu.pipeline_mode<synchronous>, transform_indices = @transform_17, window_bounds = array<i64: 4, 1, 64>}, {pipeline_mode = #tpu.pipeline_mode<synchronous>, transform_indices = @transform_18, window_bounds = array<i64: 32, 16>}, {pipeline_mode = #tpu.pipeline_mode<synchronous>, transform_indices = @transform_19, window_bounds = array<i64: 1, 16>}, {pipeline_mode = #tpu.pipeline_mode<synchronous>, transform_indices = @transform_20, window_bounds = array<i64: 16, 1>}, {pipeline_mode = #tpu.pipeline_mode<synchronous>, transform_indices = @transform_21, window_bounds = array<i64: 1, 1>}, {transform_indices = @transform_22, window_bounds = array<i64: 2, 4, 16, 64>}, {transform_indices = @transform_23, window_bounds = array<i64: 2, 16>}, {transform_indices = @transform_24, window_bounds = array<i64: 2, 16, 32>}, {transform_indices = @transform_25, window_bounds = array<i64: 2, 16, 32>}, {transform_indices = @transform_26, window_bounds = array<i64: 1, 8, 128>}]} {
    %c0 = arith.constant 0 : index
    %c0_0 = arith.constant 0 : index
    %0 = vector.load %arg2[%c0, %c0_0] : memref<2x48xf32, #tpu.memory_space<vmem>>, vector<2x48xf32>
    %c0_1 = arith.constant 0 : index
    %c0_2 = arith.constant 0 : index
    %1 = vector.load %arg3[%c0_1, %c0_2] : memref<48x32xf32, #tpu.memory_space<vmem>>, vector<48x32xf32>
    %cst = arith.constant dense<0.000000e+00> : vector<2x32xf32>
    %2 = tpu.matmul %0, %1, %cst {dimension_numbers = #tpu.dot_dimension_numbers<[1], [0], [0], [1], [0, 0, 1, 1], [], []>} : vector<2x48xf32>, vector<48x32xf32>, vector<2x32xf32> -> vector<2x32xf32>
    %c0_3 = arith.constant 0 : index
    %c0_4 = arith.constant 0 : index
    %3 = vector.load %arg4[%c0_3, %c0_4] : memref<1x32xf32, #tpu.memory_space<vmem>>, vector<1x32xf32>
    %4 = vector.broadcast %3 : vector<1x32xf32> to vector<2x32xf32>
    %5 = arith.addf %2, %4 : vector<2x32xf32>
    %c0_5 = arith.constant 0 : index
    %c0_6 = arith.constant 0 : index
    %c0_7 = arith.constant 0 : index
    %6 = vector.load %arg1[%c0_5, %c0_6, %c0_7] : memref<2x16x32xf32, #tpu.memory_space<vmem>>, vector<2x16x32xf32>
    %7 = tpu.transpose %6, [1, 0, 2] : vector<2x16x32xf32> -> vector<16x2x32xf32>
    %8 = vector.shape_cast %5 : vector<2x32xf32> to vector<1x2x32xf32>
    %9 = vector.broadcast %8 : vector<1x2x32xf32> to vector<16x2x32xf32>
    %10 = arith.addf %7, %9 : vector<16x2x32xf32>
    %11 = vector.shape_cast %10 : vector<16x2x32xf32> to vector<32x32xf32>
    %cst_8 = arith.constant dense<0.000000e+00> : vector<16x2xf32>
    %12 = vector.multi_reduction <add>, %10, %cst_8 [2] : vector<16x2x32xf32> to vector<16x2xf32>
    %cst_9 = arith.constant 3.200000e+01 : f32
    %13 = vector.broadcast %cst_9 : f32 to vector<16x2xf32>
    %14 = arith.divf %12, %13 : vector<16x2xf32>
    %cst_10 = arith.constant 0.000000e+00 : f32
    %15 = vector.broadcast %cst_10 : f32 to vector<16x2xf32>
    %c0_11 = arith.constant 0 : index
    %c0_12 = arith.constant 0 : index
    %c0_13 = arith.constant 0 : index
    %16 = vector.load %arg5[%c0_11, %c0_12, %c0_13] : memref<3x16x16xf32, #tpu.memory_space<vmem>>, vector<1x16x16xf32>
    %17 = vector.shape_cast %16 : vector<1x16x16xf32> to vector<16x16xf32>
    %cst_14 = arith.constant dense<0.000000e+00> : vector<16x2xf32>
    %18 = tpu.matmul %17, %14, %cst_14 {dimension_numbers = #tpu.dot_dimension_numbers<[1], [0], [0], [1], [0, 0, 1, 1], [], []>} : vector<16x16xf32>, vector<16x2xf32>, vector<16x2xf32> -> vector<16x2xf32>
    %19 = arith.addf %15, %18 : vector<16x2xf32>
    %20 = arith.addf %14, %18 : vector<16x2xf32>
    %c1 = arith.constant 1 : index
    %c0_15 = arith.constant 0 : index
    %c0_16 = arith.constant 0 : index
    %21 = vector.load %arg5[%c1, %c0_15, %c0_16] : memref<3x16x16xf32, #tpu.memory_space<vmem>>, vector<1x16x16xf32>
    %22 = vector.shape_cast %21 : vector<1x16x16xf32> to vector<16x16xf32>
    %cst_17 = arith.constant dense<0.000000e+00> : vector<16x2xf32>
    %23 = tpu.matmul %22, %20, %cst_17 {dimension_numbers = #tpu.dot_dimension_numbers<[1], [0], [0], [1], [0, 0, 1, 1], [], []>} : vector<16x16xf32>, vector<16x2xf32>, vector<16x2xf32> -> vector<16x2xf32>
    %24 = arith.addf %19, %23 : vector<16x2xf32>
    %25 = arith.addf %20, %23 : vector<16x2xf32>
    %c2 = arith.constant 2 : index
    %c0_18 = arith.constant 0 : index
    %c0_19 = arith.constant 0 : index
    %26 = vector.load %arg5[%c2, %c0_18, %c0_19] : memref<3x16x16xf32, #tpu.memory_space<vmem>>, vector<1x16x16xf32>
    %27 = vector.shape_cast %26 : vector<1x16x16xf32> to vector<16x16xf32>
    %cst_20 = arith.constant dense<0.000000e+00> : vector<16x2xf32>
    %28 = tpu.matmul %27, %25, %cst_20 {dimension_numbers = #tpu.dot_dimension_numbers<[1], [0], [0], [1], [0, 0, 1, 1], [], []>} : vector<16x16xf32>, vector<16x2xf32>, vector<16x2xf32> -> vector<16x2xf32>
    %29 = arith.addf %24, %28 : vector<16x2xf32>
    %30 = vector.shape_cast %29 : vector<16x2xf32> to vector<16x2x1xf32>
    %31 = vector.broadcast %30 : vector<16x2x1xf32> to vector<16x2x32xf32>
    %32 = arith.addf %10, %31 : vector<16x2x32xf32>
    %33 = tpu.transpose %32, [1, 0, 2] : vector<16x2x32xf32> -> vector<2x16x32xf32>
    %c0_21 = arith.constant 0 : index
    %c0_22 = arith.constant 0 : index
    %c0_23 = arith.constant 0 : index
    %34 = vector.load %arg25[%c0_21, %c0_22, %c0_23] : memref<2x16x32xf32, #tpu.memory_space<vmem>>, vector<2x16x32xf32>
    tpu.vector_store %arg25[%c0_21, %c0_22, %c0_23], %33 {strides = array<i32>} : memref<2x16x32xf32, #tpu.memory_space<vmem>>, vector<2x16x32xf32>,
    %c0_24 = arith.constant 0 : index
    %c0_25 = arith.constant 0 : index
    %35 = vector.load %arg7[%c0_24, %c0_25] : memref<1x32xf32, #tpu.memory_space<vmem>>, vector<1x32xf32>
    %36 = vector.broadcast %35 : vector<1x32xf32> to vector<32x32xf32>
    %37 = arith.addf %11, %36 : vector<32x32xf32>
    %c0_26 = arith.constant 0 : index
    %c0_27 = arith.constant 0 : index
    %38 = vector.load %arg28[%c0_26, %c0_27] : memref<32x32xf32, #tpu.memory_space<vmem>>, vector<32x32xf32>
    tpu.vector_store %arg28[%c0_26, %c0_27], %37 {strides = array<i32>} : memref<32x32xf32, #tpu.memory_space<vmem>>, vector<32x32xf32>,
    %c2_28 = arith.constant 2 : index
    %c0_29 = arith.constant 0 : index
    %39 = vector.load %arg28[%c2_28, %c0_29] : memref<32x32xf32, #tpu.memory_space<vmem>>, vector<30x32xf32>
    %40 = vector.extract_strided_slice %11 {offsets = [0, 0], sizes = [30, 32], strides = [1, 1]} : vector<32x32xf32> to vector<30x32xf32>
    %c0_30 = arith.constant 0 : index
    %c0_31 = arith.constant 0 : index
    %c0_32 = arith.constant 0 : index
    %41 = vector.load %arg6[%c0_30, %c0_31, %c0_32] : memref<10x32x32xf32, #tpu.memory_space<vmem>>, vector<1x32x32xf32>
    %42 = vector.shape_cast %41 : vector<1x32x32xf32> to vector<32x32xf32>
    %cst_33 = arith.constant dense<0.000000e+00> : vector<30x32xf32>
    %43 = tpu.matmul %40, %42, %cst_33 {dimension_numbers = #tpu.dot_dimension_numbers<[1], [0], [0], [1], [0, 0, 1, 1], [], []>} : vector<30x32xf32>, vector<32x32xf32>, vector<30x32xf32> -> vector<30x32xf32>
    %44 = arith.addf %39, %43 : vector<30x32xf32>
    %c2_34 = arith.constant 2 : index
    %c0_35 = arith.constant 0 : index
    %45 = vector.load %arg28[%c2_34, %c0_35] : memref<32x32xf32, #tpu.memory_space<vmem>>, vector<30x32xf32>
    tpu.vector_store %arg28[%c2_34, %c0_35], %44 {strides = array<i32>} : memref<32x32xf32, #tpu.memory_space<vmem>>, vector<30x32xf32>,
    %c0_36 = arith.constant 0 : index
    %c0_37 = arith.constant 0 : index
    %46 = vector.load %arg28[%c0_36, %c0_37] : memref<32x32xf32, #tpu.memory_space<vmem>>, vector<32x32xf32>
    %c1_38 = arith.constant 1 : index
    %c0_39 = arith.constant 0 : index
    %c0_40 = arith.constant 0 : index
    %47 = vector.load %arg6[%c1_38, %c0_39, %c0_40] : memref<10x32x32xf32, #tpu.memory_space<vmem>>, vector<1x32x32xf32>
    %48 = vector.shape_cast %47 : vector<1x32x32xf32> to vector<32x32xf32>
    %cst_41 = arith.constant dense<0.000000e+00> : vector<32x32xf32>
    %49 = tpu.matmul %11, %48, %cst_41 {dimension_numbers = #tpu.dot_dimension_numbers<[1], [0], [0], [1], [0, 0, 1, 1], [], []>} : vector<32x32xf32>, vector<32x32xf32>, vector<32x32xf32> -> vector<32x32xf32>
    %50 = arith.addf %46, %49 : vector<32x32xf32>
    %c0_42 = arith.constant 0 : index
    %c0_43 = arith.constant 0 : index
    %51 = vector.load %arg28[%c0_42, %c0_43] : memref<32x32xf32, #tpu.memory_space<vmem>>, vector<32x32xf32>
    tpu.vector_store %arg28[%c0_42, %c0_43], %50 {strides = array<i32>} : memref<32x32xf32, #tpu.memory_space<vmem>>, vector<32x32xf32>,
    %c0_44 = arith.constant 0 : index
    %c0_45 = arith.constant 0 : index
    %52 = vector.load %arg28[%c0_44, %c0_45] : memref<32x32xf32, #tpu.memory_space<vmem>>, vector<30x32xf32>
    %53 = vector.extract_strided_slice %11 {offsets = [2, 0], sizes = [30, 32], strides = [1, 1]} : vector<32x32xf32> to vector<30x32xf32>
    %c2_46 = arith.constant 2 : index
    %c0_47 = arith.constant 0 : index
    %c0_48 = arith.constant 0 : index
    %54 = vector.load %arg6[%c2_46, %c0_47, %c0_48] : memref<10x32x32xf32, #tpu.memory_space<vmem>>, vector<1x32x32xf32>
    %55 = vector.shape_cast %54 : vector<1x32x32xf32> to vector<32x32xf32>
    %cst_49 = arith.constant dense<0.000000e+00> : vector<30x32xf32>
    %56 = tpu.matmul %53, %55, %cst_49 {dimension_numbers = #tpu.dot_dimension_numbers<[1], [0], [0], [1], [0, 0, 1, 1], [], []>} : vector<30x32xf32>, vector<32x32xf32>, vector<30x32xf32> -> vector<30x32xf32>
    %57 = arith.addf %52, %56 : vector<30x32xf32>
    %c0_50 = arith.constant 0 : index
    %c0_51 = arith.constant 0 : index
    %58 = vector.load %arg28[%c0_50, %c0_51] : memref<32x32xf32, #tpu.memory_space<vmem>>, vector<30x32xf32>
    tpu.vector_store %arg28[%c0_50, %c0_51], %57 {strides = array<i32>} : memref<32x32xf32, #tpu.memory_space<vmem>>, vector<30x32xf32>,
    %c6 = arith.constant 6 : index
    %c0_52 = arith.constant 0 : index
    %59 = vector.load %arg28[%c6, %c0_52] : memref<32x32xf32, #tpu.memory_space<vmem>>, vector<26x32xf32>
    %60 = vector.extract_strided_slice %11 {offsets = [0, 0], sizes = [26, 32], strides = [1, 1]} : vector<32x32xf32> to vector<26x32xf32>
    %c3 = arith.constant 3 : index
    %c0_53 = arith.constant 0 : index
    %c0_54 = arith.constant 0 : index
    %61 = vector.load %arg6[%c3, %c0_53, %c0_54] : memref<10x32x32xf32, #tpu.memory_space<vmem>>, vector<1x32x32xf32>
    %62 = vector.shape_cast %61 : vector<1x32x32xf32> to vector<32x32xf32>
    %cst_55 = arith.constant dense<0.000000e+00> : vector<26x32xf32>
    %63 = tpu.matmul %60, %62, %cst_55 {dimension_numbers = #tpu.dot_dimension_numbers<[1], [0], [0], [1], [0, 0, 1, 1], [], []>} : vector<26x32xf32>, vector<32x32xf32>, vector<26x32xf32> -> vector<26x32xf32>
    %64 = arith.addf %59, %63 : vector<26x32xf32>
    %c6_56 = arith.constant 6 : index
    %c0_57 = arith.constant 0 : index
    %65 = vector.load %arg28[%c6_56, %c0_57] : memref<32x32xf32, #tpu.memory_space<vmem>>, vector<26x32xf32>
    tpu.vector_store %arg28[%c6_56, %c0_57], %64 {strides = array<i32>} : memref<32x32xf32, #tpu.memory_space<vmem>>, vector<26x32xf32>,
    %c0_58 = arith.constant 0 : index
    %c0_59 = arith.constant 0 : index
    %66 = vector.load %arg28[%c0_58, %c0_59] : memref<32x32xf32, #tpu.memory_space<vmem>>, vector<32x32xf32>
    %c4 = arith.constant 4 : index
    %c0_60 = arith.constant 0 : index
    %c0_61 = arith.constant 0 : index
    %67 = vector.load %arg6[%c4, %c0_60, %c0_61] : memref<10x32x32xf32, #tpu.memory_space<vmem>>, vector<1x32x32xf32>
    %68 = vector.shape_cast %67 : vector<1x32x32xf32> to vector<32x32xf32>
    %cst_62 = arith.constant dense<0.000000e+00> : vector<32x32xf32>
    %69 = tpu.matmul %11, %68, %cst_62 {dimension_numbers = #tpu.dot_dimension_numbers<[1], [0], [0], [1], [0, 0, 1, 1], [], []>} : vector<32x32xf32>, vector<32x32xf32>, vector<32x32xf32> -> vector<32x32xf32>
    %70 = arith.addf %66, %69 : vector<32x32xf32>
    %c0_63 = arith.constant 0 : index
    %c0_64 = arith.constant 0 : index
    %71 = vector.load %arg28[%c0_63, %c0_64] : memref<32x32xf32, #tpu.memory_space<vmem>>, vector<32x32xf32>
    tpu.vector_store %arg28[%c0_63, %c0_64], %70 {strides = array<i32>} : memref<32x32xf32, #tpu.memory_space<vmem>>, vector<32x32xf32>,
    %c0_65 = arith.constant 0 : index
    %c0_66 = arith.constant 0 : index
    %72 = vector.load %arg28[%c0_65, %c0_66] : memref<32x32xf32, #tpu.memory_space<vmem>>, vector<26x32xf32>
    %73 = vector.extract_strided_slice %11 {offsets = [6, 0], sizes = [26, 32], strides = [1, 1]} : vector<32x32xf32> to vector<26x32xf32>
    %c5 = arith.constant 5 : index
    %c0_67 = arith.constant 0 : index
    %c0_68 = arith.constant 0 : index
    %74 = vector.load %arg6[%c5, %c0_67, %c0_68] : memref<10x32x32xf32, #tpu.memory_space<vmem>>, vector<1x32x32xf32>
    %75 = vector.shape_cast %74 : vector<1x32x32xf32> to vector<32x32xf32>
    %cst_69 = arith.constant dense<0.000000e+00> : vector<26x32xf32>
    %76 = tpu.matmul %73, %75, %cst_69 {dimension_numbers = #tpu.dot_dimension_numbers<[1], [0], [0], [1], [0, 0, 1, 1], [], []>} : vector<26x32xf32>, vector<32x32xf32>, vector<26x32xf32> -> vector<26x32xf32>
    %77 = arith.addf %72, %76 : vector<26x32xf32>
    %c0_70 = arith.constant 0 : index
    %c0_71 = arith.constant 0 : index
    %78 = vector.load %arg28[%c0_70, %c0_71] : memref<32x32xf32, #tpu.memory_space<vmem>>, vector<26x32xf32>
    tpu.vector_store %arg28[%c0_70, %c0_71], %77 {strides = array<i32>} : memref<32x32xf32, #tpu.memory_space<vmem>>, vector<26x32xf32>,
    %c18 = arith.constant 18 : index
    %c0_72 = arith.constant 0 : index
    %79 = vector.load %arg28[%c18, %c0_72] : memref<32x32xf32, #tpu.memory_space<vmem>>, vector<14x32xf32>
    %80 = vector.extract_strided_slice %11 {offsets = [0, 0], sizes = [14, 32], strides = [1, 1]} : vector<32x32xf32> to vector<14x32xf32>
    %c6_73 = arith.constant 6 : index
    %c0_74 = arith.constant 0 : index
    %c0_75 = arith.constant 0 : index
    %81 = vector.load %arg6[%c6_73, %c0_74, %c0_75] : memref<10x32x32xf32, #tpu.memory_space<vmem>>, vector<1x32x32xf32>
    %82 = vector.shape_cast %81 : vector<1x32x32xf32> to vector<32x32xf32>
    %cst_76 = arith.constant dense<0.000000e+00> : vector<14x32xf32>
    %83 = tpu.matmul %80, %82, %cst_76 {dimension_numbers = #tpu.dot_dimension_numbers<[1], [0], [0], [1], [0, 0, 1, 1], [], []>} : vector<14x32xf32>, vector<32x32xf32>, vector<14x32xf32> -> vector<14x32xf32>
    %84 = arith.addf %79, %83 : vector<14x32xf32>
    %c18_77 = arith.constant 18 : index
    %c0_78 = arith.constant 0 : index
    %85 = vector.load %arg28[%c18_77, %c0_78] : memref<32x32xf32, #tpu.memory_space<vmem>>, vector<14x32xf32>
    tpu.vector_store %arg28[%c18_77, %c0_78], %84 {strides = array<i32>} : memref<32x32xf32, #tpu.memory_space<vmem>>, vector<14x32xf32>,
    %c0_79 = arith.constant 0 : index
    %c0_80 = arith.constant 0 : index
    %86 = vector.load %arg28[%c0_79, %c0_80] : memref<32x32xf32, #tpu.memory_space<vmem>>, vector<32x32xf32>
    %c7 = arith.constant 7 : index
    %c0_81 = arith.constant 0 : index
    %c0_82 = arith.constant 0 : index
    %87 = vector.load %arg6[%c7, %c0_81, %c0_82] : memref<10x32x32xf32, #tpu.memory_space<vmem>>, vector<1x32x32xf32>
    %88 = vector.shape_cast %87 : vector<1x32x32xf32> to vector<32x32xf32>
    %cst_83 = arith.constant dense<0.000000e+00> : vector<32x32xf32>
    %89 = tpu.matmul %11, %88, %cst_83 {dimension_numbers = #tpu.dot_dimension_numbers<[1], [0], [0], [1], [0, 0, 1, 1], [], []>} : vector<32x32xf32>, vector<32x32xf32>, vector<32x32xf32> -> vector<32x32xf32>
    %90 = arith.addf %86, %89 : vector<32x32xf32>
    %c0_84 = arith.constant 0 : index
    %c0_85 = arith.constant 0 : index
    %91 = vector.load %arg28[%c0_84, %c0_85] : memref<32x32xf32, #tpu.memory_space<vmem>>, vector<32x32xf32>
    tpu.vector_store %arg28[%c0_84, %c0_85], %90 {strides = array<i32>} : memref<32x32xf32, #tpu.memory_space<vmem>>, vector<32x32xf32>,
    %c0_86 = arith.constant 0 : index
    %c0_87 = arith.constant 0 : index
    %92 = vector.load %arg28[%c0_86, %c0_87] : memref<32x32xf32, #tpu.memory_space<vmem>>, vector<14x32xf32>
    %93 = vector.extract_strided_slice %11 {offsets = [18, 0], sizes = [14, 32], strides = [1, 1]} : vector<32x32xf32> to vector<14x32xf32>
    %c8 = arith.constant 8 : index
    %c0_88 = arith.constant 0 : index
    %c0_89 = arith.constant 0 : index
    %94 = vector.load %arg6[%c8, %c0_88, %c0_89] : memref<10x32x32xf32, #tpu.memory_space<vmem>>, vector<1x32x32xf32>
    %95 = vector.shape_cast %94 : vector<1x32x32xf32> to vector<32x32xf32>
    %cst_90 = arith.constant dense<0.000000e+00> : vector<14x32xf32>
    %96 = tpu.matmul %93, %95, %cst_90 {dimension_numbers = #tpu.dot_dimension_numbers<[1], [0], [0], [1], [0, 0, 1, 1], [], []>} : vector<14x32xf32>, vector<32x32xf32>, vector<14x32xf32> -> vector<14x32xf32>
    %97 = arith.addf %92, %96 : vector<14x32xf32>
    %c0_91 = arith.constant 0 : index
    %c0_92 = arith.constant 0 : index
    %98 = vector.load %arg28[%c0_91, %c0_92] : memref<32x32xf32, #tpu.memory_space<vmem>>, vector<14x32xf32>
    tpu.vector_store %arg28[%c0_91, %c0_92], %97 {strides = array<i32>} : memref<32x32xf32, #tpu.memory_space<vmem>>, vector<14x32xf32>,
    %c0_93 = arith.constant 0 : index
    %c0_94 = arith.constant 0 : index
    %99 = vector.load %arg28[%c0_93, %c0_94] : memref<32x32xf32, #tpu.memory_space<vmem>>, vector<32x32xf32>
    %c9 = arith.constant 9 : index
    %c0_95 = arith.constant 0 : index
    %c0_96 = arith.constant 0 : index
    %100 = vector.load %arg6[%c9, %c0_95, %c0_96] : memref<10x32x32xf32, #tpu.memory_space<vmem>>, vector<1x32x32xf32>
    %101 = vector.shape_cast %100 : vector<1x32x32xf32> to vector<32x32xf32>
    %cst_97 = arith.constant dense<0.000000e+00> : vector<32x32xf32>
    %102 = tpu.matmul %11, %101, %cst_97 {dimension_numbers = #tpu.dot_dimension_numbers<[1], [0], [0], [1], [0, 0, 1, 1], [], []>} : vector<32x32xf32>, vector<32x32xf32>, vector<32x32xf32> -> vector<32x32xf32>
    %103 = arith.addf %99, %102 : vector<32x32xf32>
    %c0_98 = arith.constant 0 : index
    %c0_99 = arith.constant 0 : index
    %104 = vector.load %arg28[%c0_98, %c0_99] : memref<32x32xf32, #tpu.memory_space<vmem>>, vector<32x32xf32>
    tpu.vector_store %arg28[%c0_98, %c0_99], %103 {strides = array<i32>} : memref<32x32xf32, #tpu.memory_space<vmem>>, vector<32x32xf32>,
    %c0_100 = arith.constant 0 : index
    %c0_101 = arith.constant 0 : index
    %105 = vector.load %arg28[%c0_100, %c0_101] : memref<32x32xf32, #tpu.memory_space<vmem>>, vector<32x32xf32>
    %cst_102 = arith.constant dense<0.000000e+00> : vector<32xf32>
    %106 = vector.multi_reduction <add>, %105, %cst_102 [1] : vector<32x32xf32> to vector<32xf32>
    %107 = vector.shape_cast %106 : vector<32xf32> to vector<32x1xf32>
    %cst_103 = arith.constant 3.200000e+01 : f32
    %108 = vector.broadcast %cst_103 : f32 to vector<32x1xf32>
    %109 = arith.divf %107, %108 : vector<32x1xf32>
    %110 = vector.broadcast %109 : vector<32x1xf32> to vector<32x32xf32>
    %111 = arith.subf %105, %110 : vector<32x32xf32>
    %112 = arith.mulf %111, %111 : vector<32x32xf32>
    %cst_104 = arith.constant dense<0.000000e+00> : vector<32xf32>
    %113 = vector.multi_reduction <add>, %112, %cst_104 [1] : vector<32x32xf32> to vector<32xf32>
    %114 = vector.shape_cast %113 : vector<32xf32> to vector<32x1xf32>
    %cst_105 = arith.constant 3.200000e+01 : f32
    %115 = vector.broadcast %cst_105 : f32 to vector<32x1xf32>
    %116 = arith.divf %114, %115 : vector<32x1xf32>
    %cst_106 = arith.constant 9.99999974E-6 : f32
    %117 = vector.broadcast %cst_106 : f32 to vector<32x1xf32>
    %118 = arith.addf %116, %117 : vector<32x1xf32>
    %119 = math.rsqrt %118 : vector<32x1xf32>
    %120 = vector.broadcast %119 : vector<32x1xf32> to vector<32x32xf32>
    %121 = arith.mulf %111, %120 : vector<32x32xf32>
    %c0_107 = arith.constant 0 : index
    %c0_108 = arith.constant 0 : index
    %122 = vector.load %arg8[%c0_107, %c0_108] : memref<1x32xf32, #tpu.memory_space<vmem>>, vector<1x32xf32>
    %123 = vector.broadcast %122 : vector<1x32xf32> to vector<32x32xf32>
    %124 = arith.mulf %121, %123 : vector<32x32xf32>
    %c0_109 = arith.constant 0 : index
    %c0_110 = arith.constant 0 : index
    %125 = vector.load %arg9[%c0_109, %c0_110] : memref<1x32xf32, #tpu.memory_space<vmem>>, vector<1x32xf32>
    %126 = vector.broadcast %125 : vector<1x32xf32> to vector<32x32xf32>
    %127 = arith.addf %124, %126 : vector<32x32xf32>
    %128 = vector.shape_cast %127 : vector<32x32xf32> to vector<16x2x32xf32>
    %129 = tpu.transpose %128, [1, 0, 2] : vector<16x2x32xf32> -> vector<2x16x32xf32>
    %c0_111 = arith.constant 0 : index
    %c0_112 = arith.constant 0 : index
    %c0_113 = arith.constant 0 : index
    %130 = vector.load %arg26[%c0_111, %c0_112, %c0_113] : memref<2x16x32xf32, #tpu.memory_space<vmem>>, vector<2x16x32xf32>
    tpu.vector_store %arg26[%c0_111, %c0_112, %c0_113], %129 {strides = array<i32>} : memref<2x16x32xf32, #tpu.memory_space<vmem>>, vector<2x16x32xf32>,
    %131 = vector.shape_cast %32 : vector<16x2x32xf32> to vector<32x32xf32>
    %c0_114 = arith.constant 0 : index
    %c0_115 = arith.constant 0 : index
    %132 = vector.load %arg10[%c0_114, %c0_115] : memref<32x32xf32, #tpu.memory_space<vmem>>, vector<32x32xf32>
    %cst_116 = arith.constant dense<0.000000e+00> : vector<32x32xf32>
    %133 = tpu.matmul %131, %132, %cst_116 {dimension_numbers = #tpu.dot_dimension_numbers<[1], [0], [0], [1], [0, 0, 1, 1], [], []>} : vector<32x32xf32>, vector<32x32xf32>, vector<32x32xf32> -> vector<32x32xf32>
    %c0_117 = arith.constant 0 : index
    %c0_118 = arith.constant 0 : index
    %134 = vector.load %arg11[%c0_117, %c0_118] : memref<32x32xf32, #tpu.memory_space<vmem>>, vector<32x32xf32>
    %cst_119 = arith.constant dense<0.000000e+00> : vector<32x32xf32>
    %135 = tpu.matmul %127, %134, %cst_119 {dimension_numbers = #tpu.dot_dimension_numbers<[1], [0], [0], [1], [0, 0, 1, 1], [], []>} : vector<32x32xf32>, vector<32x32xf32>, vector<32x32xf32> -> vector<32x32xf32>
    %136 = arith.addf %133, %135 : vector<32x32xf32>
    %c0_120 = arith.constant 0 : index
    %c0_121 = arith.constant 0 : index
    %137 = vector.load %arg12[%c0_120, %c0_121] : memref<1x32xf32, #tpu.memory_space<vmem>>, vector<1x32xf32>
    %138 = vector.broadcast %137 : vector<1x32xf32> to vector<32x32xf32>
    %139 = arith.addf %136, %138 : vector<32x32xf32>
    %140 = arith.negf %139 : vector<32x32xf32>
    %141 = math.exp %140 : vector<32x32xf32>
    %cst_122 = arith.constant 1.000000e+00 : f32
    %142 = vector.broadcast %cst_122 : f32 to vector<32x32xf32>
    %143 = arith.addf %142, %141 : vector<32x32xf32>
    %144 = arith.divf %142, %143 : vector<32x32xf32>
    %145 = arith.mulf %139, %144 : vector<32x32xf32>
    %c0_123 = arith.constant 0 : index
    %c0_124 = arith.constant 0 : index
    %146 = vector.load %arg13[%c0_123, %c0_124] : memref<32x32xf32, #tpu.memory_space<vmem>>, vector<32x32xf32>
    %cst_125 = arith.constant dense<0.000000e+00> : vector<32x32xf32>
    %147 = tpu.matmul %145, %146, %cst_125 {dimension_numbers = #tpu.dot_dimension_numbers<[1], [0], [0], [1], [0, 0, 1, 1], [], []>} : vector<32x32xf32>, vector<32x32xf32>, vector<32x32xf32> -> vector<32x32xf32>
    %c0_126 = arith.constant 0 : index
    %c0_127 = arith.constant 0 : index
    %148 = vector.load %arg14[%c0_126, %c0_127] : memref<1x32xf32, #tpu.memory_space<vmem>>, vector<1x32xf32>
    %149 = vector.broadcast %148 : vector<1x32xf32> to vector<32x32xf32>
    %150 = arith.addf %147, %149 : vector<32x32xf32>
    %c0_128 = arith.constant 0 : index
    %c0_129 = arith.constant 0 : index
    %151 = vector.load %arg15[%c0_128, %c0_129] : memref<32x128xf32, #tpu.memory_space<vmem>>, vector<32x128xf32>
    %cst_130 = arith.constant dense<0.000000e+00> : vector<32x128xf32>
    %152 = tpu.matmul %150, %151, %cst_130 {dimension_numbers = #tpu.dot_dimension_numbers<[1], [0], [0], [1], [0, 0, 1, 1], [], []>} : vector<32x32xf32>, vector<32x128xf32>, vector<32x128xf32> -> vector<32x128xf32>
    %c0_131 = arith.constant 0 : index
    %c0_132 = arith.constant 0 : index
    %153 = vector.load %arg16[%c0_131, %c0_132] : memref<1x128xf32, #tpu.memory_space<vmem>>, vector<1x128xf32>
    %154 = vector.broadcast %153 : vector<1x128xf32> to vector<32x128xf32>
    %155 = arith.addf %152, %154 : vector<32x128xf32>
    %156 = arith.negf %155 : vector<32x128xf32>
    %157 = math.exp %156 : vector<32x128xf32>
    %cst_133 = arith.constant 1.000000e+00 : f32
    %158 = vector.broadcast %cst_133 : f32 to vector<32x128xf32>
    %159 = arith.addf %158, %157 : vector<32x128xf32>
    %160 = arith.divf %158, %159 : vector<32x128xf32>
    %161 = arith.mulf %155, %160 : vector<32x128xf32>
    %162 = vector.extract_strided_slice %161 {offsets = [0, 0], sizes = [32, 32], strides = [1, 1]} : vector<32x128xf32> to vector<32x32xf32>
    %c0_134 = arith.constant 0 : index
    %c0_135 = arith.constant 0 : index
    %c0_136 = arith.constant 0 : index
    %163 = vector.load %arg17[%c0_134, %c0_135, %c0_136] : memref<4x32x64xf32, #tpu.memory_space<vmem>>, vector<1x32x64xf32>
    %164 = vector.shape_cast %163 : vector<1x32x64xf32> to vector<32x64xf32>
    %cst_137 = arith.constant dense<0.000000e+00> : vector<32x64xf32>
    %165 = tpu.matmul %162, %164, %cst_137 {dimension_numbers = #tpu.dot_dimension_numbers<[1], [0], [0], [1], [0, 0, 1, 1], [], []>} : vector<32x32xf32>, vector<32x64xf32>, vector<32x64xf32> -> vector<32x64xf32>
    %c0_138 = arith.constant 0 : index
    %c0_139 = arith.constant 0 : index
    %c0_140 = arith.constant 0 : index
    %166 = vector.load %arg18[%c0_138, %c0_139, %c0_140] : memref<4x1x64xf32, #tpu.memory_space<vmem>>, vector<1x1x64xf32>
    %167 = vector.shape_cast %166 : vector<1x1x64xf32> to vector<1x64xf32>
    %168 = vector.broadcast %167 : vector<1x64xf32> to vector<32x64xf32>
    %169 = arith.addf %165, %168 : vector<32x64xf32>
    %170 = vector.shape_cast %169 : vector<32x64xf32> to vector<16x2x64xf32>
    %171 = tpu.transpose %170, [1, 0, 2] : vector<16x2x64xf32> -> vector<2x16x64xf32>
    %172 = vector.extract_strided_slice %161 {offsets = [0, 32], sizes = [32, 32], strides = [1, 1]} : vector<32x128xf32> to vector<32x32xf32>
    %c1_141 = arith.constant 1 : index
    %c0_142 = arith.constant 0 : index
    %c0_143 = arith.constant 0 : index
    %173 = vector.load %arg17[%c1_141, %c0_142, %c0_143] : memref<4x32x64xf32, #tpu.memory_space<vmem>>, vector<1x32x64xf32>
    %174 = vector.shape_cast %173 : vector<1x32x64xf32> to vector<32x64xf32>
    %cst_144 = arith.constant dense<0.000000e+00> : vector<32x64xf32>
    %175 = tpu.matmul %172, %174, %cst_144 {dimension_numbers = #tpu.dot_dimension_numbers<[1], [0], [0], [1], [0, 0, 1, 1], [], []>} : vector<32x32xf32>, vector<32x64xf32>, vector<32x64xf32> -> vector<32x64xf32>
    %c1_145 = arith.constant 1 : index
    %c0_146 = arith.constant 0 : index
    %c0_147 = arith.constant 0 : index
    %176 = vector.load %arg18[%c1_145, %c0_146, %c0_147] : memref<4x1x64xf32, #tpu.memory_space<vmem>>, vector<1x1x64xf32>
    %177 = vector.shape_cast %176 : vector<1x1x64xf32> to vector<1x64xf32>
    %178 = vector.broadcast %177 : vector<1x64xf32> to vector<32x64xf32>
    %179 = arith.addf %175, %178 : vector<32x64xf32>
    %180 = vector.shape_cast %179 : vector<32x64xf32> to vector<16x2x64xf32>
    %181 = tpu.transpose %180, [1, 0, 2] : vector<16x2x64xf32> -> vector<2x16x64xf32>
    %182 = vector.extract_strided_slice %161 {offsets = [0, 64], sizes = [32, 32], strides = [1, 1]} : vector<32x128xf32> to vector<32x32xf32>
    %c2_148 = arith.constant 2 : index
    %c0_149 = arith.constant 0 : index
    %c0_150 = arith.constant 0 : index
    %183 = vector.load %arg17[%c2_148, %c0_149, %c0_150] : memref<4x32x64xf32, #tpu.memory_space<vmem>>, vector<1x32x64xf32>
    %184 = vector.shape_cast %183 : vector<1x32x64xf32> to vector<32x64xf32>
    %cst_151 = arith.constant dense<0.000000e+00> : vector<32x64xf32>
    %185 = tpu.matmul %182, %184, %cst_151 {dimension_numbers = #tpu.dot_dimension_numbers<[1], [0], [0], [1], [0, 0, 1, 1], [], []>} : vector<32x32xf32>, vector<32x64xf32>, vector<32x64xf32> -> vector<32x64xf32>
    %c2_152 = arith.constant 2 : index
    %c0_153 = arith.constant 0 : index
    %c0_154 = arith.constant 0 : index
    %186 = vector.load %arg18[%c2_152, %c0_153, %c0_154] : memref<4x1x64xf32, #tpu.memory_space<vmem>>, vector<1x1x64xf32>
    %187 = vector.shape_cast %186 : vector<1x1x64xf32> to vector<1x64xf32>
    %188 = vector.broadcast %187 : vector<1x64xf32> to vector<32x64xf32>
    %189 = arith.addf %185, %188 : vector<32x64xf32>
    %190 = vector.shape_cast %189 : vector<32x64xf32> to vector<16x2x64xf32>
    %191 = tpu.transpose %190, [1, 0, 2] : vector<16x2x64xf32> -> vector<2x16x64xf32>
    %192 = vector.extract_strided_slice %161 {offsets = [0, 96], sizes = [32, 32], strides = [1, 1]} : vector<32x128xf32> to vector<32x32xf32>
    %c3_155 = arith.constant 3 : index
    %c0_156 = arith.constant 0 : index
    %c0_157 = arith.constant 0 : index
    %193 = vector.load %arg17[%c3_155, %c0_156, %c0_157] : memref<4x32x64xf32, #tpu.memory_space<vmem>>, vector<1x32x64xf32>
    %194 = vector.shape_cast %193 : vector<1x32x64xf32> to vector<32x64xf32>
    %cst_158 = arith.constant dense<0.000000e+00> : vector<32x64xf32>
    %195 = tpu.matmul %192, %194, %cst_158 {dimension_numbers = #tpu.dot_dimension_numbers<[1], [0], [0], [1], [0, 0, 1, 1], [], []>} : vector<32x32xf32>, vector<32x64xf32>, vector<32x64xf32> -> vector<32x64xf32>
    %c3_159 = arith.constant 3 : index
    %c0_160 = arith.constant 0 : index
    %c0_161 = arith.constant 0 : index
    %196 = vector.load %arg18[%c3_159, %c0_160, %c0_161] : memref<4x1x64xf32, #tpu.memory_space<vmem>>, vector<1x1x64xf32>
    %197 = vector.shape_cast %196 : vector<1x1x64xf32> to vector<1x64xf32>
    %198 = vector.broadcast %197 : vector<1x64xf32> to vector<32x64xf32>
    %199 = arith.addf %195, %198 : vector<32x64xf32>
    %200 = vector.shape_cast %199 : vector<32x64xf32> to vector<16x2x64xf32>
    %201 = tpu.transpose %200, [1, 0, 2] : vector<16x2x64xf32> -> vector<2x16x64xf32>
    %202 = vector.shape_cast %171 : vector<2x16x64xf32> to vector<2x1x16x64xf32>
    %203 = vector.shape_cast %181 : vector<2x16x64xf32> to vector<2x1x16x64xf32>
    %204 = vector.shape_cast %191 : vector<2x16x64xf32> to vector<2x1x16x64xf32>
    %205 = vector.shape_cast %201 : vector<2x16x64xf32> to vector<2x1x16x64xf32>
    %206 = tpu.concatenate %202, %203, %204, %205 in 1 : vector<2x1x16x64xf32>, vector<2x1x16x64xf32>, vector<2x1x16x64xf32>, vector<2x1x16x64xf32> -> vector<2x4x16x64xf32>
    %c0_162 = arith.constant 0 : index
    %c0_163 = arith.constant 0 : index
    %c0_164 = arith.constant 0 : index
    %c0_165 = arith.constant 0 : index
    %207 = vector.load %arg23[%c0_162, %c0_163, %c0_164, %c0_165] : memref<2x4x16x64xf32, #tpu.memory_space<vmem>>, vector<2x4x16x64xf32>
    tpu.vector_store %arg23[%c0_162, %c0_163, %c0_164, %c0_165], %206 {strides = array<i32>} : memref<2x4x16x64xf32, #tpu.memory_space<vmem>>, vector<2x4x16x64xf32>,
    %c0_166 = arith.constant 0 : index
    %c0_167 = arith.constant 0 : index
    %208 = vector.load %arg19[%c0_166, %c0_167] : memref<32x16xf32, #tpu.memory_space<vmem>>, vector<32x16xf32>
    %cst_168 = arith.constant dense<0.000000e+00> : vector<32x16xf32>
    %209 = tpu.matmul %150, %208, %cst_168 {dimension_numbers = #tpu.dot_dimension_numbers<[1], [0], [0], [1], [0, 0, 1, 1], [], []>} : vector<32x32xf32>, vector<32x16xf32>, vector<32x16xf32> -> vector<32x16xf32>
    %c0_169 = arith.constant 0 : index
    %c0_170 = arith.constant 0 : index
    %210 = vector.load %arg20[%c0_169, %c0_170] : memref<1x16xf32, #tpu.memory_space<vmem>>, vector<1x16xf32>
    %211 = vector.broadcast %210 : vector<1x16xf32> to vector<32x16xf32>
    %212 = arith.addf %209, %211 : vector<32x16xf32>
    %213 = arith.negf %212 : vector<32x16xf32>
    %214 = math.exp %213 : vector<32x16xf32>
    %cst_171 = arith.constant 1.000000e+00 : f32
    %215 = vector.broadcast %cst_171 : f32 to vector<32x16xf32>
    %216 = arith.addf %215, %214 : vector<32x16xf32>
    %217 = arith.divf %215, %216 : vector<32x16xf32>
    %218 = arith.mulf %212, %217 : vector<32x16xf32>
    %c0_172 = arith.constant 0 : index
    %c0_173 = arith.constant 0 : index
    %219 = vector.load %arg21[%c0_172, %c0_173] : memref<16x1xf32, #tpu.memory_space<vmem>>, vector<16x1xf32>
    %cst_174 = arith.constant dense<0.000000e+00> : vector<32x1xf32>
    %220 = tpu.matmul %218, %219, %cst_174 {dimension_numbers = #tpu.dot_dimension_numbers<[1], [0], [0], [1], [0, 0, 1, 1], [], []>} : vector<32x16xf32>, vector<16x1xf32>, vector<32x1xf32> -> vector<32x1xf32>
    %c0_175 = arith.constant 0 : index
    %c0_176 = arith.constant 0 : index
    %221 = vector.load %arg22[%c0_175, %c0_176] : memref<1x1xf32, #tpu.memory_space<vmem>>, vector<1x1xf32>
    %222 = vector.broadcast %221 : vector<1x1xf32> to vector<32x1xf32>
    %223 = arith.addf %220, %222 : vector<32x1xf32>
    %224 = arith.negf %223 : vector<32x1xf32>
    %225 = math.exp %224 : vector<32x1xf32>
    %cst_177 = arith.constant 1.000000e+00 : f32
    %226 = vector.broadcast %cst_177 : f32 to vector<32x1xf32>
    %227 = arith.addf %226, %225 : vector<32x1xf32>
    %228 = arith.divf %226, %227 : vector<32x1xf32>
    %229 = vector.shape_cast %228 : vector<32x1xf32> to vector<16x2xf32>
    %230 = tpu.transpose %229, [1, 0] : vector<16x2xf32> -> vector<2x16xf32>
    %c0_178 = arith.constant 0 : index
    %c0_179 = arith.constant 0 : index
    %231 = vector.load %arg24[%c0_178, %c0_179] : memref<2x16xf32, #tpu.memory_space<vmem>>, vector<2x16xf32>
    tpu.vector_store %arg24[%c0_178, %c0_179], %230 {strides = array<i32>} : memref<2x16xf32, #tpu.memory_space<vmem>>, vector<2x16xf32>,
    %232 = vector.extract_strided_slice %32 {offsets = [1, 0, 0], sizes = [15, 2, 32], strides = [1, 1, 1]} : vector<16x2x32xf32> to vector<15x2x32xf32>
    %233 = vector.extract_strided_slice %32 {offsets = [0, 0, 0], sizes = [15, 2, 32], strides = [1, 1, 1]} : vector<16x2x32xf32> to vector<15x2x32xf32>
    %234 = arith.subf %232, %233 : vector<15x2x32xf32>
    %235 = arith.mulf %234, %234 : vector<15x2x32xf32>
    %236 = vector.shape_cast %235 : vector<15x2x32xf32> to vector<1x15x2x32xf32>
    %cst_180 = arith.constant dense<0.000000e+00> : vector<1xf32>
    %237 = vector.multi_reduction <add>, %236, %cst_180 [1, 2, 3] : vector<1x15x2x32xf32> to vector<1xf32>
    %238 = vector.shape_cast %237 : vector<1xf32> to vector<1x1x1x1xf32>
    %239 = vector.extract %238[0, 0, 0, 0] : f32 from vector<1x1x1x1xf32>
    %240 = arith.mulf %127, %127 : vector<32x32xf32>
    %241 = vector.shape_cast %240 : vector<32x32xf32> to vector<1x32x32xf32>
    %cst_181 = arith.constant dense<0.000000e+00> : vector<1xf32>
    %242 = vector.multi_reduction <add>, %241, %cst_181 [1, 2] : vector<1x32x32xf32> to vector<1xf32>
    %243 = vector.shape_cast %242 : vector<1xf32> to vector<1x1x1xf32>
    %244 = vector.extract %243[0, 0, 0] : f32 from vector<1x1x1xf32>
    %cst_182 = arith.constant dense<0.000000e+00> : vector<2x32xf32>
    %245 = vector.multi_reduction <add>, %128, %cst_182 [0] : vector<16x2x32xf32> to vector<2x32xf32>
    %246 = vector.shape_cast %245 : vector<2x32xf32> to vector<1x2x32xf32>
    %cst_183 = arith.constant 1.600000e+01 : f32
    %247 = vector.broadcast %cst_183 : f32 to vector<1x2x32xf32>
    %248 = arith.divf %246, %247 : vector<1x2x32xf32>
    %249 = vector.broadcast %248 : vector<1x2x32xf32> to vector<16x2x32xf32>
    %250 = arith.subf %128, %249 : vector<16x2x32xf32>
    %251 = arith.mulf %250, %250 : vector<16x2x32xf32>
    %252 = vector.shape_cast %251 : vector<16x2x32xf32> to vector<1x16x2x32xf32>
    %cst_184 = arith.constant dense<0.000000e+00> : vector<1xf32>
    %253 = vector.multi_reduction <add>, %252, %cst_184 [1, 2, 3] : vector<1x16x2x32xf32> to vector<1xf32>
    %254 = vector.shape_cast %253 : vector<1xf32> to vector<1x1x1x1xf32>
    %255 = vector.extract %254[0, 0, 0, 0] : f32 from vector<1x1x1x1xf32>
    %cst_185 = arith.constant 1.500000e+01 : f32
    %256 = arith.divf %255, %cst_185 : f32
    %257 = tpu.iota {dimensions = array<i32: 1>} : vector<8x128xi32>
    %258 = tpu.iota {dimensions = array<i32: 0>} : vector<8x128xi32>
    %c0_i32 = arith.constant 0 : i32
    %259 = vector.broadcast %c0_i32 : i32 to vector<8x128xi32>
    %260 = arith.cmpi eq, %258, %259 : vector<8x128xi32>
    %c0_i32_186 = arith.constant 0 : i32
    %261 = vector.broadcast %c0_i32_186 : i32 to vector<8x128xi32>
    %262 = arith.cmpi eq, %257, %261 : vector<8x128xi32>
    %263 = arith.andi %260, %262 : vector<8x128xi1>
    %c1_i32 = arith.constant 1 : i32
    %264 = vector.broadcast %c1_i32 : i32 to vector<8x128xi32>
    %265 = arith.cmpi eq, %257, %264 : vector<8x128xi32>
    %266 = arith.andi %260, %265 : vector<8x128xi1>
    %c2_i32 = arith.constant 2 : i32
    %267 = vector.broadcast %c2_i32 : i32 to vector<8x128xi32>
    %268 = arith.cmpi eq, %257, %267 : vector<8x128xi32>
    %269 = arith.andi %260, %268 : vector<8x128xi1>
    %cst_187 = arith.constant 0.000000e+00 : f32
    %270 = vector.broadcast %256 : f32 to vector<8x128xf32>
    %271 = vector.broadcast %cst_187 : f32 to vector<8x128xf32>
    %272 = arith.select %269, %270, %271 : vector<8x128xi1>, vector<8x128xf32>
    %273 = vector.broadcast %244 : f32 to vector<8x128xf32>
    %274 = arith.select %266, %273, %272 : vector<8x128xi1>, vector<8x128xf32>
    %275 = vector.broadcast %239 : f32 to vector<8x128xf32>
    %276 = arith.select %263, %275, %274 : vector<8x128xi1>, vector<8x128xf32>
    %c0_188 = arith.constant 0 : index
    %c0_189 = arith.constant 0 : index
    %c0_190 = arith.constant 0 : index
    %277 = vector.load %arg27[%c0_188, %c0_189, %c0_190] : memref<1x8x128xf32, #tpu.memory_space<vmem>>, vector<1x8x128xf32>
    %278 = vector.shape_cast %277 : vector<1x8x128xf32> to vector<8x128xf32>
    %279 = vector.shape_cast %276 : vector<8x128xf32> to vector<1x8x128xf32>
    tpu.vector_store %arg27[%c0_188, %c0_189, %c0_190], %279 {strides = array<i32>} : memref<1x8x128xf32, #tpu.memory_space<vmem>>, vector<1x8x128xf32>,
    return
  }
  func.func @transform_0(%arg0: i32) -> (i32, i32, i32) {
    %c0_i32 = arith.constant 0 : i32
    %c0_i32_0 = arith.constant 0 : i32
    %c0_i32_1 = arith.constant 0 : i32
    return %arg0, %c0_i32, %c0_i32_0 : i32, i32, i32
  }
  func.func @transform_1(%arg0: i32) -> (i32, i32) {
    %c0_i32 = arith.constant 0 : i32
    %c0_i32_0 = arith.constant 0 : i32
    return %arg0, %c0_i32 : i32, i32
  }
  func.func @transform_2(%arg0: i32) -> (i32, i32) {
    %c0_i32 = arith.constant 0 : i32
    %c0_i32_0 = arith.constant 0 : i32
    %c0_i32_1 = arith.constant 0 : i32
    return %c0_i32, %c0_i32_0 : i32, i32
  }
  func.func @transform_3(%arg0: i32) -> (i32, i32) {
    %c0_i32 = arith.constant 0 : i32
    %c0_i32_0 = arith.constant 0 : i32
    %c0_i32_1 = arith.constant 0 : i32
    return %c0_i32, %c0_i32_0 : i32, i32
  }
  func.func @transform_4(%arg0: i32) -> (i32, i32, i32) {
    %c0_i32 = arith.constant 0 : i32
    %c0_i32_0 = arith.constant 0 : i32
    %c0_i32_1 = arith.constant 0 : i32
    %c0_i32_2 = arith.constant 0 : i32
    return %c0_i32, %c0_i32_0, %c0_i32_1 : i32, i32, i32
  }
  func.func @transform_5(%arg0: i32) -> (i32, i32, i32) {
    %c0_i32 = arith.constant 0 : i32
    %c0_i32_0 = arith.constant 0 : i32
    %c0_i32_1 = arith.constant 0 : i32
    %c0_i32_2 = arith.constant 0 : i32
    return %c0_i32, %c0_i32_0, %c0_i32_1 : i32, i32, i32
  }
  func.func @transform_6(%arg0: i32) -> (i32, i32) {
    %c0_i32 = arith.constant 0 : i32
    %c0_i32_0 = arith.constant 0 : i32
    %c0_i32_1 = arith.constant 0 : i32
    return %c0_i32, %c0_i32_0 : i32, i32
  }
  func.func @transform_7(%arg0: i32) -> (i32, i32) {
    %c0_i32 = arith.constant 0 : i32
    %c0_i32_0 = arith.constant 0 : i32
    %c0_i32_1 = arith.constant 0 : i32
    return %c0_i32, %c0_i32_0 : i32, i32
  }
  func.func @transform_8(%arg0: i32) -> (i32, i32) {
    %c0_i32 = arith.constant 0 : i32
    %c0_i32_0 = arith.constant 0 : i32
    %c0_i32_1 = arith.constant 0 : i32
    return %c0_i32, %c0_i32_0 : i32, i32
  }
  func.func @transform_9(%arg0: i32) -> (i32, i32) {
    %c0_i32 = arith.constant 0 : i32
    %c0_i32_0 = arith.constant 0 : i32
    %c0_i32_1 = arith.constant 0 : i32
    return %c0_i32, %c0_i32_0 : i32, i32
  }
  func.func @transform_10(%arg0: i32) -> (i32, i32) {
    %c0_i32 = arith.constant 0 : i32
    %c0_i32_0 = arith.constant 0 : i32
    %c0_i32_1 = arith.constant 0 : i32
    return %c0_i32, %c0_i32_0 : i32, i32
  }
  func.func @transform_11(%arg0: i32) -> (i32, i32) {
    %c0_i32 = arith.constant 0 : i32
    %c0_i32_0 = arith.constant 0 : i32
    %c0_i32_1 = arith.constant 0 : i32
    return %c0_i32, %c0_i32_0 : i32, i32
  }
  func.func @transform_12(%arg0: i32) -> (i32, i32) {
    %c0_i32 = arith.constant 0 : i32
    %c0_i32_0 = arith.constant 0 : i32
    %c0_i32_1 = arith.constant 0 : i32
    return %c0_i32, %c0_i32_0 : i32, i32
  }
  func.func @transform_13(%arg0: i32) -> (i32, i32) {
    %c0_i32 = arith.constant 0 : i32
    %c0_i32_0 = arith.constant 0 : i32
    %c0_i32_1 = arith.constant 0 : i32
    return %c0_i32, %c0_i32_0 : i32, i32
  }
  func.func @transform_14(%arg0: i32) -> (i32, i32) {
    %c0_i32 = arith.constant 0 : i32
    %c0_i32_0 = arith.constant 0 : i32
    %c0_i32_1 = arith.constant 0 : i32
    return %c0_i32, %c0_i32_0 : i32, i32
  }
  func.func @transform_15(%arg0: i32) -> (i32, i32) {
    %c0_i32 = arith.constant 0 : i32
    %c0_i32_0 = arith.constant 0 : i32
    %c0_i32_1 = arith.constant 0 : i32
    return %c0_i32, %c0_i32_0 : i32, i32
  }
  func.func @transform_16(%arg0: i32) -> (i32, i32, i32) {
    %c0_i32 = arith.constant 0 : i32
    %c0_i32_0 = arith.constant 0 : i32
    %c0_i32_1 = arith.constant 0 : i32
    %c0_i32_2 = arith.constant 0 : i32
    return %c0_i32, %c0_i32_0, %c0_i32_1 : i32, i32, i32
  }
  func.func @transform_17(%arg0: i32) -> (i32, i32, i32) {
    %c0_i32 = arith.constant 0 : i32
    %c0_i32_0 = arith.constant 0 : i32
    %c0_i32_1 = arith.constant 0 : i32
    %c0_i32_2 = arith.constant 0 : i32
    return %c0_i32, %c0_i32_0, %c0_i32_1 : i32, i32, i32
  }
  func.func @transform_18(%arg0: i32) -> (i32, i32) {
    %c0_i32 = arith.constant 0 : i32
    %c0_i32_0 = arith.constant 0 : i32
    %c0_i32_1 = arith.constant 0 : i32
    return %c0_i32, %c0_i32_0 : i32, i32
  }
  func.func @transform_19(%arg0: i32) -> (i32, i32) {
    %c0_i32 = arith.constant 0 : i32
    %c0_i32_0 = arith.constant 0 : i32
    %c0_i32_1 = arith.constant 0 : i32
    return %c0_i32, %c0_i32_0 : i32, i32
  }
  func.func @transform_20(%arg0: i32) -> (i32, i32) {
    %c0_i32 = arith.constant 0 : i32
    %c0_i32_0 = arith.constant 0 : i32
    %c0_i32_1 = arith.constant 0 : i32
    return %c0_i32, %c0_i32_0 : i32, i32
  }
  func.func @transform_21(%arg0: i32) -> (i32, i32) {
    %c0_i32 = arith.constant 0 : i32
    %c0_i32_0 = arith.constant 0 : i32
    %c0_i32_1 = arith.constant 0 : i32
    return %c0_i32, %c0_i32_0 : i32, i32
  }
  func.func @transform_22(%arg0: i32) -> (i32, i32, i32, i32) {
    %c0_i32 = arith.constant 0 : i32
    %c0_i32_0 = arith.constant 0 : i32
    %c0_i32_1 = arith.constant 0 : i32
    %c0_i32_2 = arith.constant 0 : i32
    return %arg0, %c0_i32, %c0_i32_0, %c0_i32_1 : i32, i32, i32, i32
  }
  func.func @transform_23(%arg0: i32) -> (i32, i32) {
    %c0_i32 = arith.constant 0 : i32
    %c0_i32_0 = arith.constant 0 : i32
    return %arg0, %c0_i32 : i32, i32
  }
  func.func @transform_24(%arg0: i32) -> (i32, i32, i32) {
    %c0_i32 = arith.constant 0 : i32
    %c0_i32_0 = arith.constant 0 : i32
    %c0_i32_1 = arith.constant 0 : i32
    return %arg0, %c0_i32, %c0_i32_0 : i32, i32, i32
  }
  func.func @transform_25(%arg0: i32) -> (i32, i32, i32) {
    %c0_i32 = arith.constant 0 : i32
    %c0_i32_0 = arith.constant 0 : i32
    %c0_i32_1 = arith.constant 0 : i32
    return %arg0, %c0_i32, %c0_i32_0 : i32, i32, i32
  }
  func.func @transform_26(%arg0: i32) -> (i32, i32, i32) {
    %c0_i32 = arith.constant 0 : i32
    %c0_i32_0 = arith.constant 0 : i32
    %c0_i32_1 = arith.constant 0 : i32
    return %arg0, %c0_i32, %c0_i32_0 : i32, i32, i32
  }
}

</mosaic_0001>

<llo_original>
// kernel: tpu_custom_call.1
$region0: #{tpu_custom_call.1}
  #allocation0 [shape = 'u32[]', space=smem, size = 0x4, offset = 0x4, fixed_abs, tag = 'smem constant byte address 0x4 - core index']
  #allocation1 [shape = 'u32[144,128]{1,0:T(1,128)}', space=vmem, size = 0x12000, scoped, tag = 'internal scratch']
  #allocation2 [shape = 'f32[32,32]{1,0:T(8,128)}', space=vmem, size = 0x4000, scoped, tag = 'scratch operand']
  #allocation3 [shape = 'f32[1,1]{1,0:T(1,128)S(1)}', space=vmem, size = 0x200, scoped, tag = 'scoped memory for tpu_custom_call.1']
  %s0 = inlined_call_operand.vmem [shape: f32[2,16,32], index: 0, kind: input, shape index: {}]
  %s1 = inlined_call_operand.hbm [shape: f32[2,48], index: 1, kind: input, shape index: {}]
  %s2 = inlined_call_operand.vmem [shape: f32[48,32], index: 2, kind: input, shape index: {}]
  %s3 = inlined_call_operand.vmem [shape: f32[1,32], index: 3, kind: input, shape index: {}]
  %s4 = inlined_call_operand.vmem [shape: f32[3,16,16], index: 4, kind: input, shape index: {}]
  %s5 = inlined_call_operand.hbm [shape: f32[10,32,32], index: 5, kind: input, shape index: {}]
  %s6 = inlined_call_operand.hbm [shape: f32[1,32], index: 6, kind: input, shape index: {}]
  %s7 = inlined_call_operand.hbm [shape: f32[1,32], index: 7, kind: input, shape index: {}]
  %s8 = inlined_call_operand.hbm [shape: f32[1,32], index: 8, kind: input, shape index: {}]
  %s9 = inlined_call_operand.hbm [shape: f32[32,32], index: 9, kind: input, shape index: {}]
  %s10 = inlined_call_operand.hbm [shape: f32[32,32], index: 10, kind: input, shape index: {}]
  %s11 = inlined_call_operand.hbm [shape: f32[1,32], index: 11, kind: input, shape index: {}]
  %s12 = inlined_call_operand.hbm [shape: f32[32,32], index: 12, kind: input, shape index: {}]
  %s13 = inlined_call_operand.hbm [shape: f32[1,32], index: 13, kind: input, shape index: {}]
  %s14 = inlined_call_operand.hbm [shape: f32[32,128], index: 14, kind: input, shape index: {}]
  %s15 = inlined_call_operand.hbm [shape: f32[1,128], index: 15, kind: input, shape index: {}]
  %s16 = inlined_call_operand.vmem [shape: f32[4,32,64], index: 16, kind: input, shape index: {}]
  %s17 = inlined_call_operand.vmem [shape: f32[4,1,64], index: 17, kind: input, shape index: {}]
  %s18 = inlined_call_operand.vmem [shape: f32[32,16], index: 18, kind: input, shape index: {}]
  %s19 = inlined_call_operand.vmem [shape: f32[1,16], index: 19, kind: input, shape index: {}]
  %s20 = inlined_call_operand.vmem [shape: f32[16,1], index: 20, kind: input, shape index: {}]
  %s21 = inlined_call_operand.<no memory space> [shape: f32[1,1], index: 21, kind: input, shape index: {}]
  %s22 = inlined_call_operand.hbm [shape: f32[2,4,16,64], index: 22, kind: output, shape index: {0}]
  %s23 = inlined_call_operand.hbm [shape: f32[2,16], index: 23, kind: output, shape index: {1}]
  %s24 = inlined_call_operand.hbm [shape: f32[2,16,32], index: 24, kind: output, shape index: {2}]
  %s25 = inlined_call_operand.hbm [shape: f32[2,16,32], index: 25, kind: output, shape index: {3}]
  %s26 = inlined_call_operand.hbm [shape: f32[1,8,128], index: 26, kind: output, shape index: {4}]
  %27 = xla_tuple %s22, %s23, %s24, %s25, %s26
  %s28 = sld [smem:[#allocation0]]
  $region178: #{tpu_custom_call.1} parent=0
    _
  %s30 = ssub.s32 1, %s28
  %s31 = scalar_select 0, %s30, %s28
  %v32 = vstv %s21
  %33 = vst [vmem:[#allocation3] sm:$0x1] %v32
  $region1: #{tpu_custom_call.1} parent=0
    #allocation4 [shape = 'u8[1024]{0}', space=vmem, size = 0x400, scoped, tag = 'input window, operand 1, single buffered']
    #allocation5 [shape = 's32[1]{0}', space=sflag, size = 0x4, scoped, tag = 'scoped memory for tpu_custom_call.1']
    #allocation6 [shape = 's32[1]{0}', space=sflag, size = 0x4, scoped, tag = 'scoped memory for tpu_custom_call.1']
    #allocation7 [shape = 'u8[163840]{0}', space=vmem, size = 0x28000, scoped, tag = 'input window, operand 5, single buffered']
    #allocation8 [shape = 's32[1]{0}', space=sflag, size = 0x4, scoped, tag = 'scoped memory for tpu_custom_call.1']
    #allocation9 [shape = 'u8[512]{0}', space=vmem, size = 0x400, scoped, tag = 'input window, operand 6, single buffered']
    #allocation10 [shape = 'u8[512]{0}', space=vmem, size = 0x400, scoped, tag = 'input window, operand 7, single buffered']
    #allocation11 [shape = 's32[1]{0}', space=sflag, size = 0x4, scoped, tag = 'scoped memory for tpu_custom_call.1']
    #allocation12 [shape = 'u8[512]{0}', space=vmem, size = 0x400, scoped, tag = 'input window, operand 8, single buffered']
    #allocation13 [shape = 'u8[16384]{0}', space=vmem, size = 0x4000, scoped, tag = 'input window, operand 9, single buffered']
    #allocation14 [shape = 's32[1]{0}', space=sflag, size = 0x4, scoped, tag = 'scoped memory for tpu_custom_call.1']
    #allocation15 [shape = 'u8[16384]{0}', space=vmem, size = 0x4000, scoped, tag = 'input window, operand 10, single buffered']
    #allocation16 [shape = 'u8[512]{0}', space=vmem, size = 0x400, scoped, tag = 'input window, operand 11, single buffered']
    #allocation17 [shape = 's32[1]{0}', space=sflag, size = 0x4, scoped, tag = 'scoped memory for tpu_custom_call.1']
    #allocation18 [shape = 'u8[16384]{0}', space=vmem, size = 0x4000, scoped, tag = 'input window, operand 12, single buffered']
    #allocation19 [shape = 'u8[512]{0}', space=vmem, size = 0x400, scoped, tag = 'input window, operand 13, single buffered']
    #allocation20 [shape = 's32[1]{0}', space=sflag, size = 0x4, scoped, tag = 'scoped memory for tpu_custom_call.1']
    #allocation21 [shape = 'u8[16384]{0}', space=vmem, size = 0x4000, scoped, tag = 'input window, operand 14, single buffered']
    #allocation22 [shape = 'u8[512]{0}', space=vmem, size = 0x400, scoped, tag = 'input window, operand 15, single buffered']
    #allocation23 [shape = 's32[1]{0}', space=sflag, size = 0x4, scoped, tag = 'scoped memory for tpu_custom_call.1']
    #allocation24 [shape = 'u8[65536]{0}', space=vmem, size = 0x10000, scoped, tag = 'output window, operand 0, single buffered']
    #allocation25 [shape = 'u8[1024]{0}', space=vmem, size = 0x400, scoped, tag = 'output window, operand 1, single buffered']
    #allocation26 [shape = 's32[1]{0}', space=sflag, size = 0x4, scoped, tag = 'scoped memory for tpu_custom_call.1']
    #allocation27 [shape = 'u8[16384]{0}', space=vmem, size = 0x4000, scoped, tag = 'output window, operand 2, single buffered']
    #allocation28 [shape = 'u8[16384]{0}', space=vmem, size = 0x4000, scoped, tag = 'output window, operand 3, single buffered']
    #allocation29 [shape = 's32[1]{0}', space=sflag, size = 0x4, scoped, tag = 'scoped memory for tpu_custom_call.1']
    #allocation30 [shape = 'u8[4096]{0}', space=vmem, size = 0x1000, scoped, tag = 'output window, operand 4, single buffered']
    %34 = vsyncpa [#allocation5], 0
    %35 = vsyncpa [#allocation8], 0
    %36 = vsyncpa [#allocation11], 0
    %37 = vsyncpa [#allocation14], 0
    %38 = vsyncpa [#allocation17], 0
    %39 = vsyncpa [#allocation20], 0
    %40 = vsyncpa [#allocation23], 0
    %41 = vsyncpa [#allocation6], 0
    %42 = vsyncpa [#allocation26], 0
    %43 = vsyncpa [#allocation29], 0
    // Predicated region
    $region2: #{tpu_custom_call.1} parent=1 // pred_check
      _
    $region3: #{tpu_custom_call.1} parent=1 // pred_check_branch
      %45 = sbr.rel (0) target = $region5
    $region4: #{tpu_custom_call.1} parent=1 // pred_region
      _
    $region5: #{tpu_custom_call.1} parent=1 // pred_fallthru
      _
    // Predicated region
    $region6: #{tpu_custom_call.1} parent=1 // pred_check
      _
    $region7: #{tpu_custom_call.1} parent=1 // pred_check_branch
      %47 = sbr.rel (0) target = $region9
    $region8: #{tpu_custom_call.1} parent=1 // pred_region
      %s49 = ssub.s32 32, 32
      %50 = vsyncadd [#allocation5], %s49
      %s52 = sshll.u32 [#allocation4], 4
      %s53 = int_to_ptr.vmem [resolvable:$true] %s52
      %55 = dma.hbm_to_vmem [thread:$0]  %s1, 32, %s53, [#allocation5]
    $region9: #{tpu_custom_call.1} parent=1 // pred_fallthru
      _
    // Predicated region
    $region10: #{tpu_custom_call.1} parent=1 // pred_check
      _
    $region11: #{tpu_custom_call.1} parent=1 // pred_check_branch
      %57 = sbr.rel (0) target = $region13
    $region12: #{tpu_custom_call.1} parent=1 // pred_region
      _
    $region13: #{tpu_custom_call.1} parent=1 // pred_fallthru
      _
    // Predicated region
    $region14: #{tpu_custom_call.1} parent=1 // pred_check
      _
    $region15: #{tpu_custom_call.1} parent=1 // pred_check_branch
      %59 = sbr.rel (0) target = $region17
    $region16: #{tpu_custom_call.1} parent=1 // pred_region
      _
    $region17: #{tpu_custom_call.1} parent=1 // pred_fallthru
      _
    // Predicated region
    $region18: #{tpu_custom_call.1} parent=1 // pred_check
      _
    $region19: #{tpu_custom_call.1} parent=1 // pred_check_branch
      %61 = sbr.rel (0) target = $region21
    $region20: #{tpu_custom_call.1} parent=1 // pred_region
      _
    $region21: #{tpu_custom_call.1} parent=1 // pred_fallthru
      _
    // Predicated region
    $region22: #{tpu_custom_call.1} parent=1 // pred_check
      _
    $region23: #{tpu_custom_call.1} parent=1 // pred_check_branch
      %63 = sbr.rel (0) target = $region25
    $region24: #{tpu_custom_call.1} parent=1 // pred_region
      %s65 = ssub.s32 5120, 5120
      %66 = vsyncadd [#allocation8], %s65
      %s67 = sshll.u32 [#allocation7], 4
      %s68 = int_to_ptr.vmem [resolvable:$true] %s67
      %73 = dma.hbm_to_vmem [thread:$0]  %s5, 5120, %s68, [#allocation8], 128, 128, 8
    $region25: #{tpu_custom_call.1} parent=1 // pred_fallthru
      _
    // Predicated region
    $region26: #{tpu_custom_call.1} parent=1 // pred_check
      _
    $region27: #{tpu_custom_call.1} parent=1 // pred_check_branch
      %75 = sbr.rel (0) target = $region29
    $region28: #{tpu_custom_call.1} parent=1 // pred_region
      %s77 = ssub.s32 16, 16
      %78 = vsyncadd [#allocation8], %s77
      %s80 = sshll.u32 [#allocation9], 4
      %s81 = int_to_ptr.vmem [resolvable:$true] %s80
      %83 = dma.hbm_to_vmem [thread:$0]  %s6, 16, %s81, [#allocation8]
    $region29: #{tpu_custom_call.1} parent=1 // pred_fallthru
      _
    // Predicated region
    $region30: #{tpu_custom_call.1} parent=1 // pred_check
      _
    $region31: #{tpu_custom_call.1} parent=1 // pred_check_branch
      %85 = sbr.rel (0) target = $region33
    $region32: #{tpu_custom_call.1} parent=1 // pred_region
      %s87 = ssub.s32 16, 16
      %88 = vsyncadd [#allocation11], %s87
      %s90 = sshll.u32 [#allocation10], 4
      %s91 = int_to_ptr.vmem [resolvable:$true] %s90
      %93 = dma.hbm_to_vmem [thread:$0]  %s7, 16, %s91, [#allocation11]
    $region33: #{tpu_custom_call.1} parent=1 // pred_fallthru
      _
    // Predicated region
    $region34: #{tpu_custom_call.1} parent=1 // pred_check
      _
    $region35: #{tpu_custom_call.1} parent=1 // pred_check_branch
      %95 = sbr.rel (0) target = $region37
    $region36: #{tpu_custom_call.1} parent=1 // pred_region
      %s97 = ssub.s32 16, 16
      %98 = vsyncadd [#allocation11], %s97
      %s100 = sshll.u32 [#allocation12], 4
      %s101 = int_to_ptr.vmem [resolvable:$true] %s100
      %103 = dma.hbm_to_vmem [thread:$0]  %s8, 16, %s101, [#allocation11]
    $region37: #{tpu_custom_call.1} parent=1 // pred_fallthru
      _
    // Predicated region
    $region38: #{tpu_custom_call.1} parent=1 // pred_check
      _
    $region39: #{tpu_custom_call.1} parent=1 // pred_check_branch
      %105 = sbr.rel (0) target = $region41
    $region40: #{tpu_custom_call.1} parent=1 // pred_region
      %s107 = ssub.s32 512, 512
      %108 = vsyncadd [#allocation14], %s107
      %s109 = sshll.u32 [#allocation13], 4
      %s110 = int_to_ptr.vmem [resolvable:$true] %s109
      %115 = dma.hbm_to_vmem [thread:$0]  %s9, 512, %s110, [#allocation14], 128, 128, 8
    $region41: #{tpu_custom_call.1} parent=1 // pred_fallthru
      _
    // Predicated region
    $region42: #{tpu_custom_call.1} parent=1 // pred_check
      _
    $region43: #{tpu_custom_call.1} parent=1 // pred_check_branch
      %117 = sbr.rel (0) target = $region45
    $region44: #{tpu_custom_call.1} parent=1 // pred_region
      %s119 = ssub.s32 512, 512
      %120 = vsyncadd [#allocation14], %s119
      %s121 = sshll.u32 [#allocation15], 4
      %s122 = int_to_ptr.vmem [resolvable:$true] %s121
      %127 = dma.hbm_to_vmem [thread:$0]  %s10, 512, %s122, [#allocation14], 128, 128, 8
    $region45: #{tpu_custom_call.1} parent=1 // pred_fallthru
      _
    // Predicated region
    $region46: #{tpu_custom_call.1} parent=1 // pred_check
      _
    $region47: #{tpu_custom_call.1} parent=1 // pred_check_branch
      %129 = sbr.rel (0) target = $region49
    $region48: #{tpu_custom_call.1} parent=1 // pred_region
      %s131 = ssub.s32 16, 16
      %132 = vsyncadd [#allocation17], %s131
      %s134 = sshll.u32 [#allocation16], 4
      %s135 = int_to_ptr.vmem [resolvable:$true] %s134
      %137 = dma.hbm_to_vmem [thread:$0]  %s11, 16, %s135, [#allocation17]
    $region49: #{tpu_custom_call.1} parent=1 // pred_fallthru
      _
    // Predicated region
    $region50: #{tpu_custom_call.1} parent=1 // pred_check
      _
    $region51: #{tpu_custom_call.1} parent=1 // pred_check_branch
      %139 = sbr.rel (0) target = $region53
    $region52: #{tpu_custom_call.1} parent=1 // pred_region
      %s141 = ssub.s32 512, 512
      %142 = vsyncadd [#allocation17], %s141
      %s143 = sshll.u32 [#allocation18], 4
      %s144 = int_to_ptr.vmem [resolvable:$true] %s143
      %149 = dma.hbm_to_vmem [thread:$0]  %s12, 512, %s144, [#allocation17], 128, 128, 8
    $region53: #{tpu_custom_call.1} parent=1 // pred_fallthru
      _
    // Predicated region
    $region54: #{tpu_custom_call.1} parent=1 // pred_check
      _
    $region55: #{tpu_custom_call.1} parent=1 // pred_check_branch
      %151 = sbr.rel (0) target = $region57
    $region56: #{tpu_custom_call.1} parent=1 // pred_region
      %s153 = ssub.s32 16, 16
      %154 = vsyncadd [#allocation20], %s153
      %s156 = sshll.u32 [#allocation19], 4
      %s157 = int_to_ptr.vmem [resolvable:$true] %s156
      %159 = dma.hbm_to_vmem [thread:$0]  %s13, 16, %s157, [#allocation20]
    $region57: #{tpu_custom_call.1} parent=1 // pred_fallthru
      _
    // Predicated region
    $region58: #{tpu_custom_call.1} parent=1 // pred_check
      _
    $region59: #{tpu_custom_call.1} parent=1 // pred_check_branch
      %161 = sbr.rel (0) target = $region61
    $region60: #{tpu_custom_call.1} parent=1 // pred_region
      %s163 = ssub.s32 512, 512
      %164 = vsyncadd [#allocation20], %s163
      %s165 = sshll.u32 [#allocation21], 4
      %s166 = int_to_ptr.vmem [resolvable:$true] %s165
      %171 = dma.hbm_to_vmem [thread:$0]  %s14, 512, %s166, [#allocation20], 128, 128, 8
    $region61: #{tpu_custom_call.1} parent=1 // pred_fallthru
      _
    // Predicated region
    $region62: #{tpu_custom_call.1} parent=1 // pred_check
      _
    $region63: #{tpu_custom_call.1} parent=1 // pred_check_branch
      %173 = sbr.rel (0) target = $region65
    $region64: #{tpu_custom_call.1} parent=1 // pred_region
      %s175 = ssub.s32 16, 16
      %176 = vsyncadd [#allocation23], %s175
      %s178 = sshll.u32 [#allocation22], 4
      %s179 = int_to_ptr.vmem [resolvable:$true] %s178
      %181 = dma.hbm_to_vmem [thread:$0]  %s15, 16, %s179, [#allocation23]
    $region65: #{tpu_custom_call.1} parent=1 // pred_fallthru
      _
    // Predicated region
    $region66: #{tpu_custom_call.1} parent=1 // pred_check
      _
    $region67: #{tpu_custom_call.1} parent=1 // pred_check_branch
      %183 = sbr.rel (0) target = $region69
    $region68: #{tpu_custom_call.1} parent=1 // pred_region
      _
    $region69: #{tpu_custom_call.1} parent=1 // pred_fallthru
      _
    // Predicated region
    $region70: #{tpu_custom_call.1} parent=1 // pred_check
      _
    $region71: #{tpu_custom_call.1} parent=1 // pred_check_branch
      %185 = sbr.rel (0) target = $region73
    $region72: #{tpu_custom_call.1} parent=1 // pred_region
      _
    $region73: #{tpu_custom_call.1} parent=1 // pred_fallthru
      _
    // Predicated region
    $region74: #{tpu_custom_call.1} parent=1 // pred_check
      _
    $region75: #{tpu_custom_call.1} parent=1 // pred_check_branch
      %187 = sbr.rel (0) target = $region77
    $region76: #{tpu_custom_call.1} parent=1 // pred_region
      _
    $region77: #{tpu_custom_call.1} parent=1 // pred_fallthru
      _
    // Predicated region
    $region78: #{tpu_custom_call.1} parent=1 // pred_check
      _
    $region79: #{tpu_custom_call.1} parent=1 // pred_check_branch
      %189 = sbr.rel (0) target = $region81
    $region80: #{tpu_custom_call.1} parent=1 // pred_region
      _
    $region81: #{tpu_custom_call.1} parent=1 // pred_fallthru
      _
    // Predicated region
    $region82: #{tpu_custom_call.1} parent=1 // pred_check
      _
    $region83: #{tpu_custom_call.1} parent=1 // pred_check_branch
      %191 = sbr.rel (0) target = $region85
    $region84: #{tpu_custom_call.1} parent=1 // pred_region
      _
    $region85: #{tpu_custom_call.1} parent=1 // pred_fallthru
      _
    // Predicated region
    $region86: #{tpu_custom_call.1} parent=1 // pred_check
      _
    $region87: #{tpu_custom_call.1} parent=1 // pred_check_branch
      %193 = sbr.rel (0) target = $region89
    $region88: #{tpu_custom_call.1} parent=1 // pred_region
      _
    $region89: #{tpu_custom_call.1} parent=1 // pred_fallthru
      _
    // Predicated region
    $region90: #{tpu_custom_call.1} parent=1 // pred_check
      _
    $region91: #{tpu_custom_call.1} parent=1 // pred_check_branch
      %195 = sbr.rel (0) target = $region93
    $region92: #{tpu_custom_call.1} parent=1 // pred_region
      %196 = dma.done [#allocation5], 32
    $region93: #{tpu_custom_call.1} parent=1 // pred_fallthru
      _
    // Predicated region
    $region94: #{tpu_custom_call.1} parent=1 // pred_check
      _
    $region95: #{tpu_custom_call.1} parent=1 // pred_check_branch
      %198 = sbr.rel (0) target = $region97
    $region96: #{tpu_custom_call.1} parent=1 // pred_region
      %199 = dma.done [#allocation8], 5120
    $region97: #{tpu_custom_call.1} parent=1 // pred_fallthru
      _
    // Predicated region
    $region98: #{tpu_custom_call.1} parent=1 // pred_check
      _
    $region99: #{tpu_custom_call.1} parent=1 // pred_check_branch
      %201 = sbr.rel (0) target = $region101
    $region100: #{tpu_custom_call.1} parent=1 // pred_region
      %202 = dma.done [#allocation8], 16
    $region101: #{tpu_custom_call.1} parent=1 // pred_fallthru
      _
    // Predicated region
    $region102: #{tpu_custom_call.1} parent=1 // pred_check
      _
    $region103: #{tpu_custom_call.1} parent=1 // pred_check_branch
      %204 = sbr.rel (0) target = $region105
    $region104: #{tpu_custom_call.1} parent=1 // pred_region
      %205 = dma.done [#allocation11], 16
    $region105: #{tpu_custom_call.1} parent=1 // pred_fallthru
      _
    // Predicated region
    $region106: #{tpu_custom_call.1} parent=1 // pred_check
      _
    $region107: #{tpu_custom_call.1} parent=1 // pred_check_branch
      %207 = sbr.rel (0) target = $region109
    $region108: #{tpu_custom_call.1} parent=1 // pred_region
      %208 = dma.done [#allocation11], 16
    $region109: #{tpu_custom_call.1} parent=1 // pred_fallthru
      _
    // Predicated region
    $region110: #{tpu_custom_call.1} parent=1 // pred_check
      _
    $region111: #{tpu_custom_call.1} parent=1 // pred_check_branch
      %210 = sbr.rel (0) target = $region113
    $region112: #{tpu_custom_call.1} parent=1 // pred_region
      %211 = dma.done [#allocation14], 512
    $region113: #{tpu_custom_call.1} parent=1 // pred_fallthru
      _
    // Predicated region
    $region114: #{tpu_custom_call.1} parent=1 // pred_check
      _
    $region115: #{tpu_custom_call.1} parent=1 // pred_check_branch
      %213 = sbr.rel (0) target = $region117
    $region116: #{tpu_custom_call.1} parent=1 // pred_region
      %214 = dma.done [#allocation14], 512
    $region117: #{tpu_custom_call.1} parent=1 // pred_fallthru
      _
    // Predicated region
    $region118: #{tpu_custom_call.1} parent=1 // pred_check
      _
    $region119: #{tpu_custom_call.1} parent=1 // pred_check_branch
      %216 = sbr.rel (0) target = $region121
    $region120: #{tpu_custom_call.1} parent=1 // pred_region
      %217 = dma.done [#allocation17], 16
    $region121: #{tpu_custom_call.1} parent=1 // pred_fallthru
      _
    // Predicated region
    $region122: #{tpu_custom_call.1} parent=1 // pred_check
      _
    $region123: #{tpu_custom_call.1} parent=1 // pred_check_branch
      %219 = sbr.rel (0) target = $region125
    $region124: #{tpu_custom_call.1} parent=1 // pred_region
      %220 = dma.done [#allocation17], 512
    $region125: #{tpu_custom_call.1} parent=1 // pred_fallthru
      _
    // Predicated region
    $region126: #{tpu_custom_call.1} parent=1 // pred_check
      _
    $region127: #{tpu_custom_call.1} parent=1 // pred_check_branch
      %222 = sbr.rel (0) target = $region129
    $region128: #{tpu_custom_call.1} parent=1 // pred_region
      %223 = dma.done [#allocation20], 16
    $region129: #{tpu_custom_call.1} parent=1 // pred_fallthru
      _
    // Predicated region
    $region130: #{tpu_custom_call.1} parent=1 // pred_check
      _
    $region131: #{tpu_custom_call.1} parent=1 // pred_check_branch
      %225 = sbr.rel (0) target = $region133
    $region132: #{tpu_custom_call.1} parent=1 // pred_region
      %226 = dma.done [#allocation20], 512
    $region133: #{tpu_custom_call.1} parent=1 // pred_fallthru
      _
    // Predicated region
    $region134: #{tpu_custom_call.1} parent=1 // pred_check
      _
    $region135: #{tpu_custom_call.1} parent=1 // pred_check_branch
      %228 = sbr.rel (0) target = $region137
    $region136: #{tpu_custom_call.1} parent=1 // pred_region
      %229 = dma.done [#allocation23], 16
    $region137: #{tpu_custom_call.1} parent=1 // pred_fallthru
      _
    %v230 = vld [vmem:[#allocation4] sm:$0x3]
    %v231 = vld [vmem:[%s2] sm:$0xff]
    %v232 = vld [vmem:[%s2 + $0x8] sm:$0xff]
    %v233 = vld [vmem:[%s2 + $0x10] sm:$0xff]
    %v234 = vld [vmem:[%s2 + $0x18] sm:$0xff]
    %v235 = vld [vmem:[%s2 + $0x20] sm:$0xff]
    %v236 = vld [vmem:[%s2 + $0x28] sm:$0xff]
    %v237 = vld [vmem:[%s3] sm:$0x1]
    %v239 = vlaneseq
    %v240 = vshrl.u32 %v239, 7
    %v241 = vsub.s32 0, %v240
    %v242 = vrot.slane %v237, %v241
    %vm244 = vcmask 392192
    %v246 = vsel %vm244, %v230, 0
    %248 = vmatprep.subr.mxu0 0.0
    %249 = vmatpush1.msra.mxu0 %v231
    %250 = vmatprep.subr.mxu0 0.0
    %251 = vmatpush1.msra.mxu0 %v232
    %252 = vmatprep.subr.mxu0 0.0
    %253 = vmatpush1.msra.mxu0 %v233
    %254 = vmatprep.subr.mxu0 0.0
    %255 = vmatpush1.msra.mxu0 %v234
    %256 = vmatprep.subr.mxu0 0.0
    %257 = vmatpush1.msra.mxu0 %v235
    %258 = vmatprep.subr.mxu0 0.0
    %259 = vmatpush1.msra.mxu0 %v236
    %260 = vmatprep.subr.mxu0 0.0
    %261 = vmatpush1.msra.mxu0 0.0
    %262 = vmatprep.subr.mxu0 0.0
    %263 = vmatpush1.msra.mxu0 0.0
    %264 = vmatprep.subr.mxu0 0.0
    %265 = vmatpush1.msra.mxu0 0.0
    %266 = vmatprep.subr.mxu0 0.0
    %267 = vmatpush1.msra.mxu0 0.0
    %268 = vmatprep.subr.mxu0 0.0
    %269 = vmatpush1.msra.mxu0 0.0
    %270 = vmatprep.subr.mxu0 0.0
    %271 = vmatpush1.msra.mxu0 0.0
    %272 = vmatprep.subr.mxu0 0.0
    %273 = vmatpush1.msra.mxu0 0.0
    %274 = vmatprep.subr.mxu0 0.0
    %275 = vmatpush1.msra.mxu0 0.0
    %276 = vmatprep.subr.mxu0 0.0
    %277 = vmatpush1.msra.mxu0 0.0
    %278 = vmatprep.subr.mxu0 0.0
    %279 = vmatpush1.msra.mxu0 0.0
    %280 = vmatprep.subr.mxu0 0.0
    %281 = vmatpush1.msra.mxu0 0.0
    %282 = vmatprep.subr.mxu0 0.0
    %283 = vmatpush1.msra.mxu0 0.0
    %284 = vmatprep.subr.mxu0 0.0
    %285 = vmatpush1.msra.mxu0 0.0
    %286 = vmatprep.subr.mxu0 0.0
    %287 = vmatpush1.msra.mxu0 0.0
    %288 = vmatprep.subr.mxu0 0.0
    %289 = vmatpush1.msra.mxu0 0.0
    %290 = vmatprep.subr.mxu0 0.0
    %291 = vmatpush1.msra.mxu0 0.0
    %292 = vmatprep.subr.mxu0 0.0
    %293 = vmatpush1.msra.mxu0 0.0
    %294 = vmatprep.subr.mxu0 0.0
    %295 = vmatpush1.msra.mxu0 0.0
    %296 = vmatprep.subr.mxu0 0.0
    %297 = vmatpush1.msra.mxu0 0.0
    %298 = vmatprep.subr.mxu0 0.0
    %299 = vmatpush1.msra.mxu0 0.0
    %300 = vmatprep.subr.mxu0 0.0
    %301 = vmatpush1.msra.mxu0 0.0
    %302 = vmatprep.subr.mxu0 0.0
    %303 = vmatpush1.msra.mxu0 0.0
    %304 = vmatprep.subr.mxu0 0.0
    %305 = vmatpush1.msra.mxu0 0.0
    %306 = vmatprep.subr.mxu0 0.0
    %307 = vmatpush1.msra.mxu0 0.0
    %308 = vmatprep.subr.mxu0 0.0
    %309 = vmatpush1.msra.mxu0 0.0
    %310 = vmatprep.subr.mxu0 0.0
    %311 = vmatpush1.msra.mxu0 0.0
    %312 = vmatprep.mubr.f32.mxu0 0.0
    %313 = vmatmul.mubr.f32.gmra.mrb[0].mxu0 %v246
    %v314 = vpop.f32.mrb[0].mxu0
    %v315 = vadd.f32 %v242, %v314
    %v316 = vpop.f32.mrb[0].mxu0
    %317 = vdwg.mxu0
    %v318 = vld [vmem:[%s0] sm:$0xff]
    %v319 = vld [vmem:[%s0 + $0x8] sm:$0xff]
    %v320 = vld [vmem:[%s0 + $0x10] sm:$0xff]
    %v321 = vld [vmem:[%s0 + $0x18] sm:$0xff]
    %v322 = vcombine.high %v318, 0.0
    %v324 = vunpack.c.l.s4 1983009808
    %v325 = vunpack.c.0.s8 %v324
    %v326 = vlaneseq
    %v327 = vshrl.u32 %v326, 7
    %v328 = vsub.s32 %v325, %v327
    %v329 = vrot.slane %v318, %v328
    %v331 = vunpack.c.l.s4 1983009808
    %v332 = vunpack.c.0.s8 %v331
    %v333 = vlaneseq
    %v334 = vshrl.u32 %v333, 7
    %v335 = vsub.s32 %v332, %v334
    %v336 = vrot.slane %v322, %v335
    %v337 = vcombine.high %v320, 0.0
    %v339 = vunpack.c.l.s4 1983009808
    %v340 = vunpack.c.0.s8 %v339
    %v341 = vlaneseq
    %v342 = vshrl.u32 %v341, 7
    %v343 = vsub.s32 %v340, %v342
    %v344 = vrot.slane %v320, %v343
    %v346 = vunpack.c.l.s4 1983009808
    %v347 = vunpack.c.0.s8 %v346
    %v348 = vlaneseq
    %v349 = vshrl.u32 %v348, 7
    %v350 = vsub.s32 %v347, %v349
    %v351 = vrot.slane %v337, %v350
    %v352 = vcombine.low %v329, %v344
    %v353 = vcombine.high %v329, %v344
    %v355 = vunpack.c.l.s4 1934713408
    %v356 = vunpack.c.0.s8 %v355
    %v357 = vlaneseq
    %v358 = vshrl.u32 %v357, 7
    %v359 = vsub.s32 %v356, %v358
    %v360 = vrot.slane %v352, %v359
    %v362 = vunpack.c.l.s4 1934713408
    %v363 = vunpack.c.0.s8 %v362
    %v364 = vlaneseq
    %v365 = vshrl.u32 %v364, 7
    %v366 = vsub.s32 %v363, %v365
    %v367 = vrot.slane %v353, %v366
    %v368 = vcombine.low %v336, %v351
    %v369 = vcombine.high %v336, %v351
    %v371 = vunpack.c.l.s4 1934713408
    %v372 = vunpack.c.0.s8 %v371
    %v373 = vlaneseq
    %v374 = vshrl.u32 %v373, 7
    %v375 = vsub.s32 %v372, %v374
    %v376 = vrot.slane %v368, %v375
    %v378 = vunpack.c.l.s4 1934713408
    %v379 = vunpack.c.0.s8 %v378
    %v380 = vlaneseq
    %v381 = vshrl.u32 %v380, 7
    %v382 = vsub.s32 %v379, %v381
    %v383 = vrot.slane %v369, %v382
    %v384 = vcombine.high %v360, 0.0
    %v385 = vcombine.high %v367, 0.0
    %v386 = vcombine.high %v376, 0.0
    %v387 = vcombine.high %v383, 0.0
    %v388 = vcombine.high %v319, 0.0
    %v390 = vunpack.c.l.s4 1983009808
    %v391 = vunpack.c.0.s8 %v390
    %v392 = vlaneseq
    %v393 = vshrl.u32 %v392, 7
    %v394 = vsub.s32 %v391, %v393
    %v395 = vrot.slane %v319, %v394
    %v397 = vunpack.c.l.s4 1983009808
    %v398 = vunpack.c.0.s8 %v397
    %v399 = vlaneseq
    %v400 = vshrl.u32 %v399, 7
    %v401 = vsub.s32 %v398, %v400
    %v402 = vrot.slane %v388, %v401
    %v403 = vcombine.high %v321, 0.0
    %v405 = vunpack.c.l.s4 1983009808
    %v406 = vunpack.c.0.s8 %v405
    %v407 = vlaneseq
    %v408 = vshrl.u32 %v407, 7
    %v409 = vsub.s32 %v406, %v408
    %v410 = vrot.slane %v321, %v409
    %v412 = vunpack.c.l.s4 1983009808
    %v413 = vunpack.c.0.s8 %v412
    %v414 = vlaneseq
    %v415 = vshrl.u32 %v414, 7
    %v416 = vsub.s32 %v413, %v415
    %v417 = vrot.slane %v403, %v416
    %v418 = vcombine.low %v395, %v410
    %v419 = vcombine.high %v395, %v410
    %v421 = vunpack.c.l.s4 1934713408
    %v422 = vunpack.c.0.s8 %v421
    %v423 = vlaneseq
    %v424 = vshrl.u32 %v423, 7
    %v425 = vsub.s32 %v422, %v424
    %v426 = vrot.slane %v418, %v425
    %v428 = vunpack.c.l.s4 1934713408
    %v429 = vunpack.c.0.s8 %v428
    %v430 = vlaneseq
    %v431 = vshrl.u32 %v430, 7
    %v432 = vsub.s32 %v429, %v431
    %v433 = vrot.slane %v419, %v432
    %v434 = vcombine.low %v402, %v417
    %v435 = vcombine.high %v402, %v417
    %v437 = vunpack.c.l.s4 1934713408
    %v438 = vunpack.c.0.s8 %v437
    %v439 = vlaneseq
    %v440 = vshrl.u32 %v439, 7
    %v441 = vsub.s32 %v438, %v440
    %v442 = vrot.slane %v434, %v441
    %v444 = vunpack.c.l.s4 1934713408
    %v445 = vunpack.c.0.s8 %v444
    %v446 = vlaneseq
    %v447 = vshrl.u32 %v446, 7
    %v448 = vsub.s32 %v445, %v447
    %v449 = vrot.slane %v435, %v448
    %v450 = vcombine.high %v426, 0.0
    %v451 = vcombine.high %v433, 0.0
    %v452 = vcombine.high %v442, 0.0
    %v453 = vcombine.high %v449, 0.0
    %v454 = vadd.f32 %v360, %v315
    %v455 = vadd.f32 %v384, %v315
    %v456 = vadd.f32 %v367, %v315
    %v457 = vadd.f32 %v385, %v315
    %v458 = vadd.f32 %v376, %v315
    %v459 = vadd.f32 %v386, %v315
    %v460 = vadd.f32 %v383, %v315
    %v461 = vadd.f32 %v387, %v315
    %v462 = vadd.f32 %v426, %v315
    %v463 = vadd.f32 %v450, %v315
    %v464 = vadd.f32 %v433, %v315
    %v465 = vadd.f32 %v451, %v315
    %v466 = vadd.f32 %v442, %v315
    %v467 = vadd.f32 %v452, %v315
    %v468 = vadd.f32 %v449, %v315
    %v469 = vadd.f32 %v453, %v315
    %vm470 = vcmask 254976
    %v471 = vsel %vm470, %v454, 0.0
    %472 = vadd.xlane.f32.xlu0 %v471
    %v473 = vpop.xlane.xlu0 %472
    %v474 = vsel %vm470, %v455, 0.0
    %475 = vadd.xlane.f32.xlu0 %v474
    %v476 = vpop.xlane.xlu0 %475
    %v477 = vsel %vm470, %v456, 0.0
    %478 = vadd.xlane.f32.xlu0 %v477
    %v479 = vpop.xlane.xlu0 %478
    %v480 = vsel %vm470, %v457, 0.0
    %481 = vadd.xlane.f32.xlu0 %v480
    %v482 = vpop.xlane.xlu0 %481
    %v483 = vsel %vm470, %v458, 0.0
    %484 = vadd.xlane.f32.xlu0 %v483
    %v485 = vpop.xlane.xlu0 %484
    %v486 = vsel %vm470, %v459, 0.0
    %487 = vadd.xlane.f32.xlu0 %v486
    %v488 = vpop.xlane.xlu0 %487
    %v489 = vsel %vm470, %v460, 0.0
    %490 = vadd.xlane.f32.xlu0 %v489
    %v491 = vpop.xlane.xlu0 %490
    %v492 = vsel %vm470, %v461, 0.0
    %493 = vadd.xlane.f32.xlu0 %v492
    %v494 = vpop.xlane.xlu0 %493
    %v495 = vsel %vm470, %v462, 0.0
    %496 = vadd.xlane.f32.xlu0 %v495
    %v497 = vpop.xlane.xlu0 %496
    %v498 = vsel %vm470, %v463, 0.0
    %499 = vadd.xlane.f32.xlu0 %v498
    %v500 = vpop.xlane.xlu0 %499
    %v501 = vsel %vm470, %v464, 0.0
    %502 = vadd.xlane.f32.xlu0 %v501
    %v503 = vpop.xlane.xlu0 %502
    %v504 = vsel %vm470, %v465, 0.0
    %505 = vadd.xlane.f32.xlu0 %v504
    %v506 = vpop.xlane.xlu0 %505
    %v507 = vsel %vm470, %v466, 0.0
    %508 = vadd.xlane.f32.xlu0 %v507
    %v509 = vpop.xlane.xlu0 %508
    %v510 = vsel %vm470, %v467, 0.0
    %511 = vadd.xlane.f32.xlu0 %v510
    %v512 = vpop.xlane.xlu0 %511
    %v513 = vsel %vm470, %v468, 0.0
    %514 = vadd.xlane.f32.xlu0 %v513
    %v515 = vpop.xlane.xlu0 %514
    %v516 = vsel %vm470, %v469, 0.0
    %517 = vadd.xlane.f32.xlu0 %v516
    %v518 = vpop.xlane.xlu0 %517
    %v519 = vrcp.pop 32.0
    %v520 = vmul.f32 %v473, %v519
    %v521 = vmul.f32 %v476, %v519
    %v522 = vmul.f32 %v479, %v519
    %v523 = vmul.f32 %v482, %v519
    %v524 = vmul.f32 %v485, %v519
    %v525 = vmul.f32 %v488, %v519
    %v526 = vmul.f32 %v491, %v519
    %v527 = vmul.f32 %v494, %v519
    %v528 = vmul.f32 %v497, %v519
    %v529 = vmul.f32 %v500, %v519
    %v530 = vmul.f32 %v503, %v519
    %v531 = vmul.f32 %v506, %v519
    %v532 = vmul.f32 %v509, %v519
    %v533 = vmul.f32 %v512, %v519
    %v534 = vmul.f32 %v515, %v519
    %v535 = vmul.f32 %v518, %v519
    %v536 = vld [vmem:[%s4] sm:$0xff]
    %v537 = vld [vmem:[%s4 + $0x8] sm:$0xff]
    %v554 = vlaneseq
    %v555 = vand.u32 %v554, 127
    %v556 = vlaneseq
    %v557 = vshrl.u32 %v556, 7
    %v558 = vsub.s32 %v555, %v557
    %v559 = vrot.slane %v520, %v558
    %v560 = vlaneseq
    %v561 = vshrl.u32 %v560, 7
    %v562 = vsub.s32 %v555, %v561
    %v563 = vrot.slane %v521, %v562
    %v564 = vlaneseq
    %v565 = vshrl.u32 %v564, 7
    %v566 = vsub.s32 %v555, %v565
    %v567 = vrot.slane %v522, %v566
    %v568 = vlaneseq
    %v569 = vshrl.u32 %v568, 7
    %v570 = vsub.s32 %v555, %v569
    %v571 = vrot.slane %v523, %v570
    %v572 = vlaneseq
    %v573 = vshrl.u32 %v572, 7
    %v574 = vsub.s32 %v555, %v573
    %v575 = vrot.slane %v524, %v574
    %v576 = vlaneseq
    %v577 = vshrl.u32 %v576, 7
    %v578 = vsub.s32 %v555, %v577
    %v579 = vrot.slane %v525, %v578
    %v580 = vlaneseq
    %v581 = vshrl.u32 %v580, 7
    %v582 = vsub.s32 %v555, %v581
    %v583 = vrot.slane %v526, %v582
    %v584 = vlaneseq
    %v585 = vshrl.u32 %v584, 7
    %v586 = vsub.s32 %v555, %v585
    %v587 = vrot.slane %v527, %v586
    %v588 = vlaneseq
    %v589 = vshrl.u32 %v588, 7
    %v590 = vsub.s32 %v555, %v589
    %v591 = vrot.slane %v528, %v590
    %v592 = vlaneseq
    %v593 = vshrl.u32 %v592, 7
    %v594 = vsub.s32 %v555, %v593
    %v595 = vrot.slane %v529, %v594
    %v596 = vlaneseq
    %v597 = vshrl.u32 %v596, 7
    %v598 = vsub.s32 %v555, %v597
    %v599 = vrot.slane %v530, %v598
    %v600 = vlaneseq
    %v601 = vshrl.u32 %v600, 7
    %v602 = vsub.s32 %v555, %v601
    %v603 = vrot.slane %v531, %v602
    %v604 = vlaneseq
    %v605 = vshrl.u32 %v604, 7
    %v606 = vsub.s32 %v555, %v605
    %v607 = vrot.slane %v532, %v606
    %v608 = vlaneseq
    %v609 = vshrl.u32 %v608, 7
    %v610 = vsub.s32 %v555, %v609
    %v611 = vrot.slane %v533, %v610
    %v612 = vlaneseq
    %v613 = vshrl.u32 %v612, 7
    %v614 = vsub.s32 %v555, %v613
    %v615 = vrot.slane %v534, %v614
    %v616 = vlaneseq
    %v617 = vshrl.u32 %v616, 7
    %v618 = vsub.s32 %v555, %v617
    %v619 = vrot.slane %v535, %v618
    %vm620 = vcmask 1041409
    %v621 = vsel %vm620, %v563, %v559
    %vm622 = vcmask 1042434
    %v623 = vsel %vm622, %v567, %v621
    %vm624 = vcmask 1043459
    %v625 = vsel %vm624, %v571, %v623
    %vm626 = vcmask 1044484
    %v627 = vsel %vm626, %v575, %v625
    %vm628 = vcmask 1045509
    %v629 = vsel %vm628, %v579, %v627
    %vm630 = vcmask 1046534
    %v631 = vsel %vm630, %v583, %v629
    %vm632 = vcmask 1047559
    %v633 = vsel %vm632, %v587, %v631
    %v634 = vsel %vm620, %v595, %v591
    %v635 = vsel %vm622, %v599, %v634
    %v636 = vsel %vm624, %v603, %v635
    %v637 = vsel %vm626, %v607, %v636
    %v638 = vsel %vm628, %v611, %v637
    %v639 = vsel %vm630, %v615, %v638
    %v640 = vsel %vm632, %v619, %v639
    %vm643 = vcmask 130048
    %v645 = vsel %vm643, %v536, 0
    %v648 = vsel %vm643, %v537, 0
    %650 = vmatprep.subr.mxu0 0.0
    %651 = vmatpush1.msra.mxu0 %v633
    %652 = vmatprep.subr.mxu0 0.0
    %653 = vmatpush1.msra.mxu0 %v640
    %654 = vmatprep.subr.mxu0 0.0
    %655 = vmatpush1.msra.mxu0 0.0
    %656 = vmatprep.subr.mxu0 0.0
    %657 = vmatpush1.msra.mxu0 0.0
    %658 = vmatprep.subr.mxu0 0.0
    %659 = vmatpush1.msra.mxu0 0.0
    %660 = vmatprep.subr.mxu0 0.0
    %661 = vmatpush1.msra.mxu0 0.0
    %662 = vmatprep.subr.mxu0 0.0
    %663 = vmatpush1.msra.mxu0 0.0
    %664 = vmatprep.subr.mxu0 0.0
    %665 = vmatpush1.msra.mxu0 0.0
    %666 = vmatprep.subr.mxu0 0.0
    %667 = vmatpush1.msra.mxu0 0.0
    %668 = vmatprep.subr.mxu0 0.0
    %669 = vmatpush1.msra.mxu0 0.0
    %670 = vmatprep.subr.mxu0 0.0
    %671 = vmatpush1.msra.mxu0 0.0
    %672 = vmatprep.subr.mxu0 0.0
    %673 = vmatpush1.msra.mxu0 0.0
    %674 = vmatprep.subr.mxu0 0.0
    %675 = vmatpush1.msra.mxu0 0.0
    %676 = vmatprep.subr.mxu0 0.0
    %677 = vmatpush1.msra.mxu0 0.0
    %678 = vmatprep.subr.mxu0 0.0
    %679 = vmatpush1.msra.mxu0 0.0
    %680 = vmatprep.subr.mxu0 0.0
    %681 = vmatpush1.msra.mxu0 0.0
    %682 = vmatprep.subr.mxu0 0.0
    %683 = vmatpush1.msra.mxu0 0.0
    %684 = vmatprep.subr.mxu0 0.0
    %685 = vmatpush1.msra.mxu0 0.0
    %686 = vmatprep.subr.mxu0 0.0
    %687 = vmatpush1.msra.mxu0 0.0
    %688 = vmatprep.subr.mxu0 0.0
    %689 = vmatpush1.msra.mxu0 0.0
    %690 = vmatprep.subr.mxu0 0.0
    %691 = vmatpush1.msra.mxu0 0.0
    %692 = vmatprep.subr.mxu0 0.0
    %693 = vmatpush1.msra.mxu0 0.0
    %694 = vmatprep.subr.mxu0 0.0
    %695 = vmatpush1.msra.mxu0 0.0
    %696 = vmatprep.subr.mxu0 0.0
    %697 = vmatpush1.msra.mxu0 0.0
    %698 = vmatprep.subr.mxu0 0.0
    %699 = vmatpush1.msra.mxu0 0.0
    %700 = vmatprep.subr.mxu0 0.0
    %701 = vmatpush1.msra.mxu0 0.0
    %702 = vmatprep.subr.mxu0 0.0
    %703 = vmatpush1.msra.mxu0 0.0
    %704 = vmatprep.subr.mxu0 0.0
    %705 = vmatpush1.msra.mxu0 0.0
    %706 = vmatprep.subr.mxu0 0.0
    %707 = vmatpush1.msra.mxu0 0.0
    %708 = vmatprep.subr.mxu0 0.0
    %709 = vmatpush1.msra.mxu0 0.0
    %710 = vmatprep.subr.mxu0 0.0
    %711 = vmatpush1.msra.mxu0 0.0
    %712 = vmatprep.subr.mxu0 0.0
    %713 = vmatpush1.msra.mxu0 0.0
    %714 = vmatprep.mubr.f32.mxu0 0.0
    %715 = vmatmul.mubr.f32.gmra.mrb[0].mxu0 %v645
    %v716 = vpop.f32.mrb[0].mxu0
    %v717 = vadd.f32 0.0, %v716
    %v718 = vpop.f32.mrb[0].mxu0
    %719 = vmatprep.mubr.f32.mxu0 0.0
    %720 = vmatmul.mubr.f32.gmra.mrb[0].mxu0 %v648
    %v721 = vpop.f32.mrb[0].mxu0
    %v722 = vadd.f32 0.0, %v721
    %v723 = vpop.f32.mrb[0].mxu0
    %724 = vdwg.mxu0
    %v725 = vadd.f32 %v717, 0.0
    %v726 = vadd.f32 %v722, 0.0
    %v729 = vlaneseq
    %v730 = vshrl.u32 %v729, 7
    %v731 = vsub.s32 0, %v730
    %v732 = vrot.slane %v717, %v731
    %734 = vbcast.lane.b32.xlu0 %v732, 256
    %v735 = vpop.permute.xlu0 %734
    %v736 = vlaneseq
    %v737 = vshrl.u32 %v736, 7
    %v738 = vsub.s32 1, %v737
    %v739 = vrot.slane %v717, %v738
    %741 = vbcast.lane.b32.xlu0 %v739, 256
    %v742 = vpop.permute.xlu0 %741
    %v743 = vlaneseq
    %v744 = vshrl.u32 %v743, 7
    %v745 = vsub.s32 2, %v744
    %v746 = vrot.slane %v717, %v745
    %748 = vbcast.lane.b32.xlu0 %v746, 256
    %v749 = vpop.permute.xlu0 %748
    %v750 = vlaneseq
    %v751 = vshrl.u32 %v750, 7
    %v752 = vsub.s32 3, %v751
    %v753 = vrot.slane %v717, %v752
    %755 = vbcast.lane.b32.xlu0 %v753, 256
    %v756 = vpop.permute.xlu0 %755
    %v757 = vlaneseq
    %v758 = vshrl.u32 %v757, 7
    %v759 = vsub.s32 4, %v758
    %v760 = vrot.slane %v717, %v759
    %762 = vbcast.lane.b32.xlu0 %v760, 256
    %v763 = vpop.permute.xlu0 %762
    %v764 = vlaneseq
    %v765 = vshrl.u32 %v764, 7
    %v766 = vsub.s32 5, %v765
    %v767 = vrot.slane %v717, %v766
    %769 = vbcast.lane.b32.xlu0 %v767, 256
    %v770 = vpop.permute.xlu0 %769
    %v771 = vlaneseq
    %v772 = vshrl.u32 %v771, 7
    %v773 = vsub.s32 6, %v772
    %v774 = vrot.slane %v717, %v773
    %776 = vbcast.lane.b32.xlu0 %v774, 256
    %v777 = vpop.permute.xlu0 %776
    %v778 = vlaneseq
    %v779 = vshrl.u32 %v778, 7
    %v780 = vsub.s32 7, %v779
    %v781 = vrot.slane %v717, %v780
    %783 = vbcast.lane.b32.xlu0 %v781, 256
    %v784 = vpop.permute.xlu0 %783
    %v785 = vlaneseq
    %v786 = vshrl.u32 %v785, 7
    %v787 = vsub.s32 0, %v786
    %v788 = vrot.slane %v722, %v787
    %790 = vbcast.lane.b32.xlu0 %v788, 256
    %v791 = vpop.permute.xlu0 %790
    %v792 = vlaneseq
    %v793 = vshrl.u32 %v792, 7
    %v794 = vsub.s32 1, %v793
    %v795 = vrot.slane %v722, %v794
    %797 = vbcast.lane.b32.xlu0 %v795, 256
    %v798 = vpop.permute.xlu0 %797
    %v799 = vlaneseq
    %v800 = vshrl.u32 %v799, 7
    %v801 = vsub.s32 2, %v800
    %v802 = vrot.slane %v722, %v801
    %804 = vbcast.lane.b32.xlu0 %v802, 256
    %v805 = vpop.permute.xlu0 %804
    %v806 = vlaneseq
    %v807 = vshrl.u32 %v806, 7
    %v808 = vsub.s32 3, %v807
    %v809 = vrot.slane %v722, %v808
    %811 = vbcast.lane.b32.xlu0 %v809, 256
    %v812 = vpop.permute.xlu0 %811
    %v813 = vlaneseq
    %v814 = vshrl.u32 %v813, 7
    %v815 = vsub.s32 4, %v814
    %v816 = vrot.slane %v722, %v815
    %818 = vbcast.lane.b32.xlu0 %v816, 256
    %v819 = vpop.permute.xlu0 %818
    %v820 = vlaneseq
    %v821 = vshrl.u32 %v820, 7
    %v822 = vsub.s32 5, %v821
    %v823 = vrot.slane %v722, %v822
    %825 = vbcast.lane.b32.xlu0 %v823, 256
    %v826 = vpop.permute.xlu0 %825
    %v827 = vlaneseq
    %v828 = vshrl.u32 %v827, 7
    %v829 = vsub.s32 6, %v828
    %v830 = vrot.slane %v722, %v829
    %832 = vbcast.lane.b32.xlu0 %v830, 256
    %v833 = vpop.permute.xlu0 %832
    %v834 = vlaneseq
    %v835 = vshrl.u32 %v834, 7
    %v836 = vsub.s32 7, %v835
    %v837 = vrot.slane %v722, %v836
    %839 = vbcast.lane.b32.xlu0 %v837, 256
    %v840 = vpop.permute.xlu0 %839
    %v857 = vadd.f32 %v520, %v735
    %v858 = vadd.f32 %v521, %v742
    %v859 = vadd.f32 %v522, %v749
    %v860 = vadd.f32 %v523, %v756
    %v861 = vadd.f32 %v524, %v763
    %v862 = vadd.f32 %v525, %v770
    %v863 = vadd.f32 %v526, %v777
    %v864 = vadd.f32 %v527, %v784
    %v865 = vadd.f32 %v528, %v791
    %v866 = vadd.f32 %v529, %v798
    %v867 = vadd.f32 %v530, %v805
    %v868 = vadd.f32 %v531, %v812
    %v869 = vadd.f32 %v532, %v819
    %v870 = vadd.f32 %v533, %v826
    %v871 = vadd.f32 %v534, %v833
    %v872 = vadd.f32 %v535, %v840
    %s873 = scalar_lea.vmem %s4, 16
    %v874 = vld [vmem:[%s873] sm:$0xff]
    %v875 = vld [vmem:[%s873 + $0x8] sm:$0xff]
    %892 = vset.pattern.permute.xlu0 0
    %893 = vperm.xlu0 %892, %v857
    %v894 = vpop.permute.xlu0 %893
    %895 = vset.pattern.permute.xlu0 0
    %896 = vperm.xlu0 %895, %v858
    %v897 = vpop.permute.xlu0 %896
    %898 = vset.pattern.permute.xlu0 0
    %899 = vperm.xlu0 %898, %v859
    %v900 = vpop.permute.xlu0 %899
    %901 = vset.pattern.permute.xlu0 0
    %902 = vperm.xlu0 %901, %v860
    %v903 = vpop.permute.xlu0 %902
    %904 = vset.pattern.permute.xlu0 0
    %905 = vperm.xlu0 %904, %v861
    %v906 = vpop.permute.xlu0 %905
    %907 = vset.pattern.permute.xlu0 0
    %908 = vperm.xlu0 %907, %v862
    %v909 = vpop.permute.xlu0 %908
    %910 = vset.pattern.permute.xlu0 0
    %911 = vperm.xlu0 %910, %v863
    %v912 = vpop.permute.xlu0 %911
    %913 = vset.pattern.permute.xlu0 0
    %914 = vperm.xlu0 %913, %v864
    %v915 = vpop.permute.xlu0 %914
    %916 = vset.pattern.permute.xlu0 0
    %917 = vperm.xlu0 %916, %v865
    %v918 = vpop.permute.xlu0 %917
    %919 = vset.pattern.permute.xlu0 0
    %920 = vperm.xlu0 %919, %v866
    %v921 = vpop.permute.xlu0 %920
    %922 = vset.pattern.permute.xlu0 0
    %923 = vperm.xlu0 %922, %v867
    %v924 = vpop.permute.xlu0 %923
    %925 = vset.pattern.permute.xlu0 0
    %926 = vperm.xlu0 %925, %v868
    %v927 = vpop.permute.xlu0 %926
    %928 = vset.pattern.permute.xlu0 0
    %929 = vperm.xlu0 %928, %v869
    %v930 = vpop.permute.xlu0 %929
    %931 = vset.pattern.permute.xlu0 0
    %932 = vperm.xlu0 %931, %v870
    %v933 = vpop.permute.xlu0 %932
    %934 = vset.pattern.permute.xlu0 0
    %935 = vperm.xlu0 %934, %v871
    %v936 = vpop.permute.xlu0 %935
    %937 = vset.pattern.permute.xlu0 0
    %938 = vperm.xlu0 %937, %v872
    %v939 = vpop.permute.xlu0 %938
    %v940 = vlaneseq
    %v941 = vshrl.u32 %v940, 7
    %v942 = vsub.s32 %v555, %v941
    %v943 = vrot.slane %v894, %v942
    %v944 = vlaneseq
    %v945 = vshrl.u32 %v944, 7
    %v946 = vsub.s32 %v555, %v945
    %v947 = vrot.slane %v897, %v946
    %v948 = vlaneseq
    %v949 = vshrl.u32 %v948, 7
    %v950 = vsub.s32 %v555, %v949
    %v951 = vrot.slane %v900, %v950
    %v952 = vlaneseq
    %v953 = vshrl.u32 %v952, 7
    %v954 = vsub.s32 %v555, %v953
    %v955 = vrot.slane %v903, %v954
    %v956 = vlaneseq
    %v957 = vshrl.u32 %v956, 7
    %v958 = vsub.s32 %v555, %v957
    %v959 = vrot.slane %v906, %v958
    %v960 = vlaneseq
    %v961 = vshrl.u32 %v960, 7
    %v962 = vsub.s32 %v555, %v961
    %v963 = vrot.slane %v909, %v962
    %v964 = vlaneseq
    %v965 = vshrl.u32 %v964, 7
    %v966 = vsub.s32 %v555, %v965
    %v967 = vrot.slane %v912, %v966
    %v968 = vlaneseq
    %v969 = vshrl.u32 %v968, 7
    %v970 = vsub.s32 %v555, %v969
    %v971 = vrot.slane %v915, %v970
    %v972 = vlaneseq
    %v973 = vshrl.u32 %v972, 7
    %v974 = vsub.s32 %v555, %v973
    %v975 = vrot.slane %v918, %v974
    %v976 = vlaneseq
    %v977 = vshrl.u32 %v976, 7
    %v978 = vsub.s32 %v555, %v977
    %v979 = vrot.slane %v921, %v978
    %v980 = vlaneseq
    %v981 = vshrl.u32 %v980, 7
    %v982 = vsub.s32 %v555, %v981
    %v983 = vrot.slane %v924, %v982
    %v984 = vlaneseq
    %v985 = vshrl.u32 %v984, 7
    %v986 = vsub.s32 %v555, %v985
    %v987 = vrot.slane %v927, %v986
    %v988 = vlaneseq
    %v989 = vshrl.u32 %v988, 7
    %v990 = vsub.s32 %v555, %v989
    %v991 = vrot.slane %v930, %v990
    %v992 = vlaneseq
    %v993 = vshrl.u32 %v992, 7
    %v994 = vsub.s32 %v555, %v993
    %v995 = vrot.slane %v933, %v994
    %v996 = vlaneseq
    %v997 = vshrl.u32 %v996, 7
    %v998 = vsub.s32 %v555, %v997
    %v999 = vrot.slane %v936, %v998
    %v1000 = vlaneseq
    %v1001 = vshrl.u32 %v1000, 7
    %v1002 = vsub.s32 %v555, %v1001
    %v1003 = vrot.slane %v939, %v1002
    %v1004 = vsel %vm620, %v947, %v943
    %v1005 = vsel %vm622, %v951, %v1004
    %v1006 = vsel %vm624, %v955, %v1005
    %v1007 = vsel %vm626, %v959, %v1006
    %v1008 = vsel %vm628, %v963, %v1007
    %v1009 = vsel %vm630, %v967, %v1008
    %v1010 = vsel %vm632, %v971, %v1009
    %v1011 = vsel %vm620, %v979, %v975
    %v1012 = vsel %vm622, %v983, %v1011
    %v1013 = vsel %vm624, %v987, %v1012
    %v1014 = vsel %vm626, %v991, %v1013
    %v1015 = vsel %vm628, %v995, %v1014
    %v1016 = vsel %vm630, %v999, %v1015
    %v1017 = vsel %vm632, %v1003, %v1016
    %v1021 = vsel %vm643, %v874, 0
    %v1024 = vsel %vm643, %v875, 0
    %1026 = vmatprep.subr.mxu0 0.0
    %1027 = vmatpush1.msra.mxu0 %v1010
    %1028 = vmatprep.subr.mxu0 0.0
    %1029 = vmatpush1.msra.mxu0 %v1017
    %1030 = vmatprep.subr.mxu0 0.0
    %1031 = vmatpush1.msra.mxu0 0.0
    %1032 = vmatprep.subr.mxu0 0.0
    %1033 = vmatpush1.msra.mxu0 0.0
    %1034 = vmatprep.subr.mxu0 0.0
    %1035 = vmatpush1.msra.mxu0 0.0
    %1036 = vmatprep.subr.mxu0 0.0
    %1037 = vmatpush1.msra.mxu0 0.0
    %1038 = vmatprep.subr.mxu0 0.0
    %1039 = vmatpush1.msra.mxu0 0.0
    %1040 = vmatprep.subr.mxu0 0.0
    %1041 = vmatpush1.msra.mxu0 0.0
    %1042 = vmatprep.subr.mxu0 0.0
    %1043 = vmatpush1.msra.mxu0 0.0
    %1044 = vmatprep.subr.mxu0 0.0
    %1045 = vmatpush1.msra.mxu0 0.0
    %1046 = vmatprep.subr.mxu0 0.0
    %1047 = vmatpush1.msra.mxu0 0.0
    %1048 = vmatprep.subr.mxu0 0.0
    %1049 = vmatpush1.msra.mxu0 0.0
    %1050 = vmatprep.subr.mxu0 0.0
    %1051 = vmatpush1.msra.mxu0 0.0
    %1052 = vmatprep.subr.mxu0 0.0
    %1053 = vmatpush1.msra.mxu0 0.0
    %1054 = vmatprep.subr.mxu0 0.0
    %1055 = vmatpush1.msra.mxu0 0.0
    %1056 = vmatprep.subr.mxu0 0.0
    %1057 = vmatpush1.msra.mxu0 0.0
    %1058 = vmatprep.subr.mxu0 0.0
    %1059 = vmatpush1.msra.mxu0 0.0
    %1060 = vmatprep.subr.mxu0 0.0
    %1061 = vmatpush1.msra.mxu0 0.0
    %1062 = vmatprep.subr.mxu0 0.0
    %1063 = vmatpush1.msra.mxu0 0.0
    %1064 = vmatprep.subr.mxu0 0.0
    %1065 = vmatpush1.msra.mxu0 0.0
    %1066 = vmatprep.subr.mxu0 0.0
    %1067 = vmatpush1.msra.mxu0 0.0
    %1068 = vmatprep.subr.mxu0 0.0
    %1069 = vmatpush1.msra.mxu0 0.0
    %1070 = vmatprep.subr.mxu0 0.0
    %1071 = vmatpush1.msra.mxu0 0.0
    %1072 = vmatprep.subr.mxu0 0.0
    %1073 = vmatpush1.msra.mxu0 0.0
    %1074 = vmatprep.subr.mxu0 0.0
    %1075 = vmatpush1.msra.mxu0 0.0
    %1076 = vmatprep.subr.mxu0 0.0
    %1077 = vmatpush1.msra.mxu0 0.0
    %1078 = vmatprep.subr.mxu0 0.0
    %1079 = vmatpush1.msra.mxu0 0.0
    %1080 = vmatprep.subr.mxu0 0.0
    %1081 = vmatpush1.msra.mxu0 0.0
    %1082 = vmatprep.subr.mxu0 0.0
    %1083 = vmatpush1.msra.mxu0 0.0
    %1084 = vmatprep.subr.mxu0 0.0
    %1085 = vmatpush1.msra.mxu0 0.0
    %1086 = vmatprep.subr.mxu0 0.0
    %1087 = vmatpush1.msra.mxu0 0.0
    %1088 = vmatprep.subr.mxu0 0.0
    %1089 = vmatpush1.msra.mxu0 0.0
    %1090 = vmatprep.mubr.f32.mxu0 0.0
    %1091 = vmatmul.mubr.f32.gmra.mrb[0].mxu0 %v1021
    %v1092 = vpop.f32.mrb[0].mxu0
    %v1093 = vadd.f32 0.0, %v1092
    %v1094 = vpop.f32.mrb[0].mxu0
    %1095 = vmatprep.mubr.f32.mxu0 0.0
    %1096 = vmatmul.mubr.f32.gmra.mrb[0].mxu0 %v1024
    %v1097 = vpop.f32.mrb[0].mxu0
    %v1098 = vadd.f32 0.0, %v1097
    %v1099 = vpop.f32.mrb[0].mxu0
    %1100 = vdwg.mxu0
    %v1101 = vadd.f32 %v725, %v1093
    %v1102 = vadd.f32 %v726, %v1098
    %v1105 = vlaneseq
    %v1106 = vshrl.u32 %v1105, 7
    %v1107 = vsub.s32 0, %v1106
    %v1108 = vrot.slane %v1093, %v1107
    %1110 = vbcast.lane.b32.xlu0 %v1108, 256
    %v1111 = vpop.permute.xlu0 %1110
    %v1112 = vlaneseq
    %v1113 = vshrl.u32 %v1112, 7
    %v1114 = vsub.s32 1, %v1113
    %v1115 = vrot.slane %v1093, %v1114
    %1117 = vbcast.lane.b32.xlu0 %v1115, 256
    %v1118 = vpop.permute.xlu0 %1117
    %v1119 = vlaneseq
    %v1120 = vshrl.u32 %v1119, 7
    %v1121 = vsub.s32 2, %v1120
    %v1122 = vrot.slane %v1093, %v1121
    %1124 = vbcast.lane.b32.xlu0 %v1122, 256
    %v1125 = vpop.permute.xlu0 %1124
    %v1126 = vlaneseq
    %v1127 = vshrl.u32 %v1126, 7
    %v1128 = vsub.s32 3, %v1127
    %v1129 = vrot.slane %v1093, %v1128
    %1131 = vbcast.lane.b32.xlu0 %v1129, 256
    %v1132 = vpop.permute.xlu0 %1131
    %v1133 = vlaneseq
    %v1134 = vshrl.u32 %v1133, 7
    %v1135 = vsub.s32 4, %v1134
    %v1136 = vrot.slane %v1093, %v1135
    %1138 = vbcast.lane.b32.xlu0 %v1136, 256
    %v1139 = vpop.permute.xlu0 %1138
    %v1140 = vlaneseq
    %v1141 = vshrl.u32 %v1140, 7
    %v1142 = vsub.s32 5, %v1141
    %v1143 = vrot.slane %v1093, %v1142
    %1145 = vbcast.lane.b32.xlu0 %v1143, 256
    %v1146 = vpop.permute.xlu0 %1145
    %v1147 = vlaneseq
    %v1148 = vshrl.u32 %v1147, 7
    %v1149 = vsub.s32 6, %v1148
    %v1150 = vrot.slane %v1093, %v1149
    %1152 = vbcast.lane.b32.xlu0 %v1150, 256
    %v1153 = vpop.permute.xlu0 %1152
    %v1154 = vlaneseq
    %v1155 = vshrl.u32 %v1154, 7
    %v1156 = vsub.s32 7, %v1155
    %v1157 = vrot.slane %v1093, %v1156
    %1159 = vbcast.lane.b32.xlu0 %v1157, 256
    %v1160 = vpop.permute.xlu0 %1159
    %v1161 = vlaneseq
    %v1162 = vshrl.u32 %v1161, 7
    %v1163 = vsub.s32 0, %v1162
    %v1164 = vrot.slane %v1098, %v1163
    %1166 = vbcast.lane.b32.xlu0 %v1164, 256
    %v1167 = vpop.permute.xlu0 %1166
    %v1168 = vlaneseq
    %v1169 = vshrl.u32 %v1168, 7
    %v1170 = vsub.s32 1, %v1169
    %v1171 = vrot.slane %v1098, %v1170
    %1173 = vbcast.lane.b32.xlu0 %v1171, 256
    %v1174 = vpop.permute.xlu0 %1173
    %v1175 = vlaneseq
    %v1176 = vshrl.u32 %v1175, 7
    %v1177 = vsub.s32 2, %v1176
    %v1178 = vrot.slane %v1098, %v1177
    %1180 = vbcast.lane.b32.xlu0 %v1178, 256
    %v1181 = vpop.permute.xlu0 %1180
    %v1182 = vlaneseq
    %v1183 = vshrl.u32 %v1182, 7
    %v1184 = vsub.s32 3, %v1183
    %v1185 = vrot.slane %v1098, %v1184
    %1187 = vbcast.lane.b32.xlu0 %v1185, 256
    %v1188 = vpop.permute.xlu0 %1187
    %v1189 = vlaneseq
    %v1190 = vshrl.u32 %v1189, 7
    %v1191 = vsub.s32 4, %v1190
    %v1192 = vrot.slane %v1098, %v1191
    %1194 = vbcast.lane.b32.xlu0 %v1192, 256
    %v1195 = vpop.permute.xlu0 %1194
    %v1196 = vlaneseq
    %v1197 = vshrl.u32 %v1196, 7
    %v1198 = vsub.s32 5, %v1197
    %v1199 = vrot.slane %v1098, %v1198
    %1201 = vbcast.lane.b32.xlu0 %v1199, 256
    %v1202 = vpop.permute.xlu0 %1201
    %v1203 = vlaneseq
    %v1204 = vshrl.u32 %v1203, 7
    %v1205 = vsub.s32 6, %v1204
    %v1206 = vrot.slane %v1098, %v1205
    %1208 = vbcast.lane.b32.xlu0 %v1206, 256
    %v1209 = vpop.permute.xlu0 %1208
    %v1210 = vlaneseq
    %v1211 = vshrl.u32 %v1210, 7
    %v1212 = vsub.s32 7, %v1211
    %v1213 = vrot.slane %v1098, %v1212
    %1215 = vbcast.lane.b32.xlu0 %v1213, 256
    %v1216 = vpop.permute.xlu0 %1215
    %v1233 = vadd.f32 %v857, %v1111
    %v1234 = vadd.f32 %v858, %v1118
    %v1235 = vadd.f32 %v859, %v1125
    %v1236 = vadd.f32 %v860, %v1132
    %v1237 = vadd.f32 %v861, %v1139
    %v1238 = vadd.f32 %v862, %v1146
    %v1239 = vadd.f32 %v863, %v1153
    %v1240 = vadd.f32 %v864, %v1160
    %v1241 = vadd.f32 %v865, %v1167
    %v1242 = vadd.f32 %v866, %v1174
    %v1243 = vadd.f32 %v867, %v1181
    %v1244 = vadd.f32 %v868, %v1188
    %v1245 = vadd.f32 %v869, %v1195
    %v1246 = vadd.f32 %v870, %v1202
    %v1247 = vadd.f32 %v871, %v1209
    %v1248 = vadd.f32 %v872, %v1216
    %s1249 = scalar_lea.vmem %s4, 32
    %v1250 = vld [vmem:[%s1249] sm:$0xff]
    %v1251 = vld [vmem:[%s1249 + $0x8] sm:$0xff]
    %1268 = vset.pattern.permute.xlu0 0
    %1269 = vperm.xlu0 %1268, %v1233
    %v1270 = vpop.permute.xlu0 %1269
    %1271 = vset.pattern.permute.xlu0 0
    %1272 = vperm.xlu0 %1271, %v1234
    %v1273 = vpop.permute.xlu0 %1272
    %1274 = vset.pattern.permute.xlu0 0
    %1275 = vperm.xlu0 %1274, %v1235
    %v1276 = vpop.permute.xlu0 %1275
    %1277 = vset.pattern.permute.xlu0 0
    %1278 = vperm.xlu0 %1277, %v1236
    %v1279 = vpop.permute.xlu0 %1278
    %1280 = vset.pattern.permute.xlu0 0
    %1281 = vperm.xlu0 %1280, %v1237
    %v1282 = vpop.permute.xlu0 %1281
    %1283 = vset.pattern.permute.xlu0 0
    %1284 = vperm.xlu0 %1283, %v1238
    %v1285 = vpop.permute.xlu0 %1284
    %1286 = vset.pattern.permute.xlu0 0
    %1287 = vperm.xlu0 %1286, %v1239
    %v1288 = vpop.permute.xlu0 %1287
    %1289 = vset.pattern.permute.xlu0 0
    %1290 = vperm.xlu0 %1289, %v1240
    %v1291 = vpop.permute.xlu0 %1290
    %1292 = vset.pattern.permute.xlu0 0
    %1293 = vperm.xlu0 %1292, %v1241
    %v1294 = vpop.permute.xlu0 %1293
    %1295 = vset.pattern.permute.xlu0 0
    %1296 = vperm.xlu0 %1295, %v1242
    %v1297 = vpop.permute.xlu0 %1296
    %1298 = vset.pattern.permute.xlu0 0
    %1299 = vperm.xlu0 %1298, %v1243
    %v1300 = vpop.permute.xlu0 %1299
    %1301 = vset.pattern.permute.xlu0 0
    %1302 = vperm.xlu0 %1301, %v1244
    %v1303 = vpop.permute.xlu0 %1302
    %1304 = vset.pattern.permute.xlu0 0
    %1305 = vperm.xlu0 %1304, %v1245
    %v1306 = vpop.permute.xlu0 %1305
    %1307 = vset.pattern.permute.xlu0 0
    %1308 = vperm.xlu0 %1307, %v1246
    %v1309 = vpop.permute.xlu0 %1308
    %1310 = vset.pattern.permute.xlu0 0
    %1311 = vperm.xlu0 %1310, %v1247
    %v1312 = vpop.permute.xlu0 %1311
    %1313 = vset.pattern.permute.xlu0 0
    %1314 = vperm.xlu0 %1313, %v1248
    %v1315 = vpop.permute.xlu0 %1314
    %v1316 = vlaneseq
    %v1317 = vshrl.u32 %v1316, 7
    %v1318 = vsub.s32 %v555, %v1317
    %v1319 = vrot.slane %v1270, %v1318
    %v1320 = vlaneseq
    %v1321 = vshrl.u32 %v1320, 7
    %v1322 = vsub.s32 %v555, %v1321
    %v1323 = vrot.slane %v1273, %v1322
    %v1324 = vlaneseq
    %v1325 = vshrl.u32 %v1324, 7
    %v1326 = vsub.s32 %v555, %v1325
    %v1327 = vrot.slane %v1276, %v1326
    %v1328 = vlaneseq
    %v1329 = vshrl.u32 %v1328, 7
    %v1330 = vsub.s32 %v555, %v1329
    %v1331 = vrot.slane %v1279, %v1330
    %v1332 = vlaneseq
    %v1333 = vshrl.u32 %v1332, 7
    %v1334 = vsub.s32 %v555, %v1333
    %v1335 = vrot.slane %v1282, %v1334
    %v1336 = vlaneseq
    %v1337 = vshrl.u32 %v1336, 7
    %v1338 = vsub.s32 %v555, %v1337
    %v1339 = vrot.slane %v1285, %v1338
    %v1340 = vlaneseq
    %v1341 = vshrl.u32 %v1340, 7
    %v1342 = vsub.s32 %v555, %v1341
    %v1343 = vrot.slane %v1288, %v1342
    %v1344 = vlaneseq
    %v1345 = vshrl.u32 %v1344, 7
    %v1346 = vsub.s32 %v555, %v1345
    %v1347 = vrot.slane %v1291, %v1346
    %v1348 = vlaneseq
    %v1349 = vshrl.u32 %v1348, 7
    %v1350 = vsub.s32 %v555, %v1349
    %v1351 = vrot.slane %v1294, %v1350
    %v1352 = vlaneseq
    %v1353 = vshrl.u32 %v1352, 7
    %v1354 = vsub.s32 %v555, %v1353
    %v1355 = vrot.slane %v1297, %v1354
    %v1356 = vlaneseq
    %v1357 = vshrl.u32 %v1356, 7
    %v1358 = vsub.s32 %v555, %v1357
    %v1359 = vrot.slane %v1300, %v1358
    %v1360 = vlaneseq
    %v1361 = vshrl.u32 %v1360, 7
    %v1362 = vsub.s32 %v555, %v1361
    %v1363 = vrot.slane %v1303, %v1362
    %v1364 = vlaneseq
    %v1365 = vshrl.u32 %v1364, 7
    %v1366 = vsub.s32 %v555, %v1365
    %v1367 = vrot.slane %v1306, %v1366
    %v1368 = vlaneseq
    %v1369 = vshrl.u32 %v1368, 7
    %v1370 = vsub.s32 %v555, %v1369
    %v1371 = vrot.slane %v1309, %v1370
    %v1372 = vlaneseq
    %v1373 = vshrl.u32 %v1372, 7
    %v1374 = vsub.s32 %v555, %v1373
    %v1375 = vrot.slane %v1312, %v1374
    %v1376 = vlaneseq
    %v1377 = vshrl.u32 %v1376, 7
    %v1378 = vsub.s32 %v555, %v1377
    %v1379 = vrot.slane %v1315, %v1378
    %v1380 = vsel %vm620, %v1323, %v1319
    %v1381 = vsel %vm622, %v1327, %v1380
    %v1382 = vsel %vm624, %v1331, %v1381
    %v1383 = vsel %vm626, %v1335, %v1382
    %v1384 = vsel %vm628, %v1339, %v1383
    %v1385 = vsel %vm630, %v1343, %v1384
    %v1386 = vsel %vm632, %v1347, %v1385
    %v1387 = vsel %vm620, %v1355, %v1351
    %v1388 = vsel %vm622, %v1359, %v1387
    %v1389 = vsel %vm624, %v1363, %v1388
    %v1390 = vsel %vm626, %v1367, %v1389
    %v1391 = vsel %vm628, %v1371, %v1390
    %v1392 = vsel %vm630, %v1375, %v1391
    %v1393 = vsel %vm632, %v1379, %v1392
    %v1397 = vsel %vm643, %v1250, 0
    %v1400 = vsel %vm643, %v1251, 0
    %1402 = vmatprep.subr.mxu0 0.0
    %1403 = vmatpush1.msra.mxu0 %v1386
    %1404 = vmatprep.subr.mxu0 0.0
    %1405 = vmatpush1.msra.mxu0 %v1393
    %1406 = vmatprep.subr.mxu0 0.0
    %1407 = vmatpush1.msra.mxu0 0.0
    %1408 = vmatprep.subr.mxu0 0.0
    %1409 = vmatpush1.msra.mxu0 0.0
    %1410 = vmatprep.subr.mxu0 0.0
    %1411 = vmatpush1.msra.mxu0 0.0
    %1412 = vmatprep.subr.mxu0 0.0
    %1413 = vmatpush1.msra.mxu0 0.0
    %1414 = vmatprep.subr.mxu0 0.0
    %1415 = vmatpush1.msra.mxu0 0.0
    %1416 = vmatprep.subr.mxu0 0.0
    %1417 = vmatpush1.msra.mxu0 0.0
    %1418 = vmatprep.subr.mxu0 0.0
    %1419 = vmatpush1.msra.mxu0 0.0
    %1420 = vmatprep.subr.mxu0 0.0
    %1421 = vmatpush1.msra.mxu0 0.0
    %1422 = vmatprep.subr.mxu0 0.0
    %1423 = vmatpush1.msra.mxu0 0.0
    %1424 = vmatprep.subr.mxu0 0.0
    %1425 = vmatpush1.msra.mxu0 0.0
    %1426 = vmatprep.subr.mxu0 0.0
    %1427 = vmatpush1.msra.mxu0 0.0
    %1428 = vmatprep.subr.mxu0 0.0
    %1429 = vmatpush1.msra.mxu0 0.0
    %1430 = vmatprep.subr.mxu0 0.0
    %1431 = vmatpush1.msra.mxu0 0.0
    %1432 = vmatprep.subr.mxu0 0.0
    %1433 = vmatpush1.msra.mxu0 0.0
    %1434 = vmatprep.subr.mxu0 0.0
    %1435 = vmatpush1.msra.mxu0 0.0
    %1436 = vmatprep.subr.mxu0 0.0
    %1437 = vmatpush1.msra.mxu0 0.0
    %1438 = vmatprep.subr.mxu0 0.0
    %1439 = vmatpush1.msra.mxu0 0.0
    %1440 = vmatprep.subr.mxu0 0.0
    %1441 = vmatpush1.msra.mxu0 0.0
    %1442 = vmatprep.subr.mxu0 0.0
    %1443 = vmatpush1.msra.mxu0 0.0
    %1444 = vmatprep.subr.mxu0 0.0
    %1445 = vmatpush1.msra.mxu0 0.0
    %1446 = vmatprep.subr.mxu0 0.0
    %1447 = vmatpush1.msra.mxu0 0.0
    %1448 = vmatprep.subr.mxu0 0.0
    %1449 = vmatpush1.msra.mxu0 0.0
    %1450 = vmatprep.subr.mxu0 0.0
    %1451 = vmatpush1.msra.mxu0 0.0
    %1452 = vmatprep.subr.mxu0 0.0
    %1453 = vmatpush1.msra.mxu0 0.0
    %1454 = vmatprep.subr.mxu0 0.0
    %1455 = vmatpush1.msra.mxu0 0.0
    %1456 = vmatprep.subr.mxu0 0.0
    %1457 = vmatpush1.msra.mxu0 0.0
    %1458 = vmatprep.subr.mxu0 0.0
    %1459 = vmatpush1.msra.mxu0 0.0
    %1460 = vmatprep.subr.mxu0 0.0
    %1461 = vmatpush1.msra.mxu0 0.0
    %1462 = vmatprep.subr.mxu0 0.0
    %1463 = vmatpush1.msra.mxu0 0.0
    %1464 = vmatprep.subr.mxu0 0.0
    %1465 = vmatpush1.msra.mxu0 0.0
    %1466 = vmatprep.mubr.f32.mxu0 0.0
    %1467 = vmatmul.mubr.f32.gmra.mrb[0].mxu0 %v1397
    %v1468 = vpop.f32.mrb[0].mxu0
    %v1469 = vadd.f32 0.0, %v1468
    %v1470 = vpop.f32.mrb[0].mxu0
    %1471 = vmatprep.mubr.f32.mxu0 0.0
    %1472 = vmatmul.mubr.f32.gmra.mrb[0].mxu0 %v1400
    %v1473 = vpop.f32.mrb[0].mxu0
    %v1474 = vadd.f32 0.0, %v1473
    %v1475 = vpop.f32.mrb[0].mxu0
    %1476 = vdwg.mxu0
    %v1477 = vadd.f32 %v1101, %v1469
    %v1478 = vadd.f32 %v1102, %v1474
    %v1479 = vlaneseq
    %v1480 = vshrl.u32 %v1479, 7
    %v1481 = vsub.s32 0, %v1480
    %v1482 = vrot.slane %v1477, %v1481
    %1484 = vbcast.lane.b32.xlu0 %v1482, 256
    %v1485 = vpop.permute.xlu0 %1484
    %v1486 = vlaneseq
    %v1487 = vshrl.u32 %v1486, 7
    %v1488 = vsub.s32 1, %v1487
    %v1489 = vrot.slane %v1477, %v1488
    %1491 = vbcast.lane.b32.xlu0 %v1489, 256
    %v1492 = vpop.permute.xlu0 %1491
    %v1493 = vlaneseq
    %v1494 = vshrl.u32 %v1493, 7
    %v1495 = vsub.s32 2, %v1494
    %v1496 = vrot.slane %v1477, %v1495
    %1498 = vbcast.lane.b32.xlu0 %v1496, 256
    %v1499 = vpop.permute.xlu0 %1498
    %v1500 = vlaneseq
    %v1501 = vshrl.u32 %v1500, 7
    %v1502 = vsub.s32 3, %v1501
    %v1503 = vrot.slane %v1477, %v1502
    %1505 = vbcast.lane.b32.xlu0 %v1503, 256
    %v1506 = vpop.permute.xlu0 %1505
    %v1507 = vlaneseq
    %v1508 = vshrl.u32 %v1507, 7
    %v1509 = vsub.s32 4, %v1508
    %v1510 = vrot.slane %v1477, %v1509
    %1512 = vbcast.lane.b32.xlu0 %v1510, 256
    %v1513 = vpop.permute.xlu0 %1512
    %v1514 = vlaneseq
    %v1515 = vshrl.u32 %v1514, 7
    %v1516 = vsub.s32 5, %v1515
    %v1517 = vrot.slane %v1477, %v1516
    %1519 = vbcast.lane.b32.xlu0 %v1517, 256
    %v1520 = vpop.permute.xlu0 %1519
    %v1521 = vlaneseq
    %v1522 = vshrl.u32 %v1521, 7
    %v1523 = vsub.s32 6, %v1522
    %v1524 = vrot.slane %v1477, %v1523
    %1526 = vbcast.lane.b32.xlu0 %v1524, 256
    %v1527 = vpop.permute.xlu0 %1526
    %v1528 = vlaneseq
    %v1529 = vshrl.u32 %v1528, 7
    %v1530 = vsub.s32 7, %v1529
    %v1531 = vrot.slane %v1477, %v1530
    %1533 = vbcast.lane.b32.xlu0 %v1531, 256
    %v1534 = vpop.permute.xlu0 %1533
    %v1535 = vlaneseq
    %v1536 = vshrl.u32 %v1535, 7
    %v1537 = vsub.s32 0, %v1536
    %v1538 = vrot.slane %v1478, %v1537
    %1540 = vbcast.lane.b32.xlu0 %v1538, 256
    %v1541 = vpop.permute.xlu0 %1540
    %v1542 = vlaneseq
    %v1543 = vshrl.u32 %v1542, 7
    %v1544 = vsub.s32 1, %v1543
    %v1545 = vrot.slane %v1478, %v1544
    %1547 = vbcast.lane.b32.xlu0 %v1545, 256
    %v1548 = vpop.permute.xlu0 %1547
    %v1549 = vlaneseq
    %v1550 = vshrl.u32 %v1549, 7
    %v1551 = vsub.s32 2, %v1550
    %v1552 = vrot.slane %v1478, %v1551
    %1554 = vbcast.lane.b32.xlu0 %v1552, 256
    %v1555 = vpop.permute.xlu0 %1554
    %v1556 = vlaneseq
    %v1557 = vshrl.u32 %v1556, 7
    %v1558 = vsub.s32 3, %v1557
    %v1559 = vrot.slane %v1478, %v1558
    %1561 = vbcast.lane.b32.xlu0 %v1559, 256
    %v1562 = vpop.permute.xlu0 %1561
    %v1563 = vlaneseq
    %v1564 = vshrl.u32 %v1563, 7
    %v1565 = vsub.s32 4, %v1564
    %v1566 = vrot.slane %v1478, %v1565
    %1568 = vbcast.lane.b32.xlu0 %v1566, 256
    %v1569 = vpop.permute.xlu0 %1568
    %v1570 = vlaneseq
    %v1571 = vshrl.u32 %v1570, 7
    %v1572 = vsub.s32 5, %v1571
    %v1573 = vrot.slane %v1478, %v1572
    %1575 = vbcast.lane.b32.xlu0 %v1573, 256
    %v1576 = vpop.permute.xlu0 %1575
    %v1577 = vlaneseq
    %v1578 = vshrl.u32 %v1577, 7
    %v1579 = vsub.s32 6, %v1578
    %v1580 = vrot.slane %v1478, %v1579
    %1582 = vbcast.lane.b32.xlu0 %v1580, 256
    %v1583 = vpop.permute.xlu0 %1582
    %v1584 = vlaneseq
    %v1585 = vshrl.u32 %v1584, 7
    %v1586 = vsub.s32 7, %v1585
    %v1587 = vrot.slane %v1478, %v1586
    %1589 = vbcast.lane.b32.xlu0 %v1587, 256
    %v1590 = vpop.permute.xlu0 %1589
    %v1591 = vadd.f32 %v454, %v1485
    %v1592 = vadd.f32 %v455, %v1492
    %v1593 = vadd.f32 %v456, %v1499
    %v1594 = vadd.f32 %v457, %v1506
    %v1595 = vadd.f32 %v458, %v1513
    %v1596 = vadd.f32 %v459, %v1520
    %v1597 = vadd.f32 %v460, %v1527
    %v1598 = vadd.f32 %v461, %v1534
    %v1599 = vadd.f32 %v462, %v1541
    %v1600 = vadd.f32 %v463, %v1548
    %v1601 = vadd.f32 %v464, %v1555
    %v1602 = vadd.f32 %v465, %v1562
    %v1603 = vadd.f32 %v466, %v1569
    %v1604 = vadd.f32 %v467, %v1576
    %v1605 = vadd.f32 %v468, %v1583
    %v1606 = vadd.f32 %v469, %v1590
    %v1607 = vcombine.low %v1591, %v1593
    %v1609 = vunpack.c.l.s4 1983009808
    %v1610 = vunpack.c.0.s8 %v1609
    %v1611 = vlaneseq
    %v1612 = vshrl.u32 %v1611, 7
    %v1613 = vsub.s32 %v1610, %v1612
    %v1614 = vrot.slane %v1607, %v1613
    %v1615 = vcombine.low %v1592, %v1594
    %v1617 = vunpack.c.l.s4 1983009808
    %v1618 = vunpack.c.0.s8 %v1617
    %v1619 = vlaneseq
    %v1620 = vshrl.u32 %v1619, 7
    %v1621 = vsub.s32 %v1618, %v1620
    %v1622 = vrot.slane %v1615, %v1621
    %v1623 = vcombine.low %v1595, %v1597
    %v1625 = vunpack.c.l.s4 1983009808
    %v1626 = vunpack.c.0.s8 %v1625
    %v1627 = vlaneseq
    %v1628 = vshrl.u32 %v1627, 7
    %v1629 = vsub.s32 %v1626, %v1628
    %v1630 = vrot.slane %v1623, %v1629
    %v1631 = vcombine.low %v1596, %v1598
    %v1633 = vunpack.c.l.s4 1983009808
    %v1634 = vunpack.c.0.s8 %v1633
    %v1635 = vlaneseq
    %v1636 = vshrl.u32 %v1635, 7
    %v1637 = vsub.s32 %v1634, %v1636
    %v1638 = vrot.slane %v1631, %v1637
    %v1639 = vcombine.low %v1614, %v1622
    %v1641 = vunpack.c.l.s4 1934713408
    %v1642 = vunpack.c.0.s8 %v1641
    %v1643 = vlaneseq
    %v1644 = vshrl.u32 %v1643, 7
    %v1645 = vsub.s32 %v1642, %v1644
    %v1646 = vrot.slane %v1639, %v1645
    %v1647 = vcombine.low %v1630, %v1638
    %v1649 = vunpack.c.l.s4 1934713408
    %v1650 = vunpack.c.0.s8 %v1649
    %v1651 = vlaneseq
    %v1652 = vshrl.u32 %v1651, 7
    %v1653 = vsub.s32 %v1650, %v1652
    %v1654 = vrot.slane %v1647, %v1653
    %v1655 = vcombine.low %v1646, %v1654
    %v1656 = vcombine.high %v1646, %v1654
    %v1657 = vcombine.low %v1599, %v1601
    %v1659 = vunpack.c.l.s4 1983009808
    %v1660 = vunpack.c.0.s8 %v1659
    %v1661 = vlaneseq
    %v1662 = vshrl.u32 %v1661, 7
    %v1663 = vsub.s32 %v1660, %v1662
    %v1664 = vrot.slane %v1657, %v1663
    %v1665 = vcombine.low %v1600, %v1602
    %v1667 = vunpack.c.l.s4 1983009808
    %v1668 = vunpack.c.0.s8 %v1667
    %v1669 = vlaneseq
    %v1670 = vshrl.u32 %v1669, 7
    %v1671 = vsub.s32 %v1668, %v1670
    %v1672 = vrot.slane %v1665, %v1671
    %v1673 = vcombine.low %v1603, %v1605
    %v1675 = vunpack.c.l.s4 1983009808
    %v1676 = vunpack.c.0.s8 %v1675
    %v1677 = vlaneseq
    %v1678 = vshrl.u32 %v1677, 7
    %v1679 = vsub.s32 %v1676, %v1678
    %v1680 = vrot.slane %v1673, %v1679
    %v1681 = vcombine.low %v1604, %v1606
    %v1683 = vunpack.c.l.s4 1983009808
    %v1684 = vunpack.c.0.s8 %v1683
    %v1685 = vlaneseq
    %v1686 = vshrl.u32 %v1685, 7
    %v1687 = vsub.s32 %v1684, %v1686
    %v1688 = vrot.slane %v1681, %v1687
    %v1689 = vcombine.low %v1664, %v1672
    %v1691 = vunpack.c.l.s4 1934713408
    %v1692 = vunpack.c.0.s8 %v1691
    %v1693 = vlaneseq
    %v1694 = vshrl.u32 %v1693, 7
    %v1695 = vsub.s32 %v1692, %v1694
    %v1696 = vrot.slane %v1689, %v1695
    %v1697 = vcombine.low %v1680, %v1688
    %v1699 = vunpack.c.l.s4 1934713408
    %v1700 = vunpack.c.0.s8 %v1699
    %v1701 = vlaneseq
    %v1702 = vshrl.u32 %v1701, 7
    %v1703 = vsub.s32 %v1700, %v1702
    %v1704 = vrot.slane %v1697, %v1703
    %v1705 = vcombine.low %v1696, %v1704
    %v1706 = vcombine.high %v1696, %v1704
    %vm1707 = vcmask 261120
    %1708 = vst.msk [vmem:[#allocation27] sm:$0xff] %vm1707, %v1655
    %1709 = vst.msk [vmem:[#allocation27 + $0x8] sm:$0xff] %vm1707, %v1705
    %1710 = vst.msk [vmem:[#allocation27 + $0x10] sm:$0xff] %vm1707, %v1656
    %1711 = vst.msk [vmem:[#allocation27 + $0x18] sm:$0xff] %vm1707, %v1706
    %v1712 = vld [vmem:[#allocation9] sm:$0x1]
    %v1714 = vlaneseq
    %v1715 = vshrl.u32 %v1714, 7
    %v1716 = vsub.s32 0, %v1715
    %v1717 = vrot.slane %v1712, %v1716
    %v1718 = vcombine.high %v1717, %v1717
    %v1720 = vunpack.c.l.s4 1983009808
    %v1721 = vunpack.c.0.s8 %v1720
    %v1722 = vlaneseq
    %v1723 = vshrl.u32 %v1722, 7
    %v1724 = vsub.s32 %v1721, %v1723
    %v1725 = vrot.slane %v1717, %v1724
    %v1727 = vunpack.c.l.s4 1983009808
    %v1728 = vunpack.c.0.s8 %v1727
    %v1729 = vlaneseq
    %v1730 = vshrl.u32 %v1729, 7
    %v1731 = vsub.s32 %v1728, %v1730
    %v1732 = vrot.slane %v1718, %v1731
    %v1733 = vcombine.high %v1725, %v1725
    %v1734 = vcombine.high %v1732, %v1732
    %v1739 = vadd.f32 %v454, %v1725
    %v1740 = vadd.f32 %v455, %v1733
    %v1741 = vadd.f32 %v456, %v1732
    %v1742 = vadd.f32 %v457, %v1734
    %v1743 = vadd.f32 %v458, %v1725
    %v1744 = vadd.f32 %v459, %v1733
    %v1745 = vadd.f32 %v460, %v1732
    %v1746 = vadd.f32 %v461, %v1734
    %v1747 = vadd.f32 %v462, %v1725
    %v1748 = vadd.f32 %v463, %v1733
    %v1749 = vadd.f32 %v464, %v1732
    %v1750 = vadd.f32 %v465, %v1734
    %v1751 = vadd.f32 %v466, %v1725
    %v1752 = vadd.f32 %v467, %v1733
    %v1753 = vadd.f32 %v468, %v1732
    %v1754 = vadd.f32 %v469, %v1734
    %v1771 = vcombine.low %v1739, %v1740
    %v1772 = vcombine.low %v1741, %v1742
    %v1774 = vunpack.c.l.s4 1983009808
    %v1775 = vunpack.c.0.s8 %v1774
    %v1776 = vlaneseq
    %v1777 = vshrl.u32 %v1776, 7
    %v1778 = vsub.s32 %v1775, %v1777
    %v1779 = vrot.slane %v1771, %v1778
    %v1781 = vunpack.c.l.s4 1983009808
    %v1782 = vunpack.c.0.s8 %v1781
    %v1783 = vlaneseq
    %v1784 = vshrl.u32 %v1783, 7
    %v1785 = vsub.s32 %v1782, %v1784
    %v1786 = vrot.slane %v1772, %v1785
    %v1787 = vcombine.low %v1779, %v1786
    %v1788 = vcombine.low %v1743, %v1744
    %v1789 = vcombine.low %v1745, %v1746
    %v1791 = vunpack.c.l.s4 1983009808
    %v1792 = vunpack.c.0.s8 %v1791
    %v1793 = vlaneseq
    %v1794 = vshrl.u32 %v1793, 7
    %v1795 = vsub.s32 %v1792, %v1794
    %v1796 = vrot.slane %v1788, %v1795
    %v1798 = vunpack.c.l.s4 1983009808
    %v1799 = vunpack.c.0.s8 %v1798
    %v1800 = vlaneseq
    %v1801 = vshrl.u32 %v1800, 7
    %v1802 = vsub.s32 %v1799, %v1801
    %v1803 = vrot.slane %v1789, %v1802
    %v1804 = vcombine.low %v1796, %v1803
    %v1805 = vcombine.low %v1747, %v1748
    %v1806 = vcombine.low %v1749, %v1750
    %v1808 = vunpack.c.l.s4 1983009808
    %v1809 = vunpack.c.0.s8 %v1808
    %v1810 = vlaneseq
    %v1811 = vshrl.u32 %v1810, 7
    %v1812 = vsub.s32 %v1809, %v1811
    %v1813 = vrot.slane %v1805, %v1812
    %v1815 = vunpack.c.l.s4 1983009808
    %v1816 = vunpack.c.0.s8 %v1815
    %v1817 = vlaneseq
    %v1818 = vshrl.u32 %v1817, 7
    %v1819 = vsub.s32 %v1816, %v1818
    %v1820 = vrot.slane %v1806, %v1819
    %v1821 = vcombine.low %v1813, %v1820
    %v1822 = vcombine.low %v1751, %v1752
    %v1823 = vcombine.low %v1753, %v1754
    %v1825 = vunpack.c.l.s4 1983009808
    %v1826 = vunpack.c.0.s8 %v1825
    %v1827 = vlaneseq
    %v1828 = vshrl.u32 %v1827, 7
    %v1829 = vsub.s32 %v1826, %v1828
    %v1830 = vrot.slane %v1822, %v1829
    %v1832 = vunpack.c.l.s4 1983009808
    %v1833 = vunpack.c.0.s8 %v1832
    %v1834 = vlaneseq
    %v1835 = vshrl.u32 %v1834, 7
    %v1836 = vsub.s32 %v1833, %v1835
    %v1837 = vrot.slane %v1823, %v1836
    %v1838 = vcombine.low %v1830, %v1837
    %1843 = vst.msk [vmem:[#allocation2] sm:$0xff] %vm1707, %v1787
    %1844 = vst.msk [vmem:[#allocation2 + $0x8] sm:$0xff] %vm1707, %v1804
    %1845 = vst.msk [vmem:[#allocation2 + $0x10] sm:$0xff] %vm1707, %v1821
    %1846 = vst.msk [vmem:[#allocation2 + $0x18] sm:$0xff] %vm1707, %v1838
    %v1847 = vld [vmem:[#allocation2 + $0x2] sm:$0xff]
    %v1848 = vld [vmem:[#allocation2 + $0xa] sm:$0xff]
    %v1849 = vld [vmem:[#allocation2 + $0x12] sm:$0xff]
    %v1850 = vld [vmem:[#allocation2 + $0x1a] sm:$0x3f]
    %v1851 = vld [vmem:[#allocation7] sm:$0xff]
    %v1852 = vld [vmem:[#allocation7 + $0x8] sm:$0xff]
    %v1853 = vld [vmem:[#allocation7 + $0x10] sm:$0xff]
    %v1854 = vld [vmem:[#allocation7 + $0x18] sm:$0xff]
    %v1870 = vcombine.low %v454, %v455
    %v1871 = vcombine.low %v456, %v457
    %v1873 = vunpack.c.l.s4 1983009808
    %v1874 = vunpack.c.0.s8 %v1873
    %v1875 = vlaneseq
    %v1876 = vshrl.u32 %v1875, 7
    %v1877 = vsub.s32 %v1874, %v1876
    %v1878 = vrot.slane %v1870, %v1877
    %v1880 = vunpack.c.l.s4 1983009808
    %v1881 = vunpack.c.0.s8 %v1880
    %v1882 = vlaneseq
    %v1883 = vshrl.u32 %v1882, 7
    %v1884 = vsub.s32 %v1881, %v1883
    %v1885 = vrot.slane %v1871, %v1884
    %v1886 = vcombine.low %v1878, %v1885
    %v1887 = vcombine.low %v458, %v459
    %v1888 = vcombine.low %v460, %v461
    %v1890 = vunpack.c.l.s4 1983009808
    %v1891 = vunpack.c.0.s8 %v1890
    %v1892 = vlaneseq
    %v1893 = vshrl.u32 %v1892, 7
    %v1894 = vsub.s32 %v1891, %v1893
    %v1895 = vrot.slane %v1887, %v1894
    %v1897 = vunpack.c.l.s4 1983009808
    %v1898 = vunpack.c.0.s8 %v1897
    %v1899 = vlaneseq
    %v1900 = vshrl.u32 %v1899, 7
    %v1901 = vsub.s32 %v1898, %v1900
    %v1902 = vrot.slane %v1888, %v1901
    %v1903 = vcombine.low %v1895, %v1902
    %v1904 = vcombine.low %v462, %v463
    %v1905 = vcombine.low %v464, %v465
    %v1907 = vunpack.c.l.s4 1983009808
    %v1908 = vunpack.c.0.s8 %v1907
    %v1909 = vlaneseq
    %v1910 = vshrl.u32 %v1909, 7
    %v1911 = vsub.s32 %v1908, %v1910
    %v1912 = vrot.slane %v1904, %v1911
    %v1914 = vunpack.c.l.s4 1983009808
    %v1915 = vunpack.c.0.s8 %v1914
    %v1916 = vlaneseq
    %v1917 = vshrl.u32 %v1916, 7
    %v1918 = vsub.s32 %v1915, %v1917
    %v1919 = vrot.slane %v1905, %v1918
    %v1920 = vcombine.low %v1912, %v1919
    %v1921 = vcombine.low %v466, %v467
    %v1923 = vunpack.c.l.s4 1983009808
    %v1924 = vunpack.c.0.s8 %v1923
    %v1925 = vlaneseq
    %v1926 = vshrl.u32 %v1925, 7
    %v1927 = vsub.s32 %v1924, %v1926
    %v1928 = vrot.slane %v1921, %v1927
    %v1930 = vunpack.c.l.s4 1983009808
    %v1931 = vunpack.c.0.s8 %v1930
    %v1932 = vlaneseq
    %v1933 = vshrl.u32 %v1932, 7
    %v1934 = vsub.s32 %v1931, %v1933
    %v1935 = vrot.slane %v468, %v1934
    %v1936 = vcombine.low %v1928, %v1935
    %v1937 = vsel %vm1707, %v1886, 0
    %v1939 = vsel %vm1707, %v1903, 0
    %v1941 = vsel %vm1707, %v1920, 0
    %v1943 = vsel %vm1707, %v1936, 0
    %1945 = vmatprep.subr.mxu0 0.0
    %1946 = vmatpush1.msra.mxu0 %v1851
    %1947 = vmatprep.subr.mxu0 0.0
    %1948 = vmatpush1.msra.mxu0 %v1852
    %1949 = vmatprep.subr.mxu0 0.0
    %1950 = vmatpush1.msra.mxu0 %v1853
    %1951 = vmatprep.subr.mxu0 0.0
    %1952 = vmatpush1.msra.mxu0 %v1854
    %1953 = vmatprep.subr.mxu0 0.0
    %1954 = vmatpush1.msra.mxu0 0.0
    %1955 = vmatprep.subr.mxu0 0.0
    %1956 = vmatpush1.msra.mxu0 0.0
    %1957 = vmatprep.subr.mxu0 0.0
    %1958 = vmatpush1.msra.mxu0 0.0
    %1959 = vmatprep.subr.mxu0 0.0
    %1960 = vmatpush1.msra.mxu0 0.0
    %1961 = vmatprep.subr.mxu0 0.0
    %1962 = vmatpush1.msra.mxu0 0.0
    %1963 = vmatprep.subr.mxu0 0.0
    %1964 = vmatpush1.msra.mxu0 0.0
    %1965 = vmatprep.subr.mxu0 0.0
    %1966 = vmatpush1.msra.mxu0 0.0
    %1967 = vmatprep.subr.mxu0 0.0
    %1968 = vmatpush1.msra.mxu0 0.0
    %1969 = vmatprep.subr.mxu0 0.0
    %1970 = vmatpush1.msra.mxu0 0.0
    %1971 = vmatprep.subr.mxu0 0.0
    %1972 = vmatpush1.msra.mxu0 0.0
    %1973 = vmatprep.subr.mxu0 0.0
    %1974 = vmatpush1.msra.mxu0 0.0
    %1975 = vmatprep.subr.mxu0 0.0
    %1976 = vmatpush1.msra.mxu0 0.0
    %1977 = vmatprep.subr.mxu0 0.0
    %1978 = vmatpush1.msra.mxu0 0.0
    %1979 = vmatprep.subr.mxu0 0.0
    %1980 = vmatpush1.msra.mxu0 0.0
    %1981 = vmatprep.subr.mxu0 0.0
    %1982 = vmatpush1.msra.mxu0 0.0
    %1983 = vmatprep.subr.mxu0 0.0
    %1984 = vmatpush1.msra.mxu0 0.0
    %1985 = vmatprep.subr.mxu0 0.0
    %1986 = vmatpush1.msra.mxu0 0.0
    %1987 = vmatprep.subr.mxu0 0.0
    %1988 = vmatpush1.msra.mxu0 0.0
    %1989 = vmatprep.subr.mxu0 0.0
    %1990 = vmatpush1.msra.mxu0 0.0
    %1991 = vmatprep.subr.mxu0 0.0
    %1992 = vmatpush1.msra.mxu0 0.0
    %1993 = vmatprep.subr.mxu0 0.0
    %1994 = vmatpush1.msra.mxu0 0.0
    %1995 = vmatprep.subr.mxu0 0.0
    %1996 = vmatpush1.msra.mxu0 0.0
    %1997 = vmatprep.subr.mxu0 0.0
    %1998 = vmatpush1.msra.mxu0 0.0
    %1999 = vmatprep.subr.mxu0 0.0
    %2000 = vmatpush1.msra.mxu0 0.0
    %2001 = vmatprep.subr.mxu0 0.0
    %2002 = vmatpush1.msra.mxu0 0.0
    %2003 = vmatprep.subr.mxu0 0.0
    %2004 = vmatpush1.msra.mxu0 0.0
    %2005 = vmatprep.subr.mxu0 0.0
    %2006 = vmatpush1.msra.mxu0 0.0
    %2007 = vmatprep.subr.mxu0 0.0
    %2008 = vmatpush1.msra.mxu0 0.0
    %2009 = vmatprep.mubr.f32.mxu0 0.0
    %2010 = vmatmul.mubr.f32.gmra.mrb[0].mxu0 %v1937
    %v2011 = vpop.f32.mrb[0].mxu0
    %v2012 = vadd.f32 0.0, %v2011
    %v2013 = vpop.f32.mrb[0].mxu0
    %2014 = vmatprep.mubr.f32.mxu0 0.0
    %2015 = vmatmul.mubr.f32.gmra.mrb[0].mxu0 %v1939
    %v2016 = vpop.f32.mrb[0].mxu0
    %v2017 = vadd.f32 0.0, %v2016
    %v2018 = vpop.f32.mrb[0].mxu0
    %2019 = vmatprep.mubr.f32.mxu0 0.0
    %2020 = vmatmul.mubr.f32.gmra.mrb[0].mxu0 %v1941
    %v2021 = vpop.f32.mrb[0].mxu0
    %v2022 = vadd.f32 0.0, %v2021
    %v2023 = vpop.f32.mrb[0].mxu0
    %2024 = vmatprep.mubr.f32.mxu0 0.0
    %2025 = vmatmul.mubr.f32.gmra.mrb[0].mxu0 %v1943
    %v2026 = vpop.f32.mrb[0].mxu0
    %v2027 = vadd.f32 0.0, %v2026
    %v2028 = vpop.f32.mrb[0].mxu0
    %2029 = vdwg.mxu0
    %v2030 = vadd.f32 %v1847, %v2012
    %v2031 = vadd.f32 %v1848, %v2017
    %v2032 = vadd.f32 %v1849, %v2022
    %v2033 = vadd.f32 %v1850, %v2027
    %2034 = vst.msk [vmem:[#allocation2 + $0x2] sm:$0xff] %vm1707, %v2030
    %2035 = vst.msk [vmem:[#allocation2 + $0xa] sm:$0xff] %vm1707, %v2031
    %2036 = vst.msk [vmem:[#allocation2 + $0x12] sm:$0xff] %vm1707, %v2032
    %vm2037 = vcmask 259072
    %2038 = vst.msk [vmem:[#allocation2 + $0x1a] sm:$0x3f] %vm2037, %v2033
    %v2039 = vld [vmem:[#allocation2] sm:$0xff]
    %v2040 = vld [vmem:[#allocation2 + $0x8] sm:$0xff]
    %v2041 = vld [vmem:[#allocation2 + $0x10] sm:$0xff]
    %v2042 = vld [vmem:[#allocation2 + $0x18] sm:$0xff]
    %s2043 = scalar_lea.vmem [#allocation7], 32
    %v2044 = vld [vmem:[%s2043] sm:$0xff]
    %v2045 = vld [vmem:[%s2043 + $0x8] sm:$0xff]
    %v2046 = vld [vmem:[%s2043 + $0x10] sm:$0xff]
    %v2047 = vld [vmem:[%s2043 + $0x18] sm:$0xff]
    %v2049 = vcombine.low %v468, %v469
    %v2051 = vunpack.c.l.s4 1983009808
    %v2052 = vunpack.c.0.s8 %v2051
    %v2053 = vlaneseq
    %v2054 = vshrl.u32 %v2053, 7
    %v2055 = vsub.s32 %v2052, %v2054
    %v2056 = vrot.slane %v2049, %v2055
    %v2057 = vcombine.low %v1928, %v2056
    %v2058 = vsel %vm1707, %v2057, 0
    %2060 = vmatprep.subr.mxu0 0.0
    %2061 = vmatpush1.msra.mxu0 %v2044
    %2062 = vmatprep.subr.mxu0 0.0
    %2063 = vmatpush1.msra.mxu0 %v2045
    %2064 = vmatprep.subr.mxu0 0.0
    %2065 = vmatpush1.msra.mxu0 %v2046
    %2066 = vmatprep.subr.mxu0 0.0
    %2067 = vmatpush1.msra.mxu0 %v2047
    %2068 = vmatprep.subr.mxu0 0.0
    %2069 = vmatpush1.msra.mxu0 0.0
    %2070 = vmatprep.subr.mxu0 0.0
    %2071 = vmatpush1.msra.mxu0 0.0
    %2072 = vmatprep.subr.mxu0 0.0
    %2073 = vmatpush1.msra.mxu0 0.0
    %2074 = vmatprep.subr.mxu0 0.0
    %2075 = vmatpush1.msra.mxu0 0.0
    %2076 = vmatprep.subr.mxu0 0.0
    %2077 = vmatpush1.msra.mxu0 0.0
    %2078 = vmatprep.subr.mxu0 0.0
    %2079 = vmatpush1.msra.mxu0 0.0
    %2080 = vmatprep.subr.mxu0 0.0
    %2081 = vmatpush1.msra.mxu0 0.0
    %2082 = vmatprep.subr.mxu0 0.0
    %2083 = vmatpush1.msra.mxu0 0.0
    %2084 = vmatprep.subr.mxu0 0.0
    %2085 = vmatpush1.msra.mxu0 0.0
    %2086 = vmatprep.subr.mxu0 0.0
    %2087 = vmatpush1.msra.mxu0 0.0
    %2088 = vmatprep.subr.mxu0 0.0
    %2089 = vmatpush1.msra.mxu0 0.0
    %2090 = vmatprep.subr.mxu0 0.0
    %2091 = vmatpush1.msra.mxu0 0.0
    %2092 = vmatprep.subr.mxu0 0.0
    %2093 = vmatpush1.msra.mxu0 0.0
    %2094 = vmatprep.subr.mxu0 0.0
    %2095 = vmatpush1.msra.mxu0 0.0
    %2096 = vmatprep.subr.mxu0 0.0
    %2097 = vmatpush1.msra.mxu0 0.0
    %2098 = vmatprep.subr.mxu0 0.0
    %2099 = vmatpush1.msra.mxu0 0.0
    %2100 = vmatprep.subr.mxu0 0.0
    %2101 = vmatpush1.msra.mxu0 0.0
    %2102 = vmatprep.subr.mxu0 0.0
    %2103 = vmatpush1.msra.mxu0 0.0
    %2104 = vmatprep.subr.mxu0 0.0
    %2105 = vmatpush1.msra.mxu0 0.0
    %2106 = vmatprep.subr.mxu0 0.0
    %2107 = vmatpush1.msra.mxu0 0.0
    %2108 = vmatprep.subr.mxu0 0.0
    %2109 = vmatpush1.msra.mxu0 0.0
    %2110 = vmatprep.subr.mxu0 0.0
    %2111 = vmatpush1.msra.mxu0 0.0
    %2112 = vmatprep.subr.mxu0 0.0
    %2113 = vmatpush1.msra.mxu0 0.0
    %2114 = vmatprep.subr.mxu0 0.0
    %2115 = vmatpush1.msra.mxu0 0.0
    %2116 = vmatprep.subr.mxu0 0.0
    %2117 = vmatpush1.msra.mxu0 0.0
    %2118 = vmatprep.subr.mxu0 0.0
    %2119 = vmatpush1.msra.mxu0 0.0
    %2120 = vmatprep.subr.mxu0 0.0
    %2121 = vmatpush1.msra.mxu0 0.0
    %2122 = vmatprep.subr.mxu0 0.0
    %2123 = vmatpush1.msra.mxu0 0.0
    %2124 = vmatprep.mubr.f32.mxu0 0.0
    %2125 = vmatmul.mubr.f32.gmra.mrb[0].mxu0 %v1937
    %v2126 = vpop.f32.mrb[0].mxu0
    %v2127 = vadd.f32 0.0, %v2126
    %v2128 = vpop.f32.mrb[0].mxu0
    %2129 = vmatprep.mubr.f32.mxu0 0.0
    %2130 = vmatmul.mubr.f32.gmra.mrb[0].mxu0 %v1939
    %v2131 = vpop.f32.mrb[0].mxu0
    %v2132 = vadd.f32 0.0, %v2131
    %v2133 = vpop.f32.mrb[0].mxu0
    %2134 = vmatprep.mubr.f32.mxu0 0.0
    %2135 = vmatmul.mubr.f32.gmra.mrb[0].mxu0 %v1941
    %v2136 = vpop.f32.mrb[0].mxu0
    %v2137 = vadd.f32 0.0, %v2136
    %v2138 = vpop.f32.mrb[0].mxu0
    %2139 = vmatprep.mubr.f32.mxu0 0.0
    %2140 = vmatmul.mubr.f32.gmra.mrb[0].mxu0 %v2058
    %v2141 = vpop.f32.mrb[0].mxu0
    %v2142 = vadd.f32 0.0, %v2141
    %v2143 = vpop.f32.mrb[0].mxu0
    %2144 = vdwg.mxu0
    %v2145 = vadd.f32 %v2039, %v2127
    %v2146 = vadd.f32 %v2040, %v2132
    %v2147 = vadd.f32 %v2041, %v2137
    %v2148 = vadd.f32 %v2042, %v2142
    %2149 = vst.msk [vmem:[#allocation2] sm:$0xff] %vm1707, %v2145
    %2150 = vst.msk [vmem:[#allocation2 + $0x8] sm:$0xff] %vm1707, %v2146
    %2151 = vst.msk [vmem:[#allocation2 + $0x10] sm:$0xff] %vm1707, %v2147
    %2152 = vst.msk [vmem:[#allocation2 + $0x18] sm:$0xff] %vm1707, %v2148
    %v2153 = vld [vmem:[#allocation2] sm:$0xff]
    %v2154 = vld [vmem:[#allocation2 + $0x8] sm:$0xff]
    %v2155 = vld [vmem:[#allocation2 + $0x10] sm:$0xff]
    %v2156 = vld [vmem:[#allocation2 + $0x18] sm:$0x3f]
    %s2157 = scalar_lea.vmem [#allocation7], 64
    %v2158 = vld [vmem:[%s2157] sm:$0xff]
    %v2159 = vld [vmem:[%s2157 + $0x8] sm:$0xff]
    %v2160 = vld [vmem:[%s2157 + $0x10] sm:$0xff]
    %v2161 = vld [vmem:[%s2157 + $0x18] sm:$0xff]
    %v2162 = vcombine.low %v455, %v456
    %v2163 = vcombine.low %v457, %v458
    %v2165 = vunpack.c.l.s4 1983009808
    %v2166 = vunpack.c.0.s8 %v2165
    %v2167 = vlaneseq
    %v2168 = vshrl.u32 %v2167, 7
    %v2169 = vsub.s32 %v2166, %v2168
    %v2170 = vrot.slane %v2162, %v2169
    %v2172 = vunpack.c.l.s4 1983009808
    %v2173 = vunpack.c.0.s8 %v2172
    %v2174 = vlaneseq
    %v2175 = vshrl.u32 %v2174, 7
    %v2176 = vsub.s32 %v2173, %v2175
    %v2177 = vrot.slane %v2163, %v2176
    %v2178 = vcombine.low %v2170, %v2177
    %v2179 = vcombine.low %v459, %v460
    %v2180 = vcombine.low %v461, %v462
    %v2182 = vunpack.c.l.s4 1983009808
    %v2183 = vunpack.c.0.s8 %v2182
    %v2184 = vlaneseq
    %v2185 = vshrl.u32 %v2184, 7
    %v2186 = vsub.s32 %v2183, %v2185
    %v2187 = vrot.slane %v2179, %v2186
    %v2189 = vunpack.c.l.s4 1983009808
    %v2190 = vunpack.c.0.s8 %v2189
    %v2191 = vlaneseq
    %v2192 = vshrl.u32 %v2191, 7
    %v2193 = vsub.s32 %v2190, %v2192
    %v2194 = vrot.slane %v2180, %v2193
    %v2195 = vcombine.low %v2187, %v2194
    %v2196 = vcombine.low %v463, %v464
    %v2197 = vcombine.low %v465, %v466
    %v2199 = vunpack.c.l.s4 1983009808
    %v2200 = vunpack.c.0.s8 %v2199
    %v2201 = vlaneseq
    %v2202 = vshrl.u32 %v2201, 7
    %v2203 = vsub.s32 %v2200, %v2202
    %v2204 = vrot.slane %v2196, %v2203
    %v2206 = vunpack.c.l.s4 1983009808
    %v2207 = vunpack.c.0.s8 %v2206
    %v2208 = vlaneseq
    %v2209 = vshrl.u32 %v2208, 7
    %v2210 = vsub.s32 %v2207, %v2209
    %v2211 = vrot.slane %v2197, %v2210
    %v2212 = vcombine.low %v2204, %v2211
    %v2213 = vcombine.low %v467, %v468
    %v2215 = vunpack.c.l.s4 1983009808
    %v2216 = vunpack.c.0.s8 %v2215
    %v2217 = vlaneseq
    %v2218 = vshrl.u32 %v2217, 7
    %v2219 = vsub.s32 %v2216, %v2218
    %v2220 = vrot.slane %v2213, %v2219
    %v2222 = vunpack.c.l.s4 1983009808
    %v2223 = vunpack.c.0.s8 %v2222
    %v2224 = vlaneseq
    %v2225 = vshrl.u32 %v2224, 7
    %v2226 = vsub.s32 %v2223, %v2225
    %v2227 = vrot.slane %v469, %v2226
    %v2228 = vcombine.low %v2220, %v2227
    %v2229 = vsel %vm1707, %v2178, 0
    %v2231 = vsel %vm1707, %v2195, 0
    %v2233 = vsel %vm1707, %v2212, 0
    %v2235 = vsel %vm1707, %v2228, 0
    %2237 = vmatprep.subr.mxu0 0.0
    %2238 = vmatpush1.msra.mxu0 %v2158
    %2239 = vmatprep.subr.mxu0 0.0
    %2240 = vmatpush1.msra.mxu0 %v2159
    %2241 = vmatprep.subr.mxu0 0.0
    %2242 = vmatpush1.msra.mxu0 %v2160
    %2243 = vmatprep.subr.mxu0 0.0
    %2244 = vmatpush1.msra.mxu0 %v2161
    %2245 = vmatprep.subr.mxu0 0.0
    %2246 = vmatpush1.msra.mxu0 0.0
    %2247 = vmatprep.subr.mxu0 0.0
    %2248 = vmatpush1.msra.mxu0 0.0
    %2249 = vmatprep.subr.mxu0 0.0
    %2250 = vmatpush1.msra.mxu0 0.0
    %2251 = vmatprep.subr.mxu0 0.0
    %2252 = vmatpush1.msra.mxu0 0.0
    %2253 = vmatprep.subr.mxu0 0.0
    %2254 = vmatpush1.msra.mxu0 0.0
    %2255 = vmatprep.subr.mxu0 0.0
    %2256 = vmatpush1.msra.mxu0 0.0
    %2257 = vmatprep.subr.mxu0 0.0
    %2258 = vmatpush1.msra.mxu0 0.0
    %2259 = vmatprep.subr.mxu0 0.0
    %2260 = vmatpush1.msra.mxu0 0.0
    %2261 = vmatprep.subr.mxu0 0.0
    %2262 = vmatpush1.msra.mxu0 0.0
    %2263 = vmatprep.subr.mxu0 0.0
    %2264 = vmatpush1.msra.mxu0 0.0
    %2265 = vmatprep.subr.mxu0 0.0
    %2266 = vmatpush1.msra.mxu0 0.0
    %2267 = vmatprep.subr.mxu0 0.0
    %2268 = vmatpush1.msra.mxu0 0.0
    %2269 = vmatprep.subr.mxu0 0.0
    %2270 = vmatpush1.msra.mxu0 0.0
    %2271 = vmatprep.subr.mxu0 0.0
    %2272 = vmatpush1.msra.mxu0 0.0
    %2273 = vmatprep.subr.mxu0 0.0
    %2274 = vmatpush1.msra.mxu0 0.0
    %2275 = vmatprep.subr.mxu0 0.0
    %2276 = vmatpush1.msra.mxu0 0.0
    %2277 = vmatprep.subr.mxu0 0.0
    %2278 = vmatpush1.msra.mxu0 0.0
    %2279 = vmatprep.subr.mxu0 0.0
    %2280 = vmatpush1.msra.mxu0 0.0
    %2281 = vmatprep.subr.mxu0 0.0
    %2282 = vmatpush1.msra.mxu0 0.0
    %2283 = vmatprep.subr.mxu0 0.0
    %2284 = vmatpush1.msra.mxu0 0.0
    %2285 = vmatprep.subr.mxu0 0.0
    %2286 = vmatpush1.msra.mxu0 0.0
    %2287 = vmatprep.subr.mxu0 0.0
    %2288 = vmatpush1.msra.mxu0 0.0
    %2289 = vmatprep.subr.mxu0 0.0
    %2290 = vmatpush1.msra.mxu0 0.0
    %2291 = vmatprep.subr.mxu0 0.0
    %2292 = vmatpush1.msra.mxu0 0.0
    %2293 = vmatprep.subr.mxu0 0.0
    %2294 = vmatpush1.msra.mxu0 0.0
    %2295 = vmatprep.subr.mxu0 0.0
    %2296 = vmatpush1.msra.mxu0 0.0
    %2297 = vmatprep.subr.mxu0 0.0
    %2298 = vmatpush1.msra.mxu0 0.0
    %2299 = vmatprep.subr.mxu0 0.0
    %2300 = vmatpush1.msra.mxu0 0.0
    %2301 = vmatprep.mubr.f32.mxu0 0.0
    %2302 = vmatmul.mubr.f32.gmra.mrb[0].mxu0 %v2229
    %v2303 = vpop.f32.mrb[0].mxu0
    %v2304 = vadd.f32 0.0, %v2303
    %v2305 = vpop.f32.mrb[0].mxu0
    %2306 = vmatprep.mubr.f32.mxu0 0.0
    %2307 = vmatmul.mubr.f32.gmra.mrb[0].mxu0 %v2231
    %v2308 = vpop.f32.mrb[0].mxu0
    %v2309 = vadd.f32 0.0, %v2308
    %v2310 = vpop.f32.mrb[0].mxu0
    %2311 = vmatprep.mubr.f32.mxu0 0.0
    %2312 = vmatmul.mubr.f32.gmra.mrb[0].mxu0 %v2233
    %v2313 = vpop.f32.mrb[0].mxu0
    %v2314 = vadd.f32 0.0, %v2313
    %v2315 = vpop.f32.mrb[0].mxu0
    %2316 = vmatprep.mubr.f32.mxu0 0.0
    %2317 = vmatmul.mubr.f32.gmra.mrb[0].mxu0 %v2235
    %v2318 = vpop.f32.mrb[0].mxu0
    %v2319 = vadd.f32 0.0, %v2318
    %v2320 = vpop.f32.mrb[0].mxu0
    %2321 = vdwg.mxu0
    %v2322 = vadd.f32 %v2153, %v2304
    %v2323 = vadd.f32 %v2154, %v2309
    %v2324 = vadd.f32 %v2155, %v2314
    %v2325 = vadd.f32 %v2156, %v2319
    %2326 = vst.msk [vmem:[#allocation2] sm:$0xff] %vm1707, %v2322
    %2327 = vst.msk [vmem:[#allocation2 + $0x8] sm:$0xff] %vm1707, %v2323
    %2328 = vst.msk [vmem:[#allocation2 + $0x10] sm:$0xff] %vm1707, %v2324
    %2329 = vst.msk [vmem:[#allocation2 + $0x18] sm:$0x3f] %vm2037, %v2325
    %v2330 = vld [vmem:[#allocation2 + $0x6] sm:$0xff]
    %v2331 = vld [vmem:[#allocation2 + $0xe] sm:$0xff]
    %v2332 = vld [vmem:[#allocation2 + $0x16] sm:$0xff]
    %v2333 = vld [vmem:[#allocation2 + $0x1e] sm:$0x3]
    %s2334 = scalar_lea.vmem [#allocation7], 96
    %v2335 = vld [vmem:[%s2334] sm:$0xff]
    %v2336 = vld [vmem:[%s2334 + $0x8] sm:$0xff]
    %v2337 = vld [vmem:[%s2334 + $0x10] sm:$0xff]
    %v2338 = vld [vmem:[%s2334 + $0x18] sm:$0xff]
    %v2340 = vunpack.c.l.s4 1983009808
    %v2341 = vunpack.c.0.s8 %v2340
    %v2342 = vlaneseq
    %v2343 = vshrl.u32 %v2342, 7
    %v2344 = vsub.s32 %v2341, %v2343
    %v2345 = vrot.slane %v466, %v2344
    %v2346 = vsel %vm1707, %v2345, 0
    %2348 = vmatprep.subr.mxu0 0.0
    %2349 = vmatpush1.msra.mxu0 %v2335
    %2350 = vmatprep.subr.mxu0 0.0
    %2351 = vmatpush1.msra.mxu0 %v2336
    %2352 = vmatprep.subr.mxu0 0.0
    %2353 = vmatpush1.msra.mxu0 %v2337
    %2354 = vmatprep.subr.mxu0 0.0
    %2355 = vmatpush1.msra.mxu0 %v2338
    %2356 = vmatprep.subr.mxu0 0.0
    %2357 = vmatpush1.msra.mxu0 0.0
    %2358 = vmatprep.subr.mxu0 0.0
    %2359 = vmatpush1.msra.mxu0 0.0
    %2360 = vmatprep.subr.mxu0 0.0
    %2361 = vmatpush1.msra.mxu0 0.0
    %2362 = vmatprep.subr.mxu0 0.0
    %2363 = vmatpush1.msra.mxu0 0.0
    %2364 = vmatprep.subr.mxu0 0.0
    %2365 = vmatpush1.msra.mxu0 0.0
    %2366 = vmatprep.subr.mxu0 0.0
    %2367 = vmatpush1.msra.mxu0 0.0
    %2368 = vmatprep.subr.mxu0 0.0
    %2369 = vmatpush1.msra.mxu0 0.0
    %2370 = vmatprep.subr.mxu0 0.0
    %2371 = vmatpush1.msra.mxu0 0.0
    %2372 = vmatprep.subr.mxu0 0.0
    %2373 = vmatpush1.msra.mxu0 0.0
    %2374 = vmatprep.subr.mxu0 0.0
    %2375 = vmatpush1.msra.mxu0 0.0
    %2376 = vmatprep.subr.mxu0 0.0
    %2377 = vmatpush1.msra.mxu0 0.0
    %2378 = vmatprep.subr.mxu0 0.0
    %2379 = vmatpush1.msra.mxu0 0.0
    %2380 = vmatprep.subr.mxu0 0.0
    %2381 = vmatpush1.msra.mxu0 0.0
    %2382 = vmatprep.subr.mxu0 0.0
    %2383 = vmatpush1.msra.mxu0 0.0
    %2384 = vmatprep.subr.mxu0 0.0
    %2385 = vmatpush1.msra.mxu0 0.0
    %2386 = vmatprep.subr.mxu0 0.0
    %2387 = vmatpush1.msra.mxu0 0.0
    %2388 = vmatprep.subr.mxu0 0.0
    %2389 = vmatpush1.msra.mxu0 0.0
    %2390 = vmatprep.subr.mxu0 0.0
    %2391 = vmatpush1.msra.mxu0 0.0
    %2392 = vmatprep.subr.mxu0 0.0
    %2393 = vmatpush1.msra.mxu0 0.0
    %2394 = vmatprep.subr.mxu0 0.0
    %2395 = vmatpush1.msra.mxu0 0.0
    %2396 = vmatprep.subr.mxu0 0.0
    %2397 = vmatpush1.msra.mxu0 0.0
    %2398 = vmatprep.subr.mxu0 0.0
    %2399 = vmatpush1.msra.mxu0 0.0
    %2400 = vmatprep.subr.mxu0 0.0
    %2401 = vmatpush1.msra.mxu0 0.0
    %2402 = vmatprep.subr.mxu0 0.0
    %2403 = vmatpush1.msra.mxu0 0.0
    %2404 = vmatprep.subr.mxu0 0.0
    %2405 = vmatpush1.msra.mxu0 0.0
    %2406 = vmatprep.subr.mxu0 0.0
    %2407 = vmatpush1.msra.mxu0 0.0
    %2408 = vmatprep.subr.mxu0 0.0
    %2409 = vmatpush1.msra.mxu0 0.0
    %2410 = vmatprep.subr.mxu0 0.0
    %2411 = vmatpush1.msra.mxu0 0.0
    %2412 = vmatprep.mubr.f32.mxu0 0.0
    %2413 = vmatmul.mubr.f32.gmra.mrb[0].mxu0 %v1937
    %v2414 = vpop.f32.mrb[0].mxu0
    %v2415 = vadd.f32 0.0, %v2414
    %v2416 = vpop.f32.mrb[0].mxu0
    %2417 = vmatprep.mubr.f32.mxu0 0.0
    %2418 = vmatmul.mubr.f32.gmra.mrb[0].mxu0 %v1939
    %v2419 = vpop.f32.mrb[0].mxu0
    %v2420 = vadd.f32 0.0, %v2419
    %v2421 = vpop.f32.mrb[0].mxu0
    %2422 = vmatprep.mubr.f32.mxu0 0.0
    %2423 = vmatmul.mubr.f32.gmra.mrb[0].mxu0 %v1941
    %v2424 = vpop.f32.mrb[0].mxu0
    %v2425 = vadd.f32 0.0, %v2424
    %v2426 = vpop.f32.mrb[0].mxu0
    %2427 = vmatprep.mubr.f32.mxu0 0.0
    %2428 = vmatmul.mubr.f32.gmra.mrb[0].mxu0 %v2346
    %v2429 = vpop.f32.mrb[0].mxu0
    %v2430 = vadd.f32 0.0, %v2429
    %v2431 = vpop.f32.mrb[0].mxu0
    %2432 = vdwg.mxu0
    %v2433 = vadd.f32 %v2330, %v2415
    %v2434 = vadd.f32 %v2331, %v2420
    %v2435 = vadd.f32 %v2332, %v2425
    %v2436 = vadd.f32 %v2333, %v2430
    %2437 = vst.msk [vmem:[#allocation2 + $0x6] sm:$0xff] %vm1707, %v2433
    %2438 = vst.msk [vmem:[#allocation2 + $0xe] sm:$0xff] %vm1707, %v2434
    %2439 = vst.msk [vmem:[#allocation2 + $0x16] sm:$0xff] %vm1707, %v2435
    %2440 = vst.msk [vmem:[#allocation2 + $0x1e] sm:$0x3] %vm470, %v2436
    %v2441 = vld [vmem:[#allocation2] sm:$0xff]
    %v2442 = vld [vmem:[#allocation2 + $0x8] sm:$0xff]
    %v2443 = vld [vmem:[#allocation2 + $0x10] sm:$0xff]
    %v2444 = vld [vmem:[#allocation2 + $0x18] sm:$0xff]
    %s2445 = scalar_lea.vmem [#allocation7], 128
    %v2446 = vld [vmem:[%s2445] sm:$0xff]
    %v2447 = vld [vmem:[%s2445 + $0x8] sm:$0xff]
    %v2448 = vld [vmem:[%s2445 + $0x10] sm:$0xff]
    %v2449 = vld [vmem:[%s2445 + $0x18] sm:$0xff]
    %2450 = vmatprep.subr.mxu0 0.0
    %2451 = vmatpush1.msra.mxu0 %v2446
    %2452 = vmatprep.subr.mxu0 0.0
    %2453 = vmatpush1.msra.mxu0 %v2447
    %2454 = vmatprep.subr.mxu0 0.0
    %2455 = vmatpush1.msra.mxu0 %v2448
    %2456 = vmatprep.subr.mxu0 0.0
    %2457 = vmatpush1.msra.mxu0 %v2449
    %2458 = vmatprep.subr.mxu0 0.0
    %2459 = vmatpush1.msra.mxu0 0.0
    %2460 = vmatprep.subr.mxu0 0.0
    %2461 = vmatpush1.msra.mxu0 0.0
    %2462 = vmatprep.subr.mxu0 0.0
    %2463 = vmatpush1.msra.mxu0 0.0
    %2464 = vmatprep.subr.mxu0 0.0
    %2465 = vmatpush1.msra.mxu0 0.0
    %2466 = vmatprep.subr.mxu0 0.0
    %2467 = vmatpush1.msra.mxu0 0.0
    %2468 = vmatprep.subr.mxu0 0.0
    %2469 = vmatpush1.msra.mxu0 0.0
    %2470 = vmatprep.subr.mxu0 0.0
    %2471 = vmatpush1.msra.mxu0 0.0
    %2472 = vmatprep.subr.mxu0 0.0
    %2473 = vmatpush1.msra.mxu0 0.0
    %2474 = vmatprep.subr.mxu0 0.0
    %2475 = vmatpush1.msra.mxu0 0.0
    %2476 = vmatprep.subr.mxu0 0.0
    %2477 = vmatpush1.msra.mxu0 0.0
    %2478 = vmatprep.subr.mxu0 0.0
    %2479 = vmatpush1.msra.mxu0 0.0
    %2480 = vmatprep.subr.mxu0 0.0
    %2481 = vmatpush1.msra.mxu0 0.0
    %2482 = vmatprep.subr.mxu0 0.0
    %2483 = vmatpush1.msra.mxu0 0.0
    %2484 = vmatprep.subr.mxu0 0.0
    %2485 = vmatpush1.msra.mxu0 0.0
    %2486 = vmatprep.subr.mxu0 0.0
    %2487 = vmatpush1.msra.mxu0 0.0
    %2488 = vmatprep.subr.mxu0 0.0
    %2489 = vmatpush1.msra.mxu0 0.0
    %2490 = vmatprep.subr.mxu0 0.0
    %2491 = vmatpush1.msra.mxu0 0.0
    %2492 = vmatprep.subr.mxu0 0.0
    %2493 = vmatpush1.msra.mxu0 0.0
    %2494 = vmatprep.subr.mxu0 0.0
    %2495 = vmatpush1.msra.mxu0 0.0
    %2496 = vmatprep.subr.mxu0 0.0
    %2497 = vmatpush1.msra.mxu0 0.0
    %2498 = vmatprep.subr.mxu0 0.0
    %2499 = vmatpush1.msra.mxu0 0.0
    %2500 = vmatprep.subr.mxu0 0.0
    %2501 = vmatpush1.msra.mxu0 0.0
    %2502 = vmatprep.subr.mxu0 0.0
    %2503 = vmatpush1.msra.mxu0 0.0
    %2504 = vmatprep.subr.mxu0 0.0
    %2505 = vmatpush1.msra.mxu0 0.0
    %2506 = vmatprep.subr.mxu0 0.0
    %2507 = vmatpush1.msra.mxu0 0.0
    %2508 = vmatprep.subr.mxu0 0.0
    %2509 = vmatpush1.msra.mxu0 0.0
    %2510 = vmatprep.subr.mxu0 0.0
    %2511 = vmatpush1.msra.mxu0 0.0
    %2512 = vmatprep.subr.mxu0 0.0
    %2513 = vmatpush1.msra.mxu0 0.0
    %2514 = vmatprep.mubr.f32.mxu0 0.0
    %2515 = vmatmul.mubr.f32.gmra.mrb[0].mxu0 %v1937
    %v2516 = vpop.f32.mrb[0].mxu0
    %v2517 = vadd.f32 0.0, %v2516
    %v2518 = vpop.f32.mrb[0].mxu0
    %2519 = vmatprep.mubr.f32.mxu0 0.0
    %2520 = vmatmul.mubr.f32.gmra.mrb[0].mxu0 %v1939
    %v2521 = vpop.f32.mrb[0].mxu0
    %v2522 = vadd.f32 0.0, %v2521
    %v2523 = vpop.f32.mrb[0].mxu0
    %2524 = vmatprep.mubr.f32.mxu0 0.0
    %2525 = vmatmul.mubr.f32.gmra.mrb[0].mxu0 %v1941
    %v2526 = vpop.f32.mrb[0].mxu0
    %v2527 = vadd.f32 0.0, %v2526
    %v2528 = vpop.f32.mrb[0].mxu0
    %2529 = vmatprep.mubr.f32.mxu0 0.0
    %2530 = vmatmul.mubr.f32.gmra.mrb[0].mxu0 %v2058
    %v2531 = vpop.f32.mrb[0].mxu0
    %v2532 = vadd.f32 0.0, %v2531
    %v2533 = vpop.f32.mrb[0].mxu0
    %2534 = vdwg.mxu0
    %v2535 = vadd.f32 %v2441, %v2517
    %v2536 = vadd.f32 %v2442, %v2522
    %v2537 = vadd.f32 %v2443, %v2527
    %v2538 = vadd.f32 %v2444, %v2532
    %2539 = vst.msk [vmem:[#allocation2] sm:$0xff] %vm1707, %v2535
    %2540 = vst.msk [vmem:[#allocation2 + $0x8] sm:$0xff] %vm1707, %v2536
    %2541 = vst.msk [vmem:[#allocation2 + $0x10] sm:$0xff] %vm1707, %v2537
    %2542 = vst.msk [vmem:[#allocation2 + $0x18] sm:$0xff] %vm1707, %v2538
    %v2543 = vld [vmem:[#allocation2] sm:$0xff]
    %v2544 = vld [vmem:[#allocation2 + $0x8] sm:$0xff]
    %v2545 = vld [vmem:[#allocation2 + $0x10] sm:$0xff]
    %v2546 = vld [vmem:[#allocation2 + $0x18] sm:$0x3]
    %s2547 = scalar_lea.vmem [#allocation7], 160
    %v2548 = vld [vmem:[%s2547] sm:$0xff]
    %v2549 = vld [vmem:[%s2547 + $0x8] sm:$0xff]
    %v2550 = vld [vmem:[%s2547 + $0x10] sm:$0xff]
    %v2551 = vld [vmem:[%s2547 + $0x18] sm:$0xff]
    %v2552 = vcombine.low %v2177, %v2187
    %v2553 = vcombine.low %v2194, %v2204
    %v2554 = vcombine.low %v2211, %v2220
    %v2555 = vsel %vm1707, %v2552, 0
    %v2557 = vsel %vm1707, %v2553, 0
    %v2559 = vsel %vm1707, %v2554, 0
    %v2561 = vsel %vm1707, %v2227, 0
    %2563 = vmatprep.subr.mxu0 0.0
    %2564 = vmatpush1.msra.mxu0 %v2548
    %2565 = vmatprep.subr.mxu0 0.0
    %2566 = vmatpush1.msra.mxu0 %v2549
    %2567 = vmatprep.subr.mxu0 0.0
    %2568 = vmatpush1.msra.mxu0 %v2550
    %2569 = vmatprep.subr.mxu0 0.0
    %2570 = vmatpush1.msra.mxu0 %v2551
    %2571 = vmatprep.subr.mxu0 0.0
    %2572 = vmatpush1.msra.mxu0 0.0
    %2573 = vmatprep.subr.mxu0 0.0
    %2574 = vmatpush1.msra.mxu0 0.0
    %2575 = vmatprep.subr.mxu0 0.0
    %2576 = vmatpush1.msra.mxu0 0.0
    %2577 = vmatprep.subr.mxu0 0.0
    %2578 = vmatpush1.msra.mxu0 0.0
    %2579 = vmatprep.subr.mxu0 0.0
    %2580 = vmatpush1.msra.mxu0 0.0
    %2581 = vmatprep.subr.mxu0 0.0
    %2582 = vmatpush1.msra.mxu0 0.0
    %2583 = vmatprep.subr.mxu0 0.0
    %2584 = vmatpush1.msra.mxu0 0.0
    %2585 = vmatprep.subr.mxu0 0.0
    %2586 = vmatpush1.msra.mxu0 0.0
    %2587 = vmatprep.subr.mxu0 0.0
    %2588 = vmatpush1.msra.mxu0 0.0
    %2589 = vmatprep.subr.mxu0 0.0
    %2590 = vmatpush1.msra.mxu0 0.0
    %2591 = vmatprep.subr.mxu0 0.0
    %2592 = vmatpush1.msra.mxu0 0.0
    %2593 = vmatprep.subr.mxu0 0.0
    %2594 = vmatpush1.msra.mxu0 0.0
    %2595 = vmatprep.subr.mxu0 0.0
    %2596 = vmatpush1.msra.mxu0 0.0
    %2597 = vmatprep.subr.mxu0 0.0
    %2598 = vmatpush1.msra.mxu0 0.0
    %2599 = vmatprep.subr.mxu0 0.0
    %2600 = vmatpush1.msra.mxu0 0.0
    %2601 = vmatprep.subr.mxu0 0.0
    %2602 = vmatpush1.msra.mxu0 0.0
    %2603 = vmatprep.subr.mxu0 0.0
    %2604 = vmatpush1.msra.mxu0 0.0
    %2605 = vmatprep.subr.mxu0 0.0
    %2606 = vmatpush1.msra.mxu0 0.0
    %2607 = vmatprep.subr.mxu0 0.0
    %2608 = vmatpush1.msra.mxu0 0.0
    %2609 = vmatprep.subr.mxu0 0.0
    %2610 = vmatpush1.msra.mxu0 0.0
    %2611 = vmatprep.subr.mxu0 0.0
    %2612 = vmatpush1.msra.mxu0 0.0
    %2613 = vmatprep.subr.mxu0 0.0
    %2614 = vmatpush1.msra.mxu0 0.0
    %2615 = vmatprep.subr.mxu0 0.0
    %2616 = vmatpush1.msra.mxu0 0.0
    %2617 = vmatprep.subr.mxu0 0.0
    %2618 = vmatpush1.msra.mxu0 0.0
    %2619 = vmatprep.subr.mxu0 0.0
    %2620 = vmatpush1.msra.mxu0 0.0
    %2621 = vmatprep.subr.mxu0 0.0
    %2622 = vmatpush1.msra.mxu0 0.0
    %2623 = vmatprep.subr.mxu0 0.0
    %2624 = vmatpush1.msra.mxu0 0.0
    %2625 = vmatprep.subr.mxu0 0.0
    %2626 = vmatpush1.msra.mxu0 0.0
    %2627 = vmatprep.mubr.f32.mxu0 0.0
    %2628 = vmatmul.mubr.f32.gmra.mrb[0].mxu0 %v2555
    %v2629 = vpop.f32.mrb[0].mxu0
    %v2630 = vadd.f32 0.0, %v2629
    %v2631 = vpop.f32.mrb[0].mxu0
    %2632 = vmatprep.mubr.f32.mxu0 0.0
    %2633 = vmatmul.mubr.f32.gmra.mrb[0].mxu0 %v2557
    %v2634 = vpop.f32.mrb[0].mxu0
    %v2635 = vadd.f32 0.0, %v2634
    %v2636 = vpop.f32.mrb[0].mxu0
    %2637 = vmatprep.mubr.f32.mxu0 0.0
    %2638 = vmatmul.mubr.f32.gmra.mrb[0].mxu0 %v2559
    %v2639 = vpop.f32.mrb[0].mxu0
    %v2640 = vadd.f32 0.0, %v2639
    %v2641 = vpop.f32.mrb[0].mxu0
    %2642 = vmatprep.mubr.f32.mxu0 0.0
    %2643 = vmatmul.mubr.f32.gmra.mrb[0].mxu0 %v2561
    %v2644 = vpop.f32.mrb[0].mxu0
    %v2645 = vadd.f32 0.0, %v2644
    %v2646 = vpop.f32.mrb[0].mxu0
    %2647 = vdwg.mxu0
    %v2648 = vadd.f32 %v2543, %v2630
    %v2649 = vadd.f32 %v2544, %v2635
    %v2650 = vadd.f32 %v2545, %v2640
    %v2651 = vadd.f32 %v2546, %v2645
    %2652 = vst.msk [vmem:[#allocation2] sm:$0xff] %vm1707, %v2648
    %2653 = vst.msk [vmem:[#allocation2 + $0x8] sm:$0xff] %vm1707, %v2649
    %2654 = vst.msk [vmem:[#allocation2 + $0x10] sm:$0xff] %vm1707, %v2650
    %2655 = vst.msk [vmem:[#allocation2 + $0x18] sm:$0x3] %vm470, %v2651
    %v2656 = vld [vmem:[#allocation2 + $0x12] sm:$0xff]
    %v2657 = vld [vmem:[#allocation2 + $0x1a] sm:$0x3f]
    %s2658 = scalar_lea.vmem [#allocation7], 192
    %v2659 = vld [vmem:[%s2658] sm:$0xff]
    %v2660 = vld [vmem:[%s2658 + $0x8] sm:$0xff]
    %v2661 = vld [vmem:[%s2658 + $0x10] sm:$0xff]
    %v2662 = vld [vmem:[%s2658 + $0x18] sm:$0xff]
    %v2664 = vunpack.c.l.s4 1983009808
    %v2665 = vunpack.c.0.s8 %v2664
    %v2666 = vlaneseq
    %v2667 = vshrl.u32 %v2666, 7
    %v2668 = vsub.s32 %v2665, %v2667
    %v2669 = vrot.slane %v460, %v2668
    %v2670 = vcombine.low %v1895, %v2669
    %v2671 = vsel %vm1707, %v2670, 0
    %2673 = vmatprep.subr.mxu0 0.0
    %2674 = vmatpush1.msra.mxu0 %v2659
    %2675 = vmatprep.subr.mxu0 0.0
    %2676 = vmatpush1.msra.mxu0 %v2660
    %2677 = vmatprep.subr.mxu0 0.0
    %2678 = vmatpush1.msra.mxu0 %v2661
    %2679 = vmatprep.subr.mxu0 0.0
    %2680 = vmatpush1.msra.mxu0 %v2662
    %2681 = vmatprep.subr.mxu0 0.0
    %2682 = vmatpush1.msra.mxu0 0.0
    %2683 = vmatprep.subr.mxu0 0.0
    %2684 = vmatpush1.msra.mxu0 0.0
    %2685 = vmatprep.subr.mxu0 0.0
    %2686 = vmatpush1.msra.mxu0 0.0
    %2687 = vmatprep.subr.mxu0 0.0
    %2688 = vmatpush1.msra.mxu0 0.0
    %2689 = vmatprep.subr.mxu0 0.0
    %2690 = vmatpush1.msra.mxu0 0.0
    %2691 = vmatprep.subr.mxu0 0.0
    %2692 = vmatpush1.msra.mxu0 0.0
    %2693 = vmatprep.subr.mxu0 0.0
    %2694 = vmatpush1.msra.mxu0 0.0
    %2695 = vmatprep.subr.mxu0 0.0
    %2696 = vmatpush1.msra.mxu0 0.0
    %2697 = vmatprep.subr.mxu0 0.0
    %2698 = vmatpush1.msra.mxu0 0.0
    %2699 = vmatprep.subr.mxu0 0.0
    %2700 = vmatpush1.msra.mxu0 0.0
    %2701 = vmatprep.subr.mxu0 0.0
    %2702 = vmatpush1.msra.mxu0 0.0
    %2703 = vmatprep.subr.mxu0 0.0
    %2704 = vmatpush1.msra.mxu0 0.0
    %2705 = vmatprep.subr.mxu0 0.0
    %2706 = vmatpush1.msra.mxu0 0.0
    %2707 = vmatprep.subr.mxu0 0.0
    %2708 = vmatpush1.msra.mxu0 0.0
    %2709 = vmatprep.subr.mxu0 0.0
    %2710 = vmatpush1.msra.mxu0 0.0
    %2711 = vmatprep.subr.mxu0 0.0
    %2712 = vmatpush1.msra.mxu0 0.0
    %2713 = vmatprep.subr.mxu0 0.0
    %2714 = vmatpush1.msra.mxu0 0.0
    %2715 = vmatprep.subr.mxu0 0.0
    %2716 = vmatpush1.msra.mxu0 0.0
    %2717 = vmatprep.subr.mxu0 0.0
    %2718 = vmatpush1.msra.mxu0 0.0
    %2719 = vmatprep.subr.mxu0 0.0
    %2720 = vmatpush1.msra.mxu0 0.0
    %2721 = vmatprep.subr.mxu0 0.0
    %2722 = vmatpush1.msra.mxu0 0.0
    %2723 = vmatprep.subr.mxu0 0.0
    %2724 = vmatpush1.msra.mxu0 0.0
    %2725 = vmatprep.subr.mxu0 0.0
    %2726 = vmatpush1.msra.mxu0 0.0
    %2727 = vmatprep.subr.mxu0 0.0
    %2728 = vmatpush1.msra.mxu0 0.0
    %2729 = vmatprep.subr.mxu0 0.0
    %2730 = vmatpush1.msra.mxu0 0.0
    %2731 = vmatprep.subr.mxu0 0.0
    %2732 = vmatpush1.msra.mxu0 0.0
    %2733 = vmatprep.subr.mxu0 0.0
    %2734 = vmatpush1.msra.mxu0 0.0
    %2735 = vmatprep.subr.mxu0 0.0
    %2736 = vmatpush1.msra.mxu0 0.0
    %2737 = vmatprep.mubr.f32.mxu0 0.0
    %2738 = vmatmul.mubr.f32.gmra.mrb[0].mxu0 %v1937
    %v2739 = vpop.f32.mrb[0].mxu0
    %v2740 = vadd.f32 0.0, %v2739
    %v2741 = vpop.f32.mrb[0].mxu0
    %2742 = vmatprep.mubr.f32.mxu0 0.0
    %2743 = vmatmul.mubr.f32.gmra.mrb[0].mxu0 %v2671
    %v2744 = vpop.f32.mrb[0].mxu0
    %v2745 = vadd.f32 0.0, %v2744
    %v2746 = vpop.f32.mrb[0].mxu0
    %2747 = vdwg.mxu0
    %v2748 = vadd.f32 %v2656, %v2740
    %v2749 = vadd.f32 %v2657, %v2745
    %2750 = vst.msk [vmem:[#allocation2 + $0x12] sm:$0xff] %vm1707, %v2748
    %2751 = vst.msk [vmem:[#allocation2 + $0x1a] sm:$0x3f] %vm2037, %v2749
    %v2752 = vld [vmem:[#allocation2] sm:$0xff]
    %v2753 = vld [vmem:[#allocation2 + $0x8] sm:$0xff]
    %v2754 = vld [vmem:[#allocation2 + $0x10] sm:$0xff]
    %v2755 = vld [vmem:[#allocation2 + $0x18] sm:$0xff]
    %s2756 = scalar_lea.vmem [#allocation7], 224
    %v2757 = vld [vmem:[%s2756] sm:$0xff]
    %v2758 = vld [vmem:[%s2756 + $0x8] sm:$0xff]
    %v2759 = vld [vmem:[%s2756 + $0x10] sm:$0xff]
    %v2760 = vld [vmem:[%s2756 + $0x18] sm:$0xff]
    %2761 = vmatprep.subr.mxu0 0.0
    %2762 = vmatpush1.msra.mxu0 %v2757
    %2763 = vmatprep.subr.mxu0 0.0
    %2764 = vmatpush1.msra.mxu0 %v2758
    %2765 = vmatprep.subr.mxu0 0.0
    %2766 = vmatpush1.msra.mxu0 %v2759
    %2767 = vmatprep.subr.mxu0 0.0
    %2768 = vmatpush1.msra.mxu0 %v2760
    %2769 = vmatprep.subr.mxu0 0.0
    %2770 = vmatpush1.msra.mxu0 0.0
    %2771 = vmatprep.subr.mxu0 0.0
    %2772 = vmatpush1.msra.mxu0 0.0
    %2773 = vmatprep.subr.mxu0 0.0
    %2774 = vmatpush1.msra.mxu0 0.0
    %2775 = vmatprep.subr.mxu0 0.0
    %2776 = vmatpush1.msra.mxu0 0.0
    %2777 = vmatprep.subr.mxu0 0.0
    %2778 = vmatpush1.msra.mxu0 0.0
    %2779 = vmatprep.subr.mxu0 0.0
    %2780 = vmatpush1.msra.mxu0 0.0
    %2781 = vmatprep.subr.mxu0 0.0
    %2782 = vmatpush1.msra.mxu0 0.0
    %2783 = vmatprep.subr.mxu0 0.0
    %2784 = vmatpush1.msra.mxu0 0.0
    %2785 = vmatprep.subr.mxu0 0.0
    %2786 = vmatpush1.msra.mxu0 0.0
    %2787 = vmatprep.subr.mxu0 0.0
    %2788 = vmatpush1.msra.mxu0 0.0
    %2789 = vmatprep.subr.mxu0 0.0
    %2790 = vmatpush1.msra.mxu0 0.0
    %2791 = vmatprep.subr.mxu0 0.0
    %2792 = vmatpush1.msra.mxu0 0.0
    %2793 = vmatprep.subr.mxu0 0.0
    %2794 = vmatpush1.msra.mxu0 0.0
    %2795 = vmatprep.subr.mxu0 0.0
    %2796 = vmatpush1.msra.mxu0 0.0
    %2797 = vmatprep.subr.mxu0 0.0
    %2798 = vmatpush1.msra.mxu0 0.0
    %2799 = vmatprep.subr.mxu0 0.0
    %2800 = vmatpush1.msra.mxu0 0.0
    %2801 = vmatprep.subr.mxu0 0.0
    %2802 = vmatpush1.msra.mxu0 0.0
    %2803 = vmatprep.subr.mxu0 0.0
    %2804 = vmatpush1.msra.mxu0 0.0
    %2805 = vmatprep.subr.mxu0 0.0
    %2806 = vmatpush1.msra.mxu0 0.0
    %2807 = vmatprep.subr.mxu0 0.0
    %2808 = vmatpush1.msra.mxu0 0.0
    %2809 = vmatprep.subr.mxu0 0.0
    %2810 = vmatpush1.msra.mxu0 0.0
    %2811 = vmatprep.subr.mxu0 0.0
    %2812 = vmatpush1.msra.mxu0 0.0
    %2813 = vmatprep.subr.mxu0 0.0
    %2814 = vmatpush1.msra.mxu0 0.0
    %2815 = vmatprep.subr.mxu0 0.0
    %2816 = vmatpush1.msra.mxu0 0.0
    %2817 = vmatprep.subr.mxu0 0.0
    %2818 = vmatpush1.msra.mxu0 0.0
    %2819 = vmatprep.subr.mxu0 0.0
    %2820 = vmatpush1.msra.mxu0 0.0
    %2821 = vmatprep.subr.mxu0 0.0
    %2822 = vmatpush1.msra.mxu0 0.0
    %2823 = vmatprep.subr.mxu0 0.0
    %2824 = vmatpush1.msra.mxu0 0.0
    %2825 = vmatprep.mubr.f32.mxu0 0.0
    %2826 = vmatmul.mubr.f32.gmra.mrb[0].mxu0 %v1937
    %v2827 = vpop.f32.mrb[0].mxu0
    %v2828 = vadd.f32 0.0, %v2827
    %v2829 = vpop.f32.mrb[0].mxu0
    %2830 = vmatprep.mubr.f32.mxu0 0.0
    %2831 = vmatmul.mubr.f32.gmra.mrb[0].mxu0 %v1939
    %v2832 = vpop.f32.mrb[0].mxu0
    %v2833 = vadd.f32 0.0, %v2832
    %v2834 = vpop.f32.mrb[0].mxu0
    %2835 = vmatprep.mubr.f32.mxu0 0.0
    %2836 = vmatmul.mubr.f32.gmra.mrb[0].mxu0 %v1941
    %v2837 = vpop.f32.mrb[0].mxu0
    %v2838 = vadd.f32 0.0, %v2837
    %v2839 = vpop.f32.mrb[0].mxu0
    %2840 = vmatprep.mubr.f32.mxu0 0.0
    %2841 = vmatmul.mubr.f32.gmra.mrb[0].mxu0 %v2058
    %v2842 = vpop.f32.mrb[0].mxu0
    %v2843 = vadd.f32 0.0, %v2842
    %v2844 = vpop.f32.mrb[0].mxu0
    %2845 = vdwg.mxu0
    %v2846 = vadd.f32 %v2752, %v2828
    %v2847 = vadd.f32 %v2753, %v2833
    %v2848 = vadd.f32 %v2754, %v2838
    %v2849 = vadd.f32 %v2755, %v2843
    %2850 = vst.msk [vmem:[#allocation2] sm:$0xff] %vm1707, %v2846
    %2851 = vst.msk [vmem:[#allocation2 + $0x8] sm:$0xff] %vm1707, %v2847
    %2852 = vst.msk [vmem:[#allocation2 + $0x10] sm:$0xff] %vm1707, %v2848
    %2853 = vst.msk [vmem:[#allocation2 + $0x18] sm:$0xff] %vm1707, %v2849
    %v2854 = vld [vmem:[#allocation2] sm:$0xff]
    %v2855 = vld [vmem:[#allocation2 + $0x8] sm:$0x3f]
    %s2856 = scalar_lea.vmem [#allocation7], 256
    %v2857 = vld [vmem:[%s2856] sm:$0xff]
    %v2858 = vld [vmem:[%s2856 + $0x8] sm:$0xff]
    %v2859 = vld [vmem:[%s2856 + $0x10] sm:$0xff]
    %v2860 = vld [vmem:[%s2856 + $0x18] sm:$0xff]
    %2861 = vmatprep.subr.mxu0 0.0
    %2862 = vmatpush1.msra.mxu0 %v2857
    %2863 = vmatprep.subr.mxu0 0.0
    %2864 = vmatpush1.msra.mxu0 %v2858
    %2865 = vmatprep.subr.mxu0 0.0
    %2866 = vmatpush1.msra.mxu0 %v2859
    %2867 = vmatprep.subr.mxu0 0.0
    %2868 = vmatpush1.msra.mxu0 %v2860
    %2869 = vmatprep.subr.mxu0 0.0
    %2870 = vmatpush1.msra.mxu0 0.0
    %2871 = vmatprep.subr.mxu0 0.0
    %2872 = vmatpush1.msra.mxu0 0.0
    %2873 = vmatprep.subr.mxu0 0.0
    %2874 = vmatpush1.msra.mxu0 0.0
    %2875 = vmatprep.subr.mxu0 0.0
    %2876 = vmatpush1.msra.mxu0 0.0
    %2877 = vmatprep.subr.mxu0 0.0
    %2878 = vmatpush1.msra.mxu0 0.0
    %2879 = vmatprep.subr.mxu0 0.0
    %2880 = vmatpush1.msra.mxu0 0.0
    %2881 = vmatprep.subr.mxu0 0.0
    %2882 = vmatpush1.msra.mxu0 0.0
    %2883 = vmatprep.subr.mxu0 0.0
    %2884 = vmatpush1.msra.mxu0 0.0
    %2885 = vmatprep.subr.mxu0 0.0
    %2886 = vmatpush1.msra.mxu0 0.0
    %2887 = vmatprep.subr.mxu0 0.0
    %2888 = vmatpush1.msra.mxu0 0.0
    %2889 = vmatprep.subr.mxu0 0.0
    %2890 = vmatpush1.msra.mxu0 0.0
    %2891 = vmatprep.subr.mxu0 0.0
    %2892 = vmatpush1.msra.mxu0 0.0
    %2893 = vmatprep.subr.mxu0 0.0
    %2894 = vmatpush1.msra.mxu0 0.0
    %2895 = vmatprep.subr.mxu0 0.0
    %2896 = vmatpush1.msra.mxu0 0.0
    %2897 = vmatprep.subr.mxu0 0.0
    %2898 = vmatpush1.msra.mxu0 0.0
    %2899 = vmatprep.subr.mxu0 0.0
    %2900 = vmatpush1.msra.mxu0 0.0
    %2901 = vmatprep.subr.mxu0 0.0
    %2902 = vmatpush1.msra.mxu0 0.0
    %2903 = vmatprep.subr.mxu0 0.0
    %2904 = vmatpush1.msra.mxu0 0.0
    %2905 = vmatprep.subr.mxu0 0.0
    %2906 = vmatpush1.msra.mxu0 0.0
    %2907 = vmatprep.subr.mxu0 0.0
    %2908 = vmatpush1.msra.mxu0 0.0
    %2909 = vmatprep.subr.mxu0 0.0
    %2910 = vmatpush1.msra.mxu0 0.0
    %2911 = vmatprep.subr.mxu0 0.0
    %2912 = vmatpush1.msra.mxu0 0.0
    %2913 = vmatprep.subr.mxu0 0.0
    %2914 = vmatpush1.msra.mxu0 0.0
    %2915 = vmatprep.subr.mxu0 0.0
    %2916 = vmatpush1.msra.mxu0 0.0
    %2917 = vmatprep.subr.mxu0 0.0
    %2918 = vmatpush1.msra.mxu0 0.0
    %2919 = vmatprep.subr.mxu0 0.0
    %2920 = vmatpush1.msra.mxu0 0.0
    %2921 = vmatprep.subr.mxu0 0.0
    %2922 = vmatpush1.msra.mxu0 0.0
    %2923 = vmatprep.subr.mxu0 0.0
    %2924 = vmatpush1.msra.mxu0 0.0
    %2925 = vmatprep.mubr.f32.mxu0 0.0
    %2926 = vmatmul.mubr.f32.gmra.mrb[0].mxu0 %v2233
    %v2927 = vpop.f32.mrb[0].mxu0
    %v2928 = vadd.f32 0.0, %v2927
    %v2929 = vpop.f32.mrb[0].mxu0
    %2930 = vmatprep.mubr.f32.mxu0 0.0
    %2931 = vmatmul.mubr.f32.gmra.mrb[0].mxu0 %v2235
    %v2932 = vpop.f32.mrb[0].mxu0
    %v2933 = vadd.f32 0.0, %v2932
    %v2934 = vpop.f32.mrb[0].mxu0
    %2935 = vdwg.mxu0
    %v2936 = vadd.f32 %v2854, %v2928
    %v2937 = vadd.f32 %v2855, %v2933
    %2938 = vst.msk [vmem:[#allocation2] sm:$0xff] %vm1707, %v2936
    %2939 = vst.msk [vmem:[#allocation2 + $0x8] sm:$0x3f] %vm2037, %v2937
    %v2940 = vld [vmem:[#allocation2] sm:$0xff]
    %v2941 = vld [vmem:[#allocation2 + $0x8] sm:$0xff]
    %v2942 = vld [vmem:[#allocation2 + $0x10] sm:$0xff]
    %v2943 = vld [vmem:[#allocation2 + $0x18] sm:$0xff]
    %s2944 = scalar_lea.vmem [#allocation7], 288
    %v2945 = vld [vmem:[%s2944] sm:$0xff]
    %v2946 = vld [vmem:[%s2944 + $0x8] sm:$0xff]
    %v2947 = vld [vmem:[%s2944 + $0x10] sm:$0xff]
    %v2948 = vld [vmem:[%s2944 + $0x18] sm:$0xff]
    %2949 = vmatprep.subr.mxu0 0.0
    %2950 = vmatpush1.msra.mxu0 %v2945
    %2951 = vmatprep.subr.mxu0 0.0
    %2952 = vmatpush1.msra.mxu0 %v2946
    %2953 = vmatprep.subr.mxu0 0.0
    %2954 = vmatpush1.msra.mxu0 %v2947
    %2955 = vmatprep.subr.mxu0 0.0
    %2956 = vmatpush1.msra.mxu0 %v2948
    %2957 = vmatprep.subr.mxu0 0.0
    %2958 = vmatpush1.msra.mxu0 0.0
    %2959 = vmatprep.subr.mxu0 0.0
    %2960 = vmatpush1.msra.mxu0 0.0
    %2961 = vmatprep.subr.mxu0 0.0
    %2962 = vmatpush1.msra.mxu0 0.0
    %2963 = vmatprep.subr.mxu0 0.0
    %2964 = vmatpush1.msra.mxu0 0.0
    %2965 = vmatprep.subr.mxu0 0.0
    %2966 = vmatpush1.msra.mxu0 0.0
    %2967 = vmatprep.subr.mxu0 0.0
    %2968 = vmatpush1.msra.mxu0 0.0
    %2969 = vmatprep.subr.mxu0 0.0
    %2970 = vmatpush1.msra.mxu0 0.0
    %2971 = vmatprep.subr.mxu0 0.0
    %2972 = vmatpush1.msra.mxu0 0.0
    %2973 = vmatprep.subr.mxu0 0.0
    %2974 = vmatpush1.msra.mxu0 0.0
    %2975 = vmatprep.subr.mxu0 0.0
    %2976 = vmatpush1.msra.mxu0 0.0
    %2977 = vmatprep.subr.mxu0 0.0
    %2978 = vmatpush1.msra.mxu0 0.0
    %2979 = vmatprep.subr.mxu0 0.0
    %2980 = vmatpush1.msra.mxu0 0.0
    %2981 = vmatprep.subr.mxu0 0.0
    %2982 = vmatpush1.msra.mxu0 0.0
    %2983 = vmatprep.subr.mxu0 0.0
    %2984 = vmatpush1.msra.mxu0 0.0
    %2985 = vmatprep.subr.mxu0 0.0
    %2986 = vmatpush1.msra.mxu0 0.0
    %2987 = vmatprep.subr.mxu0 0.0
    %2988 = vmatpush1.msra.mxu0 0.0
    %2989 = vmatprep.subr.mxu0 0.0
    %2990 = vmatpush1.msra.mxu0 0.0
    %2991 = vmatprep.subr.mxu0 0.0
    %2992 = vmatpush1.msra.mxu0 0.0
    %2993 = vmatprep.subr.mxu0 0.0
    %2994 = vmatpush1.msra.mxu0 0.0
    %2995 = vmatprep.subr.mxu0 0.0
    %2996 = vmatpush1.msra.mxu0 0.0
    %2997 = vmatprep.subr.mxu0 0.0
    %2998 = vmatpush1.msra.mxu0 0.0
    %2999 = vmatprep.subr.mxu0 0.0
    %3000 = vmatpush1.msra.mxu0 0.0
    %3001 = vmatprep.subr.mxu0 0.0
    %3002 = vmatpush1.msra.mxu0 0.0
    %3003 = vmatprep.subr.mxu0 0.0
    %3004 = vmatpush1.msra.mxu0 0.0
    %3005 = vmatprep.subr.mxu0 0.0
    %3006 = vmatpush1.msra.mxu0 0.0
    %3007 = vmatprep.subr.mxu0 0.0
    %3008 = vmatpush1.msra.mxu0 0.0
    %3009 = vmatprep.subr.mxu0 0.0
    %3010 = vmatpush1.msra.mxu0 0.0
    %3011 = vmatprep.subr.mxu0 0.0
    %3012 = vmatpush1.msra.mxu0 0.0
    %3013 = vmatprep.mubr.f32.mxu0 0.0
    %3014 = vmatmul.mubr.f32.gmra.mrb[0].mxu0 %v1937
    %v3015 = vpop.f32.mrb[0].mxu0
    %v3016 = vadd.f32 0.0, %v3015
    %v3017 = vpop.f32.mrb[0].mxu0
    %3018 = vmatprep.mubr.f32.mxu0 0.0
    %3019 = vmatmul.mubr.f32.gmra.mrb[0].mxu0 %v1939
    %v3020 = vpop.f32.mrb[0].mxu0
    %v3021 = vadd.f32 0.0, %v3020
    %v3022 = vpop.f32.mrb[0].mxu0
    %3023 = vmatprep.mubr.f32.mxu0 0.0
    %3024 = vmatmul.mubr.f32.gmra.mrb[0].mxu0 %v1941
    %v3025 = vpop.f32.mrb[0].mxu0
    %v3026 = vadd.f32 0.0, %v3025
    %v3027 = vpop.f32.mrb[0].mxu0
    %3028 = vmatprep.mubr.f32.mxu0 0.0
    %3029 = vmatmul.mubr.f32.gmra.mrb[0].mxu0 %v2058
    %v3030 = vpop.f32.mrb[0].mxu0
    %v3031 = vadd.f32 0.0, %v3030
    %v3032 = vpop.f32.mrb[0].mxu0
    %3033 = vdwg.mxu0
    %v3034 = vadd.f32 %v2940, %v3016
    %v3035 = vadd.f32 %v2941, %v3021
    %v3036 = vadd.f32 %v2942, %v3026
    %v3037 = vadd.f32 %v2943, %v3031
    %3038 = vst.msk [vmem:[#allocation2] sm:$0xff] %vm1707, %v3034
    %3039 = vst.msk [vmem:[#allocation2 + $0x8] sm:$0xff] %vm1707, %v3035
    %3040 = vst.msk [vmem:[#allocation2 + $0x10] sm:$0xff] %vm1707, %v3036
    %3041 = vst.msk [vmem:[#allocation2 + $0x18] sm:$0xff] %vm1707, %v3037
    %v3042 = vld [vmem:[#allocation2] sm:$0xff]
    %v3043 = vld [vmem:[#allocation2 + $0x8] sm:$0xff]
    %v3044 = vld [vmem:[#allocation2 + $0x10] sm:$0xff]
    %v3045 = vld [vmem:[#allocation2 + $0x18] sm:$0xff]
    %v3046 = vsel %vm1707, %v3042, 0.0
    %3047 = vadd.xlane.f32.xlu0 %v3046
    %v3048 = vpop.xlane.xlu0 %3047
    %v3049 = vsel %vm1707, %v3043, 0.0
    %3050 = vadd.xlane.f32.xlu0 %v3049
    %v3051 = vpop.xlane.xlu0 %3050
    %v3052 = vsel %vm1707, %v3044, 0.0
    %3053 = vadd.xlane.f32.xlu0 %v3052
    %v3054 = vpop.xlane.xlu0 %3053
    %v3055 = vsel %vm1707, %v3045, 0.0
    %3056 = vadd.xlane.f32.xlu0 %v3055
    %v3057 = vpop.xlane.xlu0 %3056
    %v3058 = vmul.f32 %v3048, %v519
    %v3059 = vmul.f32 %v3051, %v519
    %v3060 = vmul.f32 %v3054, %v519
    %v3061 = vmul.f32 %v3057, %v519
    %v3062 = vsub.f32 %v3042, %v3058
    %v3063 = vsub.f32 %v3043, %v3059
    %v3064 = vsub.f32 %v3044, %v3060
    %v3065 = vsub.f32 %v3045, %v3061
    %v3066 = vmul.f32 %v3062, %v3062
    %v3067 = vmul.f32 %v3063, %v3063
    %v3068 = vmul.f32 %v3064, %v3064
    %v3069 = vmul.f32 %v3065, %v3065
    %v3070 = vsel %vm1707, %v3066, 0.0
    %3071 = vadd.xlane.f32.xlu0 %v3070
    %v3072 = vpop.xlane.xlu0 %3071
    %v3073 = vsel %vm1707, %v3067, 0.0
    %3074 = vadd.xlane.f32.xlu0 %v3073
    %v3075 = vpop.xlane.xlu0 %3074
    %v3076 = vsel %vm1707, %v3068, 0.0
    %3077 = vadd.xlane.f32.xlu0 %v3076
    %v3078 = vpop.xlane.xlu0 %3077
    %v3079 = vsel %vm1707, %v3069, 0.0
    %3080 = vadd.xlane.f32.xlu0 %v3079
    %v3081 = vpop.xlane.xlu0 %3080
    %v3082 = vmul.f32 %v3072, %v519
    %v3083 = vmul.f32 %v3075, %v519
    %v3084 = vmul.f32 %v3078, %v519
    %v3085 = vmul.f32 %v3081, %v519
    %v3086 = vadd.f32 %v3082, 1e-05
    %v3087 = vadd.f32 %v3083, 1e-05
    %v3088 = vadd.f32 %v3084, 1e-05
    %v3089 = vadd.f32 %v3085, 1e-05
    %v3090 = vrsqrt.pop %v3086
    %v3091 = vrsqrt.pop %v3087
    %v3092 = vrsqrt.pop %v3088
    %v3093 = vrsqrt.pop %v3089
    %v3094 = vmul.f32 %v3062, %v3090
    %v3095 = vmul.f32 %v3063, %v3091
    %v3096 = vmul.f32 %v3064, %v3092
    %v3097 = vmul.f32 %v3065, %v3093
    %v3098 = vld [vmem:[#allocation10] sm:$0x1]
    %v3100 = vlaneseq
    %v3101 = vshrl.u32 %v3100, 7
    %v3102 = vsub.s32 0, %v3101
    %v3103 = vrot.slane %v3098, %v3102
    %v3105 = vmul.f32 %v3094, %v3103
    %v3106 = vmul.f32 %v3095, %v3103
    %v3107 = vmul.f32 %v3096, %v3103
    %v3108 = vmul.f32 %v3097, %v3103
    %v3109 = vld [vmem:[#allocation12] sm:$0x1]
    %v3111 = vlaneseq
    %v3112 = vshrl.u32 %v3111, 7
    %v3113 = vsub.s32 0, %v3112
    %v3114 = vrot.slane %v3109, %v3113
    %v3116 = vadd.f32 %v3105, %v3114
    %v3117 = vadd.f32 %v3106, %v3114
    %v3118 = vadd.f32 %v3107, %v3114
    %v3119 = vadd.f32 %v3108, %v3114
    %v3124 = vcombine.high %v3116, %v3116
    %v3126 = vunpack.c.l.s4 1983009808
    %v3127 = vunpack.c.0.s8 %v3126
    %v3128 = vlaneseq
    %v3129 = vshrl.u32 %v3128, 7
    %v3130 = vsub.s32 %v3127, %v3129
    %v3131 = vrot.slane %v3116, %v3130
    %v3133 = vunpack.c.l.s4 1983009808
    %v3134 = vunpack.c.0.s8 %v3133
    %v3135 = vlaneseq
    %v3136 = vshrl.u32 %v3135, 7
    %v3137 = vsub.s32 %v3134, %v3136
    %v3138 = vrot.slane %v3124, %v3137
    %v3139 = vcombine.high %v3131, %v3131
    %v3140 = vcombine.high %v3138, %v3138
    %v3141 = vcombine.high %v3117, %v3117
    %v3143 = vunpack.c.l.s4 1983009808
    %v3144 = vunpack.c.0.s8 %v3143
    %v3145 = vlaneseq
    %v3146 = vshrl.u32 %v3145, 7
    %v3147 = vsub.s32 %v3144, %v3146
    %v3148 = vrot.slane %v3117, %v3147
    %v3150 = vunpack.c.l.s4 1983009808
    %v3151 = vunpack.c.0.s8 %v3150
    %v3152 = vlaneseq
    %v3153 = vshrl.u32 %v3152, 7
    %v3154 = vsub.s32 %v3151, %v3153
    %v3155 = vrot.slane %v3141, %v3154
    %v3156 = vcombine.high %v3148, %v3148
    %v3157 = vcombine.high %v3155, %v3155
    %v3158 = vcombine.high %v3118, %v3118
    %v3160 = vunpack.c.l.s4 1983009808
    %v3161 = vunpack.c.0.s8 %v3160
    %v3162 = vlaneseq
    %v3163 = vshrl.u32 %v3162, 7
    %v3164 = vsub.s32 %v3161, %v3163
    %v3165 = vrot.slane %v3118, %v3164
    %v3167 = vunpack.c.l.s4 1983009808
    %v3168 = vunpack.c.0.s8 %v3167
    %v3169 = vlaneseq
    %v3170 = vshrl.u32 %v3169, 7
    %v3171 = vsub.s32 %v3168, %v3170
    %v3172 = vrot.slane %v3158, %v3171
    %v3173 = vcombine.high %v3165, %v3165
    %v3174 = vcombine.high %v3172, %v3172
    %v3175 = vcombine.high %v3119, %v3119
    %v3177 = vunpack.c.l.s4 1983009808
    %v3178 = vunpack.c.0.s8 %v3177
    %v3179 = vlaneseq
    %v3180 = vshrl.u32 %v3179, 7
    %v3181 = vsub.s32 %v3178, %v3180
    %v3182 = vrot.slane %v3119, %v3181
    %v3184 = vunpack.c.l.s4 1983009808
    %v3185 = vunpack.c.0.s8 %v3184
    %v3186 = vlaneseq
    %v3187 = vshrl.u32 %v3186, 7
    %v3188 = vsub.s32 %v3185, %v3187
    %v3189 = vrot.slane %v3175, %v3188
    %v3190 = vcombine.high %v3182, %v3182
    %v3191 = vcombine.high %v3189, %v3189
    %v3208 = vcombine.low %v3131, %v3139
    %v3210 = vunpack.c.l.s4 1934713408
    %v3211 = vunpack.c.0.s8 %v3210
    %v3212 = vlaneseq
    %v3213 = vshrl.u32 %v3212, 7
    %v3214 = vsub.s32 %v3211, %v3213
    %v3215 = vrot.slane %v3208, %v3214
    %v3216 = vcombine.high %v3215, 0.0
    %v3217 = vcombine.low %v3138, %v3140
    %v3219 = vunpack.c.l.s4 1934713408
    %v3220 = vunpack.c.0.s8 %v3219
    %v3221 = vlaneseq
    %v3222 = vshrl.u32 %v3221, 7
    %v3223 = vsub.s32 %v3220, %v3222
    %v3224 = vrot.slane %v3217, %v3223
    %v3225 = vcombine.high %v3224, 0.0
    %v3226 = vcombine.low %v3148, %v3156
    %v3228 = vunpack.c.l.s4 1934713408
    %v3229 = vunpack.c.0.s8 %v3228
    %v3230 = vlaneseq
    %v3231 = vshrl.u32 %v3230, 7
    %v3232 = vsub.s32 %v3229, %v3231
    %v3233 = vrot.slane %v3226, %v3232
    %v3234 = vcombine.high %v3233, 0.0
    %v3235 = vcombine.low %v3155, %v3157
    %v3237 = vunpack.c.l.s4 1934713408
    %v3238 = vunpack.c.0.s8 %v3237
    %v3239 = vlaneseq
    %v3240 = vshrl.u32 %v3239, 7
    %v3241 = vsub.s32 %v3238, %v3240
    %v3242 = vrot.slane %v3235, %v3241
    %v3243 = vcombine.high %v3242, 0.0
    %v3244 = vcombine.low %v3165, %v3173
    %v3246 = vunpack.c.l.s4 1934713408
    %v3247 = vunpack.c.0.s8 %v3246
    %v3248 = vlaneseq
    %v3249 = vshrl.u32 %v3248, 7
    %v3250 = vsub.s32 %v3247, %v3249
    %v3251 = vrot.slane %v3244, %v3250
    %v3252 = vcombine.high %v3251, 0.0
    %v3253 = vcombine.low %v3172, %v3174
    %v3255 = vunpack.c.l.s4 1934713408
    %v3256 = vunpack.c.0.s8 %v3255
    %v3257 = vlaneseq
    %v3258 = vshrl.u32 %v3257, 7
    %v3259 = vsub.s32 %v3256, %v3258
    %v3260 = vrot.slane %v3253, %v3259
    %v3261 = vcombine.high %v3260, 0.0
    %v3262 = vcombine.low %v3182, %v3190
    %v3264 = vunpack.c.l.s4 1934713408
    %v3265 = vunpack.c.0.s8 %v3264
    %v3266 = vlaneseq
    %v3267 = vshrl.u32 %v3266, 7
    %v3268 = vsub.s32 %v3265, %v3267
    %v3269 = vrot.slane %v3262, %v3268
    %v3270 = vcombine.high %v3269, 0.0
    %v3271 = vcombine.low %v3189, %v3191
    %v3273 = vunpack.c.l.s4 1934713408
    %v3274 = vunpack.c.0.s8 %v3273
    %v3275 = vlaneseq
    %v3276 = vshrl.u32 %v3275, 7
    %v3277 = vsub.s32 %v3274, %v3276
    %v3278 = vrot.slane %v3271, %v3277
    %v3279 = vcombine.high %v3278, 0.0
    %v3296 = vcombine.low %v3215, %v3224
    %v3297 = vcombine.low %v3233, %v3242
    %v3299 = vunpack.c.l.s4 1983009808
    %v3300 = vunpack.c.0.s8 %v3299
    %v3301 = vlaneseq
    %v3302 = vshrl.u32 %v3301, 7
    %v3303 = vsub.s32 %v3300, %v3302
    %v3304 = vrot.slane %v3296, %v3303
    %v3306 = vunpack.c.l.s4 1983009808
    %v3307 = vunpack.c.0.s8 %v3306
    %v3308 = vlaneseq
    %v3309 = vshrl.u32 %v3308, 7
    %v3310 = vsub.s32 %v3307, %v3309
    %v3311 = vrot.slane %v3297, %v3310
    %v3312 = vcombine.low %v3304, %v3311
    %v3313 = vcombine.low %v3251, %v3260
    %v3314 = vcombine.low %v3269, %v3278
    %v3316 = vunpack.c.l.s4 1983009808
    %v3317 = vunpack.c.0.s8 %v3316
    %v3318 = vlaneseq
    %v3319 = vshrl.u32 %v3318, 7
    %v3320 = vsub.s32 %v3317, %v3319
    %v3321 = vrot.slane %v3313, %v3320
    %v3323 = vunpack.c.l.s4 1983009808
    %v3324 = vunpack.c.0.s8 %v3323
    %v3325 = vlaneseq
    %v3326 = vshrl.u32 %v3325, 7
    %v3327 = vsub.s32 %v3324, %v3326
    %v3328 = vrot.slane %v3314, %v3327
    %v3329 = vcombine.low %v3321, %v3328
    %v3330 = vcombine.low %v3216, %v3225
    %v3331 = vcombine.low %v3234, %v3243
    %v3333 = vunpack.c.l.s4 1983009808
    %v3334 = vunpack.c.0.s8 %v3333
    %v3335 = vlaneseq
    %v3336 = vshrl.u32 %v3335, 7
    %v3337 = vsub.s32 %v3334, %v3336
    %v3338 = vrot.slane %v3330, %v3337
    %v3340 = vunpack.c.l.s4 1983009808
    %v3341 = vunpack.c.0.s8 %v3340
    %v3342 = vlaneseq
    %v3343 = vshrl.u32 %v3342, 7
    %v3344 = vsub.s32 %v3341, %v3343
    %v3345 = vrot.slane %v3331, %v3344
    %v3346 = vcombine.low %v3338, %v3345
    %v3347 = vcombine.low %v3252, %v3261
    %v3348 = vcombine.low %v3270, %v3279
    %v3350 = vunpack.c.l.s4 1983009808
    %v3351 = vunpack.c.0.s8 %v3350
    %v3352 = vlaneseq
    %v3353 = vshrl.u32 %v3352, 7
    %v3354 = vsub.s32 %v3351, %v3353
    %v3355 = vrot.slane %v3347, %v3354
    %v3357 = vunpack.c.l.s4 1983009808
    %v3358 = vunpack.c.0.s8 %v3357
    %v3359 = vlaneseq
    %v3360 = vshrl.u32 %v3359, 7
    %v3361 = vsub.s32 %v3358, %v3360
    %v3362 = vrot.slane %v3348, %v3361
    %v3363 = vcombine.low %v3355, %v3362
    %3368 = vst.msk [vmem:[#allocation28] sm:$0xff] %vm1707, %v3312
    %3369 = vst.msk [vmem:[#allocation28 + $0x8] sm:$0xff] %vm1707, %v3329
    %3370 = vst.msk [vmem:[#allocation28 + $0x10] sm:$0xff] %vm1707, %v3346
    %3371 = vst.msk [vmem:[#allocation28 + $0x18] sm:$0xff] %vm1707, %v3363
    %v3372 = vld [vmem:[#allocation13] sm:$0xff]
    %v3373 = vld [vmem:[#allocation13 + $0x8] sm:$0xff]
    %v3374 = vld [vmem:[#allocation13 + $0x10] sm:$0xff]
    %v3375 = vld [vmem:[#allocation13 + $0x18] sm:$0xff]
    %v3376 = vld [vmem:[#allocation15] sm:$0xff]
    %v3377 = vld [vmem:[#allocation15 + $0x8] sm:$0xff]
    %v3378 = vld [vmem:[#allocation15 + $0x10] sm:$0xff]
    %v3379 = vld [vmem:[#allocation15 + $0x18] sm:$0xff]
    %v3380 = vsel %vm1707, %v3116, 0
    %v3382 = vsel %vm1707, %v3117, 0
    %v3384 = vsel %vm1707, %v3118, 0
    %v3386 = vsel %vm1707, %v3119, 0
    %3388 = vmatprep.subr.mxu0 0.0
    %3389 = vmatpush1.msra.mxu0 %v3376
    %3390 = vmatprep.subr.mxu0 0.0
    %3391 = vmatpush1.msra.mxu0 %v3377
    %3392 = vmatprep.subr.mxu0 0.0
    %3393 = vmatpush1.msra.mxu0 %v3378
    %3394 = vmatprep.subr.mxu0 0.0
    %3395 = vmatpush1.msra.mxu0 %v3379
    %3396 = vmatprep.subr.mxu0 0.0
    %3397 = vmatpush1.msra.mxu0 0.0
    %3398 = vmatprep.subr.mxu0 0.0
    %3399 = vmatpush1.msra.mxu0 0.0
    %3400 = vmatprep.subr.mxu0 0.0
    %3401 = vmatpush1.msra.mxu0 0.0
    %3402 = vmatprep.subr.mxu0 0.0
    %3403 = vmatpush1.msra.mxu0 0.0
    %3404 = vmatprep.subr.mxu0 0.0
    %3405 = vmatpush1.msra.mxu0 0.0
    %3406 = vmatprep.subr.mxu0 0.0
    %3407 = vmatpush1.msra.mxu0 0.0
    %3408 = vmatprep.subr.mxu0 0.0
    %3409 = vmatpush1.msra.mxu0 0.0
    %3410 = vmatprep.subr.mxu0 0.0
    %3411 = vmatpush1.msra.mxu0 0.0
    %3412 = vmatprep.subr.mxu0 0.0
    %3413 = vmatpush1.msra.mxu0 0.0
    %3414 = vmatprep.subr.mxu0 0.0
    %3415 = vmatpush1.msra.mxu0 0.0
    %3416 = vmatprep.subr.mxu0 0.0
    %3417 = vmatpush1.msra.mxu0 0.0
    %3418 = vmatprep.subr.mxu0 0.0
    %3419 = vmatpush1.msra.mxu0 0.0
    %3420 = vmatprep.subr.mxu0 0.0
    %3421 = vmatpush1.msra.mxu0 0.0
    %3422 = vmatprep.subr.mxu0 0.0
    %3423 = vmatpush1.msra.mxu0 0.0
    %3424 = vmatprep.subr.mxu0 0.0
    %3425 = vmatpush1.msra.mxu0 0.0
    %3426 = vmatprep.subr.mxu0 0.0
    %3427 = vmatpush1.msra.mxu0 0.0
    %3428 = vmatprep.subr.mxu0 0.0
    %3429 = vmatpush1.msra.mxu0 0.0
    %3430 = vmatprep.subr.mxu0 0.0
    %3431 = vmatpush1.msra.mxu0 0.0
    %3432 = vmatprep.subr.mxu0 0.0
    %3433 = vmatpush1.msra.mxu0 0.0
    %3434 = vmatprep.subr.mxu0 0.0
    %3435 = vmatpush1.msra.mxu0 0.0
    %3436 = vmatprep.subr.mxu0 0.0
    %3437 = vmatpush1.msra.mxu0 0.0
    %3438 = vmatprep.subr.mxu0 0.0
    %3439 = vmatpush1.msra.mxu0 0.0
    %3440 = vmatprep.subr.mxu0 0.0
    %3441 = vmatpush1.msra.mxu0 0.0
    %3442 = vmatprep.subr.mxu0 0.0
    %3443 = vmatpush1.msra.mxu0 0.0
    %3444 = vmatprep.subr.mxu0 0.0
    %3445 = vmatpush1.msra.mxu0 0.0
    %3446 = vmatprep.subr.mxu0 0.0
    %3447 = vmatpush1.msra.mxu0 0.0
    %3448 = vmatprep.subr.mxu0 0.0
    %3449 = vmatpush1.msra.mxu0 0.0
    %3450 = vmatprep.subr.mxu0 0.0
    %3451 = vmatpush1.msra.mxu0 0.0
    %3452 = vmatprep.mubr.f32.mxu0 0.0
    %3453 = vmatmul.mubr.f32.gmra.mrb[0].mxu0 %v3380
    %v3454 = vpop.f32.mrb[0].mxu0
    %v3455 = vadd.f32 0.0, %v3454
    %v3456 = vpop.f32.mrb[0].mxu0
    %3457 = vmatprep.mubr.f32.mxu0 0.0
    %3458 = vmatmul.mubr.f32.gmra.mrb[0].mxu0 %v3382
    %v3459 = vpop.f32.mrb[0].mxu0
    %v3460 = vadd.f32 0.0, %v3459
    %v3461 = vpop.f32.mrb[0].mxu0
    %3462 = vmatprep.mubr.f32.mxu0 0.0
    %3463 = vmatmul.mubr.f32.gmra.mrb[0].mxu0 %v3384
    %v3464 = vpop.f32.mrb[0].mxu0
    %v3465 = vadd.f32 0.0, %v3464
    %v3466 = vpop.f32.mrb[0].mxu0
    %3467 = vmatprep.mubr.f32.mxu0 0.0
    %3468 = vmatmul.mubr.f32.gmra.mrb[0].mxu0 %v3386
    %v3469 = vpop.f32.mrb[0].mxu0
    %v3470 = vadd.f32 0.0, %v3469
    %v3471 = vpop.f32.mrb[0].mxu0
    %3472 = vdwg.mxu0
    %v3489 = vcombine.low %v1591, %v1592
    %v3490 = vcombine.low %v1593, %v1594
    %v3492 = vunpack.c.l.s4 1983009808
    %v3493 = vunpack.c.0.s8 %v3492
    %v3494 = vlaneseq
    %v3495 = vshrl.u32 %v3494, 7
    %v3496 = vsub.s32 %v3493, %v3495
    %v3497 = vrot.slane %v3489, %v3496
    %v3499 = vunpack.c.l.s4 1983009808
    %v3500 = vunpack.c.0.s8 %v3499
    %v3501 = vlaneseq
    %v3502 = vshrl.u32 %v3501, 7
    %v3503 = vsub.s32 %v3500, %v3502
    %v3504 = vrot.slane %v3490, %v3503
    %v3505 = vcombine.low %v3497, %v3504
    %v3506 = vcombine.low %v1595, %v1596
    %v3507 = vcombine.low %v1597, %v1598
    %v3509 = vunpack.c.l.s4 1983009808
    %v3510 = vunpack.c.0.s8 %v3509
    %v3511 = vlaneseq
    %v3512 = vshrl.u32 %v3511, 7
    %v3513 = vsub.s32 %v3510, %v3512
    %v3514 = vrot.slane %v3506, %v3513
    %v3516 = vunpack.c.l.s4 1983009808
    %v3517 = vunpack.c.0.s8 %v3516
    %v3518 = vlaneseq
    %v3519 = vshrl.u32 %v3518, 7
    %v3520 = vsub.s32 %v3517, %v3519
    %v3521 = vrot.slane %v3507, %v3520
    %v3522 = vcombine.low %v3514, %v3521
    %v3523 = vcombine.low %v1599, %v1600
    %v3524 = vcombine.low %v1601, %v1602
    %v3526 = vunpack.c.l.s4 1983009808
    %v3527 = vunpack.c.0.s8 %v3526
    %v3528 = vlaneseq
    %v3529 = vshrl.u32 %v3528, 7
    %v3530 = vsub.s32 %v3527, %v3529
    %v3531 = vrot.slane %v3523, %v3530
    %v3533 = vunpack.c.l.s4 1983009808
    %v3534 = vunpack.c.0.s8 %v3533
    %v3535 = vlaneseq
    %v3536 = vshrl.u32 %v3535, 7
    %v3537 = vsub.s32 %v3534, %v3536
    %v3538 = vrot.slane %v3524, %v3537
    %v3539 = vcombine.low %v3531, %v3538
    %v3540 = vcombine.low %v1603, %v1604
    %v3541 = vcombine.low %v1605, %v1606
    %v3543 = vunpack.c.l.s4 1983009808
    %v3544 = vunpack.c.0.s8 %v3543
    %v3545 = vlaneseq
    %v3546 = vshrl.u32 %v3545, 7
    %v3547 = vsub.s32 %v3544, %v3546
    %v3548 = vrot.slane %v3540, %v3547
    %v3550 = vunpack.c.l.s4 1983009808
    %v3551 = vunpack.c.0.s8 %v3550
    %v3552 = vlaneseq
    %v3553 = vshrl.u32 %v3552, 7
    %v3554 = vsub.s32 %v3551, %v3553
    %v3555 = vrot.slane %v3541, %v3554
    %v3556 = vcombine.low %v3548, %v3555
    %v3557 = vsel %vm1707, %v3505, 0
    %v3559 = vsel %vm1707, %v3522, 0
    %v3561 = vsel %vm1707, %v3539, 0
    %v3563 = vsel %vm1707, %v3556, 0
    %3565 = vmatprep.subr.mxu0 0.0
    %3566 = vmatpush1.msra.mxu0 %v3372
    %3567 = vmatprep.subr.mxu0 0.0
    %3568 = vmatpush1.msra.mxu0 %v3373
    %3569 = vmatprep.subr.mxu0 0.0
    %3570 = vmatpush1.msra.mxu0 %v3374
    %3571 = vmatprep.subr.mxu0 0.0
    %3572 = vmatpush1.msra.mxu0 %v3375
    %3573 = vmatprep.subr.mxu0 0.0
    %3574 = vmatpush1.msra.mxu0 0.0
    %3575 = vmatprep.subr.mxu0 0.0
    %3576 = vmatpush1.msra.mxu0 0.0
    %3577 = vmatprep.subr.mxu0 0.0
    %3578 = vmatpush1.msra.mxu0 0.0
    %3579 = vmatprep.subr.mxu0 0.0
    %3580 = vmatpush1.msra.mxu0 0.0
    %3581 = vmatprep.subr.mxu0 0.0
    %3582 = vmatpush1.msra.mxu0 0.0
    %3583 = vmatprep.subr.mxu0 0.0
    %3584 = vmatpush1.msra.mxu0 0.0
    %3585 = vmatprep.subr.mxu0 0.0
    %3586 = vmatpush1.msra.mxu0 0.0
    %3587 = vmatprep.subr.mxu0 0.0
    %3588 = vmatpush1.msra.mxu0 0.0
    %3589 = vmatprep.subr.mxu0 0.0
    %3590 = vmatpush1.msra.mxu0 0.0
    %3591 = vmatprep.subr.mxu0 0.0
    %3592 = vmatpush1.msra.mxu0 0.0
    %3593 = vmatprep.subr.mxu0 0.0
    %3594 = vmatpush1.msra.mxu0 0.0
    %3595 = vmatprep.subr.mxu0 0.0
    %3596 = vmatpush1.msra.mxu0 0.0
    %3597 = vmatprep.subr.mxu0 0.0
    %3598 = vmatpush1.msra.mxu0 0.0
    %3599 = vmatprep.subr.mxu0 0.0
    %3600 = vmatpush1.msra.mxu0 0.0
    %3601 = vmatprep.subr.mxu0 0.0
    %3602 = vmatpush1.msra.mxu0 0.0
    %3603 = vmatprep.subr.mxu0 0.0
    %3604 = vmatpush1.msra.mxu0 0.0
    %3605 = vmatprep.subr.mxu0 0.0
    %3606 = vmatpush1.msra.mxu0 0.0
    %3607 = vmatprep.subr.mxu0 0.0
    %3608 = vmatpush1.msra.mxu0 0.0
    %3609 = vmatprep.subr.mxu0 0.0
    %3610 = vmatpush1.msra.mxu0 0.0
    %3611 = vmatprep.subr.mxu0 0.0
    %3612 = vmatpush1.msra.mxu0 0.0
    %3613 = vmatprep.subr.mxu0 0.0
    %3614 = vmatpush1.msra.mxu0 0.0
    %3615 = vmatprep.subr.mxu0 0.0
    %3616 = vmatpush1.msra.mxu0 0.0
    %3617 = vmatprep.subr.mxu0 0.0
    %3618 = vmatpush1.msra.mxu0 0.0
    %3619 = vmatprep.subr.mxu0 0.0
    %3620 = vmatpush1.msra.mxu0 0.0
    %3621 = vmatprep.subr.mxu0 0.0
    %3622 = vmatpush1.msra.mxu0 0.0
    %3623 = vmatprep.subr.mxu0 0.0
    %3624 = vmatpush1.msra.mxu0 0.0
    %3625 = vmatprep.subr.mxu0 0.0
    %3626 = vmatpush1.msra.mxu0 0.0
    %3627 = vmatprep.subr.mxu0 0.0
    %3628 = vmatpush1.msra.mxu0 0.0
    %3629 = vmatprep.mubr.f32.mxu0 0.0
    %3630 = vmatmul.mubr.f32.gmra.mrb[0].mxu0 %v3557
    %v3631 = vpop.f32.mrb[0].mxu0
    %v3632 = vadd.f32 %v3455, %v3631
    %v3633 = vpop.f32.mrb[0].mxu0
    %3634 = vmatprep.mubr.f32.mxu0 0.0
    %3635 = vmatmul.mubr.f32.gmra.mrb[0].mxu0 %v3559
    %v3636 = vpop.f32.mrb[0].mxu0
    %v3637 = vadd.f32 %v3460, %v3636
    %v3638 = vpop.f32.mrb[0].mxu0
    %3639 = vmatprep.mubr.f32.mxu0 0.0
    %3640 = vmatmul.mubr.f32.gmra.mrb[0].mxu0 %v3561
    %v3641 = vpop.f32.mrb[0].mxu0
    %v3642 = vadd.f32 %v3465, %v3641
    %v3643 = vpop.f32.mrb[0].mxu0
    %3644 = vmatprep.mubr.f32.mxu0 0.0
    %3645 = vmatmul.mubr.f32.gmra.mrb[0].mxu0 %v3563
    %v3646 = vpop.f32.mrb[0].mxu0
    %v3647 = vadd.f32 %v3470, %v3646
    %v3648 = vpop.f32.mrb[0].mxu0
    %3649 = vdwg.mxu0
    %v3650 = vld [vmem:[#allocation16] sm:$0x1]
    %v3652 = vlaneseq
    %v3653 = vshrl.u32 %v3652, 7
    %v3654 = vsub.s32 0, %v3653
    %v3655 = vrot.slane %v3650, %v3654
    %v3657 = vadd.f32 %v3632, %v3655
    %v3658 = vadd.f32 %v3637, %v3655
    %v3659 = vadd.f32 %v3642, %v3655
    %v3660 = vadd.f32 %v3647, %v3655
    %v3661 = vxor.u32 %v3657, 2147483648
    %v3662 = vxor.u32 %v3658, 2147483648
    %v3663 = vxor.u32 %v3659, 2147483648
    %v3664 = vxor.u32 %v3660, 2147483648
    %v3665 = vmul.f32 %v3661, 1.442695
    %v3666 = vpow.pop %v3665
    %v3667 = vmul.f32 %v3662, 1.442695
    %v3668 = vpow.pop %v3667
    %v3669 = vmul.f32 %v3663, 1.442695
    %v3670 = vpow.pop %v3669
    %v3671 = vmul.f32 %v3664, 1.442695
    %v3672 = vpow.pop %v3671
    %v3673 = vadd.f32 %v3666, 1.0
    %v3674 = vadd.f32 %v3668, 1.0
    %v3675 = vadd.f32 %v3670, 1.0
    %v3676 = vadd.f32 %v3672, 1.0
    %v3677 = vrcp.pop %v3673
    %v3678 = vmul.f32 1.0, %v3677
    %v3679 = vrcp.pop %v3674
    %v3680 = vmul.f32 1.0, %v3679
    %v3681 = vrcp.pop %v3675
    %v3682 = vmul.f32 1.0, %v3681
    %v3683 = vrcp.pop %v3676
    %v3684 = vmul.f32 1.0, %v3683
    %v3685 = vmul.f32 %v3657, %v3678
    %v3686 = vmul.f32 %v3658, %v3680
    %v3687 = vmul.f32 %v3659, %v3682
    %v3688 = vmul.f32 %v3660, %v3684
    %v3689 = vld [vmem:[#allocation18] sm:$0xff]
    %v3690 = vld [vmem:[#allocation18 + $0x8] sm:$0xff]
    %v3691 = vld [vmem:[#allocation18 + $0x10] sm:$0xff]
    %v3692 = vld [vmem:[#allocation18 + $0x18] sm:$0xff]
    %v3693 = vld [vmem:[#allocation19] sm:$0x1]
    %v3695 = vlaneseq
    %v3696 = vshrl.u32 %v3695, 7
    %v3697 = vsub.s32 0, %v3696
    %v3698 = vrot.slane %v3693, %v3697
    %v3701 = vsel %vm1707, %v3685, 0
    %v3704 = vsel %vm1707, %v3686, 0
    %v3707 = vsel %vm1707, %v3687, 0
    %v3710 = vsel %vm1707, %v3688, 0
    %3712 = vmatprep.subr.mxu0 0.0
    %3713 = vmatpush1.msra.mxu0 %v3689
    %3714 = vmatprep.subr.mxu0 0.0
    %3715 = vmatpush1.msra.mxu0 %v3690
    %3716 = vmatprep.subr.mxu0 0.0
    %3717 = vmatpush1.msra.mxu0 %v3691
    %3718 = vmatprep.subr.mxu0 0.0
    %3719 = vmatpush1.msra.mxu0 %v3692
    %3720 = vmatprep.subr.mxu0 0.0
    %3721 = vmatpush1.msra.mxu0 0.0
    %3722 = vmatprep.subr.mxu0 0.0
    %3723 = vmatpush1.msra.mxu0 0.0
    %3724 = vmatprep.subr.mxu0 0.0
    %3725 = vmatpush1.msra.mxu0 0.0
    %3726 = vmatprep.subr.mxu0 0.0
    %3727 = vmatpush1.msra.mxu0 0.0
    %3728 = vmatprep.subr.mxu0 0.0
    %3729 = vmatpush1.msra.mxu0 0.0
    %3730 = vmatprep.subr.mxu0 0.0
    %3731 = vmatpush1.msra.mxu0 0.0
    %3732 = vmatprep.subr.mxu0 0.0
    %3733 = vmatpush1.msra.mxu0 0.0
    %3734 = vmatprep.subr.mxu0 0.0
    %3735 = vmatpush1.msra.mxu0 0.0
    %3736 = vmatprep.subr.mxu0 0.0
    %3737 = vmatpush1.msra.mxu0 0.0
    %3738 = vmatprep.subr.mxu0 0.0
    %3739 = vmatpush1.msra.mxu0 0.0
    %3740 = vmatprep.subr.mxu0 0.0
    %3741 = vmatpush1.msra.mxu0 0.0
    %3742 = vmatprep.subr.mxu0 0.0
    %3743 = vmatpush1.msra.mxu0 0.0
    %3744 = vmatprep.subr.mxu0 0.0
    %3745 = vmatpush1.msra.mxu0 0.0
    %3746 = vmatprep.subr.mxu0 0.0
    %3747 = vmatpush1.msra.mxu0 0.0
    %3748 = vmatprep.subr.mxu0 0.0
    %3749 = vmatpush1.msra.mxu0 0.0
    %3750 = vmatprep.subr.mxu0 0.0
    %3751 = vmatpush1.msra.mxu0 0.0
    %3752 = vmatprep.subr.mxu0 0.0
    %3753 = vmatpush1.msra.mxu0 0.0
    %3754 = vmatprep.subr.mxu0 0.0
    %3755 = vmatpush1.msra.mxu0 0.0
    %3756 = vmatprep.subr.mxu0 0.0
    %3757 = vmatpush1.msra.mxu0 0.0
    %3758 = vmatprep.subr.mxu0 0.0
    %3759 = vmatpush1.msra.mxu0 0.0
    %3760 = vmatprep.subr.mxu0 0.0
    %3761 = vmatpush1.msra.mxu0 0.0
    %3762 = vmatprep.subr.mxu0 0.0
    %3763 = vmatpush1.msra.mxu0 0.0
    %3764 = vmatprep.subr.mxu0 0.0
    %3765 = vmatpush1.msra.mxu0 0.0
    %3766 = vmatprep.subr.mxu0 0.0
    %3767 = vmatpush1.msra.mxu0 0.0
    %3768 = vmatprep.subr.mxu0 0.0
    %3769 = vmatpush1.msra.mxu0 0.0
    %3770 = vmatprep.subr.mxu0 0.0
    %3771 = vmatpush1.msra.mxu0 0.0
    %3772 = vmatprep.subr.mxu0 0.0
    %3773 = vmatpush1.msra.mxu0 0.0
    %3774 = vmatprep.subr.mxu0 0.0
    %3775 = vmatpush1.msra.mxu0 0.0
    %3776 = vmatprep.mubr.f32.mxu0 0.0
    %3777 = vmatmul.mubr.f32.gmra.mrb[0].mxu0 %v3701
    %v3778 = vpop.f32.mrb[0].mxu0
    %v3779 = vadd.f32 %v3698, %v3778
    %v3780 = vpop.f32.mrb[0].mxu0
    %3781 = vmatprep.mubr.f32.mxu0 0.0
    %3782 = vmatmul.mubr.f32.gmra.mrb[0].mxu0 %v3704
    %v3783 = vpop.f32.mrb[0].mxu0
    %v3784 = vadd.f32 %v3698, %v3783
    %v3785 = vpop.f32.mrb[0].mxu0
    %3786 = vmatprep.mubr.f32.mxu0 0.0
    %3787 = vmatmul.mubr.f32.gmra.mrb[0].mxu0 %v3707
    %v3788 = vpop.f32.mrb[0].mxu0
    %v3789 = vadd.f32 %v3698, %v3788
    %v3790 = vpop.f32.mrb[0].mxu0
    %3791 = vmatprep.mubr.f32.mxu0 0.0
    %3792 = vmatmul.mubr.f32.gmra.mrb[0].mxu0 %v3710
    %v3793 = vpop.f32.mrb[0].mxu0
    %v3794 = vadd.f32 %v3698, %v3793
    %v3795 = vpop.f32.mrb[0].mxu0
    %3796 = vdwg.mxu0
    %v3797 = vld [vmem:[#allocation21] sm:$0xff]
    %v3798 = vld [vmem:[#allocation21 + $0x8] sm:$0xff]
    %v3799 = vld [vmem:[#allocation21 + $0x10] sm:$0xff]
    %v3800 = vld [vmem:[#allocation21 + $0x18] sm:$0xff]
    %v3801 = vld [vmem:[#allocation22] sm:$0x1]
    %v3803 = vlaneseq
    %v3804 = vshrl.u32 %v3803, 7
    %v3805 = vsub.s32 0, %v3804
    %v3806 = vrot.slane %v3801, %v3805
    %v3809 = vsel %vm1707, %v3779, 0
    %v3812 = vsel %vm1707, %v3784, 0
    %v3815 = vsel %vm1707, %v3789, 0
    %v3818 = vsel %vm1707, %v3794, 0
    %3820 = vmatprep.subr.mxu0 0.0
    %3821 = vmatpush1.msra.mxu0 %v3797
    %3822 = vmatprep.subr.mxu0 0.0
    %3823 = vmatpush1.msra.mxu0 %v3798
    %3824 = vmatprep.subr.mxu0 0.0
    %3825 = vmatpush1.msra.mxu0 %v3799
    %3826 = vmatprep.subr.mxu0 0.0
    %3827 = vmatpush1.msra.mxu0 %v3800
    %3828 = vmatprep.subr.mxu0 0.0
    %3829 = vmatpush1.msra.mxu0 0.0
    %3830 = vmatprep.subr.mxu0 0.0
    %3831 = vmatpush1.msra.mxu0 0.0
    %3832 = vmatprep.subr.mxu0 0.0
    %3833 = vmatpush1.msra.mxu0 0.0
    %3834 = vmatprep.subr.mxu0 0.0
    %3835 = vmatpush1.msra.mxu0 0.0
    %3836 = vmatprep.subr.mxu0 0.0
    %3837 = vmatpush1.msra.mxu0 0.0
    %3838 = vmatprep.subr.mxu0 0.0
    %3839 = vmatpush1.msra.mxu0 0.0
    %3840 = vmatprep.subr.mxu0 0.0
    %3841 = vmatpush1.msra.mxu0 0.0
    %3842 = vmatprep.subr.mxu0 0.0
    %3843 = vmatpush1.msra.mxu0 0.0
    %3844 = vmatprep.subr.mxu0 0.0
    %3845 = vmatpush1.msra.mxu0 0.0
    %3846 = vmatprep.subr.mxu0 0.0
    %3847 = vmatpush1.msra.mxu0 0.0
    %3848 = vmatprep.subr.mxu0 0.0
    %3849 = vmatpush1.msra.mxu0 0.0
    %3850 = vmatprep.subr.mxu0 0.0
    %3851 = vmatpush1.msra.mxu0 0.0
    %3852 = vmatprep.subr.mxu0 0.0
    %3853 = vmatpush1.msra.mxu0 0.0
    %3854 = vmatprep.subr.mxu0 0.0
    %3855 = vmatpush1.msra.mxu0 0.0
    %3856 = vmatprep.subr.mxu0 0.0
    %3857 = vmatpush1.msra.mxu0 0.0
    %3858 = vmatprep.subr.mxu0 0.0
    %3859 = vmatpush1.msra.mxu0 0.0
    %3860 = vmatprep.subr.mxu0 0.0
    %3861 = vmatpush1.msra.mxu0 0.0
    %3862 = vmatprep.subr.mxu0 0.0
    %3863 = vmatpush1.msra.mxu0 0.0
    %3864 = vmatprep.subr.mxu0 0.0
    %3865 = vmatpush1.msra.mxu0 0.0
    %3866 = vmatprep.subr.mxu0 0.0
    %3867 = vmatpush1.msra.mxu0 0.0
    %3868 = vmatprep.subr.mxu0 0.0
    %3869 = vmatpush1.msra.mxu0 0.0
    %3870 = vmatprep.subr.mxu0 0.0
    %3871 = vmatpush1.msra.mxu0 0.0
    %3872 = vmatprep.subr.mxu0 0.0
    %3873 = vmatpush1.msra.mxu0 0.0
    %3874 = vmatprep.subr.mxu0 0.0
    %3875 = vmatpush1.msra.mxu0 0.0
    %3876 = vmatprep.subr.mxu0 0.0
    %3877 = vmatpush1.msra.mxu0 0.0
    %3878 = vmatprep.subr.mxu0 0.0
    %3879 = vmatpush1.msra.mxu0 0.0
    %3880 = vmatprep.subr.mxu0 0.0
    %3881 = vmatpush1.msra.mxu0 0.0
    %3882 = vmatprep.subr.mxu0 0.0
    %3883 = vmatpush1.msra.mxu0 0.0
    %3884 = vmatprep.mubr.f32.mxu0 0.0
    %3885 = vmatmul.mubr.f32.gmra.mrb[0].mxu0 %v3809
    %v3886 = vpop.f32.mrb[0].mxu0
    %v3887 = vadd.f32 %v3806, %v3886
    %v3888 = vpop.f32.mrb[0].mxu0
    %3889 = vmatprep.mubr.f32.mxu0 0.0
    %3890 = vmatmul.mubr.f32.gmra.mrb[0].mxu0 %v3812
    %v3891 = vpop.f32.mrb[0].mxu0
    %v3892 = vadd.f32 %v3806, %v3891
    %v3893 = vpop.f32.mrb[0].mxu0
    %3894 = vmatprep.mubr.f32.mxu0 0.0
    %3895 = vmatmul.mubr.f32.gmra.mrb[0].mxu0 %v3815
    %v3896 = vpop.f32.mrb[0].mxu0
    %v3897 = vadd.f32 %v3806, %v3896
    %v3898 = vpop.f32.mrb[0].mxu0
    %3899 = vmatprep.mubr.f32.mxu0 0.0
    %3900 = vmatmul.mubr.f32.gmra.mrb[0].mxu0 %v3818
    %v3901 = vpop.f32.mrb[0].mxu0
    %v3902 = vadd.f32 %v3806, %v3901
    %v3903 = vpop.f32.mrb[0].mxu0
    %3904 = vdwg.mxu0
    %v3905 = vxor.u32 %v3887, 2147483648
    %v3906 = vxor.u32 %v3892, 2147483648
    %v3907 = vxor.u32 %v3897, 2147483648
    %v3908 = vxor.u32 %v3902, 2147483648
    %v3909 = vmul.f32 %v3905, 1.442695
    %v3910 = vpow.pop %v3909
    %v3911 = vmul.f32 %v3906, 1.442695
    %v3912 = vpow.pop %v3911
    %v3913 = vmul.f32 %v3907, 1.442695
    %v3914 = vpow.pop %v3913
    %v3915 = vmul.f32 %v3908, 1.442695
    %v3916 = vpow.pop %v3915
    %v3917 = vadd.f32 %v3910, 1.0
    %v3918 = vadd.f32 %v3912, 1.0
    %v3919 = vadd.f32 %v3914, 1.0
    %v3920 = vadd.f32 %v3916, 1.0
    %v3921 = vrcp.pop %v3917
    %v3922 = vmul.f32 1.0, %v3921
    %v3923 = vrcp.pop %v3918
    %v3924 = vmul.f32 1.0, %v3923
    %v3925 = vrcp.pop %v3919
    %v3926 = vmul.f32 1.0, %v3925
    %v3927 = vrcp.pop %v3920
    %v3928 = vmul.f32 1.0, %v3927
    %v3929 = vmul.f32 %v3887, %v3922
    %v3930 = vmul.f32 %v3892, %v3924
    %v3931 = vmul.f32 %v3897, %v3926
    %v3932 = vmul.f32 %v3902, %v3928
    %v3933 = vld [vmem:[%s16] sm:$0xff]
    %v3934 = vld [vmem:[%s16 + $0x8] sm:$0xff]
    %v3935 = vld [vmem:[%s16 + $0x10] sm:$0xff]
    %v3936 = vld [vmem:[%s16 + $0x18] sm:$0xff]
    %v3937 = vld [vmem:[%s17] sm:$0x1]
    %v3939 = vlaneseq
    %v3940 = vshrl.u32 %v3939, 7
    %v3941 = vsub.s32 0, %v3940
    %v3942 = vrot.slane %v3937, %v3941
    %v3945 = vsel %vm1707, %v3929, 0
    %v3948 = vsel %vm1707, %v3930, 0
    %v3951 = vsel %vm1707, %v3931, 0
    %v3954 = vsel %vm1707, %v3932, 0
    %3956 = vmatprep.subr.mxu0 0.0
    %3957 = vmatpush1.msra.mxu0 %v3933
    %3958 = vmatprep.subr.mxu0 0.0
    %3959 = vmatpush1.msra.mxu0 %v3934
    %3960 = vmatprep.subr.mxu0 0.0
    %3961 = vmatpush1.msra.mxu0 %v3935
    %3962 = vmatprep.subr.mxu0 0.0
    %3963 = vmatpush1.msra.mxu0 %v3936
    %3964 = vmatprep.subr.mxu0 0.0
    %3965 = vmatpush1.msra.mxu0 0.0
    %3966 = vmatprep.subr.mxu0 0.0
    %3967 = vmatpush1.msra.mxu0 0.0
    %3968 = vmatprep.subr.mxu0 0.0
    %3969 = vmatpush1.msra.mxu0 0.0
    %3970 = vmatprep.subr.mxu0 0.0
    %3971 = vmatpush1.msra.mxu0 0.0
    %3972 = vmatprep.subr.mxu0 0.0
    %3973 = vmatpush1.msra.mxu0 0.0
    %3974 = vmatprep.subr.mxu0 0.0
    %3975 = vmatpush1.msra.mxu0 0.0
    %3976 = vmatprep.subr.mxu0 0.0
    %3977 = vmatpush1.msra.mxu0 0.0
    %3978 = vmatprep.subr.mxu0 0.0
    %3979 = vmatpush1.msra.mxu0 0.0
    %3980 = vmatprep.subr.mxu0 0.0
    %3981 = vmatpush1.msra.mxu0 0.0
    %3982 = vmatprep.subr.mxu0 0.0
    %3983 = vmatpush1.msra.mxu0 0.0
    %3984 = vmatprep.subr.mxu0 0.0
    %3985 = vmatpush1.msra.mxu0 0.0
    %3986 = vmatprep.subr.mxu0 0.0
    %3987 = vmatpush1.msra.mxu0 0.0
    %3988 = vmatprep.subr.mxu0 0.0
    %3989 = vmatpush1.msra.mxu0 0.0
    %3990 = vmatprep.subr.mxu0 0.0
    %3991 = vmatpush1.msra.mxu0 0.0
    %3992 = vmatprep.subr.mxu0 0.0
    %3993 = vmatpush1.msra.mxu0 0.0
    %3994 = vmatprep.subr.mxu0 0.0
    %3995 = vmatpush1.msra.mxu0 0.0
    %3996 = vmatprep.subr.mxu0 0.0
    %3997 = vmatpush1.msra.mxu0 0.0
    %3998 = vmatprep.subr.mxu0 0.0
    %3999 = vmatpush1.msra.mxu0 0.0
    %4000 = vmatprep.subr.mxu0 0.0
    %4001 = vmatpush1.msra.mxu0 0.0
    %4002 = vmatprep.subr.mxu0 0.0
    %4003 = vmatpush1.msra.mxu0 0.0
    %4004 = vmatprep.subr.mxu0 0.0
    %4005 = vmatpush1.msra.mxu0 0.0
    %4006 = vmatprep.subr.mxu0 0.0
    %4007 = vmatpush1.msra.mxu0 0.0
    %4008 = vmatprep.subr.mxu0 0.0
    %4009 = vmatpush1.msra.mxu0 0.0
    %4010 = vmatprep.subr.mxu0 0.0
    %4011 = vmatpush1.msra.mxu0 0.0
    %4012 = vmatprep.subr.mxu0 0.0
    %4013 = vmatpush1.msra.mxu0 0.0
    %4014 = vmatprep.subr.mxu0 0.0
    %4015 = vmatpush1.msra.mxu0 0.0
    %4016 = vmatprep.subr.mxu0 0.0
    %4017 = vmatpush1.msra.mxu0 0.0
    %4018 = vmatprep.subr.mxu0 0.0
    %4019 = vmatpush1.msra.mxu0 0.0
    %4020 = vmatprep.mubr.f32.mxu0 0.0
    %4021 = vmatmul.mubr.f32.gmra.mrb[0].mxu0 %v3945
    %v4022 = vpop.f32.mrb[0].mxu0
    %v4023 = vadd.f32 %v3942, %v4022
    %v4024 = vpop.f32.mrb[0].mxu0
    %4025 = vmatprep.mubr.f32.mxu0 0.0
    %4026 = vmatmul.mubr.f32.gmra.mrb[0].mxu0 %v3948
    %v4027 = vpop.f32.mrb[0].mxu0
    %v4028 = vadd.f32 %v3942, %v4027
    %v4029 = vpop.f32.mrb[0].mxu0
    %4030 = vmatprep.mubr.f32.mxu0 0.0
    %4031 = vmatmul.mubr.f32.gmra.mrb[0].mxu0 %v3951
    %v4032 = vpop.f32.mrb[0].mxu0
    %v4033 = vadd.f32 %v3942, %v4032
    %v4034 = vpop.f32.mrb[0].mxu0
    %4035 = vmatprep.mubr.f32.mxu0 0.0
    %4036 = vmatmul.mubr.f32.gmra.mrb[0].mxu0 %v3954
    %v4037 = vpop.f32.mrb[0].mxu0
    %v4038 = vadd.f32 %v3942, %v4037
    %v4039 = vpop.f32.mrb[0].mxu0
    %4040 = vdwg.mxu0
    %v4045 = vcombine.high %v4023, %v4023
    %v4047 = vunpack.c.l.s4 1983009808
    %v4048 = vunpack.c.0.s8 %v4047
    %v4049 = vlaneseq
    %v4050 = vshrl.u32 %v4049, 7
    %v4051 = vsub.s32 %v4048, %v4050
    %v4052 = vrot.slane %v4023, %v4051
    %v4054 = vunpack.c.l.s4 1983009808
    %v4055 = vunpack.c.0.s8 %v4054
    %v4056 = vlaneseq
    %v4057 = vshrl.u32 %v4056, 7
    %v4058 = vsub.s32 %v4055, %v4057
    %v4059 = vrot.slane %v4045, %v4058
    %v4060 = vcombine.high %v4052, %v4052
    %v4061 = vcombine.high %v4059, %v4059
    %v4062 = vcombine.high %v4028, %v4028
    %v4064 = vunpack.c.l.s4 1983009808
    %v4065 = vunpack.c.0.s8 %v4064
    %v4066 = vlaneseq
    %v4067 = vshrl.u32 %v4066, 7
    %v4068 = vsub.s32 %v4065, %v4067
    %v4069 = vrot.slane %v4028, %v4068
    %v4071 = vunpack.c.l.s4 1983009808
    %v4072 = vunpack.c.0.s8 %v4071
    %v4073 = vlaneseq
    %v4074 = vshrl.u32 %v4073, 7
    %v4075 = vsub.s32 %v4072, %v4074
    %v4076 = vrot.slane %v4062, %v4075
    %v4077 = vcombine.high %v4069, %v4069
    %v4078 = vcombine.high %v4076, %v4076
    %v4079 = vcombine.high %v4033, %v4033
    %v4081 = vunpack.c.l.s4 1983009808
    %v4082 = vunpack.c.0.s8 %v4081
    %v4083 = vlaneseq
    %v4084 = vshrl.u32 %v4083, 7
    %v4085 = vsub.s32 %v4082, %v4084
    %v4086 = vrot.slane %v4033, %v4085
    %v4088 = vunpack.c.l.s4 1983009808
    %v4089 = vunpack.c.0.s8 %v4088
    %v4090 = vlaneseq
    %v4091 = vshrl.u32 %v4090, 7
    %v4092 = vsub.s32 %v4089, %v4091
    %v4093 = vrot.slane %v4079, %v4092
    %v4094 = vcombine.high %v4086, %v4086
    %v4095 = vcombine.high %v4093, %v4093
    %v4096 = vcombine.high %v4038, %v4038
    %v4098 = vunpack.c.l.s4 1983009808
    %v4099 = vunpack.c.0.s8 %v4098
    %v4100 = vlaneseq
    %v4101 = vshrl.u32 %v4100, 7
    %v4102 = vsub.s32 %v4099, %v4101
    %v4103 = vrot.slane %v4038, %v4102
    %v4105 = vunpack.c.l.s4 1983009808
    %v4106 = vunpack.c.0.s8 %v4105
    %v4107 = vlaneseq
    %v4108 = vshrl.u32 %v4107, 7
    %v4109 = vsub.s32 %v4106, %v4108
    %v4110 = vrot.slane %v4096, %v4109
    %v4111 = vcombine.high %v4103, %v4103
    %v4112 = vcombine.high %v4110, %v4110
    %v4129 = vcombine.low %v4052, %v4060
    %v4131 = vunpack.c.l.s4 1934713408
    %v4132 = vunpack.c.0.s8 %v4131
    %v4133 = vlaneseq
    %v4134 = vshrl.u32 %v4133, 7
    %v4135 = vsub.s32 %v4132, %v4134
    %v4136 = vrot.slane %v4129, %v4135
    %v4137 = vcombine.high %v4136, 0.0
    %v4138 = vcombine.low %v4059, %v4061
    %v4140 = vunpack.c.l.s4 1934713408
    %v4141 = vunpack.c.0.s8 %v4140
    %v4142 = vlaneseq
    %v4143 = vshrl.u32 %v4142, 7
    %v4144 = vsub.s32 %v4141, %v4143
    %v4145 = vrot.slane %v4138, %v4144
    %v4146 = vcombine.high %v4145, 0.0
    %v4147 = vcombine.low %v4069, %v4077
    %v4149 = vunpack.c.l.s4 1934713408
    %v4150 = vunpack.c.0.s8 %v4149
    %v4151 = vlaneseq
    %v4152 = vshrl.u32 %v4151, 7
    %v4153 = vsub.s32 %v4150, %v4152
    %v4154 = vrot.slane %v4147, %v4153
    %v4155 = vcombine.high %v4154, 0.0
    %v4156 = vcombine.low %v4076, %v4078
    %v4158 = vunpack.c.l.s4 1934713408
    %v4159 = vunpack.c.0.s8 %v4158
    %v4160 = vlaneseq
    %v4161 = vshrl.u32 %v4160, 7
    %v4162 = vsub.s32 %v4159, %v4161
    %v4163 = vrot.slane %v4156, %v4162
    %v4164 = vcombine.high %v4163, 0.0
    %v4165 = vcombine.low %v4086, %v4094
    %v4167 = vunpack.c.l.s4 1934713408
    %v4168 = vunpack.c.0.s8 %v4167
    %v4169 = vlaneseq
    %v4170 = vshrl.u32 %v4169, 7
    %v4171 = vsub.s32 %v4168, %v4170
    %v4172 = vrot.slane %v4165, %v4171
    %v4173 = vcombine.high %v4172, 0.0
    %v4174 = vcombine.low %v4093, %v4095
    %v4176 = vunpack.c.l.s4 1934713408
    %v4177 = vunpack.c.0.s8 %v4176
    %v4178 = vlaneseq
    %v4179 = vshrl.u32 %v4178, 7
    %v4180 = vsub.s32 %v4177, %v4179
    %v4181 = vrot.slane %v4174, %v4180
    %v4182 = vcombine.high %v4181, 0.0
    %v4183 = vcombine.low %v4103, %v4111
    %v4185 = vunpack.c.l.s4 1934713408
    %v4186 = vunpack.c.0.s8 %v4185
    %v4187 = vlaneseq
    %v4188 = vshrl.u32 %v4187, 7
    %v4189 = vsub.s32 %v4186, %v4188
    %v4190 = vrot.slane %v4183, %v4189
    %v4191 = vcombine.high %v4190, 0.0
    %v4192 = vcombine.low %v4110, %v4112
    %v4194 = vunpack.c.l.s4 1934713408
    %v4195 = vunpack.c.0.s8 %v4194
    %v4196 = vlaneseq
    %v4197 = vshrl.u32 %v4196, 7
    %v4198 = vsub.s32 %v4195, %v4197
    %v4199 = vrot.slane %v4192, %v4198
    %v4200 = vcombine.high %v4199, 0.0
    %s4201 = scalar_lea.vmem %s16, 32
    %v4202 = vld [vmem:[%s4201] sm:$0xff]
    %v4203 = vld [vmem:[%s4201 + $0x8] sm:$0xff]
    %v4204 = vld [vmem:[%s4201 + $0x10] sm:$0xff]
    %v4205 = vld [vmem:[%s4201 + $0x18] sm:$0xff]
    %s4206 = scalar_lea.vmem %s17, 1
    %v4207 = vld [vmem:[%s4206] sm:$0x1]
    %v4209 = vlaneseq
    %v4210 = vshrl.u32 %v4209, 7
    %v4211 = vsub.s32 0, %v4210
    %v4212 = vrot.slane %v4207, %v4211
    %4214 = vrot.lane.b32.xlu0 %v3929, 96
    %v4215 = vpop.permute.xlu0 %4214
    %4216 = vrot.lane.b32.xlu0 %v3930, 96
    %v4217 = vpop.permute.xlu0 %4216
    %4218 = vrot.lane.b32.xlu0 %v3931, 96
    %v4219 = vpop.permute.xlu0 %4218
    %4220 = vrot.lane.b32.xlu0 %v3932, 96
    %v4221 = vpop.permute.xlu0 %4220
    %v4222 = vsel %vm1707, %v4215, 0
    %v4224 = vsel %vm1707, %v4217, 0
    %v4226 = vsel %vm1707, %v4219, 0
    %v4228 = vsel %vm1707, %v4221, 0
    %4230 = vmatprep.subr.mxu0 0.0
    %4231 = vmatpush1.msra.mxu0 %v4202
    %4232 = vmatprep.subr.mxu0 0.0
    %4233 = vmatpush1.msra.mxu0 %v4203
    %4234 = vmatprep.subr.mxu0 0.0
    %4235 = vmatpush1.msra.mxu0 %v4204
    %4236 = vmatprep.subr.mxu0 0.0
    %4237 = vmatpush1.msra.mxu0 %v4205
    %4238 = vmatprep.subr.mxu0 0.0
    %4239 = vmatpush1.msra.mxu0 0.0
    %4240 = vmatprep.subr.mxu0 0.0
    %4241 = vmatpush1.msra.mxu0 0.0
    %4242 = vmatprep.subr.mxu0 0.0
    %4243 = vmatpush1.msra.mxu0 0.0
    %4244 = vmatprep.subr.mxu0 0.0
    %4245 = vmatpush1.msra.mxu0 0.0
    %4246 = vmatprep.subr.mxu0 0.0
    %4247 = vmatpush1.msra.mxu0 0.0
    %4248 = vmatprep.subr.mxu0 0.0
    %4249 = vmatpush1.msra.mxu0 0.0
    %4250 = vmatprep.subr.mxu0 0.0
    %4251 = vmatpush1.msra.mxu0 0.0
    %4252 = vmatprep.subr.mxu0 0.0
    %4253 = vmatpush1.msra.mxu0 0.0
    %4254 = vmatprep.subr.mxu0 0.0
    %4255 = vmatpush1.msra.mxu0 0.0
    %4256 = vmatprep.subr.mxu0 0.0
    %4257 = vmatpush1.msra.mxu0 0.0
    %4258 = vmatprep.subr.mxu0 0.0
    %4259 = vmatpush1.msra.mxu0 0.0
    %4260 = vmatprep.subr.mxu0 0.0
    %4261 = vmatpush1.msra.mxu0 0.0
    %4262 = vmatprep.subr.mxu0 0.0
    %4263 = vmatpush1.msra.mxu0 0.0
    %4264 = vmatprep.subr.mxu0 0.0
    %4265 = vmatpush1.msra.mxu0 0.0
    %4266 = vmatprep.subr.mxu0 0.0
    %4267 = vmatpush1.msra.mxu0 0.0
    %4268 = vmatprep.subr.mxu0 0.0
    %4269 = vmatpush1.msra.mxu0 0.0
    %4270 = vmatprep.subr.mxu0 0.0
    %4271 = vmatpush1.msra.mxu0 0.0
    %4272 = vmatprep.subr.mxu0 0.0
    %4273 = vmatpush1.msra.mxu0 0.0
    %4274 = vmatprep.subr.mxu0 0.0
    %4275 = vmatpush1.msra.mxu0 0.0
    %4276 = vmatprep.subr.mxu0 0.0
    %4277 = vmatpush1.msra.mxu0 0.0
    %4278 = vmatprep.subr.mxu0 0.0
    %4279 = vmatpush1.msra.mxu0 0.0
    %4280 = vmatprep.subr.mxu0 0.0
    %4281 = vmatpush1.msra.mxu0 0.0
    %4282 = vmatprep.subr.mxu0 0.0
    %4283 = vmatpush1.msra.mxu0 0.0
    %4284 = vmatprep.subr.mxu0 0.0
    %4285 = vmatpush1.msra.mxu0 0.0
    %4286 = vmatprep.subr.mxu0 0.0
    %4287 = vmatpush1.msra.mxu0 0.0
    %4288 = vmatprep.subr.mxu0 0.0
    %4289 = vmatpush1.msra.mxu0 0.0
    %4290 = vmatprep.subr.mxu0 0.0
    %4291 = vmatpush1.msra.mxu0 0.0
    %4292 = vmatprep.subr.mxu0 0.0
    %4293 = vmatpush1.msra.mxu0 0.0
    %4294 = vmatprep.mubr.f32.mxu0 0.0
    %4295 = vmatmul.mubr.f32.gmra.mrb[0].mxu0 %v4222
    %v4296 = vpop.f32.mrb[0].mxu0
    %v4297 = vadd.f32 %v4212, %v4296
    %v4298 = vpop.f32.mrb[0].mxu0
    %4299 = vmatprep.mubr.f32.mxu0 0.0
    %4300 = vmatmul.mubr.f32.gmra.mrb[0].mxu0 %v4224
    %v4301 = vpop.f32.mrb[0].mxu0
    %v4302 = vadd.f32 %v4212, %v4301
    %v4303 = vpop.f32.mrb[0].mxu0
    %4304 = vmatprep.mubr.f32.mxu0 0.0
    %4305 = vmatmul.mubr.f32.gmra.mrb[0].mxu0 %v4226
    %v4306 = vpop.f32.mrb[0].mxu0
    %v4307 = vadd.f32 %v4212, %v4306
    %v4308 = vpop.f32.mrb[0].mxu0
    %4309 = vmatprep.mubr.f32.mxu0 0.0
    %4310 = vmatmul.mubr.f32.gmra.mrb[0].mxu0 %v4228
    %v4311 = vpop.f32.mrb[0].mxu0
    %v4312 = vadd.f32 %v4212, %v4311
    %v4313 = vpop.f32.mrb[0].mxu0
    %4314 = vdwg.mxu0
    %v4319 = vcombine.high %v4297, %v4297
    %v4321 = vunpack.c.l.s4 1983009808
    %v4322 = vunpack.c.0.s8 %v4321
    %v4323 = vlaneseq
    %v4324 = vshrl.u32 %v4323, 7
    %v4325 = vsub.s32 %v4322, %v4324
    %v4326 = vrot.slane %v4297, %v4325
    %v4328 = vunpack.c.l.s4 1983009808
    %v4329 = vunpack.c.0.s8 %v4328
    %v4330 = vlaneseq
    %v4331 = vshrl.u32 %v4330, 7
    %v4332 = vsub.s32 %v4329, %v4331
    %v4333 = vrot.slane %v4319, %v4332
    %v4334 = vcombine.high %v4326, %v4326
    %v4335 = vcombine.high %v4333, %v4333
    %v4336 = vcombine.high %v4302, %v4302
    %v4338 = vunpack.c.l.s4 1983009808
    %v4339 = vunpack.c.0.s8 %v4338
    %v4340 = vlaneseq
    %v4341 = vshrl.u32 %v4340, 7
    %v4342 = vsub.s32 %v4339, %v4341
    %v4343 = vrot.slane %v4302, %v4342
    %v4345 = vunpack.c.l.s4 1983009808
    %v4346 = vunpack.c.0.s8 %v4345
    %v4347 = vlaneseq
    %v4348 = vshrl.u32 %v4347, 7
    %v4349 = vsub.s32 %v4346, %v4348
    %v4350 = vrot.slane %v4336, %v4349
    %v4351 = vcombine.high %v4343, %v4343
    %v4352 = vcombine.high %v4350, %v4350
    %v4353 = vcombine.high %v4307, %v4307
    %v4355 = vunpack.c.l.s4 1983009808
    %v4356 = vunpack.c.0.s8 %v4355
    %v4357 = vlaneseq
    %v4358 = vshrl.u32 %v4357, 7
    %v4359 = vsub.s32 %v4356, %v4358
    %v4360 = vrot.slane %v4307, %v4359
    %v4362 = vunpack.c.l.s4 1983009808
    %v4363 = vunpack.c.0.s8 %v4362
    %v4364 = vlaneseq
    %v4365 = vshrl.u32 %v4364, 7
    %v4366 = vsub.s32 %v4363, %v4365
    %v4367 = vrot.slane %v4353, %v4366
    %v4368 = vcombine.high %v4360, %v4360
    %v4369 = vcombine.high %v4367, %v4367
    %v4370 = vcombine.high %v4312, %v4312
    %v4372 = vunpack.c.l.s4 1983009808
    %v4373 = vunpack.c.0.s8 %v4372
    %v4374 = vlaneseq
    %v4375 = vshrl.u32 %v4374, 7
    %v4376 = vsub.s32 %v4373, %v4375
    %v4377 = vrot.slane %v4312, %v4376
    %v4379 = vunpack.c.l.s4 1983009808
    %v4380 = vunpack.c.0.s8 %v4379
    %v4381 = vlaneseq
    %v4382 = vshrl.u32 %v4381, 7
    %v4383 = vsub.s32 %v4380, %v4382
    %v4384 = vrot.slane %v4370, %v4383
    %v4385 = vcombine.high %v4377, %v4377
    %v4386 = vcombine.high %v4384, %v4384
    %v4403 = vcombine.low %v4326, %v4334
    %v4405 = vunpack.c.l.s4 1934713408
    %v4406 = vunpack.c.0.s8 %v4405
    %v4407 = vlaneseq
    %v4408 = vshrl.u32 %v4407, 7
    %v4409 = vsub.s32 %v4406, %v4408
    %v4410 = vrot.slane %v4403, %v4409
    %v4411 = vcombine.high %v4410, 0.0
    %v4412 = vcombine.low %v4333, %v4335
    %v4414 = vunpack.c.l.s4 1934713408
    %v4415 = vunpack.c.0.s8 %v4414
    %v4416 = vlaneseq
    %v4417 = vshrl.u32 %v4416, 7
    %v4418 = vsub.s32 %v4415, %v4417
    %v4419 = vrot.slane %v4412, %v4418
    %v4420 = vcombine.high %v4419, 0.0
    %v4421 = vcombine.low %v4343, %v4351
    %v4423 = vunpack.c.l.s4 1934713408
    %v4424 = vunpack.c.0.s8 %v4423
    %v4425 = vlaneseq
    %v4426 = vshrl.u32 %v4425, 7
    %v4427 = vsub.s32 %v4424, %v4426
    %v4428 = vrot.slane %v4421, %v4427
    %v4429 = vcombine.high %v4428, 0.0
    %v4430 = vcombine.low %v4350, %v4352
    %v4432 = vunpack.c.l.s4 1934713408
    %v4433 = vunpack.c.0.s8 %v4432
    %v4434 = vlaneseq
    %v4435 = vshrl.u32 %v4434, 7
    %v4436 = vsub.s32 %v4433, %v4435
    %v4437 = vrot.slane %v4430, %v4436
    %v4438 = vcombine.high %v4437, 0.0
    %v4439 = vcombine.low %v4360, %v4368
    %v4441 = vunpack.c.l.s4 1934713408
    %v4442 = vunpack.c.0.s8 %v4441
    %v4443 = vlaneseq
    %v4444 = vshrl.u32 %v4443, 7
    %v4445 = vsub.s32 %v4442, %v4444
    %v4446 = vrot.slane %v4439, %v4445
    %v4447 = vcombine.high %v4446, 0.0
    %v4448 = vcombine.low %v4367, %v4369
    %v4450 = vunpack.c.l.s4 1934713408
    %v4451 = vunpack.c.0.s8 %v4450
    %v4452 = vlaneseq
    %v4453 = vshrl.u32 %v4452, 7
    %v4454 = vsub.s32 %v4451, %v4453
    %v4455 = vrot.slane %v4448, %v4454
    %v4456 = vcombine.high %v4455, 0.0
    %v4457 = vcombine.low %v4377, %v4385
    %v4459 = vunpack.c.l.s4 1934713408
    %v4460 = vunpack.c.0.s8 %v4459
    %v4461 = vlaneseq
    %v4462 = vshrl.u32 %v4461, 7
    %v4463 = vsub.s32 %v4460, %v4462
    %v4464 = vrot.slane %v4457, %v4463
    %v4465 = vcombine.high %v4464, 0.0
    %v4466 = vcombine.low %v4384, %v4386
    %v4468 = vunpack.c.l.s4 1934713408
    %v4469 = vunpack.c.0.s8 %v4468
    %v4470 = vlaneseq
    %v4471 = vshrl.u32 %v4470, 7
    %v4472 = vsub.s32 %v4469, %v4471
    %v4473 = vrot.slane %v4466, %v4472
    %v4474 = vcombine.high %v4473, 0.0
    %s4475 = scalar_lea.vmem %s16, 64
    %v4476 = vld [vmem:[%s4475] sm:$0xff]
    %v4477 = vld [vmem:[%s4475 + $0x8] sm:$0xff]
    %v4478 = vld [vmem:[%s4475 + $0x10] sm:$0xff]
    %v4479 = vld [vmem:[%s4475 + $0x18] sm:$0xff]
    %s4480 = scalar_lea.vmem %s17, 2
    %v4481 = vld [vmem:[%s4480] sm:$0x1]
    %v4483 = vlaneseq
    %v4484 = vshrl.u32 %v4483, 7
    %v4485 = vsub.s32 0, %v4484
    %v4486 = vrot.slane %v4481, %v4485
    %4488 = vrot.lane.b32.xlu0 %v3929, 64
    %v4489 = vpop.permute.xlu0 %4488
    %4490 = vrot.lane.b32.xlu0 %v3930, 64
    %v4491 = vpop.permute.xlu0 %4490
    %4492 = vrot.lane.b32.xlu0 %v3931, 64
    %v4493 = vpop.permute.xlu0 %4492
    %4494 = vrot.lane.b32.xlu0 %v3932, 64
    %v4495 = vpop.permute.xlu0 %4494
    %v4496 = vsel %vm1707, %v4489, 0
    %v4498 = vsel %vm1707, %v4491, 0
    %v4500 = vsel %vm1707, %v4493, 0
    %v4502 = vsel %vm1707, %v4495, 0
    %4504 = vmatprep.subr.mxu0 0.0
    %4505 = vmatpush1.msra.mxu0 %v4476
    %4506 = vmatprep.subr.mxu0 0.0
    %4507 = vmatpush1.msra.mxu0 %v4477
    %4508 = vmatprep.subr.mxu0 0.0
    %4509 = vmatpush1.msra.mxu0 %v4478
    %4510 = vmatprep.subr.mxu0 0.0
    %4511 = vmatpush1.msra.mxu0 %v4479
    %4512 = vmatprep.subr.mxu0 0.0
    %4513 = vmatpush1.msra.mxu0 0.0
    %4514 = vmatprep.subr.mxu0 0.0
    %4515 = vmatpush1.msra.mxu0 0.0
    %4516 = vmatprep.subr.mxu0 0.0
    %4517 = vmatpush1.msra.mxu0 0.0
    %4518 = vmatprep.subr.mxu0 0.0
    %4519 = vmatpush1.msra.mxu0 0.0
    %4520 = vmatprep.subr.mxu0 0.0
    %4521 = vmatpush1.msra.mxu0 0.0
    %4522 = vmatprep.subr.mxu0 0.0
    %4523 = vmatpush1.msra.mxu0 0.0
    %4524 = vmatprep.subr.mxu0 0.0
    %4525 = vmatpush1.msra.mxu0 0.0
    %4526 = vmatprep.subr.mxu0 0.0
    %4527 = vmatpush1.msra.mxu0 0.0
    %4528 = vmatprep.subr.mxu0 0.0
    %4529 = vmatpush1.msra.mxu0 0.0
    %4530 = vmatprep.subr.mxu0 0.0
    %4531 = vmatpush1.msra.mxu0 0.0
    %4532 = vmatprep.subr.mxu0 0.0
    %4533 = vmatpush1.msra.mxu0 0.0
    %4534 = vmatprep.subr.mxu0 0.0
    %4535 = vmatpush1.msra.mxu0 0.0
    %4536 = vmatprep.subr.mxu0 0.0
    %4537 = vmatpush1.msra.mxu0 0.0
    %4538 = vmatprep.subr.mxu0 0.0
    %4539 = vmatpush1.msra.mxu0 0.0
    %4540 = vmatprep.subr.mxu0 0.0
    %4541 = vmatpush1.msra.mxu0 0.0
    %4542 = vmatprep.subr.mxu0 0.0
    %4543 = vmatpush1.msra.mxu0 0.0
    %4544 = vmatprep.subr.mxu0 0.0
    %4545 = vmatpush1.msra.mxu0 0.0
    %4546 = vmatprep.subr.mxu0 0.0
    %4547 = vmatpush1.msra.mxu0 0.0
    %4548 = vmatprep.subr.mxu0 0.0
    %4549 = vmatpush1.msra.mxu0 0.0
    %4550 = vmatprep.subr.mxu0 0.0
    %4551 = vmatpush1.msra.mxu0 0.0
    %4552 = vmatprep.subr.mxu0 0.0
    %4553 = vmatpush1.msra.mxu0 0.0
    %4554 = vmatprep.subr.mxu0 0.0
    %4555 = vmatpush1.msra.mxu0 0.0
    %4556 = vmatprep.subr.mxu0 0.0
    %4557 = vmatpush1.msra.mxu0 0.0
    %4558 = vmatprep.subr.mxu0 0.0
    %4559 = vmatpush1.msra.mxu0 0.0
    %4560 = vmatprep.subr.mxu0 0.0
    %4561 = vmatpush1.msra.mxu0 0.0
    %4562 = vmatprep.subr.mxu0 0.0
    %4563 = vmatpush1.msra.mxu0 0.0
    %4564 = vmatprep.subr.mxu0 0.0
    %4565 = vmatpush1.msra.mxu0 0.0
    %4566 = vmatprep.subr.mxu0 0.0
    %4567 = vmatpush1.msra.mxu0 0.0
    %4568 = vmatprep.mubr.f32.mxu0 0.0
    %4569 = vmatmul.mubr.f32.gmra.mrb[0].mxu0 %v4496
    %v4570 = vpop.f32.mrb[0].mxu0
    %v4571 = vadd.f32 %v4486, %v4570
    %v4572 = vpop.f32.mrb[0].mxu0
    %4573 = vmatprep.mubr.f32.mxu0 0.0
    %4574 = vmatmul.mubr.f32.gmra.mrb[0].mxu0 %v4498
    %v4575 = vpop.f32.mrb[0].mxu0
    %v4576 = vadd.f32 %v4486, %v4575
    %v4577 = vpop.f32.mrb[0].mxu0
    %4578 = vmatprep.mubr.f32.mxu0 0.0
    %4579 = vmatmul.mubr.f32.gmra.mrb[0].mxu0 %v4500
    %v4580 = vpop.f32.mrb[0].mxu0
    %v4581 = vadd.f32 %v4486, %v4580
    %v4582 = vpop.f32.mrb[0].mxu0
    %4583 = vmatprep.mubr.f32.mxu0 0.0
    %4584 = vmatmul.mubr.f32.gmra.mrb[0].mxu0 %v4502
    %v4585 = vpop.f32.mrb[0].mxu0
    %v4586 = vadd.f32 %v4486, %v4585
    %v4587 = vpop.f32.mrb[0].mxu0
    %4588 = vdwg.mxu0
    %v4593 = vcombine.high %v4571, %v4571
    %v4595 = vunpack.c.l.s4 1983009808
    %v4596 = vunpack.c.0.s8 %v4595
    %v4597 = vlaneseq
    %v4598 = vshrl.u32 %v4597, 7
    %v4599 = vsub.s32 %v4596, %v4598
    %v4600 = vrot.slane %v4571, %v4599
    %v4602 = vunpack.c.l.s4 1983009808
    %v4603 = vunpack.c.0.s8 %v4602
    %v4604 = vlaneseq
    %v4605 = vshrl.u32 %v4604, 7
    %v4606 = vsub.s32 %v4603, %v4605
    %v4607 = vrot.slane %v4593, %v4606
    %v4608 = vcombine.high %v4600, %v4600
    %v4609 = vcombine.high %v4607, %v4607
    %v4610 = vcombine.high %v4576, %v4576
    %v4612 = vunpack.c.l.s4 1983009808
    %v4613 = vunpack.c.0.s8 %v4612
    %v4614 = vlaneseq
    %v4615 = vshrl.u32 %v4614, 7
    %v4616 = vsub.s32 %v4613, %v4615
    %v4617 = vrot.slane %v4576, %v4616
    %v4619 = vunpack.c.l.s4 1983009808
    %v4620 = vunpack.c.0.s8 %v4619
    %v4621 = vlaneseq
    %v4622 = vshrl.u32 %v4621, 7
    %v4623 = vsub.s32 %v4620, %v4622
    %v4624 = vrot.slane %v4610, %v4623
    %v4625 = vcombine.high %v4617, %v4617
    %v4626 = vcombine.high %v4624, %v4624
    %v4627 = vcombine.high %v4581, %v4581
    %v4629 = vunpack.c.l.s4 1983009808
    %v4630 = vunpack.c.0.s8 %v4629
    %v4631 = vlaneseq
    %v4632 = vshrl.u32 %v4631, 7
    %v4633 = vsub.s32 %v4630, %v4632
    %v4634 = vrot.slane %v4581, %v4633
    %v4636 = vunpack.c.l.s4 1983009808
    %v4637 = vunpack.c.0.s8 %v4636
    %v4638 = vlaneseq
    %v4639 = vshrl.u32 %v4638, 7
    %v4640 = vsub.s32 %v4637, %v4639
    %v4641 = vrot.slane %v4627, %v4640
    %v4642 = vcombine.high %v4634, %v4634
    %v4643 = vcombine.high %v4641, %v4641
    %v4644 = vcombine.high %v4586, %v4586
    %v4646 = vunpack.c.l.s4 1983009808
    %v4647 = vunpack.c.0.s8 %v4646
    %v4648 = vlaneseq
    %v4649 = vshrl.u32 %v4648, 7
    %v4650 = vsub.s32 %v4647, %v4649
    %v4651 = vrot.slane %v4586, %v4650
    %v4653 = vunpack.c.l.s4 1983009808
    %v4654 = vunpack.c.0.s8 %v4653
    %v4655 = vlaneseq
    %v4656 = vshrl.u32 %v4655, 7
    %v4657 = vsub.s32 %v4654, %v4656
    %v4658 = vrot.slane %v4644, %v4657
    %v4659 = vcombine.high %v4651, %v4651
    %v4660 = vcombine.high %v4658, %v4658
    %v4677 = vcombine.low %v4600, %v4608
    %v4679 = vunpack.c.l.s4 1934713408
    %v4680 = vunpack.c.0.s8 %v4679
    %v4681 = vlaneseq
    %v4682 = vshrl.u32 %v4681, 7
    %v4683 = vsub.s32 %v4680, %v4682
    %v4684 = vrot.slane %v4677, %v4683
    %v4685 = vcombine.high %v4684, 0.0
    %v4686 = vcombine.low %v4607, %v4609
    %v4688 = vunpack.c.l.s4 1934713408
    %v4689 = vunpack.c.0.s8 %v4688
    %v4690 = vlaneseq
    %v4691 = vshrl.u32 %v4690, 7
    %v4692 = vsub.s32 %v4689, %v4691
    %v4693 = vrot.slane %v4686, %v4692
    %v4694 = vcombine.high %v4693, 0.0
    %v4695 = vcombine.low %v4617, %v4625
    %v4697 = vunpack.c.l.s4 1934713408
    %v4698 = vunpack.c.0.s8 %v4697
    %v4699 = vlaneseq
    %v4700 = vshrl.u32 %v4699, 7
    %v4701 = vsub.s32 %v4698, %v4700
    %v4702 = vrot.slane %v4695, %v4701
    %v4703 = vcombine.high %v4702, 0.0
    %v4704 = vcombine.low %v4624, %v4626
    %v4706 = vunpack.c.l.s4 1934713408
    %v4707 = vunpack.c.0.s8 %v4706
    %v4708 = vlaneseq
    %v4709 = vshrl.u32 %v4708, 7
    %v4710 = vsub.s32 %v4707, %v4709
    %v4711 = vrot.slane %v4704, %v4710
    %v4712 = vcombine.high %v4711, 0.0
    %v4713 = vcombine.low %v4634, %v4642
    %v4715 = vunpack.c.l.s4 1934713408
    %v4716 = vunpack.c.0.s8 %v4715
    %v4717 = vlaneseq
    %v4718 = vshrl.u32 %v4717, 7
    %v4719 = vsub.s32 %v4716, %v4718
    %v4720 = vrot.slane %v4713, %v4719
    %v4721 = vcombine.high %v4720, 0.0
    %v4722 = vcombine.low %v4641, %v4643
    %v4724 = vunpack.c.l.s4 1934713408
    %v4725 = vunpack.c.0.s8 %v4724
    %v4726 = vlaneseq
    %v4727 = vshrl.u32 %v4726, 7
    %v4728 = vsub.s32 %v4725, %v4727
    %v4729 = vrot.slane %v4722, %v4728
    %v4730 = vcombine.high %v4729, 0.0
    %v4731 = vcombine.low %v4651, %v4659
    %v4733 = vunpack.c.l.s4 1934713408
    %v4734 = vunpack.c.0.s8 %v4733
    %v4735 = vlaneseq
    %v4736 = vshrl.u32 %v4735, 7
    %v4737 = vsub.s32 %v4734, %v4736
    %v4738 = vrot.slane %v4731, %v4737
    %v4739 = vcombine.high %v4738, 0.0
    %v4740 = vcombine.low %v4658, %v4660
    %v4742 = vunpack.c.l.s4 1934713408
    %v4743 = vunpack.c.0.s8 %v4742
    %v4744 = vlaneseq
    %v4745 = vshrl.u32 %v4744, 7
    %v4746 = vsub.s32 %v4743, %v4745
    %v4747 = vrot.slane %v4740, %v4746
    %v4748 = vcombine.high %v4747, 0.0
    %s4749 = scalar_lea.vmem %s16, 96
    %v4750 = vld [vmem:[%s4749] sm:$0xff]
    %v4751 = vld [vmem:[%s4749 + $0x8] sm:$0xff]
    %v4752 = vld [vmem:[%s4749 + $0x10] sm:$0xff]
    %v4753 = vld [vmem:[%s4749 + $0x18] sm:$0xff]
    %s4754 = scalar_lea.vmem %s17, 3
    %v4755 = vld [vmem:[%s4754] sm:$0x1]
    %v4757 = vlaneseq
    %v4758 = vshrl.u32 %v4757, 7
    %v4759 = vsub.s32 0, %v4758
    %v4760 = vrot.slane %v4755, %v4759
    %4762 = vrot.lane.b32.xlu0 %v3929, 32
    %v4763 = vpop.permute.xlu0 %4762
    %4764 = vrot.lane.b32.xlu0 %v3930, 32
    %v4765 = vpop.permute.xlu0 %4764
    %4766 = vrot.lane.b32.xlu0 %v3931, 32
    %v4767 = vpop.permute.xlu0 %4766
    %4768 = vrot.lane.b32.xlu0 %v3932, 32
    %v4769 = vpop.permute.xlu0 %4768
    %v4770 = vsel %vm1707, %v4763, 0
    %v4772 = vsel %vm1707, %v4765, 0
    %v4774 = vsel %vm1707, %v4767, 0
    %v4776 = vsel %vm1707, %v4769, 0
    %4778 = vmatprep.subr.mxu0 0.0
    %4779 = vmatpush1.msra.mxu0 %v4750
    %4780 = vmatprep.subr.mxu0 0.0
    %4781 = vmatpush1.msra.mxu0 %v4751
    %4782 = vmatprep.subr.mxu0 0.0
    %4783 = vmatpush1.msra.mxu0 %v4752
    %4784 = vmatprep.subr.mxu0 0.0
    %4785 = vmatpush1.msra.mxu0 %v4753
    %4786 = vmatprep.subr.mxu0 0.0
    %4787 = vmatpush1.msra.mxu0 0.0
    %4788 = vmatprep.subr.mxu0 0.0
    %4789 = vmatpush1.msra.mxu0 0.0
    %4790 = vmatprep.subr.mxu0 0.0
    %4791 = vmatpush1.msra.mxu0 0.0
    %4792 = vmatprep.subr.mxu0 0.0
    %4793 = vmatpush1.msra.mxu0 0.0
    %4794 = vmatprep.subr.mxu0 0.0
    %4795 = vmatpush1.msra.mxu0 0.0
    %4796 = vmatprep.subr.mxu0 0.0
    %4797 = vmatpush1.msra.mxu0 0.0
    %4798 = vmatprep.subr.mxu0 0.0
    %4799 = vmatpush1.msra.mxu0 0.0
    %4800 = vmatprep.subr.mxu0 0.0
    %4801 = vmatpush1.msra.mxu0 0.0
    %4802 = vmatprep.subr.mxu0 0.0
    %4803 = vmatpush1.msra.mxu0 0.0
    %4804 = vmatprep.subr.mxu0 0.0
    %4805 = vmatpush1.msra.mxu0 0.0
    %4806 = vmatprep.subr.mxu0 0.0
    %4807 = vmatpush1.msra.mxu0 0.0
    %4808 = vmatprep.subr.mxu0 0.0
    %4809 = vmatpush1.msra.mxu0 0.0
    %4810 = vmatprep.subr.mxu0 0.0
    %4811 = vmatpush1.msra.mxu0 0.0
    %4812 = vmatprep.subr.mxu0 0.0
    %4813 = vmatpush1.msra.mxu0 0.0
    %4814 = vmatprep.subr.mxu0 0.0
    %4815 = vmatpush1.msra.mxu0 0.0
    %4816 = vmatprep.subr.mxu0 0.0
    %4817 = vmatpush1.msra.mxu0 0.0
    %4818 = vmatprep.subr.mxu0 0.0
    %4819 = vmatpush1.msra.mxu0 0.0
    %4820 = vmatprep.subr.mxu0 0.0
    %4821 = vmatpush1.msra.mxu0 0.0
    %4822 = vmatprep.subr.mxu0 0.0
    %4823 = vmatpush1.msra.mxu0 0.0
    %4824 = vmatprep.subr.mxu0 0.0
    %4825 = vmatpush1.msra.mxu0 0.0
    %4826 = vmatprep.subr.mxu0 0.0
    %4827 = vmatpush1.msra.mxu0 0.0
    %4828 = vmatprep.subr.mxu0 0.0
    %4829 = vmatpush1.msra.mxu0 0.0
    %4830 = vmatprep.subr.mxu0 0.0
    %4831 = vmatpush1.msra.mxu0 0.0
    %4832 = vmatprep.subr.mxu0 0.0
    %4833 = vmatpush1.msra.mxu0 0.0
    %4834 = vmatprep.subr.mxu0 0.0
    %4835 = vmatpush1.msra.mxu0 0.0
    %4836 = vmatprep.subr.mxu0 0.0
    %4837 = vmatpush1.msra.mxu0 0.0
    %4838 = vmatprep.subr.mxu0 0.0
    %4839 = vmatpush1.msra.mxu0 0.0
    %4840 = vmatprep.subr.mxu0 0.0
    %4841 = vmatpush1.msra.mxu0 0.0
    %4842 = vmatprep.mubr.f32.mxu0 0.0
    %4843 = vmatmul.mubr.f32.gmra.mrb[0].mxu0 %v4770
    %v4844 = vpop.f32.mrb[0].mxu0
    %v4845 = vadd.f32 %v4760, %v4844
    %v4846 = vpop.f32.mrb[0].mxu0
    %4847 = vmatprep.mubr.f32.mxu0 0.0
    %4848 = vmatmul.mubr.f32.gmra.mrb[0].mxu0 %v4772
    %v4849 = vpop.f32.mrb[0].mxu0
    %v4850 = vadd.f32 %v4760, %v4849
    %v4851 = vpop.f32.mrb[0].mxu0
    %4852 = vmatprep.mubr.f32.mxu0 0.0
    %4853 = vmatmul.mubr.f32.gmra.mrb[0].mxu0 %v4774
    %v4854 = vpop.f32.mrb[0].mxu0
    %v4855 = vadd.f32 %v4760, %v4854
    %v4856 = vpop.f32.mrb[0].mxu0
    %4857 = vmatprep.mubr.f32.mxu0 0.0
    %4858 = vmatmul.mubr.f32.gmra.mrb[0].mxu0 %v4776
    %v4859 = vpop.f32.mrb[0].mxu0
    %v4860 = vadd.f32 %v4760, %v4859
    %v4861 = vpop.f32.mrb[0].mxu0
    %4862 = vdwg.mxu0
    %v4867 = vcombine.high %v4845, %v4845
    %v4869 = vunpack.c.l.s4 1983009808
    %v4870 = vunpack.c.0.s8 %v4869
    %v4871 = vlaneseq
    %v4872 = vshrl.u32 %v4871, 7
    %v4873 = vsub.s32 %v4870, %v4872
    %v4874 = vrot.slane %v4845, %v4873
    %v4876 = vunpack.c.l.s4 1983009808
    %v4877 = vunpack.c.0.s8 %v4876
    %v4878 = vlaneseq
    %v4879 = vshrl.u32 %v4878, 7
    %v4880 = vsub.s32 %v4877, %v4879
    %v4881 = vrot.slane %v4867, %v4880
    %v4882 = vcombine.high %v4874, %v4874
    %v4883 = vcombine.high %v4881, %v4881
    %v4884 = vcombine.high %v4850, %v4850
    %v4886 = vunpack.c.l.s4 1983009808
    %v4887 = vunpack.c.0.s8 %v4886
    %v4888 = vlaneseq
    %v4889 = vshrl.u32 %v4888, 7
    %v4890 = vsub.s32 %v4887, %v4889
    %v4891 = vrot.slane %v4850, %v4890
    %v4893 = vunpack.c.l.s4 1983009808
    %v4894 = vunpack.c.0.s8 %v4893
    %v4895 = vlaneseq
    %v4896 = vshrl.u32 %v4895, 7
    %v4897 = vsub.s32 %v4894, %v4896
    %v4898 = vrot.slane %v4884, %v4897
    %v4899 = vcombine.high %v4891, %v4891
    %v4900 = vcombine.high %v4898, %v4898
    %v4901 = vcombine.high %v4855, %v4855
    %v4903 = vunpack.c.l.s4 1983009808
    %v4904 = vunpack.c.0.s8 %v4903
    %v4905 = vlaneseq
    %v4906 = vshrl.u32 %v4905, 7
    %v4907 = vsub.s32 %v4904, %v4906
    %v4908 = vrot.slane %v4855, %v4907
    %v4910 = vunpack.c.l.s4 1983009808
    %v4911 = vunpack.c.0.s8 %v4910
    %v4912 = vlaneseq
    %v4913 = vshrl.u32 %v4912, 7
    %v4914 = vsub.s32 %v4911, %v4913
    %v4915 = vrot.slane %v4901, %v4914
    %v4916 = vcombine.high %v4908, %v4908
    %v4917 = vcombine.high %v4915, %v4915
    %v4918 = vcombine.high %v4860, %v4860
    %v4920 = vunpack.c.l.s4 1983009808
    %v4921 = vunpack.c.0.s8 %v4920
    %v4922 = vlaneseq
    %v4923 = vshrl.u32 %v4922, 7
    %v4924 = vsub.s32 %v4921, %v4923
    %v4925 = vrot.slane %v4860, %v4924
    %v4927 = vunpack.c.l.s4 1983009808
    %v4928 = vunpack.c.0.s8 %v4927
    %v4929 = vlaneseq
    %v4930 = vshrl.u32 %v4929, 7
    %v4931 = vsub.s32 %v4928, %v4930
    %v4932 = vrot.slane %v4918, %v4931
    %v4933 = vcombine.high %v4925, %v4925
    %v4934 = vcombine.high %v4932, %v4932
    %v4951 = vcombine.low %v4874, %v4882
    %v4953 = vunpack.c.l.s4 1934713408
    %v4954 = vunpack.c.0.s8 %v4953
    %v4955 = vlaneseq
    %v4956 = vshrl.u32 %v4955, 7
    %v4957 = vsub.s32 %v4954, %v4956
    %v4958 = vrot.slane %v4951, %v4957
    %v4959 = vcombine.high %v4958, 0.0
    %v4960 = vcombine.low %v4881, %v4883
    %v4962 = vunpack.c.l.s4 1934713408
    %v4963 = vunpack.c.0.s8 %v4962
    %v4964 = vlaneseq
    %v4965 = vshrl.u32 %v4964, 7
    %v4966 = vsub.s32 %v4963, %v4965
    %v4967 = vrot.slane %v4960, %v4966
    %v4968 = vcombine.high %v4967, 0.0
    %v4969 = vcombine.low %v4891, %v4899
    %v4971 = vunpack.c.l.s4 1934713408
    %v4972 = vunpack.c.0.s8 %v4971
    %v4973 = vlaneseq
    %v4974 = vshrl.u32 %v4973, 7
    %v4975 = vsub.s32 %v4972, %v4974
    %v4976 = vrot.slane %v4969, %v4975
    %v4977 = vcombine.high %v4976, 0.0
    %v4978 = vcombine.low %v4898, %v4900
    %v4980 = vunpack.c.l.s4 1934713408
    %v4981 = vunpack.c.0.s8 %v4980
    %v4982 = vlaneseq
    %v4983 = vshrl.u32 %v4982, 7
    %v4984 = vsub.s32 %v4981, %v4983
    %v4985 = vrot.slane %v4978, %v4984
    %v4986 = vcombine.high %v4985, 0.0
    %v4987 = vcombine.low %v4908, %v4916
    %v4989 = vunpack.c.l.s4 1934713408
    %v4990 = vunpack.c.0.s8 %v4989
    %v4991 = vlaneseq
    %v4992 = vshrl.u32 %v4991, 7
    %v4993 = vsub.s32 %v4990, %v4992
    %v4994 = vrot.slane %v4987, %v4993
    %v4995 = vcombine.high %v4994, 0.0
    %v4996 = vcombine.low %v4915, %v4917
    %v4998 = vunpack.c.l.s4 1934713408
    %v4999 = vunpack.c.0.s8 %v4998
    %v5000 = vlaneseq
    %v5001 = vshrl.u32 %v5000, 7
    %v5002 = vsub.s32 %v4999, %v5001
    %v5003 = vrot.slane %v4996, %v5002
    %v5004 = vcombine.high %v5003, 0.0
    %v5005 = vcombine.low %v4925, %v4933
    %v5007 = vunpack.c.l.s4 1934713408
    %v5008 = vunpack.c.0.s8 %v5007
    %v5009 = vlaneseq
    %v5010 = vshrl.u32 %v5009, 7
    %v5011 = vsub.s32 %v5008, %v5010
    %v5012 = vrot.slane %v5005, %v5011
    %v5013 = vcombine.high %v5012, 0.0
    %v5014 = vcombine.low %v4932, %v4934
    %v5016 = vunpack.c.l.s4 1934713408
    %v5017 = vunpack.c.0.s8 %v5016
    %v5018 = vlaneseq
    %v5019 = vshrl.u32 %v5018, 7
    %v5020 = vsub.s32 %v5017, %v5019
    %v5021 = vrot.slane %v5014, %v5020
    %v5022 = vcombine.high %v5021, 0.0
    %v5087 = vcombine.low %v4136, %v4145
    %v5088 = vcombine.low %v4154, %v4163
    %v5090 = vunpack.c.l.s4 1983009808
    %v5091 = vunpack.c.0.s8 %v5090
    %v5092 = vlaneseq
    %v5093 = vshrl.u32 %v5092, 7
    %v5094 = vsub.s32 %v5091, %v5093
    %v5095 = vrot.slane %v5087, %v5094
    %v5097 = vunpack.c.l.s4 1983009808
    %v5098 = vunpack.c.0.s8 %v5097
    %v5099 = vlaneseq
    %v5100 = vshrl.u32 %v5099, 7
    %v5101 = vsub.s32 %v5098, %v5100
    %v5102 = vrot.slane %v5088, %v5101
    %v5103 = vcombine.low %v5095, %v5102
    %v5104 = vcombine.low %v4172, %v4181
    %v5105 = vcombine.low %v4190, %v4199
    %v5107 = vunpack.c.l.s4 1983009808
    %v5108 = vunpack.c.0.s8 %v5107
    %v5109 = vlaneseq
    %v5110 = vshrl.u32 %v5109, 7
    %v5111 = vsub.s32 %v5108, %v5110
    %v5112 = vrot.slane %v5104, %v5111
    %v5114 = vunpack.c.l.s4 1983009808
    %v5115 = vunpack.c.0.s8 %v5114
    %v5116 = vlaneseq
    %v5117 = vshrl.u32 %v5116, 7
    %v5118 = vsub.s32 %v5115, %v5117
    %v5119 = vrot.slane %v5105, %v5118
    %v5120 = vcombine.low %v5112, %v5119
    %v5121 = vcombine.low %v4410, %v4419
    %v5122 = vcombine.low %v4428, %v4437
    %v5124 = vunpack.c.l.s4 1983009808
    %v5125 = vunpack.c.0.s8 %v5124
    %v5126 = vlaneseq
    %v5127 = vshrl.u32 %v5126, 7
    %v5128 = vsub.s32 %v5125, %v5127
    %v5129 = vrot.slane %v5121, %v5128
    %v5131 = vunpack.c.l.s4 1983009808
    %v5132 = vunpack.c.0.s8 %v5131
    %v5133 = vlaneseq
    %v5134 = vshrl.u32 %v5133, 7
    %v5135 = vsub.s32 %v5132, %v5134
    %v5136 = vrot.slane %v5122, %v5135
    %v5137 = vcombine.low %v5129, %v5136
    %v5138 = vcombine.low %v4446, %v4455
    %v5139 = vcombine.low %v4464, %v4473
    %v5141 = vunpack.c.l.s4 1983009808
    %v5142 = vunpack.c.0.s8 %v5141
    %v5143 = vlaneseq
    %v5144 = vshrl.u32 %v5143, 7
    %v5145 = vsub.s32 %v5142, %v5144
    %v5146 = vrot.slane %v5138, %v5145
    %v5148 = vunpack.c.l.s4 1983009808
    %v5149 = vunpack.c.0.s8 %v5148
    %v5150 = vlaneseq
    %v5151 = vshrl.u32 %v5150, 7
    %v5152 = vsub.s32 %v5149, %v5151
    %v5153 = vrot.slane %v5139, %v5152
    %v5154 = vcombine.low %v5146, %v5153
    %v5155 = vcombine.low %v4684, %v4693
    %v5156 = vcombine.low %v4702, %v4711
    %v5158 = vunpack.c.l.s4 1983009808
    %v5159 = vunpack.c.0.s8 %v5158
    %v5160 = vlaneseq
    %v5161 = vshrl.u32 %v5160, 7
    %v5162 = vsub.s32 %v5159, %v5161
    %v5163 = vrot.slane %v5155, %v5162
    %v5165 = vunpack.c.l.s4 1983009808
    %v5166 = vunpack.c.0.s8 %v5165
    %v5167 = vlaneseq
    %v5168 = vshrl.u32 %v5167, 7
    %v5169 = vsub.s32 %v5166, %v5168
    %v5170 = vrot.slane %v5156, %v5169
    %v5171 = vcombine.low %v5163, %v5170
    %v5172 = vcombine.low %v4720, %v4729
    %v5173 = vcombine.low %v4738, %v4747
    %v5175 = vunpack.c.l.s4 1983009808
    %v5176 = vunpack.c.0.s8 %v5175
    %v5177 = vlaneseq
    %v5178 = vshrl.u32 %v5177, 7
    %v5179 = vsub.s32 %v5176, %v5178
    %v5180 = vrot.slane %v5172, %v5179
    %v5182 = vunpack.c.l.s4 1983009808
    %v5183 = vunpack.c.0.s8 %v5182
    %v5184 = vlaneseq
    %v5185 = vshrl.u32 %v5184, 7
    %v5186 = vsub.s32 %v5183, %v5185
    %v5187 = vrot.slane %v5173, %v5186
    %v5188 = vcombine.low %v5180, %v5187
    %v5189 = vcombine.low %v4958, %v4967
    %v5190 = vcombine.low %v4976, %v4985
    %v5192 = vunpack.c.l.s4 1983009808
    %v5193 = vunpack.c.0.s8 %v5192
    %v5194 = vlaneseq
    %v5195 = vshrl.u32 %v5194, 7
    %v5196 = vsub.s32 %v5193, %v5195
    %v5197 = vrot.slane %v5189, %v5196
    %v5199 = vunpack.c.l.s4 1983009808
    %v5200 = vunpack.c.0.s8 %v5199
    %v5201 = vlaneseq
    %v5202 = vshrl.u32 %v5201, 7
    %v5203 = vsub.s32 %v5200, %v5202
    %v5204 = vrot.slane %v5190, %v5203
    %v5205 = vcombine.low %v5197, %v5204
    %v5206 = vcombine.low %v4994, %v5003
    %v5207 = vcombine.low %v5012, %v5021
    %v5209 = vunpack.c.l.s4 1983009808
    %v5210 = vunpack.c.0.s8 %v5209
    %v5211 = vlaneseq
    %v5212 = vshrl.u32 %v5211, 7
    %v5213 = vsub.s32 %v5210, %v5212
    %v5214 = vrot.slane %v5206, %v5213
    %v5216 = vunpack.c.l.s4 1983009808
    %v5217 = vunpack.c.0.s8 %v5216
    %v5218 = vlaneseq
    %v5219 = vshrl.u32 %v5218, 7
    %v5220 = vsub.s32 %v5217, %v5219
    %v5221 = vrot.slane %v5207, %v5220
    %v5222 = vcombine.low %v5214, %v5221
    %v5223 = vcombine.low %v4137, %v4146
    %v5224 = vcombine.low %v4155, %v4164
    %v5226 = vunpack.c.l.s4 1983009808
    %v5227 = vunpack.c.0.s8 %v5226
    %v5228 = vlaneseq
    %v5229 = vshrl.u32 %v5228, 7
    %v5230 = vsub.s32 %v5227, %v5229
    %v5231 = vrot.slane %v5223, %v5230
    %v5233 = vunpack.c.l.s4 1983009808
    %v5234 = vunpack.c.0.s8 %v5233
    %v5235 = vlaneseq
    %v5236 = vshrl.u32 %v5235, 7
    %v5237 = vsub.s32 %v5234, %v5236
    %v5238 = vrot.slane %v5224, %v5237
    %v5239 = vcombine.low %v5231, %v5238
    %v5240 = vcombine.low %v4173, %v4182
    %v5241 = vcombine.low %v4191, %v4200
    %v5243 = vunpack.c.l.s4 1983009808
    %v5244 = vunpack.c.0.s8 %v5243
    %v5245 = vlaneseq
    %v5246 = vshrl.u32 %v5245, 7
    %v5247 = vsub.s32 %v5244, %v5246
    %v5248 = vrot.slane %v5240, %v5247
    %v5250 = vunpack.c.l.s4 1983009808
    %v5251 = vunpack.c.0.s8 %v5250
    %v5252 = vlaneseq
    %v5253 = vshrl.u32 %v5252, 7
    %v5254 = vsub.s32 %v5251, %v5253
    %v5255 = vrot.slane %v5241, %v5254
    %v5256 = vcombine.low %v5248, %v5255
    %v5257 = vcombine.low %v4411, %v4420
    %v5258 = vcombine.low %v4429, %v4438
    %v5260 = vunpack.c.l.s4 1983009808
    %v5261 = vunpack.c.0.s8 %v5260
    %v5262 = vlaneseq
    %v5263 = vshrl.u32 %v5262, 7
    %v5264 = vsub.s32 %v5261, %v5263
    %v5265 = vrot.slane %v5257, %v5264
    %v5267 = vunpack.c.l.s4 1983009808
    %v5268 = vunpack.c.0.s8 %v5267
    %v5269 = vlaneseq
    %v5270 = vshrl.u32 %v5269, 7
    %v5271 = vsub.s32 %v5268, %v5270
    %v5272 = vrot.slane %v5258, %v5271
    %v5273 = vcombine.low %v5265, %v5272
    %v5274 = vcombine.low %v4447, %v4456
    %v5275 = vcombine.low %v4465, %v4474
    %v5277 = vunpack.c.l.s4 1983009808
    %v5278 = vunpack.c.0.s8 %v5277
    %v5279 = vlaneseq
    %v5280 = vshrl.u32 %v5279, 7
    %v5281 = vsub.s32 %v5278, %v5280
    %v5282 = vrot.slane %v5274, %v5281
    %v5284 = vunpack.c.l.s4 1983009808
    %v5285 = vunpack.c.0.s8 %v5284
    %v5286 = vlaneseq
    %v5287 = vshrl.u32 %v5286, 7
    %v5288 = vsub.s32 %v5285, %v5287
    %v5289 = vrot.slane %v5275, %v5288
    %v5290 = vcombine.low %v5282, %v5289
    %v5291 = vcombine.low %v4685, %v4694
    %v5292 = vcombine.low %v4703, %v4712
    %v5294 = vunpack.c.l.s4 1983009808
    %v5295 = vunpack.c.0.s8 %v5294
    %v5296 = vlaneseq
    %v5297 = vshrl.u32 %v5296, 7
    %v5298 = vsub.s32 %v5295, %v5297
    %v5299 = vrot.slane %v5291, %v5298
    %v5301 = vunpack.c.l.s4 1983009808
    %v5302 = vunpack.c.0.s8 %v5301
    %v5303 = vlaneseq
    %v5304 = vshrl.u32 %v5303, 7
    %v5305 = vsub.s32 %v5302, %v5304
    %v5306 = vrot.slane %v5292, %v5305
    %v5307 = vcombine.low %v5299, %v5306
    %v5308 = vcombine.low %v4721, %v4730
    %v5309 = vcombine.low %v4739, %v4748
    %v5311 = vunpack.c.l.s4 1983009808
    %v5312 = vunpack.c.0.s8 %v5311
    %v5313 = vlaneseq
    %v5314 = vshrl.u32 %v5313, 7
    %v5315 = vsub.s32 %v5312, %v5314
    %v5316 = vrot.slane %v5308, %v5315
    %v5318 = vunpack.c.l.s4 1983009808
    %v5319 = vunpack.c.0.s8 %v5318
    %v5320 = vlaneseq
    %v5321 = vshrl.u32 %v5320, 7
    %v5322 = vsub.s32 %v5319, %v5321
    %v5323 = vrot.slane %v5309, %v5322
    %v5324 = vcombine.low %v5316, %v5323
    %v5325 = vcombine.low %v4959, %v4968
    %v5326 = vcombine.low %v4977, %v4986
    %v5328 = vunpack.c.l.s4 1983009808
    %v5329 = vunpack.c.0.s8 %v5328
    %v5330 = vlaneseq
    %v5331 = vshrl.u32 %v5330, 7
    %v5332 = vsub.s32 %v5329, %v5331
    %v5333 = vrot.slane %v5325, %v5332
    %v5335 = vunpack.c.l.s4 1983009808
    %v5336 = vunpack.c.0.s8 %v5335
    %v5337 = vlaneseq
    %v5338 = vshrl.u32 %v5337, 7
    %v5339 = vsub.s32 %v5336, %v5338
    %v5340 = vrot.slane %v5326, %v5339
    %v5341 = vcombine.low %v5333, %v5340
    %v5342 = vcombine.low %v4995, %v5004
    %v5343 = vcombine.low %v5013, %v5022
    %v5345 = vunpack.c.l.s4 1983009808
    %v5346 = vunpack.c.0.s8 %v5345
    %v5347 = vlaneseq
    %v5348 = vshrl.u32 %v5347, 7
    %v5349 = vsub.s32 %v5346, %v5348
    %v5350 = vrot.slane %v5342, %v5349
    %v5352 = vunpack.c.l.s4 1983009808
    %v5353 = vunpack.c.0.s8 %v5352
    %v5354 = vlaneseq
    %v5355 = vshrl.u32 %v5354, 7
    %v5356 = vsub.s32 %v5353, %v5355
    %v5357 = vrot.slane %v5343, %v5356
    %v5358 = vcombine.low %v5350, %v5357
    %vm5375 = vcmask 523264
    %5376 = vst.msk [vmem:[#allocation24] sm:$0xff] %vm5375, %v5103
    %5377 = vst.msk [vmem:[#allocation24 + $0x8] sm:$0xff] %vm5375, %v5120
    %5378 = vst.msk [vmem:[#allocation24 + $0x10] sm:$0xff] %vm5375, %v5137
    %5379 = vst.msk [vmem:[#allocation24 + $0x18] sm:$0xff] %vm5375, %v5154
    %5380 = vst.msk [vmem:[#allocation24 + $0x20] sm:$0xff] %vm5375, %v5171
    %5381 = vst.msk [vmem:[#allocation24 + $0x28] sm:$0xff] %vm5375, %v5188
    %5382 = vst.msk [vmem:[#allocation24 + $0x30] sm:$0xff] %vm5375, %v5205
    %5383 = vst.msk [vmem:[#allocation24 + $0x38] sm:$0xff] %vm5375, %v5222
    %5384 = vst.msk [vmem:[#allocation24 + $0x40] sm:$0xff] %vm5375, %v5239
    %5385 = vst.msk [vmem:[#allocation24 + $0x48] sm:$0xff] %vm5375, %v5256
    %5386 = vst.msk [vmem:[#allocation24 + $0x50] sm:$0xff] %vm5375, %v5273
    %5387 = vst.msk [vmem:[#allocation24 + $0x58] sm:$0xff] %vm5375, %v5290
    %5388 = vst.msk [vmem:[#allocation24 + $0x60] sm:$0xff] %vm5375, %v5307
    %5389 = vst.msk [vmem:[#allocation24 + $0x68] sm:$0xff] %vm5375, %v5324
    %5390 = vst.msk [vmem:[#allocation24 + $0x70] sm:$0xff] %vm5375, %v5341
    %5391 = vst.msk [vmem:[#allocation24 + $0x78] sm:$0xff] %vm5375, %v5358
    %v5392 = vld [vmem:[%s18] sm:$0xff]
    %v5393 = vld [vmem:[%s18 + $0x8] sm:$0xff]
    %v5394 = vld [vmem:[%s18 + $0x10] sm:$0xff]
    %v5395 = vld [vmem:[%s18 + $0x18] sm:$0xff]
    %v5396 = vld [vmem:[%s19] sm:$0x1]
    %v5398 = vlaneseq
    %v5399 = vshrl.u32 %v5398, 7
    %v5400 = vsub.s32 0, %v5399
    %v5401 = vrot.slane %v5396, %v5400
    %5403 = vmatprep.subr.mxu0 0.0
    %5404 = vmatpush1.msra.mxu0 %v5392
    %5405 = vmatprep.subr.mxu0 0.0
    %5406 = vmatpush1.msra.mxu0 %v5393
    %5407 = vmatprep.subr.mxu0 0.0
    %5408 = vmatpush1.msra.mxu0 %v5394
    %5409 = vmatprep.subr.mxu0 0.0
    %5410 = vmatpush1.msra.mxu0 %v5395
    %5411 = vmatprep.subr.mxu0 0.0
    %5412 = vmatpush1.msra.mxu0 0.0
    %5413 = vmatprep.subr.mxu0 0.0
    %5414 = vmatpush1.msra.mxu0 0.0
    %5415 = vmatprep.subr.mxu0 0.0
    %5416 = vmatpush1.msra.mxu0 0.0
    %5417 = vmatprep.subr.mxu0 0.0
    %5418 = vmatpush1.msra.mxu0 0.0
    %5419 = vmatprep.subr.mxu0 0.0
    %5420 = vmatpush1.msra.mxu0 0.0
    %5421 = vmatprep.subr.mxu0 0.0
    %5422 = vmatpush1.msra.mxu0 0.0
    %5423 = vmatprep.subr.mxu0 0.0
    %5424 = vmatpush1.msra.mxu0 0.0
    %5425 = vmatprep.subr.mxu0 0.0
    %5426 = vmatpush1.msra.mxu0 0.0
    %5427 = vmatprep.subr.mxu0 0.0
    %5428 = vmatpush1.msra.mxu0 0.0
    %5429 = vmatprep.subr.mxu0 0.0
    %5430 = vmatpush1.msra.mxu0 0.0
    %5431 = vmatprep.subr.mxu0 0.0
    %5432 = vmatpush1.msra.mxu0 0.0
    %5433 = vmatprep.subr.mxu0 0.0
    %5434 = vmatpush1.msra.mxu0 0.0
    %5435 = vmatprep.subr.mxu0 0.0
    %5436 = vmatpush1.msra.mxu0 0.0
    %5437 = vmatprep.subr.mxu0 0.0
    %5438 = vmatpush1.msra.mxu0 0.0
    %5439 = vmatprep.subr.mxu0 0.0
    %5440 = vmatpush1.msra.mxu0 0.0
    %5441 = vmatprep.subr.mxu0 0.0
    %5442 = vmatpush1.msra.mxu0 0.0
    %5443 = vmatprep.subr.mxu0 0.0
    %5444 = vmatpush1.msra.mxu0 0.0
    %5445 = vmatprep.subr.mxu0 0.0
    %5446 = vmatpush1.msra.mxu0 0.0
    %5447 = vmatprep.subr.mxu0 0.0
    %5448 = vmatpush1.msra.mxu0 0.0
    %5449 = vmatprep.subr.mxu0 0.0
    %5450 = vmatpush1.msra.mxu0 0.0
    %5451 = vmatprep.subr.mxu0 0.0
    %5452 = vmatpush1.msra.mxu0 0.0
    %5453 = vmatprep.subr.mxu0 0.0
    %5454 = vmatpush1.msra.mxu0 0.0
    %5455 = vmatprep.subr.mxu0 0.0
    %5456 = vmatpush1.msra.mxu0 0.0
    %5457 = vmatprep.subr.mxu0 0.0
    %5458 = vmatpush1.msra.mxu0 0.0
    %5459 = vmatprep.subr.mxu0 0.0
    %5460 = vmatpush1.msra.mxu0 0.0
    %5461 = vmatprep.subr.mxu0 0.0
    %5462 = vmatpush1.msra.mxu0 0.0
    %5463 = vmatprep.subr.mxu0 0.0
    %5464 = vmatpush1.msra.mxu0 0.0
    %5465 = vmatprep.subr.mxu0 0.0
    %5466 = vmatpush1.msra.mxu0 0.0
    %5467 = vmatprep.mubr.f32.mxu0 0.0
    %5468 = vmatmul.mubr.f32.gmra.mrb[0].mxu0 %v3809
    %v5469 = vpop.f32.mrb[0].mxu0
    %v5470 = vadd.f32 %v5401, %v5469
    %v5471 = vpop.f32.mrb[0].mxu0
    %5472 = vmatprep.mubr.f32.mxu0 0.0
    %5473 = vmatmul.mubr.f32.gmra.mrb[0].mxu0 %v3812
    %v5474 = vpop.f32.mrb[0].mxu0
    %v5475 = vadd.f32 %v5401, %v5474
    %v5476 = vpop.f32.mrb[0].mxu0
    %5477 = vmatprep.mubr.f32.mxu0 0.0
    %5478 = vmatmul.mubr.f32.gmra.mrb[0].mxu0 %v3815
    %v5479 = vpop.f32.mrb[0].mxu0
    %v5480 = vadd.f32 %v5401, %v5479
    %v5481 = vpop.f32.mrb[0].mxu0
    %5482 = vmatprep.mubr.f32.mxu0 0.0
    %5483 = vmatmul.mubr.f32.gmra.mrb[0].mxu0 %v3818
    %v5484 = vpop.f32.mrb[0].mxu0
    %v5485 = vadd.f32 %v5401, %v5484
    %v5486 = vpop.f32.mrb[0].mxu0
    %5487 = vdwg.mxu0
    %v5488 = vxor.u32 %v5470, 2147483648
    %v5489 = vxor.u32 %v5475, 2147483648
    %v5490 = vxor.u32 %v5480, 2147483648
    %v5491 = vxor.u32 %v5485, 2147483648
    %v5492 = vmul.f32 %v5488, 1.442695
    %v5493 = vpow.pop %v5492
    %v5494 = vmul.f32 %v5489, 1.442695
    %v5495 = vpow.pop %v5494
    %v5496 = vmul.f32 %v5490, 1.442695
    %v5497 = vpow.pop %v5496
    %v5498 = vmul.f32 %v5491, 1.442695
    %v5499 = vpow.pop %v5498
    %v5500 = vadd.f32 %v5493, 1.0
    %v5501 = vadd.f32 %v5495, 1.0
    %v5502 = vadd.f32 %v5497, 1.0
    %v5503 = vadd.f32 %v5499, 1.0
    %v5504 = vrcp.pop %v5500
    %v5505 = vmul.f32 1.0, %v5504
    %v5506 = vrcp.pop %v5501
    %v5507 = vmul.f32 1.0, %v5506
    %v5508 = vrcp.pop %v5502
    %v5509 = vmul.f32 1.0, %v5508
    %v5510 = vrcp.pop %v5503
    %v5511 = vmul.f32 1.0, %v5510
    %v5512 = vmul.f32 %v5470, %v5505
    %v5513 = vmul.f32 %v5475, %v5507
    %v5514 = vmul.f32 %v5480, %v5509
    %v5515 = vmul.f32 %v5485, %v5511
    %v5516 = vld [vmem:[%s20] sm:$0xff]
    %v5517 = vld [vmem:[%s20 + $0x8] sm:$0xff]
    %v5518 = vld [vmem:[#allocation3] sm:$0x1]
    %v5520 = vlaneseq
    %v5521 = vshrl.u32 %v5520, 7
    %v5522 = vsub.s32 0, %v5521
    %v5523 = vrot.slane %v5518, %v5522
    %v5526 = vsel %vm643, %v5512, 0
    %v5529 = vsel %vm643, %v5513, 0
    %v5532 = vsel %vm643, %v5514, 0
    %v5535 = vsel %vm643, %v5515, 0
    %5537 = vmatprep.subr.mxu0 0.0
    %5538 = vmatpush1.msra.mxu0 %v5516
    %5539 = vmatprep.subr.mxu0 0.0
    %5540 = vmatpush1.msra.mxu0 %v5517
    %5541 = vmatprep.subr.mxu0 0.0
    %5542 = vmatpush1.msra.mxu0 0.0
    %5543 = vmatprep.subr.mxu0 0.0
    %5544 = vmatpush1.msra.mxu0 0.0
    %5545 = vmatprep.subr.mxu0 0.0
    %5546 = vmatpush1.msra.mxu0 0.0
    %5547 = vmatprep.subr.mxu0 0.0
    %5548 = vmatpush1.msra.mxu0 0.0
    %5549 = vmatprep.subr.mxu0 0.0
    %5550 = vmatpush1.msra.mxu0 0.0
    %5551 = vmatprep.subr.mxu0 0.0
    %5552 = vmatpush1.msra.mxu0 0.0
    %5553 = vmatprep.subr.mxu0 0.0
    %5554 = vmatpush1.msra.mxu0 0.0
    %5555 = vmatprep.subr.mxu0 0.0
    %5556 = vmatpush1.msra.mxu0 0.0
    %5557 = vmatprep.subr.mxu0 0.0
    %5558 = vmatpush1.msra.mxu0 0.0
    %5559 = vmatprep.subr.mxu0 0.0
    %5560 = vmatpush1.msra.mxu0 0.0
    %5561 = vmatprep.subr.mxu0 0.0
    %5562 = vmatpush1.msra.mxu0 0.0
    %5563 = vmatprep.subr.mxu0 0.0
    %5564 = vmatpush1.msra.mxu0 0.0
    %5565 = vmatprep.subr.mxu0 0.0
    %5566 = vmatpush1.msra.mxu0 0.0
    %5567 = vmatprep.subr.mxu0 0.0
    %5568 = vmatpush1.msra.mxu0 0.0
    %5569 = vmatprep.subr.mxu0 0.0
    %5570 = vmatpush1.msra.mxu0 0.0
    %5571 = vmatprep.subr.mxu0 0.0
    %5572 = vmatpush1.msra.mxu0 0.0
    %5573 = vmatprep.subr.mxu0 0.0
    %5574 = vmatpush1.msra.mxu0 0.0
    %5575 = vmatprep.subr.mxu0 0.0
    %5576 = vmatpush1.msra.mxu0 0.0
    %5577 = vmatprep.subr.mxu0 0.0
    %5578 = vmatpush1.msra.mxu0 0.0
    %5579 = vmatprep.subr.mxu0 0.0
    %5580 = vmatpush1.msra.mxu0 0.0
    %5581 = vmatprep.subr.mxu0 0.0
    %5582 = vmatpush1.msra.mxu0 0.0
    %5583 = vmatprep.subr.mxu0 0.0
    %5584 = vmatpush1.msra.mxu0 0.0
    %5585 = vmatprep.subr.mxu0 0.0
    %5586 = vmatpush1.msra.mxu0 0.0
    %5587 = vmatprep.subr.mxu0 0.0
    %5588 = vmatpush1.msra.mxu0 0.0
    %5589 = vmatprep.subr.mxu0 0.0
    %5590 = vmatpush1.msra.mxu0 0.0
    %5591 = vmatprep.subr.mxu0 0.0
    %5592 = vmatpush1.msra.mxu0 0.0
    %5593 = vmatprep.subr.mxu0 0.0
    %5594 = vmatpush1.msra.mxu0 0.0
    %5595 = vmatprep.subr.mxu0 0.0
    %5596 = vmatpush1.msra.mxu0 0.0
    %5597 = vmatprep.subr.mxu0 0.0
    %5598 = vmatpush1.msra.mxu0 0.0
    %5599 = vmatprep.subr.mxu0 0.0
    %5600 = vmatpush1.msra.mxu0 0.0
    %5601 = vmatprep.mubr.f32.mxu0 0.0
    %5602 = vmatmul.mubr.f32.gmra.mrb[0].mxu0 %v5526
    %v5603 = vpop.f32.mrb[0].mxu0
    %v5604 = vadd.f32 %v5523, %v5603
    %v5605 = vpop.f32.mrb[0].mxu0
    %5606 = vmatprep.mubr.f32.mxu0 0.0
    %5607 = vmatmul.mubr.f32.gmra.mrb[0].mxu0 %v5529
    %v5608 = vpop.f32.mrb[0].mxu0
    %v5609 = vadd.f32 %v5523, %v5608
    %v5610 = vpop.f32.mrb[0].mxu0
    %5611 = vmatprep.mubr.f32.mxu0 0.0
    %5612 = vmatmul.mubr.f32.gmra.mrb[0].mxu0 %v5532
    %v5613 = vpop.f32.mrb[0].mxu0
    %v5614 = vadd.f32 %v5523, %v5613
    %v5615 = vpop.f32.mrb[0].mxu0
    %5616 = vmatprep.mubr.f32.mxu0 0.0
    %5617 = vmatmul.mubr.f32.gmra.mrb[0].mxu0 %v5535
    %v5618 = vpop.f32.mrb[0].mxu0
    %v5619 = vadd.f32 %v5523, %v5618
    %v5620 = vpop.f32.mrb[0].mxu0
    %5621 = vdwg.mxu0
    %v5622 = vxor.u32 %v5604, 2147483648
    %v5623 = vxor.u32 %v5609, 2147483648
    %v5624 = vxor.u32 %v5614, 2147483648
    %v5625 = vxor.u32 %v5619, 2147483648
    %v5626 = vmul.f32 %v5622, 1.442695
    %v5627 = vpow.pop %v5626
    %v5628 = vmul.f32 %v5623, 1.442695
    %v5629 = vpow.pop %v5628
    %v5630 = vmul.f32 %v5624, 1.442695
    %v5631 = vpow.pop %v5630
    %v5632 = vmul.f32 %v5625, 1.442695
    %v5633 = vpow.pop %v5632
    %v5634 = vadd.f32 %v5627, 1.0
    %v5635 = vadd.f32 %v5629, 1.0
    %v5636 = vadd.f32 %v5631, 1.0
    %v5637 = vadd.f32 %v5633, 1.0
    %v5638 = vrcp.pop %v5634
    %v5639 = vmul.f32 1.0, %v5638
    %v5640 = vrcp.pop %v5635
    %v5641 = vmul.f32 1.0, %v5640
    %v5642 = vrcp.pop %v5636
    %v5643 = vmul.f32 1.0, %v5642
    %v5644 = vrcp.pop %v5637
    %v5645 = vmul.f32 1.0, %v5644
    %v5650 = vcombine.high %v5639, %v5639
    %v5652 = vunpack.c.l.s4 1983009808
    %v5653 = vunpack.c.0.s8 %v5652
    %v5654 = vlaneseq
    %v5655 = vshrl.u32 %v5654, 7
    %v5656 = vsub.s32 %v5653, %v5655
    %v5657 = vrot.slane %v5639, %v5656
    %v5659 = vunpack.c.l.s4 1983009808
    %v5660 = vunpack.c.0.s8 %v5659
    %v5661 = vlaneseq
    %v5662 = vshrl.u32 %v5661, 7
    %v5663 = vsub.s32 %v5660, %v5662
    %v5664 = vrot.slane %v5650, %v5663
    %v5665 = vcombine.high %v5657, %v5657
    %v5666 = vcombine.high %v5664, %v5664
    %v5667 = vcombine.high %v5641, %v5641
    %v5669 = vunpack.c.l.s4 1983009808
    %v5670 = vunpack.c.0.s8 %v5669
    %v5671 = vlaneseq
    %v5672 = vshrl.u32 %v5671, 7
    %v5673 = vsub.s32 %v5670, %v5672
    %v5674 = vrot.slane %v5641, %v5673
    %v5676 = vunpack.c.l.s4 1983009808
    %v5677 = vunpack.c.0.s8 %v5676
    %v5678 = vlaneseq
    %v5679 = vshrl.u32 %v5678, 7
    %v5680 = vsub.s32 %v5677, %v5679
    %v5681 = vrot.slane %v5667, %v5680
    %v5682 = vcombine.high %v5674, %v5674
    %v5683 = vcombine.high %v5681, %v5681
    %v5684 = vcombine.high %v5643, %v5643
    %v5686 = vunpack.c.l.s4 1983009808
    %v5687 = vunpack.c.0.s8 %v5686
    %v5688 = vlaneseq
    %v5689 = vshrl.u32 %v5688, 7
    %v5690 = vsub.s32 %v5687, %v5689
    %v5691 = vrot.slane %v5643, %v5690
    %v5693 = vunpack.c.l.s4 1983009808
    %v5694 = vunpack.c.0.s8 %v5693
    %v5695 = vlaneseq
    %v5696 = vshrl.u32 %v5695, 7
    %v5697 = vsub.s32 %v5694, %v5696
    %v5698 = vrot.slane %v5684, %v5697
    %v5699 = vcombine.high %v5691, %v5691
    %v5700 = vcombine.high %v5698, %v5698
    %v5701 = vcombine.high %v5645, %v5645
    %v5703 = vunpack.c.l.s4 1983009808
    %v5704 = vunpack.c.0.s8 %v5703
    %v5705 = vlaneseq
    %v5706 = vshrl.u32 %v5705, 7
    %v5707 = vsub.s32 %v5704, %v5706
    %v5708 = vrot.slane %v5645, %v5707
    %v5710 = vunpack.c.l.s4 1983009808
    %v5711 = vunpack.c.0.s8 %v5710
    %v5712 = vlaneseq
    %v5713 = vshrl.u32 %v5712, 7
    %v5714 = vsub.s32 %v5711, %v5713
    %v5715 = vrot.slane %v5701, %v5714
    %v5716 = vcombine.high %v5708, %v5708
    %v5717 = vcombine.high %v5715, %v5715
    %v5719 = vunpack.c.l.s4 1983009808
    %v5720 = vunpack.c.0.s8 %v5719
    %v5721 = vlaneseq
    %v5722 = vshrl.u32 %v5721, 7
    %v5723 = vsub.s32 %v5720, %v5722
    %v5724 = vrot.slane %v5657, %v5723
    %v5726 = vunpack.c.l.s4 1983009808
    %v5727 = vunpack.c.0.s8 %v5726
    %v5728 = vlaneseq
    %v5729 = vshrl.u32 %v5728, 7
    %v5730 = vsub.s32 %v5727, %v5729
    %v5731 = vrot.slane %v5665, %v5730
    %v5733 = vunpack.c.l.s4 1983009808
    %v5734 = vunpack.c.0.s8 %v5733
    %v5735 = vlaneseq
    %v5736 = vshrl.u32 %v5735, 7
    %v5737 = vsub.s32 %v5734, %v5736
    %v5738 = vrot.slane %v5664, %v5737
    %v5740 = vunpack.c.l.s4 1983009808
    %v5741 = vunpack.c.0.s8 %v5740
    %v5742 = vlaneseq
    %v5743 = vshrl.u32 %v5742, 7
    %v5744 = vsub.s32 %v5741, %v5743
    %v5745 = vrot.slane %v5666, %v5744
    %v5747 = vunpack.c.l.s4 1983009808
    %v5748 = vunpack.c.0.s8 %v5747
    %v5749 = vlaneseq
    %v5750 = vshrl.u32 %v5749, 7
    %v5751 = vsub.s32 %v5748, %v5750
    %v5752 = vrot.slane %v5674, %v5751
    %v5754 = vunpack.c.l.s4 1983009808
    %v5755 = vunpack.c.0.s8 %v5754
    %v5756 = vlaneseq
    %v5757 = vshrl.u32 %v5756, 7
    %v5758 = vsub.s32 %v5755, %v5757
    %v5759 = vrot.slane %v5682, %v5758
    %v5761 = vunpack.c.l.s4 1983009808
    %v5762 = vunpack.c.0.s8 %v5761
    %v5763 = vlaneseq
    %v5764 = vshrl.u32 %v5763, 7
    %v5765 = vsub.s32 %v5762, %v5764
    %v5766 = vrot.slane %v5681, %v5765
    %v5768 = vunpack.c.l.s4 1983009808
    %v5769 = vunpack.c.0.s8 %v5768
    %v5770 = vlaneseq
    %v5771 = vshrl.u32 %v5770, 7
    %v5772 = vsub.s32 %v5769, %v5771
    %v5773 = vrot.slane %v5683, %v5772
    %v5775 = vunpack.c.l.s4 1983009808
    %v5776 = vunpack.c.0.s8 %v5775
    %v5777 = vlaneseq
    %v5778 = vshrl.u32 %v5777, 7
    %v5779 = vsub.s32 %v5776, %v5778
    %v5780 = vrot.slane %v5691, %v5779
    %v5782 = vunpack.c.l.s4 1983009808
    %v5783 = vunpack.c.0.s8 %v5782
    %v5784 = vlaneseq
    %v5785 = vshrl.u32 %v5784, 7
    %v5786 = vsub.s32 %v5783, %v5785
    %v5787 = vrot.slane %v5699, %v5786
    %v5789 = vunpack.c.l.s4 1983009808
    %v5790 = vunpack.c.0.s8 %v5789
    %v5791 = vlaneseq
    %v5792 = vshrl.u32 %v5791, 7
    %v5793 = vsub.s32 %v5790, %v5792
    %v5794 = vrot.slane %v5698, %v5793
    %v5796 = vunpack.c.l.s4 1983009808
    %v5797 = vunpack.c.0.s8 %v5796
    %v5798 = vlaneseq
    %v5799 = vshrl.u32 %v5798, 7
    %v5800 = vsub.s32 %v5797, %v5799
    %v5801 = vrot.slane %v5700, %v5800
    %v5803 = vunpack.c.l.s4 1983009808
    %v5804 = vunpack.c.0.s8 %v5803
    %v5805 = vlaneseq
    %v5806 = vshrl.u32 %v5805, 7
    %v5807 = vsub.s32 %v5804, %v5806
    %v5808 = vrot.slane %v5708, %v5807
    %v5810 = vunpack.c.l.s4 1983009808
    %v5811 = vunpack.c.0.s8 %v5810
    %v5812 = vlaneseq
    %v5813 = vshrl.u32 %v5812, 7
    %v5814 = vsub.s32 %v5811, %v5813
    %v5815 = vrot.slane %v5716, %v5814
    %v5817 = vunpack.c.l.s4 1983009808
    %v5818 = vunpack.c.0.s8 %v5817
    %v5819 = vlaneseq
    %v5820 = vshrl.u32 %v5819, 7
    %v5821 = vsub.s32 %v5818, %v5820
    %v5822 = vrot.slane %v5715, %v5821
    %v5824 = vunpack.c.l.s4 1983009808
    %v5825 = vunpack.c.0.s8 %v5824
    %v5826 = vlaneseq
    %v5827 = vshrl.u32 %v5826, 7
    %v5828 = vsub.s32 %v5825, %v5827
    %v5829 = vrot.slane %v5717, %v5828
    %5830 = vset.pattern.permute.xlu0 0
    %5831 = vperm.xlu0 %5830, %v5724
    %v5832 = vpop.permute.xlu0 %5831
    %5833 = vset.pattern.permute.xlu0 0
    %5834 = vperm.xlu0 %5833, %v5731
    %v5835 = vpop.permute.xlu0 %5834
    %5836 = vset.pattern.permute.xlu0 0
    %5837 = vperm.xlu0 %5836, %v5738
    %v5838 = vpop.permute.xlu0 %5837
    %5839 = vset.pattern.permute.xlu0 0
    %5840 = vperm.xlu0 %5839, %v5745
    %v5841 = vpop.permute.xlu0 %5840
    %5842 = vset.pattern.permute.xlu0 0
    %5843 = vperm.xlu0 %5842, %v5752
    %v5844 = vpop.permute.xlu0 %5843
    %5845 = vset.pattern.permute.xlu0 0
    %5846 = vperm.xlu0 %5845, %v5759
    %v5847 = vpop.permute.xlu0 %5846
    %5848 = vset.pattern.permute.xlu0 0
    %5849 = vperm.xlu0 %5848, %v5766
    %v5850 = vpop.permute.xlu0 %5849
    %5851 = vset.pattern.permute.xlu0 0
    %5852 = vperm.xlu0 %5851, %v5773
    %v5853 = vpop.permute.xlu0 %5852
    %5854 = vset.pattern.permute.xlu0 0
    %5855 = vperm.xlu0 %5854, %v5780
    %v5856 = vpop.permute.xlu0 %5855
    %5857 = vset.pattern.permute.xlu0 0
    %5858 = vperm.xlu0 %5857, %v5787
    %v5859 = vpop.permute.xlu0 %5858
    %5860 = vset.pattern.permute.xlu0 0
    %5861 = vperm.xlu0 %5860, %v5794
    %v5862 = vpop.permute.xlu0 %5861
    %5863 = vset.pattern.permute.xlu0 0
    %5864 = vperm.xlu0 %5863, %v5801
    %v5865 = vpop.permute.xlu0 %5864
    %5866 = vset.pattern.permute.xlu0 0
    %5867 = vperm.xlu0 %5866, %v5808
    %v5868 = vpop.permute.xlu0 %5867
    %5869 = vset.pattern.permute.xlu0 0
    %5870 = vperm.xlu0 %5869, %v5815
    %v5871 = vpop.permute.xlu0 %5870
    %5872 = vset.pattern.permute.xlu0 0
    %5873 = vperm.xlu0 %5872, %v5822
    %v5874 = vpop.permute.xlu0 %5873
    %5875 = vset.pattern.permute.xlu0 0
    %5876 = vperm.xlu0 %5875, %v5829
    %v5877 = vpop.permute.xlu0 %5876
    %v5878 = vlaneseq
    %v5879 = vshrl.u32 %v5878, 7
    %v5880 = vsub.s32 %v555, %v5879
    %v5881 = vrot.slane %v5832, %v5880
    %v5882 = vlaneseq
    %v5883 = vshrl.u32 %v5882, 7
    %v5884 = vsub.s32 %v555, %v5883
    %v5885 = vrot.slane %v5835, %v5884
    %v5886 = vlaneseq
    %v5887 = vshrl.u32 %v5886, 7
    %v5888 = vsub.s32 %v555, %v5887
    %v5889 = vrot.slane %v5838, %v5888
    %v5890 = vlaneseq
    %v5891 = vshrl.u32 %v5890, 7
    %v5892 = vsub.s32 %v555, %v5891
    %v5893 = vrot.slane %v5841, %v5892
    %v5894 = vlaneseq
    %v5895 = vshrl.u32 %v5894, 7
    %v5896 = vsub.s32 %v555, %v5895
    %v5897 = vrot.slane %v5844, %v5896
    %v5898 = vlaneseq
    %v5899 = vshrl.u32 %v5898, 7
    %v5900 = vsub.s32 %v555, %v5899
    %v5901 = vrot.slane %v5847, %v5900
    %v5902 = vlaneseq
    %v5903 = vshrl.u32 %v5902, 7
    %v5904 = vsub.s32 %v555, %v5903
    %v5905 = vrot.slane %v5850, %v5904
    %v5906 = vlaneseq
    %v5907 = vshrl.u32 %v5906, 7
    %v5908 = vsub.s32 %v555, %v5907
    %v5909 = vrot.slane %v5853, %v5908
    %v5910 = vlaneseq
    %v5911 = vshrl.u32 %v5910, 7
    %v5912 = vsub.s32 %v555, %v5911
    %v5913 = vrot.slane %v5856, %v5912
    %v5914 = vlaneseq
    %v5915 = vshrl.u32 %v5914, 7
    %v5916 = vsub.s32 %v555, %v5915
    %v5917 = vrot.slane %v5859, %v5916
    %v5918 = vlaneseq
    %v5919 = vshrl.u32 %v5918, 7
    %v5920 = vsub.s32 %v555, %v5919
    %v5921 = vrot.slane %v5862, %v5920
    %v5922 = vlaneseq
    %v5923 = vshrl.u32 %v5922, 7
    %v5924 = vsub.s32 %v555, %v5923
    %v5925 = vrot.slane %v5865, %v5924
    %v5926 = vlaneseq
    %v5927 = vshrl.u32 %v5926, 7
    %v5928 = vsub.s32 %v555, %v5927
    %v5929 = vrot.slane %v5868, %v5928
    %v5930 = vlaneseq
    %v5931 = vshrl.u32 %v5930, 7
    %v5932 = vsub.s32 %v555, %v5931
    %v5933 = vrot.slane %v5871, %v5932
    %v5934 = vlaneseq
    %v5935 = vshrl.u32 %v5934, 7
    %v5936 = vsub.s32 %v555, %v5935
    %v5937 = vrot.slane %v5874, %v5936
    %v5938 = vlaneseq
    %v5939 = vshrl.u32 %v5938, 7
    %v5940 = vsub.s32 %v555, %v5939
    %v5941 = vrot.slane %v5877, %v5940
    %v5942 = vsel %vm620, %v5885, %v5881
    %v5943 = vsel %vm622, %v5889, %v5942
    %v5944 = vsel %vm624, %v5893, %v5943
    %v5945 = vsel %vm626, %v5897, %v5944
    %v5946 = vsel %vm628, %v5901, %v5945
    %v5947 = vsel %vm630, %v5905, %v5946
    %v5948 = vsel %vm632, %v5909, %v5947
    %v5949 = vsel %vm620, %v5917, %v5913
    %v5950 = vsel %vm622, %v5921, %v5949
    %v5951 = vsel %vm624, %v5925, %v5950
    %v5952 = vsel %vm626, %v5929, %v5951
    %v5953 = vsel %vm628, %v5933, %v5952
    %v5954 = vsel %vm630, %v5937, %v5953
    %v5955 = vsel %vm632, %v5941, %v5954
    %5958 = vxpose.xlu0.b32.start [1/16] %v5948, 128
    %5959 = vxpose.xlu0.b32.cont [2/16] %v5955, 128
    %5960 = vxpose.xlu0.b32.cont [3/16] 0.0, 128
    %5961 = vxpose.xlu0.b32.cont [4/16] 0.0, 128
    %5962 = vxpose.xlu0.b32.cont [5/16] 0.0, 128
    %5963 = vxpose.xlu0.b32.cont [6/16] 0.0, 128
    %5964 = vxpose.xlu0.b32.cont [7/16] 0.0, 128
    %5965 = vxpose.xlu0.b32.cont [8/16] 0.0, 128
    %5966 = vxpose.xlu0.b32.cont [9/16] 0.0, 128
    %5967 = vxpose.xlu0.b32.cont [10/16] 0.0, 128
    %5968 = vxpose.xlu0.b32.cont [11/16] 0.0, 128
    %5969 = vxpose.xlu0.b32.cont [12/16] 0.0, 128
    %5970 = vxpose.xlu0.b32.cont [13/16] 0.0, 128
    %5971 = vxpose.xlu0.b32.cont [14/16] 0.0, 128
    %5972 = vxpose.xlu0.b32.cont [15/16] 0.0, 128
    %5973 = vxpose.xlu0.b32.end [16/16] 0.0, 128
    %v5974 = vpop.trf.xlu0
    %v5975 = vpop.trf.xlu0
    %v5976 = vpop.trf.xlu0
    %v5977 = vpop.trf.xlu0
    %v5978 = vpop.trf.xlu0
    %v5979 = vpop.trf.xlu0
    %v5980 = vpop.trf.xlu0
    %v5981 = vpop.trf.xlu0
    %v5982 = vpop.trf.xlu0
    %v5983 = vpop.trf.xlu0
    %v5984 = vpop.trf.xlu0
    %v5985 = vpop.trf.xlu0
    %v5986 = vpop.trf.xlu0
    %v5987 = vpop.trf.xlu0
    %v5988 = vpop.trf.xlu0
    %v5989 = vpop.trf.xlu0
    %vm5990 = vcmask 123904
    %5991 = vst.msk [vmem:[#allocation25] sm:$0x3] %vm5990, %v5974
    %v5992 = vsub.f32 %v1592, %v1591
    %v5993 = vsub.f32 %v1593, %v1592
    %v5994 = vsub.f32 %v1594, %v1593
    %v5995 = vsub.f32 %v1595, %v1594
    %v5996 = vsub.f32 %v1596, %v1595
    %v5997 = vsub.f32 %v1597, %v1596
    %v5998 = vsub.f32 %v1598, %v1597
    %v5999 = vsub.f32 %v1599, %v1598
    %v6000 = vsub.f32 %v1600, %v1599
    %v6001 = vsub.f32 %v1601, %v1600
    %v6002 = vsub.f32 %v1602, %v1601
    %v6003 = vsub.f32 %v1603, %v1602
    %v6004 = vsub.f32 %v1604, %v1603
    %v6005 = vsub.f32 %v1605, %v1604
    %v6006 = vsub.f32 %v1606, %v1605
    %v6007 = vmul.f32 %v5992, %v5992
    %v6008 = vmul.f32 %v5993, %v5993
    %v6009 = vmul.f32 %v5994, %v5994
    %v6010 = vmul.f32 %v5995, %v5995
    %v6011 = vmul.f32 %v5996, %v5996
    %v6012 = vmul.f32 %v5997, %v5997
    %v6013 = vmul.f32 %v5998, %v5998
    %v6014 = vmul.f32 %v5999, %v5999
    %v6015 = vmul.f32 %v6000, %v6000
    %v6016 = vmul.f32 %v6001, %v6001
    %v6017 = vmul.f32 %v6002, %v6002
    %v6018 = vmul.f32 %v6003, %v6003
    %v6019 = vmul.f32 %v6004, %v6004
    %v6020 = vmul.f32 %v6005, %v6005
    %v6021 = vmul.f32 %v6006, %v6006
    %v6022 = vsel %vm470, %v6007, 0.0
    %v6023 = vsel %vm470, %v6008, 0.0
    %v6024 = vadd.f32 %v6022, %v6023
    %v6025 = vsel %vm470, %v6009, 0.0
    %v6026 = vadd.f32 %v6024, %v6025
    %v6027 = vsel %vm470, %v6010, 0.0
    %v6028 = vadd.f32 %v6026, %v6027
    %v6029 = vsel %vm470, %v6011, 0.0
    %v6030 = vadd.f32 %v6028, %v6029
    %v6031 = vsel %vm470, %v6012, 0.0
    %v6032 = vadd.f32 %v6030, %v6031
    %v6033 = vsel %vm470, %v6013, 0.0
    %v6034 = vadd.f32 %v6032, %v6033
    %v6035 = vsel %vm470, %v6014, 0.0
    %v6036 = vadd.f32 %v6034, %v6035
    %v6037 = vsel %vm470, %v6015, 0.0
    %v6038 = vadd.f32 %v6036, %v6037
    %v6039 = vsel %vm470, %v6016, 0.0
    %v6040 = vadd.f32 %v6038, %v6039
    %v6041 = vsel %vm470, %v6017, 0.0
    %v6042 = vadd.f32 %v6040, %v6041
    %v6043 = vsel %vm470, %v6018, 0.0
    %v6044 = vadd.f32 %v6042, %v6043
    %v6045 = vsel %vm470, %v6019, 0.0
    %v6046 = vadd.f32 %v6044, %v6045
    %v6047 = vsel %vm470, %v6020, 0.0
    %v6048 = vadd.f32 %v6046, %v6047
    %v6049 = vsel %vm470, %v6021, 0.0
    %v6050 = vadd.f32 %v6048, %v6049
    %6051 = vadd.xlane.f32.xlu0 %v6050
    %v6052 = vpop.xlane.xlu0 %6051
    %v6053 = vrot.slane %v6052, 4
    %v6054 = vadd.f32 %v6052, %v6053
    %v6055 = vrot.slane %v6054, 2
    %v6056 = vadd.f32 %v6054, %v6055
    %v6057 = vrot.slane %v6056, 1
    %v6058 = vadd.f32 %v6056, %v6057
    %s6059 = vtos %v6058
    %v6060 = vmul.f32 %v3116, %v3116
    %v6061 = vmul.f32 %v3117, %v3117
    %v6062 = vmul.f32 %v3118, %v3118
    %v6063 = vmul.f32 %v3119, %v3119
    %v6064 = vsel %vm1707, %v6060, 0.0
    %v6065 = vsel %vm1707, %v6061, 0.0
    %v6066 = vadd.f32 %v6064, %v6065
    %v6067 = vsel %vm1707, %v6062, 0.0
    %v6068 = vadd.f32 %v6066, %v6067
    %v6069 = vsel %vm1707, %v6063, 0.0
    %v6070 = vadd.f32 %v6068, %v6069
    %6071 = vadd.xlane.f32.xlu0 %v6070
    %v6072 = vpop.xlane.xlu0 %6071
    %v6073 = vrot.slane %v6072, 4
    %v6074 = vadd.f32 %v6072, %v6073
    %v6075 = vrot.slane %v6074, 2
    %v6076 = vadd.f32 %v6074, %v6075
    %v6077 = vrot.slane %v6076, 1
    %v6078 = vadd.f32 %v6076, %v6077
    %s6079 = vtos %v6078
    %v6080 = vsel %vm470, %v3131, 0.0
    %v6081 = vsel %vm470, %v3139, 0.0
    %v6082 = vadd.f32 %v6080, %v6081
    %v6083 = vsel %vm470, %v3138, 0.0
    %v6084 = vadd.f32 %v6082, %v6083
    %v6085 = vsel %vm470, %v3140, 0.0
    %v6086 = vadd.f32 %v6084, %v6085
    %v6087 = vsel %vm470, %v3148, 0.0
    %v6088 = vadd.f32 %v6086, %v6087
    %v6089 = vsel %vm470, %v3156, 0.0
    %v6090 = vadd.f32 %v6088, %v6089
    %v6091 = vsel %vm470, %v3155, 0.0
    %v6092 = vadd.f32 %v6090, %v6091
    %v6093 = vsel %vm470, %v3157, 0.0
    %v6094 = vadd.f32 %v6092, %v6093
    %v6095 = vsel %vm470, %v3165, 0.0
    %v6096 = vadd.f32 %v6094, %v6095
    %v6097 = vsel %vm470, %v3173, 0.0
    %v6098 = vadd.f32 %v6096, %v6097
    %v6099 = vsel %vm470, %v3172, 0.0
    %v6100 = vadd.f32 %v6098, %v6099
    %v6101 = vsel %vm470, %v3174, 0.0
    %v6102 = vadd.f32 %v6100, %v6101
    %v6103 = vsel %vm470, %v3182, 0.0
    %v6104 = vadd.f32 %v6102, %v6103
    %v6105 = vsel %vm470, %v3190, 0.0
    %v6106 = vadd.f32 %v6104, %v6105
    %v6107 = vsel %vm470, %v3189, 0.0
    %v6108 = vadd.f32 %v6106, %v6107
    %v6109 = vsel %vm470, %v3191, 0.0
    %v6110 = vadd.f32 %v6108, %v6109
    %v6111 = vrcp.pop 16.0
    %v6112 = vmul.f32 %v6110, %v6111
    %v6113 = vsub.f32 %v3131, %v6112
    %v6114 = vsub.f32 %v3139, %v6112
    %v6115 = vsub.f32 %v3138, %v6112
    %v6116 = vsub.f32 %v3140, %v6112
    %v6117 = vsub.f32 %v3148, %v6112
    %v6118 = vsub.f32 %v3156, %v6112
    %v6119 = vsub.f32 %v3155, %v6112
    %v6120 = vsub.f32 %v3157, %v6112
    %v6121 = vsub.f32 %v3165, %v6112
    %v6122 = vsub.f32 %v3173, %v6112
    %v6123 = vsub.f32 %v3172, %v6112
    %v6124 = vsub.f32 %v3174, %v6112
    %v6125 = vsub.f32 %v3182, %v6112
    %v6126 = vsub.f32 %v3190, %v6112
    %v6127 = vsub.f32 %v3189, %v6112
    %v6128 = vsub.f32 %v3191, %v6112
    %v6129 = vmul.f32 %v6113, %v6113
    %v6130 = vmul.f32 %v6114, %v6114
    %v6131 = vmul.f32 %v6115, %v6115
    %v6132 = vmul.f32 %v6116, %v6116
    %v6133 = vmul.f32 %v6117, %v6117
    %v6134 = vmul.f32 %v6118, %v6118
    %v6135 = vmul.f32 %v6119, %v6119
    %v6136 = vmul.f32 %v6120, %v6120
    %v6137 = vmul.f32 %v6121, %v6121
    %v6138 = vmul.f32 %v6122, %v6122
    %v6139 = vmul.f32 %v6123, %v6123
    %v6140 = vmul.f32 %v6124, %v6124
    %v6141 = vmul.f32 %v6125, %v6125
    %v6142 = vmul.f32 %v6126, %v6126
    %v6143 = vmul.f32 %v6127, %v6127
    %v6144 = vmul.f32 %v6128, %v6128
    %v6145 = vsel %vm470, %v6129, 0.0
    %v6146 = vsel %vm470, %v6130, 0.0
    %v6147 = vadd.f32 %v6145, %v6146
    %v6148 = vsel %vm470, %v6131, 0.0
    %v6149 = vadd.f32 %v6147, %v6148
    %v6150 = vsel %vm470, %v6132, 0.0
    %v6151 = vadd.f32 %v6149, %v6150
    %v6152 = vsel %vm470, %v6133, 0.0
    %v6153 = vadd.f32 %v6151, %v6152
    %v6154 = vsel %vm470, %v6134, 0.0
    %v6155 = vadd.f32 %v6153, %v6154
    %v6156 = vsel %vm470, %v6135, 0.0
    %v6157 = vadd.f32 %v6155, %v6156
    %v6158 = vsel %vm470, %v6136, 0.0
    %v6159 = vadd.f32 %v6157, %v6158
    %v6160 = vsel %vm470, %v6137, 0.0
    %v6161 = vadd.f32 %v6159, %v6160
    %v6162 = vsel %vm470, %v6138, 0.0
    %v6163 = vadd.f32 %v6161, %v6162
    %v6164 = vsel %vm470, %v6139, 0.0
    %v6165 = vadd.f32 %v6163, %v6164
    %v6166 = vsel %vm470, %v6140, 0.0
    %v6167 = vadd.f32 %v6165, %v6166
    %v6168 = vsel %vm470, %v6141, 0.0
    %v6169 = vadd.f32 %v6167, %v6168
    %v6170 = vsel %vm470, %v6142, 0.0
    %v6171 = vadd.f32 %v6169, %v6170
    %v6172 = vsel %vm470, %v6143, 0.0
    %v6173 = vadd.f32 %v6171, %v6172
    %v6174 = vsel %vm470, %v6144, 0.0
    %v6175 = vadd.f32 %v6173, %v6174
    %6176 = vadd.xlane.f32.xlu0 %v6175
    %v6177 = vpop.xlane.xlu0 %6176
    %v6178 = vrot.slane %v6177, 4
    %v6179 = vadd.f32 %v6177, %v6178
    %v6180 = vrot.slane %v6179, 2
    %v6181 = vadd.f32 %v6179, %v6180
    %v6182 = vrot.slane %v6181, 1
    %v6183 = vadd.f32 %v6181, %v6182
    %s6184 = vtos %v6183
    %v6185 = vrcp.pop 15.0
    %s6186 = vtos %v6185
    %s6187 = smul.f32 %s6184, %s6186
    %v6188 = vlaneseq
    %v6189 = vshrl.u32 %v6188, 7
    %vm6190 = vcmp.eq.s32.totalorder %v6189, 0
    %vm6191 = vcmp.eq.s32.totalorder %v555, 0
    %vm6192 = vmand %vm6190, %vm6191
    %vm6193 = vcmp.eq.s32.totalorder %v555, 1
    %vm6194 = vmand %vm6190, %vm6193
    %vm6195 = vcmp.eq.s32.totalorder %v555, 2
    %vm6196 = vmand %vm6190, %vm6195
    %v6197 = vstv %s6187
    %v6198 = vsel %vm6196, %v6197, 0.0
    %v6199 = vstv %s6079
    %v6200 = vsel %vm6194, %v6199, %v6198
    %v6201 = vstv %s6059
    %v6202 = vsel %vm6192, %v6201, %v6200
    %6203 = vst [vmem:[#allocation30] sm:$0xff] %v6202
    // Predicated region
    $region138: #{tpu_custom_call.1} parent=1 // pred_check
      _
    $region139: #{tpu_custom_call.1} parent=1 // pred_check_branch
      %6205 = sbr.rel (0) target = $region141
    $region140: #{tpu_custom_call.1} parent=1 // pred_region
      %s6207 = ssub.s32 2048, 2048
      %6208 = vsyncadd [#allocation6], %s6207
      %s6209 = sshll.u32 [#allocation24], 4
      %s6210 = int_to_ptr.vmem [resolvable:$true] %s6209
      %6215 = dma.vmem_to_hbm [thread:$0]  %s6210, 2048, %s22, [#allocation6], 128, 128, 8
    $region141: #{tpu_custom_call.1} parent=1 // pred_fallthru
      _
    // Predicated region
    $region142: #{tpu_custom_call.1} parent=1 // pred_check
      _
    $region143: #{tpu_custom_call.1} parent=1 // pred_check_branch
      %6217 = sbr.rel (0) target = $region145
    $region144: #{tpu_custom_call.1} parent=1 // pred_region
      %s6219 = ssub.s32 32, 32
      %6220 = vsyncadd [#allocation26], %s6219
      %s6222 = sshll.u32 [#allocation25], 4
      %s6223 = int_to_ptr.vmem [resolvable:$true] %s6222
      %6225 = dma.vmem_to_hbm [thread:$0]  %s6223, 32, %s23, [#allocation26]
    $region145: #{tpu_custom_call.1} parent=1 // pred_fallthru
      _
    // Predicated region
    $region146: #{tpu_custom_call.1} parent=1 // pred_check
      _
    $region147: #{tpu_custom_call.1} parent=1 // pred_check_branch
      %6227 = sbr.rel (0) target = $region149
    $region148: #{tpu_custom_call.1} parent=1 // pred_region
      %s6229 = ssub.s32 512, 512
      %6230 = vsyncadd [#allocation26], %s6229
      %s6231 = sshll.u32 [#allocation27], 4
      %s6232 = int_to_ptr.vmem [resolvable:$true] %s6231
      %6237 = dma.vmem_to_hbm [thread:$0]  %s6232, 512, %s24, [#allocation26], 128, 128, 8
    $region149: #{tpu_custom_call.1} parent=1 // pred_fallthru
      _
    // Predicated region
    $region150: #{tpu_custom_call.1} parent=1 // pred_check
      _
    $region151: #{tpu_custom_call.1} parent=1 // pred_check_branch
      %6239 = sbr.rel (0) target = $region153
    $region152: #{tpu_custom_call.1} parent=1 // pred_region
      %s6241 = ssub.s32 512, 512
      %6242 = vsyncadd [#allocation29], %s6241
      %s6243 = sshll.u32 [#allocation28], 4
      %s6244 = int_to_ptr.vmem [resolvable:$true] %s6243
      %6249 = dma.vmem_to_hbm [thread:$0]  %s6244, 512, %s25, [#allocation29], 128, 128, 8
    $region153: #{tpu_custom_call.1} parent=1 // pred_fallthru
      _
    // Predicated region
    $region154: #{tpu_custom_call.1} parent=1 // pred_check
      _
    $region155: #{tpu_custom_call.1} parent=1 // pred_check_branch
      %6251 = sbr.rel (0) target = $region157
    $region156: #{tpu_custom_call.1} parent=1 // pred_region
      %s6253 = ssub.s32 128, 128
      %6254 = vsyncadd [#allocation29], %s6253
      %s6256 = sshll.u32 [#allocation30], 4
      %s6257 = int_to_ptr.vmem [resolvable:$true] %s6256
      %6259 = dma.vmem_to_hbm [thread:$0]  %s6257, 128, %s26, [#allocation29]
    $region157: #{tpu_custom_call.1} parent=1 // pred_fallthru
      _
    // Predicated region
    $region158: #{tpu_custom_call.1} parent=1 // pred_check
      _
    $region159: #{tpu_custom_call.1} parent=1 // pred_check_branch
      %6261 = sbr.rel (0) target = $region161
    $region160: #{tpu_custom_call.1} parent=1 // pred_region
      %6262 = dma.done [#allocation6], 2048
    $region161: #{tpu_custom_call.1} parent=1 // pred_fallthru
      _
    // Predicated region
    $region162: #{tpu_custom_call.1} parent=1 // pred_check
      _
    $region163: #{tpu_custom_call.1} parent=1 // pred_check_branch
      %6264 = sbr.rel (0) target = $region165
    $region164: #{tpu_custom_call.1} parent=1 // pred_region
      %6265 = dma.done [#allocation26], 32
    $region165: #{tpu_custom_call.1} parent=1 // pred_fallthru
      _
    // Predicated region
    $region166: #{tpu_custom_call.1} parent=1 // pred_check
      _
    $region167: #{tpu_custom_call.1} parent=1 // pred_check_branch
      %6267 = sbr.rel (0) target = $region169
    $region168: #{tpu_custom_call.1} parent=1 // pred_region
      %6268 = dma.done [#allocation26], 512
    $region169: #{tpu_custom_call.1} parent=1 // pred_fallthru
      _
    // Predicated region
    $region170: #{tpu_custom_call.1} parent=1 // pred_check
      _
    $region171: #{tpu_custom_call.1} parent=1 // pred_check_branch
      %6270 = sbr.rel (0) target = $region173
    $region172: #{tpu_custom_call.1} parent=1 // pred_region
      %6271 = dma.done [#allocation29], 512
    $region173: #{tpu_custom_call.1} parent=1 // pred_fallthru
      _
    // Predicated region
    $region174: #{tpu_custom_call.1} parent=1 // pred_check
      _
    $region175: #{tpu_custom_call.1} parent=1 // pred_check_branch
      %6273 = sbr.rel (0) target = $region177
    $region176: #{tpu_custom_call.1} parent=1 // pred_region
      %6274 = dma.done [#allocation29], 128
    $region177: #{tpu_custom_call.1} parent=1 // pred_fallthru
      _
    %6275 = vsyncpa [#allocation5], 1
    %6276 = vsyncpa [#allocation8], 1
    %6277 = vsyncpa [#allocation11], 1
    %6278 = vsyncpa [#allocation14], 1
    %6279 = vsyncpa [#allocation17], 1
    %6280 = vsyncpa [#allocation20], 1
    %6281 = vsyncpa [#allocation23], 1
    %6282 = vsyncpa [#allocation6], 1
    %6283 = vsyncpa [#allocation26], 1
    %6284 = vsyncpa [#allocation29], 1

</llo_original>
